<compile_context>
chip_gen: v7x
topology: tpu7x:2x2x1
jax: 0.10.0
libtpu: 0.0.40
codegen_flags: <defaults>
</compile_context>

<pallas_src>
import functools

import jax
import jax.numpy as jnp
from jax.experimental import pallas as pl
from jax.experimental.pallas import tpu as pltpu

EPS = 1e-5  # torch.nn.LayerNorm default


# ---------------------------------------------------------------------------
# shared math helpers (pure jnp -> usable inside the kernel and the reference)
# ---------------------------------------------------------------------------
def _layernorm(x, g, b):
    mu = jnp.mean(x, axis=-1, keepdims=True)
    var = jnp.mean(jnp.square(x - mu), axis=-1, keepdims=True)
    return (x - mu) * jax.lax.rsqrt(var + EPS) * g + b


def _mm_bf16(x16, w16):
    # x16: (..., in) bf16, w16: (in, out) bf16; f32 MXU accumulation.
    return jax.lax.dot_general(
        x16, w16, (((x16.ndim - 1,), (0,)), ((), ())),
        preferred_element_type=jnp.float32)


def _mm(x, w):
    return _mm_bf16(x.astype(jnp.bfloat16), w.astype(jnp.bfloat16))


def _sigmoid(x):
    return 1.0 / (1.0 + jnp.exp(-x))


def _sign(x):
    # torch.sign semantics: -1 / 0 / +1
    return jnp.where(x > 0, 1.0, 0.0) - jnp.where(x < 0, 1.0, 0.0)


# ---------------------------------------------------------------------------
# Fused RSBU_CW kernel: one grid step == bb whole batch elements as (bb*T, C) rows
# ---------------------------------------------------------------------------
def rsbu_cw_kernel(x_ref,
                   ln1g_ref, ln1b_ref, w1_ref, b1_ref,
                   ln2g_ref, ln2b_ref, w2_ref, b2_ref,
                   fc1w_ref, fc1b_ref, ln3g_ref, ln3b_ref, fc2w_ref, fc2b_ref,
                   o_ref, *, T):
    x = x_ref[...]                                   # (M, C) f32 residual input, M = bb*T
    M = x.shape[0]

    # Per-row time index within its batch segment. Block boundaries coincide with
    # batch boundaries (M is a multiple of T), so t == row % T.
    t_idx = jax.lax.broadcasted_iota(jnp.int32, (M, 1), 0) % T
    is_first = t_idx == 0          # conv tap from t-1 is zero-padded on these rows
    is_last = t_idx == T - 1       # conv tap from t+1 is zero-padded on these rows

    def conv3(h, w_ref, b):
        # Conv1d(k=3, stride=1, padding=1) over time.  Compute the three per-tap
        # matmuls on the UN-shifted rows, then shift the *results* by +/-1 row with
        # pltpu.roll (row shifts commute with the per-row matmul) and zero the
        # batch-boundary rows.
        h16 = h.astype(jnp.bfloat16)                 # single bf16 cast per conv
        p_prev = _mm_bf16(h16, w_ref[0])             # contributes h[t-1] @ W[...,0]
        p_mid = _mm_bf16(h16, w_ref[1])              # contributes h[t]   @ W[...,1]
        p_next = _mm_bf16(h16, w_ref[2])             # contributes h[t+1] @ W[...,2]
        prev = jnp.where(is_first, 0.0, pltpu.roll(p_prev, shift=1, axis=0))
        nxt = jnp.where(is_last, 0.0, pltpu.roll(p_next, shift=M - 1, axis=0))
        return prev + p_mid + nxt + b

    # ---- BRC branch -------------------------------------------------------
    h = jnp.maximum(_layernorm(x, ln1g_ref[...], ln1b_ref[...]), 0.0)
    y1 = conv3(h, w1_ref, b1_ref[...])
    h2 = jnp.maximum(_layernorm(y1, ln2g_ref[...], ln2b_ref[...]), 0.0)
    y2 = conv3(h2, w2_ref, b2_ref[...])              # x = BRC(input)

    # ---- channel-wise soft-threshold gate -----------------------------------
    # AdaptiveAvgPool1d(256) pools the last axis; here that is the channel axis of
    # length 256, so gap == |y2| exactly.
    x_abs = jnp.abs(y2)
    z = _mm_bf16(x_abs.astype(jnp.bfloat16), fc1w_ref[...]) + fc1b_ref[...]
    z = jnp.maximum(_layernorm(z, ln3g_ref[...], ln3b_ref[...]), 0.0)
    logits = _mm_bf16(z.astype(jnp.bfloat16), fc2w_ref[...]) + fc2b_ref[...]
    alpha = pl.reciprocal(1.0 + jnp.exp(-logits), approx=True)   # sigmoid on the EUP

    # sign(y2) * max(|y2| - |y2|*alpha, 0) == y2 * (1 - alpha) since alpha in (0,1)
    o_ref[...] = y2 * (1.0 - alpha) + x              # + residual


def _choose_bb(B, T, target_rows=512):
    """How many whole batch elements to fold into one grid step."""
    divs = [d for d in range(1, B + 1) if B % d == 0 and (d * T) % 8 == 0]
    if not divs:
        return B                                     # single full-array block (always legal)
    fitting = [d for d in divs if d * T <= target_rows] or [divs[0]]
    bb = max(fitting)
    if B // bb < 2:                                  # keep >= 2 grid steps for v7x's 2 TCs
        two_step = [d for d in fitting if B // d >= 2]
        if two_step:
            bb = max(two_step)
    return bb


def run_rsbu_cw(x, p, *, target_rows=512):
    B, T, C = x.shape
    K = p["w1"].shape[0]
    assert K == 3 and C == 256, "RSBU_CW requires kernel_size=3 and out_channels=256"

    bb = _choose_bb(B, T, target_rows)
    G = B // bb                  # grid steps (batch groups)
    M = bb * T                   # matmul M rows per step
    x2 = x.reshape(B * T, C)     # free, contiguous view: rows grouped per batch element

    consts = [p["ln1_g"], p["ln1_b"], p["w1"], p["b1"],
              p["ln2_g"], p["ln2_b"], p["w2"], p["b2"],
              p["fc1_w"], p["fc1_b"], p["ln3_g"], p["ln3_b"],
              p["fc2_w"], p["fc2_b"]]

    def const_spec(a):
        n = a.ndim
        # NOTE: on v7x these ~1 MB constant-index weights could use
        # pipeline_mode=pl.Buffered(1) to save the second buffer; default kept here.
        return pl.BlockSpec(a.shape, lambda i, n=n: (0,) * n)

    rows = B * T
    weight_bytes = sum(int(a.size) * a.dtype.itemsize for a in consts)
    cost = pl.CostEstimate(
        flops=8 * rows * C * C * 2,              # 6 conv-tap + 2 FC matmuls
        transcendentals=rows * (C + 3),          # sigmoid exp/recip + 3 LayerNorm rsqrt
        bytes_accessed=2 * rows * C * 4 + weight_bytes)

    out2 = pl.pallas_call(
        functools.partial(rsbu_cw_kernel, T=T),
        out_shape=jax.ShapeDtypeStruct((rows, C), jnp.float32),
        grid=(G,),
        in_specs=[pl.BlockSpec((M, C), lambda i: (i, 0))]
                 + [const_spec(a) for a in consts],
        out_specs=pl.BlockSpec((M, C), lambda i: (i, 0)),
        compiler_params=pltpu.CompilerParams(
            dimension_semantics=("parallel",),
            vmem_limit_bytes=32 * 1024 * 1024),
        cost_estimate=cost,
    )(x2, *consts)
    # TODO(synk): for production sequence lengths on v7x (64 MiB VMEM), add a T-tiling
    # grid axis with a 2-row halo instead of folding whole sequences into one block.
    return out2.reshape(B, T, C)


# ---------------------------------------------------------------------------
# Pure-JAX reference (mirrors the PyTorch graph, incl. the sign/abs/max chain;
# same bf16-operand matmuls as the kernel -> tolerance 1e-2)
# ---------------------------------------------------------------------------
def _conv1d_ref(h, w_taps, b):
    B, T, _ = h.shape
    K = w_taps.shape[0]
    hp = jnp.pad(h, ((0, 0), (1, 1), (0, 0)))
    acc = jnp.zeros((B, T, w_taps.shape[2]), jnp.float32)
    for k in range(K):
        acc = acc + _mm(hp[:, k:k + T, :], w_taps[k])
    return acc + b


def reference_forward(x, p):
    h = jnp.maximum(_layernorm(x, p["ln1_g"], p["ln1_b"]), 0.0)
    y1 = _conv1d_ref(h, p["w1"], p["b1"])
    h2 = jnp.maximum(_layernorm(y1, p["ln2_g"], p["ln2_b"]), 0.0)
    y2 = _conv1d_ref(h2, p["w2"], p["b2"])
    x_abs = jnp.abs(y2)
    gap = x_abs                                  # AdaptiveAvgPool1d(256) over length-256 last dim
    z = _mm(gap, p["fc1_w"]) + p["fc1_b"]
    z = jnp.maximum(_layernorm(z, p["ln3_g"], p["ln3_b"]), 0.0)
    alpha = _sigmoid(_mm(z, p["fc2_w"]) + p["fc2_b"])
    thr = gap * alpha
    n_sub = jnp.maximum(x_abs - thr, 0.0)
    return _sign(y2) * n_sub + x


# ---------------------------------------------------------------------------
# Deterministic parameter init (shapes from the module's __init__)
#   torch Conv1d weight (C_out, C_in, K)  ->  taps (K, C_in, C_out)
#   torch Linear weight (out, in)         ->  (in, out)
# ---------------------------------------------------------------------------
def init_params(key, C, K):
    ks = iter(jax.random.split(key, 16))

    def nrm(shape, scale, dtype=jnp.float32):
        return (scale * jax.random.normal(next(ks), shape)).astype(dtype)

    ones = lambda: jnp.ones((1, C), jnp.float32)
    zeros = lambda: jnp.zeros((1, C), jnp.float32)

    return dict(
        ln1_g=ones(), ln1_b=zeros(),
        w1=nrm((K, C, C), (C * K) ** -0.5, jnp.bfloat16), b1=nrm((1, C), 0.02),
        ln2_g=ones(), ln2_b=zeros(),
        w2=nrm((K, C, C), (C * K) ** -0.5, jnp.bfloat16), b2=nrm((1, C), 0.02),
        fc1_w=nrm((C, C), C ** -0.5, jnp.bfloat16), fc1_b=nrm((1, C), 0.02),
        ln3_g=ones(), ln3_b=zeros(),
        fc2_w=nrm((C, C), C ** -0.5, jnp.bfloat16), fc2_b=nrm((1, C), 0.02),
    )


if __name__ == "__main__":
    # RSBU_CW(in_channels=256, out_channels=256, kernel_size=3); input (B, T, C)
    B, T, C, K = 8, 64, 256, 3
    key = jax.random.PRNGKey(0)
    kx, kp = jax.random.split(key)
    x = jax.random.normal(kx, (B, T, C), jnp.float32)
    params = init_params(kp, C, K)

    y = run_rsbu_cw(x, params)
    jax.block_until_ready(y)

    y_ref = reference_forward(x, params)
    assert y.shape == (B, T, C)
    assert bool(jnp.all(jnp.isfinite(y)))
    assert bool(jnp.allclose(y, y_ref, atol=1e-2, rtol=1e-2)), "output mismatch vs reference"
    print("KERNEL_OK")
</pallas_src>

<mosaic_0001>
module attributes {stable_mosaic.version = 11 : i64} {
  func.func @rsbu_cw_kernel(%arg0: i32, %arg1: memref<256x256xf32, #tpu.memory_space<vmem>>, %arg2: memref<1x256xf32, #tpu.memory_space<vmem>>, %arg3: memref<1x256xf32, #tpu.memory_space<vmem>>, %arg4: memref<3x256x256xbf16, #tpu.memory_space<vmem>>, %arg5: memref<1x256xf32, #tpu.memory_space<vmem>>, %arg6: memref<1x256xf32, #tpu.memory_space<vmem>>, %arg7: memref<1x256xf32, #tpu.memory_space<vmem>>, %arg8: memref<3x256x256xbf16, #tpu.memory_space<vmem>>, %arg9: memref<1x256xf32, #tpu.memory_space<vmem>>, %arg10: memref<256x256xbf16, #tpu.memory_space<vmem>>, %arg11: memref<1x256xf32, #tpu.memory_space<vmem>>, %arg12: memref<1x256xf32, #tpu.memory_space<vmem>>, %arg13: memref<1x256xf32, #tpu.memory_space<vmem>>, %arg14: memref<256x256xbf16, #tpu.memory_space<vmem>>, %arg15: memref<1x256xf32, #tpu.memory_space<vmem>>, %arg16: memref<256x256xf32, #tpu.memory_space<vmem>>) attributes {dimension_semantics = [#tpu.dimension_semantics<parallel>], iteration_bounds = array<i64: 2>, scalar_prefetch = 0 : i64, scratch_operands = 0 : i64, tpu.core_type = #tpu.core_type<tc>, window_params = [{transform_indices = @transform_0, window_bounds = array<i64: 256, 256>}, {pipeline_mode = #tpu.pipeline_mode<synchronous>, transform_indices = @transform_1, window_bounds = array<i64: 1, 256>}, {pipeline_mode = #tpu.pipeline_mode<synchronous>, transform_indices = @transform_2, window_bounds = array<i64: 1, 256>}, {pipeline_mode = #tpu.pipeline_mode<synchronous>, transform_indices = @transform_3, window_bounds = array<i64: 3, 256, 256>}, {pipeline_mode = #tpu.pipeline_mode<synchronous>, transform_indices = @transform_4, window_bounds = array<i64: 1, 256>}, {pipeline_mode = #tpu.pipeline_mode<synchronous>, transform_indices = @transform_5, window_bounds = array<i64: 1, 256>}, {pipeline_mode = #tpu.pipeline_mode<synchronous>, transform_indices = @transform_6, window_bounds = array<i64: 1, 256>}, {pipeline_mode = #tpu.pipeline_mode<synchronous>, transform_indices = @transform_7, window_bounds = array<i64: 3, 256, 256>}, {pipeline_mode = #tpu.pipeline_mode<synchronous>, transform_indices = @transform_8, window_bounds = array<i64: 1, 256>}, {pipeline_mode = #tpu.pipeline_mode<synchronous>, transform_indices = @transform_9, window_bounds = array<i64: 256, 256>}, {pipeline_mode = #tpu.pipeline_mode<synchronous>, transform_indices = @transform_10, window_bounds = array<i64: 1, 256>}, {pipeline_mode = #tpu.pipeline_mode<synchronous>, transform_indices = @transform_11, window_bounds = array<i64: 1, 256>}, {pipeline_mode = #tpu.pipeline_mode<synchronous>, transform_indices = @transform_12, window_bounds = array<i64: 1, 256>}, {pipeline_mode = #tpu.pipeline_mode<synchronous>, transform_indices = @transform_13, window_bounds = array<i64: 256, 256>}, {pipeline_mode = #tpu.pipeline_mode<synchronous>, transform_indices = @transform_14, window_bounds = array<i64: 1, 256>}, {transform_indices = @transform_15, window_bounds = array<i64: 256, 256>}]} {
    %c0 = arith.constant 0 : index
    %c0_0 = arith.constant 0 : index
    %0 = vector.load %arg1[%c0, %c0_0] : memref<256x256xf32, #tpu.memory_space<vmem>>, vector<256x256xf32>
    %1 = tpu.iota {dimensions = array<i32: 0>} : vector<256x1xi32>
    %c64_i32 = arith.constant 64 : i32
    %c0_i32 = arith.constant 0 : i32
    %2 = arith.cmpi eq, %c64_i32, %c0_i32 : i32
    %c1_i32 = arith.constant 1 : i32
    %3 = arith.select %2, %c1_i32, %c64_i32 : i32
    %4 = vector.broadcast %3 : i32 to vector<256x1xi32>
    %5 = arith.remsi %1, %4 : vector<256x1xi32>
    %c0_i32_1 = arith.constant 0 : i32
    %6 = vector.broadcast %c0_i32_1 : i32 to vector<256x1xi32>
    %7 = arith.cmpi ne, %5, %6 : vector<256x1xi32>
    %c0_i32_2 = arith.constant 0 : i32
    %8 = vector.broadcast %c0_i32_2 : i32 to vector<256x1xi32>
    %9 = arith.cmpi slt, %5, %8 : vector<256x1xi32>
    %c0_i32_3 = arith.constant 0 : i32
    %10 = arith.cmpi slt, %3, %c0_i32_3 : i32
    %11 = vector.broadcast %10 : i1 to vector<256x1xi1>
    %12 = vector.broadcast %11 : vector<256x1xi1> to vector<256x1xi1>
    %13 = arith.xori %9, %12 : vector<256x1xi1>
    %14 = arith.andi %13, %7 : vector<256x1xi1>
    %15 = vector.broadcast %3 : i32 to vector<256x1xi32>
    %16 = arith.addi %5, %15 : vector<256x1xi32>
    %17 = arith.select %14, %16, %5 : vector<256x1xi1>, vector<256x1xi32>
    %c0_i32_4 = arith.constant 0 : i32
    %18 = vector.broadcast %c0_i32_4 : i32 to vector<256x1xi32>
    %19 = arith.cmpi eq, %17, %18 : vector<256x1xi32>
    %c63_i32 = arith.constant 63 : i32
    %20 = vector.broadcast %c63_i32 : i32 to vector<256x1xi32>
    %21 = arith.cmpi eq, %17, %20 : vector<256x1xi32>
    %c0_5 = arith.constant 0 : index
    %c0_6 = arith.constant 0 : index
    %22 = vector.load %arg2[%c0_5, %c0_6] : memref<1x256xf32, #tpu.memory_space<vmem>>, vector<1x256xf32>
    %c0_7 = arith.constant 0 : index
    %c0_8 = arith.constant 0 : index
    %23 = vector.load %arg3[%c0_7, %c0_8] : memref<1x256xf32, #tpu.memory_space<vmem>>, vector<1x256xf32>
    %cst = arith.constant dense<0.000000e+00> : vector<256xf32>
    %24 = vector.multi_reduction <add>, %0, %cst [1] : vector<256x256xf32> to vector<256xf32>
    %25 = vector.shape_cast %24 : vector<256xf32> to vector<256x1xf32>
    %cst_9 = arith.constant 2.560000e+02 : f32
    %26 = vector.broadcast %cst_9 : f32 to vector<256x1xf32>
    %27 = arith.divf %25, %26 : vector<256x1xf32>
    %28 = vector.broadcast %27 : vector<256x1xf32> to vector<256x256xf32>
    %29 = arith.subf %0, %28 : vector<256x256xf32>
    %30 = arith.mulf %29, %29 : vector<256x256xf32>
    %cst_10 = arith.constant dense<0.000000e+00> : vector<256xf32>
    %31 = vector.multi_reduction <add>, %30, %cst_10 [1] : vector<256x256xf32> to vector<256xf32>
    %32 = vector.shape_cast %31 : vector<256xf32> to vector<256x1xf32>
    %cst_11 = arith.constant 2.560000e+02 : f32
    %33 = vector.broadcast %cst_11 : f32 to vector<256x1xf32>
    %34 = arith.divf %32, %33 : vector<256x1xf32>
    %35 = vector.broadcast %27 : vector<256x1xf32> to vector<256x256xf32>
    %36 = arith.subf %0, %35 : vector<256x256xf32>
    %cst_12 = arith.constant 9.99999974E-6 : f32
    %37 = vector.broadcast %cst_12 : f32 to vector<256x1xf32>
    %38 = arith.addf %34, %37 : vector<256x1xf32>
    %39 = math.rsqrt %38 : vector<256x1xf32>
    %40 = vector.broadcast %39 : vector<256x1xf32> to vector<256x256xf32>
    %41 = arith.mulf %36, %40 : vector<256x256xf32>
    %42 = vector.broadcast %22 : vector<1x256xf32> to vector<256x256xf32>
    %43 = arith.mulf %41, %42 : vector<256x256xf32>
    %44 = vector.broadcast %23 : vector<1x256xf32> to vector<256x256xf32>
    %45 = arith.addf %43, %44 : vector<256x256xf32>
    %cst_13 = arith.constant 0.000000e+00 : f32
    %46 = vector.broadcast %cst_13 : f32 to vector<256x256xf32>
    %47 = arith.maximumf %45, %46 : vector<256x256xf32>
    %c0_14 = arith.constant 0 : index
    %c0_15 = arith.constant 0 : index
    %48 = vector.load %arg5[%c0_14, %c0_15] : memref<1x256xf32, #tpu.memory_space<vmem>>, vector<1x256xf32>
    %49 = arith.truncf %47 : vector<256x256xf32> to vector<256x256xbf16>
    %c0_16 = arith.constant 0 : index
    %c0_17 = arith.constant 0 : index
    %c0_18 = arith.constant 0 : index
    %50 = vector.load %arg4[%c0_16, %c0_17, %c0_18] : memref<3x256x256xbf16, #tpu.memory_space<vmem>>, vector<1x256x256xbf16>
    %51 = vector.shape_cast %50 : vector<1x256x256xbf16> to vector<256x256xbf16>
    %cst_19 = arith.constant dense<0.000000e+00> : vector<256x256xf32>
    %52 = tpu.matmul %49, %51, %cst_19 {dimension_numbers = #tpu.dot_dimension_numbers<[1], [0], [0], [1], [0, 0, 1, 1], [], []>} : vector<256x256xbf16>, vector<256x256xbf16>, vector<256x256xf32> -> vector<256x256xf32>
    %c1 = arith.constant 1 : index
    %c0_20 = arith.constant 0 : index
    %c0_21 = arith.constant 0 : index
    %53 = vector.load %arg4[%c1, %c0_20, %c0_21] : memref<3x256x256xbf16, #tpu.memory_space<vmem>>, vector<1x256x256xbf16>
    %54 = vector.shape_cast %53 : vector<1x256x256xbf16> to vector<256x256xbf16>
    %cst_22 = arith.constant dense<0.000000e+00> : vector<256x256xf32>
    %55 = tpu.matmul %49, %54, %cst_22 {dimension_numbers = #tpu.dot_dimension_numbers<[1], [0], [0], [1], [0, 0, 1, 1], [], []>} : vector<256x256xbf16>, vector<256x256xbf16>, vector<256x256xf32> -> vector<256x256xf32>
    %c2 = arith.constant 2 : index
    %c0_23 = arith.constant 0 : index
    %c0_24 = arith.constant 0 : index
    %56 = vector.load %arg4[%c2, %c0_23, %c0_24] : memref<3x256x256xbf16, #tpu.memory_space<vmem>>, vector<1x256x256xbf16>
    %57 = vector.shape_cast %56 : vector<1x256x256xbf16> to vector<256x256xbf16>
    %cst_25 = arith.constant dense<0.000000e+00> : vector<256x256xf32>
    %58 = tpu.matmul %49, %57, %cst_25 {dimension_numbers = #tpu.dot_dimension_numbers<[1], [0], [0], [1], [0, 0, 1, 1], [], []>} : vector<256x256xbf16>, vector<256x256xbf16>, vector<256x256xf32> -> vector<256x256xf32>
    %c1_i32_26 = arith.constant 1 : i32
    %59 = tpu.dynamic_rotate %52 by %c1_i32_26 dim 0 : vector<256x256xf32>, i32 -> vector<256x256xf32>
    %cst_27 = arith.constant 0.000000e+00 : f32
    %60 = vector.shape_cast %19 : vector<256x1xi1> to vector<256x1xi1>
    %61 = vector.broadcast %60 : vector<256x1xi1> to vector<256x256xi1>
    %62 = vector.broadcast %cst_27 : f32 to vector<256x256xf32>
    %63 = arith.select %61, %62, %59 : vector<256x256xi1>, vector<256x256xf32>
    %c255_i32 = arith.constant 255 : i32
    %64 = tpu.dynamic_rotate %58 by %c255_i32 dim 0 : vector<256x256xf32>, i32 -> vector<256x256xf32>
    %cst_28 = arith.constant 0.000000e+00 : f32
    %65 = vector.shape_cast %21 : vector<256x1xi1> to vector<256x1xi1>
    %66 = vector.broadcast %65 : vector<256x1xi1> to vector<256x256xi1>
    %67 = vector.broadcast %cst_28 : f32 to vector<256x256xf32>
    %68 = arith.select %66, %67, %64 : vector<256x256xi1>, vector<256x256xf32>
    %69 = arith.addf %63, %55 : vector<256x256xf32>
    %70 = arith.addf %69, %68 : vector<256x256xf32>
    %71 = vector.broadcast %48 : vector<1x256xf32> to vector<256x256xf32>
    %72 = arith.addf %70, %71 : vector<256x256xf32>
    %c0_29 = arith.constant 0 : index
    %c0_30 = arith.constant 0 : index
    %73 = vector.load %arg6[%c0_29, %c0_30] : memref<1x256xf32, #tpu.memory_space<vmem>>, vector<1x256xf32>
    %c0_31 = arith.constant 0 : index
    %c0_32 = arith.constant 0 : index
    %74 = vector.load %arg7[%c0_31, %c0_32] : memref<1x256xf32, #tpu.memory_space<vmem>>, vector<1x256xf32>
    %cst_33 = arith.constant dense<0.000000e+00> : vector<256xf32>
    %75 = vector.multi_reduction <add>, %72, %cst_33 [1] : vector<256x256xf32> to vector<256xf32>
    %76 = vector.shape_cast %75 : vector<256xf32> to vector<256x1xf32>
    %cst_34 = arith.constant 2.560000e+02 : f32
    %77 = vector.broadcast %cst_34 : f32 to vector<256x1xf32>
    %78 = arith.divf %76, %77 : vector<256x1xf32>
    %79 = vector.broadcast %78 : vector<256x1xf32> to vector<256x256xf32>
    %80 = arith.subf %72, %79 : vector<256x256xf32>
    %81 = arith.mulf %80, %80 : vector<256x256xf32>
    %cst_35 = arith.constant dense<0.000000e+00> : vector<256xf32>
    %82 = vector.multi_reduction <add>, %81, %cst_35 [1] : vector<256x256xf32> to vector<256xf32>
    %83 = vector.shape_cast %82 : vector<256xf32> to vector<256x1xf32>
    %cst_36 = arith.constant 2.560000e+02 : f32
    %84 = vector.broadcast %cst_36 : f32 to vector<256x1xf32>
    %85 = arith.divf %83, %84 : vector<256x1xf32>
    %86 = vector.broadcast %78 : vector<256x1xf32> to vector<256x256xf32>
    %87 = arith.subf %72, %86 : vector<256x256xf32>
    %cst_37 = arith.constant 9.99999974E-6 : f32
    %88 = vector.broadcast %cst_37 : f32 to vector<256x1xf32>
    %89 = arith.addf %85, %88 : vector<256x1xf32>
    %90 = math.rsqrt %89 : vector<256x1xf32>
    %91 = vector.broadcast %90 : vector<256x1xf32> to vector<256x256xf32>
    %92 = arith.mulf %87, %91 : vector<256x256xf32>
    %93 = vector.broadcast %73 : vector<1x256xf32> to vector<256x256xf32>
    %94 = arith.mulf %92, %93 : vector<256x256xf32>
    %95 = vector.broadcast %74 : vector<1x256xf32> to vector<256x256xf32>
    %96 = arith.addf %94, %95 : vector<256x256xf32>
    %cst_38 = arith.constant 0.000000e+00 : f32
    %97 = vector.broadcast %cst_38 : f32 to vector<256x256xf32>
    %98 = arith.maximumf %96, %97 : vector<256x256xf32>
    %c0_39 = arith.constant 0 : index
    %c0_40 = arith.constant 0 : index
    %99 = vector.load %arg9[%c0_39, %c0_40] : memref<1x256xf32, #tpu.memory_space<vmem>>, vector<1x256xf32>
    %100 = arith.truncf %98 : vector<256x256xf32> to vector<256x256xbf16>
    %c0_41 = arith.constant 0 : index
    %c0_42 = arith.constant 0 : index
    %c0_43 = arith.constant 0 : index
    %101 = vector.load %arg8[%c0_41, %c0_42, %c0_43] : memref<3x256x256xbf16, #tpu.memory_space<vmem>>, vector<1x256x256xbf16>
    %102 = vector.shape_cast %101 : vector<1x256x256xbf16> to vector<256x256xbf16>
    %cst_44 = arith.constant dense<0.000000e+00> : vector<256x256xf32>
    %103 = tpu.matmul %100, %102, %cst_44 {dimension_numbers = #tpu.dot_dimension_numbers<[1], [0], [0], [1], [0, 0, 1, 1], [], []>} : vector<256x256xbf16>, vector<256x256xbf16>, vector<256x256xf32> -> vector<256x256xf32>
    %c1_45 = arith.constant 1 : index
    %c0_46 = arith.constant 0 : index
    %c0_47 = arith.constant 0 : index
    %104 = vector.load %arg8[%c1_45, %c0_46, %c0_47] : memref<3x256x256xbf16, #tpu.memory_space<vmem>>, vector<1x256x256xbf16>
    %105 = vector.shape_cast %104 : vector<1x256x256xbf16> to vector<256x256xbf16>
    %cst_48 = arith.constant dense<0.000000e+00> : vector<256x256xf32>
    %106 = tpu.matmul %100, %105, %cst_48 {dimension_numbers = #tpu.dot_dimension_numbers<[1], [0], [0], [1], [0, 0, 1, 1], [], []>} : vector<256x256xbf16>, vector<256x256xbf16>, vector<256x256xf32> -> vector<256x256xf32>
    %c2_49 = arith.constant 2 : index
    %c0_50 = arith.constant 0 : index
    %c0_51 = arith.constant 0 : index
    %107 = vector.load %arg8[%c2_49, %c0_50, %c0_51] : memref<3x256x256xbf16, #tpu.memory_space<vmem>>, vector<1x256x256xbf16>
    %108 = vector.shape_cast %107 : vector<1x256x256xbf16> to vector<256x256xbf16>
    %cst_52 = arith.constant dense<0.000000e+00> : vector<256x256xf32>
    %109 = tpu.matmul %100, %108, %cst_52 {dimension_numbers = #tpu.dot_dimension_numbers<[1], [0], [0], [1], [0, 0, 1, 1], [], []>} : vector<256x256xbf16>, vector<256x256xbf16>, vector<256x256xf32> -> vector<256x256xf32>
    %c1_i32_53 = arith.constant 1 : i32
    %110 = tpu.dynamic_rotate %103 by %c1_i32_53 dim 0 : vector<256x256xf32>, i32 -> vector<256x256xf32>
    %cst_54 = arith.constant 0.000000e+00 : f32
    %111 = vector.shape_cast %19 : vector<256x1xi1> to vector<256x1xi1>
    %112 = vector.broadcast %111 : vector<256x1xi1> to vector<256x256xi1>
    %113 = vector.broadcast %cst_54 : f32 to vector<256x256xf32>
    %114 = arith.select %112, %113, %110 : vector<256x256xi1>, vector<256x256xf32>
    %c255_i32_55 = arith.constant 255 : i32
    %115 = tpu.dynamic_rotate %109 by %c255_i32_55 dim 0 : vector<256x256xf32>, i32 -> vector<256x256xf32>
    %cst_56 = arith.constant 0.000000e+00 : f32
    %116 = vector.shape_cast %21 : vector<256x1xi1> to vector<256x1xi1>
    %117 = vector.broadcast %116 : vector<256x1xi1> to vector<256x256xi1>
    %118 = vector.broadcast %cst_56 : f32 to vector<256x256xf32>
    %119 = arith.select %117, %118, %115 : vector<256x256xi1>, vector<256x256xf32>
    %120 = arith.addf %114, %106 : vector<256x256xf32>
    %121 = arith.addf %120, %119 : vector<256x256xf32>
    %122 = vector.broadcast %99 : vector<1x256xf32> to vector<256x256xf32>
    %123 = arith.addf %121, %122 : vector<256x256xf32>
    %124 = math.absf %123 : vector<256x256xf32>
    %125 = arith.truncf %124 : vector<256x256xf32> to vector<256x256xbf16>
    %c0_57 = arith.constant 0 : index
    %c0_58 = arith.constant 0 : index
    %126 = vector.load %arg10[%c0_57, %c0_58] : memref<256x256xbf16, #tpu.memory_space<vmem>>, vector<256x256xbf16>
    %cst_59 = arith.constant dense<0.000000e+00> : vector<256x256xf32>
    %127 = tpu.matmul %125, %126, %cst_59 {dimension_numbers = #tpu.dot_dimension_numbers<[1], [0], [0], [1], [0, 0, 1, 1], [], []>} : vector<256x256xbf16>, vector<256x256xbf16>, vector<256x256xf32> -> vector<256x256xf32>
    %c0_60 = arith.constant 0 : index
    %c0_61 = arith.constant 0 : index
    %128 = vector.load %arg11[%c0_60, %c0_61] : memref<1x256xf32, #tpu.memory_space<vmem>>, vector<1x256xf32>
    %129 = vector.broadcast %128 : vector<1x256xf32> to vector<256x256xf32>
    %130 = arith.addf %127, %129 : vector<256x256xf32>
    %c0_62 = arith.constant 0 : index
    %c0_63 = arith.constant 0 : index
    %131 = vector.load %arg12[%c0_62, %c0_63] : memref<1x256xf32, #tpu.memory_space<vmem>>, vector<1x256xf32>
    %c0_64 = arith.constant 0 : index
    %c0_65 = arith.constant 0 : index
    %132 = vector.load %arg13[%c0_64, %c0_65] : memref<1x256xf32, #tpu.memory_space<vmem>>, vector<1x256xf32>
    %cst_66 = arith.constant dense<0.000000e+00> : vector<256xf32>
    %133 = vector.multi_reduction <add>, %130, %cst_66 [1] : vector<256x256xf32> to vector<256xf32>
    %134 = vector.shape_cast %133 : vector<256xf32> to vector<256x1xf32>
    %cst_67 = arith.constant 2.560000e+02 : f32
    %135 = vector.broadcast %cst_67 : f32 to vector<256x1xf32>
    %136 = arith.divf %134, %135 : vector<256x1xf32>
    %137 = vector.broadcast %136 : vector<256x1xf32> to vector<256x256xf32>
    %138 = arith.subf %130, %137 : vector<256x256xf32>
    %139 = arith.mulf %138, %138 : vector<256x256xf32>
    %cst_68 = arith.constant dense<0.000000e+00> : vector<256xf32>
    %140 = vector.multi_reduction <add>, %139, %cst_68 [1] : vector<256x256xf32> to vector<256xf32>
    %141 = vector.shape_cast %140 : vector<256xf32> to vector<256x1xf32>
    %cst_69 = arith.constant 2.560000e+02 : f32
    %142 = vector.broadcast %cst_69 : f32 to vector<256x1xf32>
    %143 = arith.divf %141, %142 : vector<256x1xf32>
    %144 = vector.broadcast %136 : vector<256x1xf32> to vector<256x256xf32>
    %145 = arith.subf %130, %144 : vector<256x256xf32>
    %cst_70 = arith.constant 9.99999974E-6 : f32
    %146 = vector.broadcast %cst_70 : f32 to vector<256x1xf32>
    %147 = arith.addf %143, %146 : vector<256x1xf32>
    %148 = math.rsqrt %147 : vector<256x1xf32>
    %149 = vector.broadcast %148 : vector<256x1xf32> to vector<256x256xf32>
    %150 = arith.mulf %145, %149 : vector<256x256xf32>
    %151 = vector.broadcast %131 : vector<1x256xf32> to vector<256x256xf32>
    %152 = arith.mulf %150, %151 : vector<256x256xf32>
    %153 = vector.broadcast %132 : vector<1x256xf32> to vector<256x256xf32>
    %154 = arith.addf %152, %153 : vector<256x256xf32>
    %cst_71 = arith.constant 0.000000e+00 : f32
    %155 = vector.broadcast %cst_71 : f32 to vector<256x256xf32>
    %156 = arith.maximumf %154, %155 : vector<256x256xf32>
    %157 = arith.truncf %156 : vector<256x256xf32> to vector<256x256xbf16>
    %c0_72 = arith.constant 0 : index
    %c0_73 = arith.constant 0 : index
    %158 = vector.load %arg14[%c0_72, %c0_73] : memref<256x256xbf16, #tpu.memory_space<vmem>>, vector<256x256xbf16>
    %cst_74 = arith.constant dense<0.000000e+00> : vector<256x256xf32>
    %159 = tpu.matmul %157, %158, %cst_74 {dimension_numbers = #tpu.dot_dimension_numbers<[1], [0], [0], [1], [0, 0, 1, 1], [], []>} : vector<256x256xbf16>, vector<256x256xbf16>, vector<256x256xf32> -> vector<256x256xf32>
    %c0_75 = arith.constant 0 : index
    %c0_76 = arith.constant 0 : index
    %160 = vector.load %arg15[%c0_75, %c0_76] : memref<1x256xf32, #tpu.memory_space<vmem>>, vector<1x256xf32>
    %161 = vector.broadcast %160 : vector<1x256xf32> to vector<256x256xf32>
    %162 = arith.addf %159, %161 : vector<256x256xf32>
    %cst_77 = arith.constant 0.000000e+00 : f32
    %163 = vector.broadcast %cst_77 : f32 to vector<256x256xf32>
    %164 = arith.subf %163, %162 : vector<256x256xf32>
    %165 = math.exp %164 : vector<256x256xf32>
    %cst_78 = arith.constant 1.000000e+00 : f32
    %166 = vector.broadcast %cst_78 : f32 to vector<256x256xf32>
    %167 = arith.addf %166, %165 : vector<256x256xf32>
    %168 = tpu.reciprocal %167 {approx = true} : vector<256x256xf32> -> vector<256x256xf32>
    %cst_79 = arith.constant 1.000000e+00 : f32
    %169 = vector.broadcast %cst_79 : f32 to vector<256x256xf32>
    %170 = arith.subf %169, %168 : vector<256x256xf32>
    %171 = arith.mulf %123, %170 : vector<256x256xf32>
    %172 = arith.addf %171, %0 : vector<256x256xf32>
    %c0_80 = arith.constant 0 : index
    %c0_81 = arith.constant 0 : index
    %173 = vector.load %arg16[%c0_80, %c0_81] : memref<256x256xf32, #tpu.memory_space<vmem>>, vector<256x256xf32>
    tpu.vector_store %arg16[%c0_80, %c0_81], %172 {strides = array<i32>} : memref<256x256xf32, #tpu.memory_space<vmem>>, vector<256x256xf32>,
    return
  }
  func.func @transform_0(%arg0: i32) -> (i32, i32) {
    %c0_i32 = arith.constant 0 : i32
    %c0_i32_0 = arith.constant 0 : i32
    return %arg0, %c0_i32 : i32, i32
  }
  func.func @transform_1(%arg0: i32) -> (i32, i32) {
    %c0_i32 = arith.constant 0 : i32
    %c0_i32_0 = arith.constant 0 : i32
    %c0_i32_1 = arith.constant 0 : i32
    return %c0_i32, %c0_i32_0 : i32, i32
  }
  func.func @transform_2(%arg0: i32) -> (i32, i32) {
    %c0_i32 = arith.constant 0 : i32
    %c0_i32_0 = arith.constant 0 : i32
    %c0_i32_1 = arith.constant 0 : i32
    return %c0_i32, %c0_i32_0 : i32, i32
  }
  func.func @transform_3(%arg0: i32) -> (i32, i32, i32) {
    %c0_i32 = arith.constant 0 : i32
    %c0_i32_0 = arith.constant 0 : i32
    %c0_i32_1 = arith.constant 0 : i32
    %c0_i32_2 = arith.constant 0 : i32
    return %c0_i32, %c0_i32_0, %c0_i32_1 : i32, i32, i32
  }
  func.func @transform_4(%arg0: i32) -> (i32, i32) {
    %c0_i32 = arith.constant 0 : i32
    %c0_i32_0 = arith.constant 0 : i32
    %c0_i32_1 = arith.constant 0 : i32
    return %c0_i32, %c0_i32_0 : i32, i32
  }
  func.func @transform_5(%arg0: i32) -> (i32, i32) {
    %c0_i32 = arith.constant 0 : i32
    %c0_i32_0 = arith.constant 0 : i32
    %c0_i32_1 = arith.constant 0 : i32
    return %c0_i32, %c0_i32_0 : i32, i32
  }
  func.func @transform_6(%arg0: i32) -> (i32, i32) {
    %c0_i32 = arith.constant 0 : i32
    %c0_i32_0 = arith.constant 0 : i32
    %c0_i32_1 = arith.constant 0 : i32
    return %c0_i32, %c0_i32_0 : i32, i32
  }
  func.func @transform_7(%arg0: i32) -> (i32, i32, i32) {
    %c0_i32 = arith.constant 0 : i32
    %c0_i32_0 = arith.constant 0 : i32
    %c0_i32_1 = arith.constant 0 : i32
    %c0_i32_2 = arith.constant 0 : i32
    return %c0_i32, %c0_i32_0, %c0_i32_1 : i32, i32, i32
  }
  func.func @transform_8(%arg0: i32) -> (i32, i32) {
    %c0_i32 = arith.constant 0 : i32
    %c0_i32_0 = arith.constant 0 : i32
    %c0_i32_1 = arith.constant 0 : i32
    return %c0_i32, %c0_i32_0 : i32, i32
  }
  func.func @transform_9(%arg0: i32) -> (i32, i32) {
    %c0_i32 = arith.constant 0 : i32
    %c0_i32_0 = arith.constant 0 : i32
    %c0_i32_1 = arith.constant 0 : i32
    return %c0_i32, %c0_i32_0 : i32, i32
  }
  func.func @transform_10(%arg0: i32) -> (i32, i32) {
    %c0_i32 = arith.constant 0 : i32
    %c0_i32_0 = arith.constant 0 : i32
    %c0_i32_1 = arith.constant 0 : i32
    return %c0_i32, %c0_i32_0 : i32, i32
  }
  func.func @transform_11(%arg0: i32) -> (i32, i32) {
    %c0_i32 = arith.constant 0 : i32
    %c0_i32_0 = arith.constant 0 : i32
    %c0_i32_1 = arith.constant 0 : i32
    return %c0_i32, %c0_i32_0 : i32, i32
  }
  func.func @transform_12(%arg0: i32) -> (i32, i32) {
    %c0_i32 = arith.constant 0 : i32
    %c0_i32_0 = arith.constant 0 : i32
    %c0_i32_1 = arith.constant 0 : i32
    return %c0_i32, %c0_i32_0 : i32, i32
  }
  func.func @transform_13(%arg0: i32) -> (i32, i32) {
    %c0_i32 = arith.constant 0 : i32
    %c0_i32_0 = arith.constant 0 : i32
    %c0_i32_1 = arith.constant 0 : i32
    return %c0_i32, %c0_i32_0 : i32, i32
  }
  func.func @transform_14(%arg0: i32) -> (i32, i32) {
    %c0_i32 = arith.constant 0 : i32
    %c0_i32_0 = arith.constant 0 : i32
    %c0_i32_1 = arith.constant 0 : i32
    return %c0_i32, %c0_i32_0 : i32, i32
  }
  func.func @transform_15(%arg0: i32) -> (i32, i32) {
    %c0_i32 = arith.constant 0 : i32
    %c0_i32_0 = arith.constant 0 : i32
    return %arg0, %c0_i32 : i32, i32
  }
}

</mosaic_0001>

<llo_original>
// kernel: tpu_custom_call.1
$region0: #{tpu_custom_call.1}
  #allocation0 [shape = 'u32[]', space=smem, size = 0x4, offset = 0x4, fixed_abs, tag = 'smem constant byte address 0x4 - core index']
  #allocation1 [shape = 'u32[144,128]{1,0:T(1,128)}', space=vmem, size = 0x12000, scoped, tag = 'internal scratch']
  %s0 = inlined_call_operand.hbm [shape: f32[512,256], index: 0, kind: input, shape index: {}]
  %s1 = inlined_call_operand.vmem [shape: f32[1,256], index: 1, kind: input, shape index: {}]
  %s2 = inlined_call_operand.vmem [shape: f32[1,256], index: 2, kind: input, shape index: {}]
  %s3 = inlined_call_operand.hbm [shape: bf16[3,256,256], index: 3, kind: input, shape index: {}]
  %s4 = inlined_call_operand.vmem [shape: f32[1,256], index: 4, kind: input, shape index: {}]
  %s5 = inlined_call_operand.vmem [shape: f32[1,256], index: 5, kind: input, shape index: {}]
  %s6 = inlined_call_operand.vmem [shape: f32[1,256], index: 6, kind: input, shape index: {}]
  %s7 = inlined_call_operand.hbm [shape: bf16[3,256,256], index: 7, kind: input, shape index: {}]
  %s8 = inlined_call_operand.vmem [shape: f32[1,256], index: 8, kind: input, shape index: {}]
  %s9 = inlined_call_operand.hbm [shape: bf16[256,256], index: 9, kind: input, shape index: {}]
  %s10 = inlined_call_operand.vmem [shape: f32[1,256], index: 10, kind: input, shape index: {}]
  %s11 = inlined_call_operand.vmem [shape: f32[1,256], index: 11, kind: input, shape index: {}]
  %s12 = inlined_call_operand.vmem [shape: f32[1,256], index: 12, kind: input, shape index: {}]
  %s13 = inlined_call_operand.hbm [shape: bf16[256,256], index: 13, kind: input, shape index: {}]
  %s14 = inlined_call_operand.vmem [shape: f32[1,256], index: 14, kind: input, shape index: {}]
  %s15 = inlined_call_operand.hbm [shape: f32[512,256], index: 15, kind: output, shape index: {}]
  %s16 = sld [smem:[#allocation0]]
  $region113: #{tpu_custom_call.1} parent=0
    _
  %s18 = ssub.s32 1, %s16
  %s19 = scalar_select 0, %s18, %s16
  $region1: #{tpu_custom_call.1} parent=0
    #allocation2 [shape = 'u8[524288]{0}', space=vmem, size = 0x80000, scoped, tag = 'input window, operand 0']
    #allocation3 [shape = 's32[2]{0}', space=sflag, size = 0x8, scoped, tag = 'scoped memory for tpu_custom_call.1']
    #allocation4 [shape = 's32[2]{0}', space=sflag, size = 0x8, scoped, tag = 'scoped memory for tpu_custom_call.1']
    #allocation5 [shape = 'u8[393216]{0}', space=vmem, size = 0x60000, scoped, tag = 'input window, operand 3, single buffered']
    #allocation6 [shape = 's32[1]{0}', space=sflag, size = 0x4, scoped, tag = 'scoped memory for tpu_custom_call.1']
    #allocation7 [shape = 'u8[393216]{0}', space=vmem, size = 0x60000, scoped, tag = 'input window, operand 7, single buffered']
    #allocation8 [shape = 'u8[131072]{0}', space=vmem, size = 0x20000, scoped, tag = 'input window, operand 9, single buffered']
    #allocation9 [shape = 's32[1]{0}', space=sflag, size = 0x4, scoped, tag = 'scoped memory for tpu_custom_call.1']
    #allocation10 [shape = 'u8[131072]{0}', space=vmem, size = 0x20000, scoped, tag = 'input window, operand 13, single buffered']
    #allocation11 [shape = 'u8[524288]{0}', space=vmem, size = 0x80000, scoped, tag = 'output window, operand 0']
    %20 = vsyncpa [#allocation3], 0
    %s21 = scalar_lea.sflag [#allocation3], 1
    %22 = vsyncpa %s21, 0
    %23 = vsyncpa [#allocation6], 0
    %24 = vsyncpa [#allocation9], 0
    %25 = vsyncpa [#allocation4], 0
    %s26 = scalar_lea.sflag [#allocation4], 1
    %27 = vsyncpa %s26, 0
    loop: start=0, step=1, limit=4
    $region2: #{tpu_custom_call.1} parent=1 // loop_pre_header
      _
    $region3: #{tpu_custom_call.1} parent=1 // loop_header
      %s29 = sphi 0, %s33
      %p30 = scmp.ge.s32.totalorder %s29, 4
      %s39 = sphi 0, %s41
      %s42 = sphi 0, %s39
      %s43 = sphi 0, %s42
      %s59 = sphi 0, %s43
      %s63 = sphi 0, %s63
      %s65 = sphi 0, %s63
      %s66 = sphi 0, %s65
      %s80 = sphi 0, %s66
      %s84 = sphi 0, %s84
      %s86 = sphi 0, %s84
      %s87 = sphi 0, %s86
      %s101 = sphi 0, %s87
      %s105 = sphi 0, %s105
      %s107 = sphi 0, %s105
      %s108 = sphi 0, %s107
      %s122 = sphi 0, %s108
      %s126 = sphi 0, %s126
      %s128 = sphi 0, %s126
      %s129 = sphi 0, %s128
      %s143 = sphi 0, %s129
      %s147 = sphi 0, %s147
      %s149 = sphi 0, %s147
      %s150 = sphi 0, %s149
      %s164 = sphi 0, %s150
      %s168 = sphi 0, %s168
      %s170 = sphi 0, %s168
      %s171 = sphi 0, %s170
      %s185 = sphi 0, %s171
      %s189 = sphi 0, %s189
      %s191 = sphi 0, %s189
      %s192 = sphi 0, %s191
      %s206 = sphi 0, %s192
      %s210 = sphi 0, %s210
      %s212 = sphi 0, %s210
      %s213 = sphi 0, %s212
      %s227 = sphi 0, %s213
      %s231 = sphi 0, %s231
      %s233 = sphi 0, %s231
      %s234 = sphi 0, %s233
      %s248 = sphi 0, %s234
      %s252 = sphi 0, %s252
      %s254 = sphi 0, %s252
      %s255 = sphi 0, %s254
      %s269 = sphi 0, %s255
      %s273 = sphi 0, %s273
      %s275 = sphi 0, %s273
      %s276 = sphi 0, %s275
      %s290 = sphi 0, %s276
      %s294 = sphi 0, %s294
      %s296 = sphi 0, %s294
      %s297 = sphi 0, %s296
      %s311 = sphi 0, %s297
      %s315 = sphi 0, %s315
      %s317 = sphi 0, %s315
      %s318 = sphi 0, %s317
      %s332 = sphi 0, %s318
      %s336 = sphi 0, %s336
      %s338 = sphi 0, %s336
      %s339 = sphi 0, %s338
      %s353 = sphi 0, %s339
      %s359 = sphi 0, %s361
      %s362 = sphi 0, %s359
      %s363 = sphi 0, %s362
      %s379 = sphi 0, %s363
    $region4: #{tpu_custom_call.1} parent=1 // loop_header_branch
      %32 = sbr.rel (%p30) target = $region8
    $region5: #{tpu_custom_call.1} parent=1 // loop_body
      %s34 = ssub.s32 %s29, 1
      %s35 = ssub.s32 %s29, 2
      %s36 = sadd.s32 %s29, 1
      %s37 = ssub.s32 %s29, %s36
      %p38 = scmp.eq.s32.totalorder %s37, 0
      %s40 = sadd.s32 %s39, 1
      %s41 = scalar_select %p38, %s39, %s40
      %p44 = pneg %p38
      %p45 = scmp.eq.s32.totalorder %s29, 1
      %p46 = por %p44, %p45
      %p47 = scmp.ne.s32.totalorder %s39, %s42
      %p48 = scmp.eq.s32.totalorder %s29, 0
      %p49 = por %p47, %p48
      %p50 = scmp.ne.s32.totalorder %s39, %s42
      %p51 = scmp.eq.s32.totalorder %s34, 1
      %p52 = por %p50, %p51
      %p53 = scmp.ne.s32.totalorder %s42, %s43
      %p54 = scmp.eq.s32.totalorder %s34, 0
      %p55 = por %p53, %p54
      %p56 = scmp.ne.s32.totalorder %s42, %s43
      %p57 = scmp.eq.s32.totalorder %s35, 1
      %p58 = por %p56, %p57
      %p60 = scmp.ne.s32.totalorder %s43, %s59
      %p61 = scmp.eq.s32.totalorder %s35, 0
      %p62 = por %p60, %p61
      %s64 = sadd.s32 %s63, 1
      %p67 = scmp.eq.s32.totalorder %s29, 1
      %p68 = scmp.ne.s32.totalorder %s63, %s65
      %p69 = scmp.eq.s32.totalorder %s29, 0
      %p70 = por %p68, %p69
      %p71 = scmp.ne.s32.totalorder %s63, %s65
      %p72 = scmp.eq.s32.totalorder %s34, 1
      %p73 = por %p71, %p72
      %p74 = scmp.ne.s32.totalorder %s65, %s66
      %p75 = scmp.eq.s32.totalorder %s34, 0
      %p76 = por %p74, %p75
      %p77 = scmp.ne.s32.totalorder %s65, %s66
      %p78 = scmp.eq.s32.totalorder %s35, 1
      %p79 = por %p77, %p78
      %p81 = scmp.ne.s32.totalorder %s66, %s80
      %p82 = scmp.eq.s32.totalorder %s35, 0
      %p83 = por %p81, %p82
      %s85 = sadd.s32 %s84, 1
      %p88 = scmp.eq.s32.totalorder %s29, 1
      %p89 = scmp.ne.s32.totalorder %s84, %s86
      %p90 = scmp.eq.s32.totalorder %s29, 0
      %p91 = por %p89, %p90
      %p92 = scmp.ne.s32.totalorder %s84, %s86
      %p93 = scmp.eq.s32.totalorder %s34, 1
      %p94 = por %p92, %p93
      %p95 = scmp.ne.s32.totalorder %s86, %s87
      %p96 = scmp.eq.s32.totalorder %s34, 0
      %p97 = por %p95, %p96
      %p98 = scmp.ne.s32.totalorder %s86, %s87
      %p99 = scmp.eq.s32.totalorder %s35, 1
      %p100 = por %p98, %p99
      %p102 = scmp.ne.s32.totalorder %s87, %s101
      %p103 = scmp.eq.s32.totalorder %s35, 0
      %p104 = por %p102, %p103
      %s106 = sadd.s32 %s105, 1
      %p109 = scmp.eq.s32.totalorder %s29, 1
      %p110 = scmp.ne.s32.totalorder %s105, %s107
      %p111 = scmp.eq.s32.totalorder %s29, 0
      %p112 = por %p110, %p111
      %p113 = scmp.ne.s32.totalorder %s105, %s107
      %p114 = scmp.eq.s32.totalorder %s34, 1
      %p115 = por %p113, %p114
      %p116 = scmp.ne.s32.totalorder %s107, %s108
      %p117 = scmp.eq.s32.totalorder %s34, 0
      %p118 = por %p116, %p117
      %p119 = scmp.ne.s32.totalorder %s107, %s108
      %p120 = scmp.eq.s32.totalorder %s35, 1
      %p121 = por %p119, %p120
      %p123 = scmp.ne.s32.totalorder %s108, %s122
      %p124 = scmp.eq.s32.totalorder %s35, 0
      %p125 = por %p123, %p124
      %s127 = sadd.s32 %s126, 1
      %p130 = scmp.eq.s32.totalorder %s29, 1
      %p131 = scmp.ne.s32.totalorder %s126, %s128
      %p132 = scmp.eq.s32.totalorder %s29, 0
      %p133 = por %p131, %p132
      %p134 = scmp.ne.s32.totalorder %s126, %s128
      %p135 = scmp.eq.s32.totalorder %s34, 1
      %p136 = por %p134, %p135
      %p137 = scmp.ne.s32.totalorder %s128, %s129
      %p138 = scmp.eq.s32.totalorder %s34, 0
      %p139 = por %p137, %p138
      %p140 = scmp.ne.s32.totalorder %s128, %s129
      %p141 = scmp.eq.s32.totalorder %s35, 1
      %p142 = por %p140, %p141
      %p144 = scmp.ne.s32.totalorder %s129, %s143
      %p145 = scmp.eq.s32.totalorder %s35, 0
      %p146 = por %p144, %p145
      %s148 = sadd.s32 %s147, 1
      %p151 = scmp.eq.s32.totalorder %s29, 1
      %p152 = scmp.ne.s32.totalorder %s147, %s149
      %p153 = scmp.eq.s32.totalorder %s29, 0
      %p154 = por %p152, %p153
      %p155 = scmp.ne.s32.totalorder %s147, %s149
      %p156 = scmp.eq.s32.totalorder %s34, 1
      %p157 = por %p155, %p156
      %p158 = scmp.ne.s32.totalorder %s149, %s150
      %p159 = scmp.eq.s32.totalorder %s34, 0
      %p160 = por %p158, %p159
      %p161 = scmp.ne.s32.totalorder %s149, %s150
      %p162 = scmp.eq.s32.totalorder %s35, 1
      %p163 = por %p161, %p162
      %p165 = scmp.ne.s32.totalorder %s150, %s164
      %p166 = scmp.eq.s32.totalorder %s35, 0
      %p167 = por %p165, %p166
      %s169 = sadd.s32 %s168, 1
      %p172 = scmp.eq.s32.totalorder %s29, 1
      %p173 = scmp.ne.s32.totalorder %s168, %s170
      %p174 = scmp.eq.s32.totalorder %s29, 0
      %p175 = por %p173, %p174
      %p176 = scmp.ne.s32.totalorder %s168, %s170
      %p177 = scmp.eq.s32.totalorder %s34, 1
      %p178 = por %p176, %p177
      %p179 = scmp.ne.s32.totalorder %s170, %s171
      %p180 = scmp.eq.s32.totalorder %s34, 0
      %p181 = por %p179, %p180
      %p182 = scmp.ne.s32.totalorder %s170, %s171
      %p183 = scmp.eq.s32.totalorder %s35, 1
      %p184 = por %p182, %p183
      %p186 = scmp.ne.s32.totalorder %s171, %s185
      %p187 = scmp.eq.s32.totalorder %s35, 0
      %p188 = por %p186, %p187
      %s190 = sadd.s32 %s189, 1
      %p193 = scmp.eq.s32.totalorder %s29, 1
      %p194 = scmp.ne.s32.totalorder %s189, %s191
      %p195 = scmp.eq.s32.totalorder %s29, 0
      %p196 = por %p194, %p195
      %p197 = scmp.ne.s32.totalorder %s189, %s191
      %p198 = scmp.eq.s32.totalorder %s34, 1
      %p199 = por %p197, %p198
      %p200 = scmp.ne.s32.totalorder %s191, %s192
      %p201 = scmp.eq.s32.totalorder %s34, 0
      %p202 = por %p200, %p201
      %p203 = scmp.ne.s32.totalorder %s191, %s192
      %p204 = scmp.eq.s32.totalorder %s35, 1
      %p205 = por %p203, %p204
      %p207 = scmp.ne.s32.totalorder %s192, %s206
      %p208 = scmp.eq.s32.totalorder %s35, 0
      %p209 = por %p207, %p208
      %s211 = sadd.s32 %s210, 1
      %p214 = scmp.eq.s32.totalorder %s29, 1
      %p215 = scmp.ne.s32.totalorder %s210, %s212
      %p216 = scmp.eq.s32.totalorder %s29, 0
      %p217 = por %p215, %p216
      %p218 = scmp.ne.s32.totalorder %s210, %s212
      %p219 = scmp.eq.s32.totalorder %s34, 1
      %p220 = por %p218, %p219
      %p221 = scmp.ne.s32.totalorder %s212, %s213
      %p222 = scmp.eq.s32.totalorder %s34, 0
      %p223 = por %p221, %p222
      %p224 = scmp.ne.s32.totalorder %s212, %s213
      %p225 = scmp.eq.s32.totalorder %s35, 1
      %p226 = por %p224, %p225
      %p228 = scmp.ne.s32.totalorder %s213, %s227
      %p229 = scmp.eq.s32.totalorder %s35, 0
      %p230 = por %p228, %p229
      %s232 = sadd.s32 %s231, 1
      %p235 = scmp.eq.s32.totalorder %s29, 1
      %p236 = scmp.ne.s32.totalorder %s231, %s233
      %p237 = scmp.eq.s32.totalorder %s29, 0
      %p238 = por %p236, %p237
      %p239 = scmp.ne.s32.totalorder %s231, %s233
      %p240 = scmp.eq.s32.totalorder %s34, 1
      %p241 = por %p239, %p240
      %p242 = scmp.ne.s32.totalorder %s233, %s234
      %p243 = scmp.eq.s32.totalorder %s34, 0
      %p244 = por %p242, %p243
      %p245 = scmp.ne.s32.totalorder %s233, %s234
      %p246 = scmp.eq.s32.totalorder %s35, 1
      %p247 = por %p245, %p246
      %p249 = scmp.ne.s32.totalorder %s234, %s248
      %p250 = scmp.eq.s32.totalorder %s35, 0
      %p251 = por %p249, %p250
      %s253 = sadd.s32 %s252, 1
      %p256 = scmp.eq.s32.totalorder %s29, 1
      %p257 = scmp.ne.s32.totalorder %s252, %s254
      %p258 = scmp.eq.s32.totalorder %s29, 0
      %p259 = por %p257, %p258
      %p260 = scmp.ne.s32.totalorder %s252, %s254
      %p261 = scmp.eq.s32.totalorder %s34, 1
      %p262 = por %p260, %p261
      %p263 = scmp.ne.s32.totalorder %s254, %s255
      %p264 = scmp.eq.s32.totalorder %s34, 0
      %p265 = por %p263, %p264
      %p266 = scmp.ne.s32.totalorder %s254, %s255
      %p267 = scmp.eq.s32.totalorder %s35, 1
      %p268 = por %p266, %p267
      %p270 = scmp.ne.s32.totalorder %s255, %s269
      %p271 = scmp.eq.s32.totalorder %s35, 0
      %p272 = por %p270, %p271
      %s274 = sadd.s32 %s273, 1
      %p277 = scmp.eq.s32.totalorder %s29, 1
      %p278 = scmp.ne.s32.totalorder %s273, %s275
      %p279 = scmp.eq.s32.totalorder %s29, 0
      %p280 = por %p278, %p279
      %p281 = scmp.ne.s32.totalorder %s273, %s275
      %p282 = scmp.eq.s32.totalorder %s34, 1
      %p283 = por %p281, %p282
      %p284 = scmp.ne.s32.totalorder %s275, %s276
      %p285 = scmp.eq.s32.totalorder %s34, 0
      %p286 = por %p284, %p285
      %p287 = scmp.ne.s32.totalorder %s275, %s276
      %p288 = scmp.eq.s32.totalorder %s35, 1
      %p289 = por %p287, %p288
      %p291 = scmp.ne.s32.totalorder %s276, %s290
      %p292 = scmp.eq.s32.totalorder %s35, 0
      %p293 = por %p291, %p292
      %s295 = sadd.s32 %s294, 1
      %p298 = scmp.eq.s32.totalorder %s29, 1
      %p299 = scmp.ne.s32.totalorder %s294, %s296
      %p300 = scmp.eq.s32.totalorder %s29, 0
      %p301 = por %p299, %p300
      %p302 = scmp.ne.s32.totalorder %s294, %s296
      %p303 = scmp.eq.s32.totalorder %s34, 1
      %p304 = por %p302, %p303
      %p305 = scmp.ne.s32.totalorder %s296, %s297
      %p306 = scmp.eq.s32.totalorder %s34, 0
      %p307 = por %p305, %p306
      %p308 = scmp.ne.s32.totalorder %s296, %s297
      %p309 = scmp.eq.s32.totalorder %s35, 1
      %p310 = por %p308, %p309
      %p312 = scmp.ne.s32.totalorder %s297, %s311
      %p313 = scmp.eq.s32.totalorder %s35, 0
      %p314 = por %p312, %p313
      %s316 = sadd.s32 %s315, 1
      %p319 = scmp.eq.s32.totalorder %s29, 1
      %p320 = scmp.ne.s32.totalorder %s315, %s317
      %p321 = scmp.eq.s32.totalorder %s29, 0
      %p322 = por %p320, %p321
      %p323 = scmp.ne.s32.totalorder %s315, %s317
      %p324 = scmp.eq.s32.totalorder %s34, 1
      %p325 = por %p323, %p324
      %p326 = scmp.ne.s32.totalorder %s317, %s318
      %p327 = scmp.eq.s32.totalorder %s34, 0
      %p328 = por %p326, %p327
      %p329 = scmp.ne.s32.totalorder %s317, %s318
      %p330 = scmp.eq.s32.totalorder %s35, 1
      %p331 = por %p329, %p330
      %p333 = scmp.ne.s32.totalorder %s318, %s332
      %p334 = scmp.eq.s32.totalorder %s35, 0
      %p335 = por %p333, %p334
      %s337 = sadd.s32 %s336, 1
      %p340 = scmp.eq.s32.totalorder %s29, 1
      %p341 = scmp.ne.s32.totalorder %s336, %s338
      %p342 = scmp.eq.s32.totalorder %s29, 0
      %p343 = por %p341, %p342
      %p344 = scmp.ne.s32.totalorder %s336, %s338
      %p345 = scmp.eq.s32.totalorder %s34, 1
      %p346 = por %p344, %p345
      %p347 = scmp.ne.s32.totalorder %s338, %s339
      %p348 = scmp.eq.s32.totalorder %s34, 0
      %p349 = por %p347, %p348
      %p350 = scmp.ne.s32.totalorder %s338, %s339
      %p351 = scmp.eq.s32.totalorder %s35, 1
      %p352 = por %p350, %p351
      %p354 = scmp.ne.s32.totalorder %s339, %s353
      %p355 = scmp.eq.s32.totalorder %s35, 0
      %p356 = por %p354, %p355
      %s357 = ssub.s32 %s29, %s36
      %p358 = scmp.eq.s32.totalorder %s357, 0
      %s360 = sadd.s32 %s359, 1
      %s361 = scalar_select %p358, %s359, %s360
      %p364 = pneg %p358
      %p365 = scmp.eq.s32.totalorder %s29, 1
      %p366 = por %p364, %p365
      %p367 = scmp.ne.s32.totalorder %s359, %s362
      %p368 = scmp.eq.s32.totalorder %s29, 0
      %p369 = por %p367, %p368
      %p370 = scmp.ne.s32.totalorder %s359, %s362
      %p371 = scmp.eq.s32.totalorder %s34, 1
      %p372 = por %p370, %p371
      %p373 = scmp.ne.s32.totalorder %s362, %s363
      %p374 = scmp.eq.s32.totalorder %s34, 0
      %p375 = por %p373, %p374
      %p376 = scmp.ne.s32.totalorder %s362, %s363
      %p377 = scmp.eq.s32.totalorder %s35, 1
      %p378 = por %p376, %p377
      %p380 = scmp.ne.s32.totalorder %s363, %s379
      %p381 = scmp.eq.s32.totalorder %s35, 0
      %p382 = por %p380, %p381
      %p383 = scmp.le.s32.totalorder 1, %s29
      %p384 = scmp.lt.s32.totalorder %s29, 3
      %p385 = pnand %p383, %p384
      %p386 = pneg %p385
      // Predicated region
      $region9: #{tpu_custom_call.1} parent=5 // pred_check
        _
      $region10: #{tpu_custom_call.1} parent=5 // pred_check_branch
        %388 = sbr.rel (%p385) target = $region12
      $region11: #{tpu_custom_call.1} parent=5 // pred_region
        %s389 = ssub.s32 %s29, 1
        // Predicated region
        $region13: #{tpu_custom_call.1} parent=11 // pred_check
          %p390 = pneg %p76
        $region14: #{tpu_custom_call.1} parent=11 // pred_check_branch
          %392 = sbr.rel (%p390) target = $region16
        $region15: #{tpu_custom_call.1} parent=11 // pred_region
          _
        $region16: #{tpu_custom_call.1} parent=11 // pred_fallthru
          _
        // Predicated region
        $region17: #{tpu_custom_call.1} parent=11 // pred_check
          %p393 = pneg %p97
        $region18: #{tpu_custom_call.1} parent=11 // pred_check_branch
          %395 = sbr.rel (%p393) target = $region20
        $region19: #{tpu_custom_call.1} parent=11 // pred_region
          _
        $region20: #{tpu_custom_call.1} parent=11 // pred_fallthru
          _
        // Predicated region
        $region21: #{tpu_custom_call.1} parent=11 // pred_check
          %p396 = pneg %p118
        $region22: #{tpu_custom_call.1} parent=11 // pred_check_branch
          %398 = sbr.rel (%p396) target = $region24
        $region23: #{tpu_custom_call.1} parent=11 // pred_region
          %s400 = ssub.s32 12288, 12288
          %401 = vsyncadd [#allocation6], %s400
          %s402 = sshll.u32 [#allocation5], 4
          %s403 = int_to_ptr.vmem [resolvable:$true] %s402
          %408 = dma.hbm_to_vmem [thread:$0]  %s3, 12288, %s403, [#allocation6], 128, 128, 8
        $region24: #{tpu_custom_call.1} parent=11 // pred_fallthru
          _
        // Predicated region
        $region25: #{tpu_custom_call.1} parent=11 // pred_check
          %p409 = pneg %p139
        $region26: #{tpu_custom_call.1} parent=11 // pred_check_branch
          %411 = sbr.rel (%p409) target = $region28
        $region27: #{tpu_custom_call.1} parent=11 // pred_region
          _
        $region28: #{tpu_custom_call.1} parent=11 // pred_fallthru
          _
        // Predicated region
        $region29: #{tpu_custom_call.1} parent=11 // pred_check
          %p412 = pneg %p160
        $region30: #{tpu_custom_call.1} parent=11 // pred_check_branch
          %414 = sbr.rel (%p412) target = $region32
        $region31: #{tpu_custom_call.1} parent=11 // pred_region
          _
        $region32: #{tpu_custom_call.1} parent=11 // pred_fallthru
          _
        // Predicated region
        $region33: #{tpu_custom_call.1} parent=11 // pred_check
          %p415 = pneg %p181
        $region34: #{tpu_custom_call.1} parent=11 // pred_check_branch
          %417 = sbr.rel (%p415) target = $region36
        $region35: #{tpu_custom_call.1} parent=11 // pred_region
          _
        $region36: #{tpu_custom_call.1} parent=11 // pred_fallthru
          _
        // Predicated region
        $region37: #{tpu_custom_call.1} parent=11 // pred_check
          %p418 = pneg %p202
        $region38: #{tpu_custom_call.1} parent=11 // pred_check_branch
          %420 = sbr.rel (%p418) target = $region40
        $region39: #{tpu_custom_call.1} parent=11 // pred_region
          %s422 = ssub.s32 12288, 12288
          %423 = vsyncadd [#allocation6], %s422
          %s424 = sshll.u32 [#allocation7], 4
          %s425 = int_to_ptr.vmem [resolvable:$true] %s424
          %430 = dma.hbm_to_vmem [thread:$0]  %s7, 12288, %s425, [#allocation6], 128, 128, 8
        $region40: #{tpu_custom_call.1} parent=11 // pred_fallthru
          _
        // Predicated region
        $region41: #{tpu_custom_call.1} parent=11 // pred_check
          %p431 = pneg %p223
        $region42: #{tpu_custom_call.1} parent=11 // pred_check_branch
          %433 = sbr.rel (%p431) target = $region44
        $region43: #{tpu_custom_call.1} parent=11 // pred_region
          _
        $region44: #{tpu_custom_call.1} parent=11 // pred_fallthru
          _
        // Predicated region
        $region45: #{tpu_custom_call.1} parent=11 // pred_check
          %p434 = pneg %p244
        $region46: #{tpu_custom_call.1} parent=11 // pred_check_branch
          %436 = sbr.rel (%p434) target = $region48
        $region47: #{tpu_custom_call.1} parent=11 // pred_region
          %s438 = ssub.s32 4096, 4096
          %439 = vsyncadd [#allocation9], %s438
          %s440 = sshll.u32 [#allocation8], 4
          %s441 = int_to_ptr.vmem [resolvable:$true] %s440
          %446 = dma.hbm_to_vmem [thread:$0]  %s9, 4096, %s441, [#allocation9], 128, 128, 8
        $region48: #{tpu_custom_call.1} parent=11 // pred_fallthru
          _
        // Predicated region
        $region49: #{tpu_custom_call.1} parent=11 // pred_check
          %p447 = pneg %p265
        $region50: #{tpu_custom_call.1} parent=11 // pred_check_branch
          %449 = sbr.rel (%p447) target = $region52
        $region51: #{tpu_custom_call.1} parent=11 // pred_region
          _
        $region52: #{tpu_custom_call.1} parent=11 // pred_fallthru
          _
        // Predicated region
        $region53: #{tpu_custom_call.1} parent=11 // pred_check
          %p450 = pneg %p286
        $region54: #{tpu_custom_call.1} parent=11 // pred_check_branch
          %452 = sbr.rel (%p450) target = $region56
        $region55: #{tpu_custom_call.1} parent=11 // pred_region
          _
        $region56: #{tpu_custom_call.1} parent=11 // pred_fallthru
          _
        // Predicated region
        $region57: #{tpu_custom_call.1} parent=11 // pred_check
          %p453 = pneg %p307
        $region58: #{tpu_custom_call.1} parent=11 // pred_check_branch
          %455 = sbr.rel (%p453) target = $region60
        $region59: #{tpu_custom_call.1} parent=11 // pred_region
          _
        $region60: #{tpu_custom_call.1} parent=11 // pred_fallthru
          _
        // Predicated region
        $region61: #{tpu_custom_call.1} parent=11 // pred_check
          %p456 = pneg %p328
        $region62: #{tpu_custom_call.1} parent=11 // pred_check_branch
          %458 = sbr.rel (%p456) target = $region64
        $region63: #{tpu_custom_call.1} parent=11 // pred_region
          %s460 = ssub.s32 4096, 4096
          %461 = vsyncadd [#allocation9], %s460
          %s462 = sshll.u32 [#allocation10], 4
          %s463 = int_to_ptr.vmem [resolvable:$true] %s462
          %468 = dma.hbm_to_vmem [thread:$0]  %s13, 4096, %s463, [#allocation9], 128, 128, 8
        $region64: #{tpu_custom_call.1} parent=11 // pred_fallthru
          _
        // Predicated region
        $region65: #{tpu_custom_call.1} parent=11 // pred_check
          %p469 = pneg %p349
        $region66: #{tpu_custom_call.1} parent=11 // pred_check_branch
          %471 = sbr.rel (%p469) target = $region68
        $region67: #{tpu_custom_call.1} parent=11 // pred_region
          _
        $region68: #{tpu_custom_call.1} parent=11 // pred_fallthru
          _
      $region12: #{tpu_custom_call.1} parent=5 // pred_fallthru
        _
      %p472 = scmp.lt.s32.totalorder %s29, 2
      // Predicated region
      $region69: #{tpu_custom_call.1} parent=5 // pred_check
        %p473 = pneg %p472
      $region70: #{tpu_custom_call.1} parent=5 // pred_check_branch
        %475 = sbr.rel (%p473) target = $region72
      $region71: #{tpu_custom_call.1} parent=5 // pred_region
        // Predicated region
        $region73: #{tpu_custom_call.1} parent=71 // pred_check
          %p476 = pneg %p49
        $region74: #{tpu_custom_call.1} parent=71 // pred_check_branch
          %478 = sbr.rel (%p476) target = $region76
        $region75: #{tpu_custom_call.1} parent=71 // pred_region
          %s479 = sand.u32 %s39, 1
          %s480 = scalar_lea.sflag [#allocation3], %s479
          %s481 = sand.u32 %s39, 1
          %s482 = smul.addr %s481, 512
          %s483 = scalar_lea.vmem [#allocation2], %s482
          %s484 = smul.u32 32, %s29
          %s486 = ssub.s32 8192, 8192
          %487 = vsyncadd %s480, %s486
          %s488 = smul.addr %s484, 2
          %s489 = smul.addr %s488, 128
          %s490 = scalar_lea.hbm %s0, %s489
          %s491 = sshll.u32 %s483, 4
          %s492 = int_to_ptr.vmem [resolvable:$true] %s491
          %497 = dma.hbm_to_vmem [thread:$0]  %s490, 8192, %s492, %s480, 256, 256, 16
        $region76: #{tpu_custom_call.1} parent=71 // pred_fallthru
          _
      $region72: #{tpu_custom_call.1} parent=5 // pred_fallthru
        _
      %p498 = scmp.le.s32.totalorder 1, %s29
      %p499 = scmp.lt.s32.totalorder %s29, 3
      %p500 = pnand %p498, %p499
      %p501 = pneg %p500
      // Predicated region
      $region77: #{tpu_custom_call.1} parent=5 // pred_check
        _
      $region78: #{tpu_custom_call.1} parent=5 // pred_check_branch
        %503 = sbr.rel (%p500) target = $region80
      $region79: #{tpu_custom_call.1} parent=5 // pred_region
        %s504 = ssub.s32 %s29, 1
        %s505 = sand.u32 %s42, 1
        %s506 = scalar_lea.sflag [#allocation3], %s505
        %s507 = sand.u32 %s42, 1
        %s508 = smul.addr %s507, 512
        %s509 = scalar_lea.vmem [#allocation2], %s508
        // Predicated region
        $region81: #{tpu_custom_call.1} parent=79 // pred_check
          %p510 = pneg %p55
        $region82: #{tpu_custom_call.1} parent=79 // pred_check_branch
          %512 = sbr.rel (%p510) target = $region84
        $region83: #{tpu_custom_call.1} parent=79 // pred_region
          %513 = dma.done %s506, 8192
        $region84: #{tpu_custom_call.1} parent=79 // pred_fallthru
          _
        // Predicated region
        $region85: #{tpu_custom_call.1} parent=79 // pred_check
          %p514 = pneg %p118
        $region86: #{tpu_custom_call.1} parent=79 // pred_check_branch
          %516 = sbr.rel (%p514) target = $region88
        $region87: #{tpu_custom_call.1} parent=79 // pred_region
          %517 = dma.done [#allocation6], 12288
        $region88: #{tpu_custom_call.1} parent=79 // pred_fallthru
          _
        // Predicated region
        $region89: #{tpu_custom_call.1} parent=79 // pred_check
          %p518 = pneg %p202
        $region90: #{tpu_custom_call.1} parent=79 // pred_check_branch
          %520 = sbr.rel (%p518) target = $region92
        $region91: #{tpu_custom_call.1} parent=79 // pred_region
          %521 = dma.done [#allocation6], 12288
        $region92: #{tpu_custom_call.1} parent=79 // pred_fallthru
          _
        // Predicated region
        $region93: #{tpu_custom_call.1} parent=79 // pred_check
          %p522 = pneg %p244
        $region94: #{tpu_custom_call.1} parent=79 // pred_check_branch
          %524 = sbr.rel (%p522) target = $region96
        $region95: #{tpu_custom_call.1} parent=79 // pred_region
          %525 = dma.done [#allocation9], 4096
        $region96: #{tpu_custom_call.1} parent=79 // pred_fallthru
          _
        // Predicated region
        $region97: #{tpu_custom_call.1} parent=79 // pred_check
          %p526 = pneg %p328
        $region98: #{tpu_custom_call.1} parent=79 // pred_check_branch
          %528 = sbr.rel (%p526) target = $region100
        $region99: #{tpu_custom_call.1} parent=79 // pred_region
          %529 = dma.done [#allocation9], 4096
        $region100: #{tpu_custom_call.1} parent=79 // pred_fallthru
          _
        %s530 = sand.u32 %s42, 1
        %s531 = scalar_lea.sflag [#allocation3], %s530
        %s532 = sand.u32 %s42, 1
        %s533 = smul.addr %s532, 512
        %s534 = scalar_lea.vmem [#allocation2], %s533
        %p535 = pneg %p55
        %p536 = pneg %p52
        %p537 = pneg %p76
        %p538 = pneg %p73
        %p539 = pneg %p97
        %p540 = pneg %p94
        %p541 = pneg %p118
        %p542 = pneg %p115
        %p543 = pneg %p139
        %p544 = pneg %p136
        %p545 = pneg %p160
        %p546 = pneg %p157
        %p547 = pneg %p181
        %p548 = pneg %p178
        %p549 = pneg %p202
        %p550 = pneg %p199
        %p551 = pneg %p223
        %p552 = pneg %p220
        %p553 = pneg %p244
        %p554 = pneg %p241
        %p555 = pneg %p265
        %p556 = pneg %p262
        %p557 = pneg %p286
        %p558 = pneg %p283
        %p559 = pneg %p307
        %p560 = pneg %p304
        %p561 = pneg %p328
        %p562 = pneg %p325
        %p563 = pneg %p349
        %p564 = pneg %p346
        %p565 = pneg %p375
        %p566 = pneg %p372
        %s567 = sand.u32 %s362, 1
        %s568 = scalar_lea.sflag [#allocation4], %s567
        %s569 = sand.u32 %s362, 1
        %s570 = smul.addr %s569, 512
        %s571 = scalar_lea.vmem [#allocation11], %s570
        %s572 = smul.u32 32, %s34
        %s573 = smul.u32 32, %s34
        %v574 = vld [vmem:[%s509] sm:$0xff]
        %v575 = vld [vmem:[%s509 + $0x8] sm:$0xff]
        %v576 = vld [vmem:[%s509 + $0x10] sm:$0xff]
        %v577 = vld [vmem:[%s509 + $0x18] sm:$0xff]
        %v578 = vld [vmem:[%s509 + $0x20] sm:$0xff]
        %v579 = vld [vmem:[%s509 + $0x28] sm:$0xff]
        %v580 = vld [vmem:[%s509 + $0x30] sm:$0xff]
        %v581 = vld [vmem:[%s509 + $0x38] sm:$0xff]
        %v582 = vld [vmem:[%s509 + $0x40] sm:$0xff]
        %v583 = vld [vmem:[%s509 + $0x48] sm:$0xff]
        %v584 = vld [vmem:[%s509 + $0x50] sm:$0xff]
        %v585 = vld [vmem:[%s509 + $0x58] sm:$0xff]
        %v586 = vld [vmem:[%s509 + $0x60] sm:$0xff]
        %v587 = vld [vmem:[%s509 + $0x68] sm:$0xff]
        %v588 = vld [vmem:[%s509 + $0x70] sm:$0xff]
        %v589 = vld [vmem:[%s509 + $0x78] sm:$0xff]
        %v590 = vld [vmem:[%s509 + $0x80] sm:$0xff]
        %v591 = vld [vmem:[%s509 + $0x88] sm:$0xff]
        %v592 = vld [vmem:[%s509 + $0x90] sm:$0xff]
        %v593 = vld [vmem:[%s509 + $0x98] sm:$0xff]
        %v594 = vld [vmem:[%s509 + $0xa0] sm:$0xff]
        %v595 = vld [vmem:[%s509 + $0xa8] sm:$0xff]
        %v596 = vld [vmem:[%s509 + $0xb0] sm:$0xff]
        %v597 = vld [vmem:[%s509 + $0xb8] sm:$0xff]
        %v598 = vld [vmem:[%s509 + $0xc0] sm:$0xff]
        %v599 = vld [vmem:[%s509 + $0xc8] sm:$0xff]
        %v600 = vld [vmem:[%s509 + $0xd0] sm:$0xff]
        %v601 = vld [vmem:[%s509 + $0xd8] sm:$0xff]
        %v602 = vld [vmem:[%s509 + $0xe0] sm:$0xff]
        %v603 = vld [vmem:[%s509 + $0xe8] sm:$0xff]
        %v604 = vld [vmem:[%s509 + $0xf0] sm:$0xff]
        %v605 = vld [vmem:[%s509 + $0xf8] sm:$0xff]
        %v606 = vld [vmem:[%s509 + $0x100] sm:$0xff]
        %v607 = vld [vmem:[%s509 + $0x108] sm:$0xff]
        %v608 = vld [vmem:[%s509 + $0x110] sm:$0xff]
        %v609 = vld [vmem:[%s509 + $0x118] sm:$0xff]
        %v610 = vld [vmem:[%s509 + $0x120] sm:$0xff]
        %v611 = vld [vmem:[%s509 + $0x128] sm:$0xff]
        %v612 = vld [vmem:[%s509 + $0x130] sm:$0xff]
        %v613 = vld [vmem:[%s509 + $0x138] sm:$0xff]
        %v614 = vld [vmem:[%s509 + $0x140] sm:$0xff]
        %v615 = vld [vmem:[%s509 + $0x148] sm:$0xff]
        %v616 = vld [vmem:[%s509 + $0x150] sm:$0xff]
        %v617 = vld [vmem:[%s509 + $0x158] sm:$0xff]
        %v618 = vld [vmem:[%s509 + $0x160] sm:$0xff]
        %v619 = vld [vmem:[%s509 + $0x168] sm:$0xff]
        %v620 = vld [vmem:[%s509 + $0x170] sm:$0xff]
        %v621 = vld [vmem:[%s509 + $0x178] sm:$0xff]
        %v622 = vld [vmem:[%s509 + $0x180] sm:$0xff]
        %v623 = vld [vmem:[%s509 + $0x188] sm:$0xff]
        %v624 = vld [vmem:[%s509 + $0x190] sm:$0xff]
        %v625 = vld [vmem:[%s509 + $0x198] sm:$0xff]
        %v626 = vld [vmem:[%s509 + $0x1a0] sm:$0xff]
        %v627 = vld [vmem:[%s509 + $0x1a8] sm:$0xff]
        %v628 = vld [vmem:[%s509 + $0x1b0] sm:$0xff]
        %v629 = vld [vmem:[%s509 + $0x1b8] sm:$0xff]
        %v630 = vld [vmem:[%s509 + $0x1c0] sm:$0xff]
        %v631 = vld [vmem:[%s509 + $0x1c8] sm:$0xff]
        %v632 = vld [vmem:[%s509 + $0x1d0] sm:$0xff]
        %v633 = vld [vmem:[%s509 + $0x1d8] sm:$0xff]
        %v634 = vld [vmem:[%s509 + $0x1e0] sm:$0xff]
        %v635 = vld [vmem:[%s509 + $0x1e8] sm:$0xff]
        %v636 = vld [vmem:[%s509 + $0x1f0] sm:$0xff]
        %v637 = vld [vmem:[%s509 + $0x1f8] sm:$0xff]
        %v638 = vlaneseq
        %v639 = vshrl.u32 %v638, 7
        %v640 = vadd.s32 %v639, 8
        %v641 = vadd.s32 %v639, 16
        %v642 = vadd.s32 %v639, 24
        %v643 = vadd.s32 %v639, 32
        %v644 = vadd.s32 %v639, 40
        %v645 = vadd.s32 %v639, 48
        %v646 = vadd.s32 %v639, 56
        %v647 = vadd.s32 %v639, 64
        %v648 = vadd.s32 %v639, 72
        %v649 = vadd.s32 %v639, 80
        %v650 = vadd.s32 %v639, 88
        %v651 = vadd.s32 %v639, 96
        %v652 = vadd.s32 %v639, 104
        %v653 = vadd.s32 %v639, 112
        %v654 = vadd.s32 %v639, 120
        %v655 = vadd.s32 %v639, 128
        %v656 = vadd.s32 %v639, 136
        %v657 = vadd.s32 %v639, 144
        %v658 = vadd.s32 %v639, 152
        %v659 = vadd.s32 %v639, 160
        %v660 = vadd.s32 %v639, 168
        %v661 = vadd.s32 %v639, 176
        %v662 = vadd.s32 %v639, 184
        %v663 = vadd.s32 %v639, 192
        %v664 = vadd.s32 %v639, 200
        %v665 = vadd.s32 %v639, 208
        %v666 = vadd.s32 %v639, 216
        %v667 = vadd.s32 %v639, 224
        %v668 = vadd.s32 %v639, 232
        %v669 = vadd.s32 %v639, 240
        %v670 = vadd.s32 %v639, 248
        %vm671 = vcmp.lt.s32.totalorder %v639, 0
        %v672 = vsub.s32 0, %v639
        %v673 = vsel %vm671, %v672, %v639
        %v674 = vshrl.u32 %v673, 6
        %v675 = vand.u32 %v673, 63
        %v676 = vsub.s32 0, %v675
        %v677 = vsel %vm671, %v676, %v675
        %vm678 = vcmp.lt.s32.totalorder %v640, 0
        %v679 = vsub.s32 0, %v640
        %v680 = vsel %vm678, %v679, %v640
        %v681 = vshrl.u32 %v680, 6
        %v682 = vand.u32 %v680, 63
        %v683 = vsub.s32 0, %v682
        %v684 = vsel %vm678, %v683, %v682
        %vm685 = vcmp.lt.s32.totalorder %v641, 0
        %v686 = vsub.s32 0, %v641
        %v687 = vsel %vm685, %v686, %v641
        %v688 = vshrl.u32 %v687, 6
        %v689 = vand.u32 %v687, 63
        %v690 = vsub.s32 0, %v689
        %v691 = vsel %vm685, %v690, %v689
        %vm692 = vcmp.lt.s32.totalorder %v642, 0
        %v693 = vsub.s32 0, %v642
        %v694 = vsel %vm692, %v693, %v642
        %v695 = vshrl.u32 %v694, 6
        %v696 = vand.u32 %v694, 63
        %v697 = vsub.s32 0, %v696
        %v698 = vsel %vm692, %v697, %v696
        %vm699 = vcmp.lt.s32.totalorder %v643, 0
        %v700 = vsub.s32 0, %v643
        %v701 = vsel %vm699, %v700, %v643
        %v702 = vshrl.u32 %v701, 6
        %v703 = vand.u32 %v701, 63
        %v704 = vsub.s32 0, %v703
        %v705 = vsel %vm699, %v704, %v703
        %vm706 = vcmp.lt.s32.totalorder %v644, 0
        %v707 = vsub.s32 0, %v644
        %v708 = vsel %vm706, %v707, %v644
        %v709 = vshrl.u32 %v708, 6
        %v710 = vand.u32 %v708, 63
        %v711 = vsub.s32 0, %v710
        %v712 = vsel %vm706, %v711, %v710
        %vm713 = vcmp.lt.s32.totalorder %v645, 0
        %v714 = vsub.s32 0, %v645
        %v715 = vsel %vm713, %v714, %v645
        %v716 = vshrl.u32 %v715, 6
        %v717 = vand.u32 %v715, 63
        %v718 = vsub.s32 0, %v717
        %v719 = vsel %vm713, %v718, %v717
        %vm720 = vcmp.lt.s32.totalorder %v646, 0
        %v721 = vsub.s32 0, %v646
        %v722 = vsel %vm720, %v721, %v646
        %v723 = vshrl.u32 %v722, 6
        %v724 = vand.u32 %v722, 63
        %v725 = vsub.s32 0, %v724
        %v726 = vsel %vm720, %v725, %v724
        %vm727 = vcmp.lt.s32.totalorder %v647, 0
        %v728 = vsub.s32 0, %v647
        %v729 = vsel %vm727, %v728, %v647
        %v730 = vshrl.u32 %v729, 6
        %v731 = vand.u32 %v729, 63
        %v732 = vsub.s32 0, %v731
        %v733 = vsel %vm727, %v732, %v731
        %vm734 = vcmp.lt.s32.totalorder %v648, 0
        %v735 = vsub.s32 0, %v648
        %v736 = vsel %vm734, %v735, %v648
        %v737 = vshrl.u32 %v736, 6
        %v738 = vand.u32 %v736, 63
        %v739 = vsub.s32 0, %v738
        %v740 = vsel %vm734, %v739, %v738
        %vm741 = vcmp.lt.s32.totalorder %v649, 0
        %v742 = vsub.s32 0, %v649
        %v743 = vsel %vm741, %v742, %v649
        %v744 = vshrl.u32 %v743, 6
        %v745 = vand.u32 %v743, 63
        %v746 = vsub.s32 0, %v745
        %v747 = vsel %vm741, %v746, %v745
        %vm748 = vcmp.lt.s32.totalorder %v650, 0
        %v749 = vsub.s32 0, %v650
        %v750 = vsel %vm748, %v749, %v650
        %v751 = vshrl.u32 %v750, 6
        %v752 = vand.u32 %v750, 63
        %v753 = vsub.s32 0, %v752
        %v754 = vsel %vm748, %v753, %v752
        %vm755 = vcmp.lt.s32.totalorder %v651, 0
        %v756 = vsub.s32 0, %v651
        %v757 = vsel %vm755, %v756, %v651
        %v758 = vshrl.u32 %v757, 6
        %v759 = vand.u32 %v757, 63
        %v760 = vsub.s32 0, %v759
        %v761 = vsel %vm755, %v760, %v759
        %vm762 = vcmp.lt.s32.totalorder %v652, 0
        %v763 = vsub.s32 0, %v652
        %v764 = vsel %vm762, %v763, %v652
        %v765 = vshrl.u32 %v764, 6
        %v766 = vand.u32 %v764, 63
        %v767 = vsub.s32 0, %v766
        %v768 = vsel %vm762, %v767, %v766
        %vm769 = vcmp.lt.s32.totalorder %v653, 0
        %v770 = vsub.s32 0, %v653
        %v771 = vsel %vm769, %v770, %v653
        %v772 = vshrl.u32 %v771, 6
        %v773 = vand.u32 %v771, 63
        %v774 = vsub.s32 0, %v773
        %v775 = vsel %vm769, %v774, %v773
        %vm776 = vcmp.lt.s32.totalorder %v654, 0
        %v777 = vsub.s32 0, %v654
        %v778 = vsel %vm776, %v777, %v654
        %v779 = vshrl.u32 %v778, 6
        %v780 = vand.u32 %v778, 63
        %v781 = vsub.s32 0, %v780
        %v782 = vsel %vm776, %v781, %v780
        %vm783 = vcmp.lt.s32.totalorder %v655, 0
        %v784 = vsub.s32 0, %v655
        %v785 = vsel %vm783, %v784, %v655
        %v786 = vshrl.u32 %v785, 6
        %v787 = vand.u32 %v785, 63
        %v788 = vsub.s32 0, %v787
        %v789 = vsel %vm783, %v788, %v787
        %vm790 = vcmp.lt.s32.totalorder %v656, 0
        %v791 = vsub.s32 0, %v656
        %v792 = vsel %vm790, %v791, %v656
        %v793 = vshrl.u32 %v792, 6
        %v794 = vand.u32 %v792, 63
        %v795 = vsub.s32 0, %v794
        %v796 = vsel %vm790, %v795, %v794
        %vm797 = vcmp.lt.s32.totalorder %v657, 0
        %v798 = vsub.s32 0, %v657
        %v799 = vsel %vm797, %v798, %v657
        %v800 = vshrl.u32 %v799, 6
        %v801 = vand.u32 %v799, 63
        %v802 = vsub.s32 0, %v801
        %v803 = vsel %vm797, %v802, %v801
        %vm804 = vcmp.lt.s32.totalorder %v658, 0
        %v805 = vsub.s32 0, %v658
        %v806 = vsel %vm804, %v805, %v658
        %v807 = vshrl.u32 %v806, 6
        %v808 = vand.u32 %v806, 63
        %v809 = vsub.s32 0, %v808
        %v810 = vsel %vm804, %v809, %v808
        %vm811 = vcmp.lt.s32.totalorder %v659, 0
        %v812 = vsub.s32 0, %v659
        %v813 = vsel %vm811, %v812, %v659
        %v814 = vshrl.u32 %v813, 6
        %v815 = vand.u32 %v813, 63
        %v816 = vsub.s32 0, %v815
        %v817 = vsel %vm811, %v816, %v815
        %vm818 = vcmp.lt.s32.totalorder %v660, 0
        %v819 = vsub.s32 0, %v660
        %v820 = vsel %vm818, %v819, %v660
        %v821 = vshrl.u32 %v820, 6
        %v822 = vand.u32 %v820, 63
        %v823 = vsub.s32 0, %v822
        %v824 = vsel %vm818, %v823, %v822
        %vm825 = vcmp.lt.s32.totalorder %v661, 0
        %v826 = vsub.s32 0, %v661
        %v827 = vsel %vm825, %v826, %v661
        %v828 = vshrl.u32 %v827, 6
        %v829 = vand.u32 %v827, 63
        %v830 = vsub.s32 0, %v829
        %v831 = vsel %vm825, %v830, %v829
        %vm832 = vcmp.lt.s32.totalorder %v662, 0
        %v833 = vsub.s32 0, %v662
        %v834 = vsel %vm832, %v833, %v662
        %v835 = vshrl.u32 %v834, 6
        %v836 = vand.u32 %v834, 63
        %v837 = vsub.s32 0, %v836
        %v838 = vsel %vm832, %v837, %v836
        %vm839 = vcmp.lt.s32.totalorder %v663, 0
        %v840 = vsub.s32 0, %v663
        %v841 = vsel %vm839, %v840, %v663
        %v842 = vshrl.u32 %v841, 6
        %v843 = vand.u32 %v841, 63
        %v844 = vsub.s32 0, %v843
        %v845 = vsel %vm839, %v844, %v843
        %vm846 = vcmp.lt.s32.totalorder %v664, 0
        %v847 = vsub.s32 0, %v664
        %v848 = vsel %vm846, %v847, %v664
        %v849 = vshrl.u32 %v848, 6
        %v850 = vand.u32 %v848, 63
        %v851 = vsub.s32 0, %v850
        %v852 = vsel %vm846, %v851, %v850
        %vm853 = vcmp.lt.s32.totalorder %v665, 0
        %v854 = vsub.s32 0, %v665
        %v855 = vsel %vm853, %v854, %v665
        %v856 = vshrl.u32 %v855, 6
        %v857 = vand.u32 %v855, 63
        %v858 = vsub.s32 0, %v857
        %v859 = vsel %vm853, %v858, %v857
        %vm860 = vcmp.lt.s32.totalorder %v666, 0
        %v861 = vsub.s32 0, %v666
        %v862 = vsel %vm860, %v861, %v666
        %v863 = vshrl.u32 %v862, 6
        %v864 = vand.u32 %v862, 63
        %v865 = vsub.s32 0, %v864
        %v866 = vsel %vm860, %v865, %v864
        %vm867 = vcmp.lt.s32.totalorder %v667, 0
        %v868 = vsub.s32 0, %v667
        %v869 = vsel %vm867, %v868, %v667
        %v870 = vshrl.u32 %v869, 6
        %v871 = vand.u32 %v869, 63
        %v872 = vsub.s32 0, %v871
        %v873 = vsel %vm867, %v872, %v871
        %vm874 = vcmp.lt.s32.totalorder %v668, 0
        %v875 = vsub.s32 0, %v668
        %v876 = vsel %vm874, %v875, %v668
        %v877 = vshrl.u32 %v876, 6
        %v878 = vand.u32 %v876, 63
        %v879 = vsub.s32 0, %v878
        %v880 = vsel %vm874, %v879, %v878
        %vm881 = vcmp.lt.s32.totalorder %v669, 0
        %v882 = vsub.s32 0, %v669
        %v883 = vsel %vm881, %v882, %v669
        %v884 = vshrl.u32 %v883, 6
        %v885 = vand.u32 %v883, 63
        %v886 = vsub.s32 0, %v885
        %v887 = vsel %vm881, %v886, %v885
        %vm888 = vcmp.lt.s32.totalorder %v670, 0
        %v889 = vsub.s32 0, %v670
        %v890 = vsel %vm888, %v889, %v670
        %v891 = vshrl.u32 %v890, 6
        %v892 = vand.u32 %v890, 63
        %v893 = vsub.s32 0, %v892
        %v894 = vsel %vm888, %v893, %v892
        %vm895 = vcmp.ne.s32.totalorder %v677, 0
        %vm896 = vcmp.ne.s32.totalorder %v684, 0
        %vm897 = vcmp.ne.s32.totalorder %v691, 0
        %vm898 = vcmp.ne.s32.totalorder %v698, 0
        %vm899 = vcmp.ne.s32.totalorder %v705, 0
        %vm900 = vcmp.ne.s32.totalorder %v712, 0
        %vm901 = vcmp.ne.s32.totalorder %v719, 0
        %vm902 = vcmp.ne.s32.totalorder %v726, 0
        %vm903 = vcmp.ne.s32.totalorder %v733, 0
        %vm904 = vcmp.ne.s32.totalorder %v740, 0
        %vm905 = vcmp.ne.s32.totalorder %v747, 0
        %vm906 = vcmp.ne.s32.totalorder %v754, 0
        %vm907 = vcmp.ne.s32.totalorder %v761, 0
        %vm908 = vcmp.ne.s32.totalorder %v768, 0
        %vm909 = vcmp.ne.s32.totalorder %v775, 0
        %vm910 = vcmp.ne.s32.totalorder %v782, 0
        %vm911 = vcmp.ne.s32.totalorder %v789, 0
        %vm912 = vcmp.ne.s32.totalorder %v796, 0
        %vm913 = vcmp.ne.s32.totalorder %v803, 0
        %vm914 = vcmp.ne.s32.totalorder %v810, 0
        %vm915 = vcmp.ne.s32.totalorder %v817, 0
        %vm916 = vcmp.ne.s32.totalorder %v824, 0
        %vm917 = vcmp.ne.s32.totalorder %v831, 0
        %vm918 = vcmp.ne.s32.totalorder %v838, 0
        %vm919 = vcmp.ne.s32.totalorder %v845, 0
        %vm920 = vcmp.ne.s32.totalorder %v852, 0
        %vm921 = vcmp.ne.s32.totalorder %v859, 0
        %vm922 = vcmp.ne.s32.totalorder %v866, 0
        %vm923 = vcmp.ne.s32.totalorder %v873, 0
        %vm924 = vcmp.ne.s32.totalorder %v880, 0
        %vm925 = vcmp.ne.s32.totalorder %v887, 0
        %vm926 = vcmp.ne.s32.totalorder %v894, 0
        %vm927 = vcmp.lt.s32.totalorder %v677, 0
        %vm928 = vcmp.lt.s32.totalorder %v684, 0
        %vm929 = vcmp.lt.s32.totalorder %v691, 0
        %vm930 = vcmp.lt.s32.totalorder %v698, 0
        %vm931 = vcmp.lt.s32.totalorder %v705, 0
        %vm932 = vcmp.lt.s32.totalorder %v712, 0
        %vm933 = vcmp.lt.s32.totalorder %v719, 0
        %vm934 = vcmp.lt.s32.totalorder %v726, 0
        %vm935 = vcmp.lt.s32.totalorder %v733, 0
        %vm936 = vcmp.lt.s32.totalorder %v740, 0
        %vm937 = vcmp.lt.s32.totalorder %v747, 0
        %vm938 = vcmp.lt.s32.totalorder %v754, 0
        %vm939 = vcmp.lt.s32.totalorder %v761, 0
        %vm940 = vcmp.lt.s32.totalorder %v768, 0
        %vm941 = vcmp.lt.s32.totalorder %v775, 0
        %vm942 = vcmp.lt.s32.totalorder %v782, 0
        %vm943 = vcmp.lt.s32.totalorder %v789, 0
        %vm944 = vcmp.lt.s32.totalorder %v796, 0
        %vm945 = vcmp.lt.s32.totalorder %v803, 0
        %vm946 = vcmp.lt.s32.totalorder %v810, 0
        %vm947 = vcmp.lt.s32.totalorder %v817, 0
        %vm948 = vcmp.lt.s32.totalorder %v824, 0
        %vm949 = vcmp.lt.s32.totalorder %v831, 0
        %vm950 = vcmp.lt.s32.totalorder %v838, 0
        %vm951 = vcmp.lt.s32.totalorder %v845, 0
        %vm952 = vcmp.lt.s32.totalorder %v852, 0
        %vm953 = vcmp.lt.s32.totalorder %v859, 0
        %vm954 = vcmp.lt.s32.totalorder %v866, 0
        %vm955 = vcmp.lt.s32.totalorder %v873, 0
        %vm956 = vcmp.lt.s32.totalorder %v880, 0
        %vm957 = vcmp.lt.s32.totalorder %v887, 0
        %vm958 = vcmp.lt.s32.totalorder %v894, 0
        %vm959 = vmand %vm927, %vm895
        %vm960 = vmand %vm928, %vm896
        %vm961 = vmand %vm929, %vm897
        %vm962 = vmand %vm930, %vm898
        %vm963 = vmand %vm931, %vm899
        %vm964 = vmand %vm932, %vm900
        %vm965 = vmand %vm933, %vm901
        %vm966 = vmand %vm934, %vm902
        %vm967 = vmand %vm935, %vm903
        %vm968 = vmand %vm936, %vm904
        %vm969 = vmand %vm937, %vm905
        %vm970 = vmand %vm938, %vm906
        %vm971 = vmand %vm939, %vm907
        %vm972 = vmand %vm940, %vm908
        %vm973 = vmand %vm941, %vm909
        %vm974 = vmand %vm942, %vm910
        %vm975 = vmand %vm943, %vm911
        %vm976 = vmand %vm944, %vm912
        %vm977 = vmand %vm945, %vm913
        %vm978 = vmand %vm946, %vm914
        %vm979 = vmand %vm947, %vm915
        %vm980 = vmand %vm948, %vm916
        %vm981 = vmand %vm949, %vm917
        %vm982 = vmand %vm950, %vm918
        %vm983 = vmand %vm951, %vm919
        %vm984 = vmand %vm952, %vm920
        %vm985 = vmand %vm953, %vm921
        %vm986 = vmand %vm954, %vm922
        %vm987 = vmand %vm955, %vm923
        %vm988 = vmand %vm956, %vm924
        %vm989 = vmand %vm957, %vm925
        %vm990 = vmand %vm958, %vm926
        %v991 = vadd.s32 %v677, 64
        %v992 = vadd.s32 %v684, 64
        %v993 = vadd.s32 %v691, 64
        %v994 = vadd.s32 %v698, 64
        %v995 = vadd.s32 %v705, 64
        %v996 = vadd.s32 %v712, 64
        %v997 = vadd.s32 %v719, 64
        %v998 = vadd.s32 %v726, 64
        %v999 = vadd.s32 %v733, 64
        %v1000 = vadd.s32 %v740, 64
        %v1001 = vadd.s32 %v747, 64
        %v1002 = vadd.s32 %v754, 64
        %v1003 = vadd.s32 %v761, 64
        %v1004 = vadd.s32 %v768, 64
        %v1005 = vadd.s32 %v775, 64
        %v1006 = vadd.s32 %v782, 64
        %v1007 = vadd.s32 %v789, 64
        %v1008 = vadd.s32 %v796, 64
        %v1009 = vadd.s32 %v803, 64
        %v1010 = vadd.s32 %v810, 64
        %v1011 = vadd.s32 %v817, 64
        %v1012 = vadd.s32 %v824, 64
        %v1013 = vadd.s32 %v831, 64
        %v1014 = vadd.s32 %v838, 64
        %v1015 = vadd.s32 %v845, 64
        %v1016 = vadd.s32 %v852, 64
        %v1017 = vadd.s32 %v859, 64
        %v1018 = vadd.s32 %v866, 64
        %v1019 = vadd.s32 %v873, 64
        %v1020 = vadd.s32 %v880, 64
        %v1021 = vadd.s32 %v887, 64
        %v1022 = vadd.s32 %v894, 64
        %v1023 = vsel %vm959, %v991, %v677
        %v1024 = vsel %vm960, %v992, %v684
        %v1025 = vsel %vm961, %v993, %v691
        %v1026 = vsel %vm962, %v994, %v698
        %v1027 = vsel %vm963, %v995, %v705
        %v1028 = vsel %vm964, %v996, %v712
        %v1029 = vsel %vm965, %v997, %v719
        %v1030 = vsel %vm966, %v998, %v726
        %v1031 = vsel %vm967, %v999, %v733
        %v1032 = vsel %vm968, %v1000, %v740
        %v1033 = vsel %vm969, %v1001, %v747
        %v1034 = vsel %vm970, %v1002, %v754
        %v1035 = vsel %vm971, %v1003, %v761
        %v1036 = vsel %vm972, %v1004, %v768
        %v1037 = vsel %vm973, %v1005, %v775
        %v1038 = vsel %vm974, %v1006, %v782
        %v1039 = vsel %vm975, %v1007, %v789
        %v1040 = vsel %vm976, %v1008, %v796
        %v1041 = vsel %vm977, %v1009, %v803
        %v1042 = vsel %vm978, %v1010, %v810
        %v1043 = vsel %vm979, %v1011, %v817
        %v1044 = vsel %vm980, %v1012, %v824
        %v1045 = vsel %vm981, %v1013, %v831
        %v1046 = vsel %vm982, %v1014, %v838
        %v1047 = vsel %vm983, %v1015, %v845
        %v1048 = vsel %vm984, %v1016, %v852
        %v1049 = vsel %vm985, %v1017, %v859
        %v1050 = vsel %vm986, %v1018, %v866
        %v1051 = vsel %vm987, %v1019, %v873
        %v1052 = vsel %vm988, %v1020, %v880
        %v1053 = vsel %vm989, %v1021, %v887
        %v1054 = vsel %vm990, %v1022, %v894
        %vm1055 = vcmp.eq.s32.totalorder %v1023, 0
        %vm1056 = vcmp.eq.s32.totalorder %v1024, 0
        %vm1057 = vcmp.eq.s32.totalorder %v1025, 0
        %vm1058 = vcmp.eq.s32.totalorder %v1026, 0
        %vm1059 = vcmp.eq.s32.totalorder %v1027, 0
        %vm1060 = vcmp.eq.s32.totalorder %v1028, 0
        %vm1061 = vcmp.eq.s32.totalorder %v1029, 0
        %vm1062 = vcmp.eq.s32.totalorder %v1030, 0
        %vm1063 = vcmp.eq.s32.totalorder %v1031, 0
        %vm1064 = vcmp.eq.s32.totalorder %v1032, 0
        %vm1065 = vcmp.eq.s32.totalorder %v1033, 0
        %vm1066 = vcmp.eq.s32.totalorder %v1034, 0
        %vm1067 = vcmp.eq.s32.totalorder %v1035, 0
        %vm1068 = vcmp.eq.s32.totalorder %v1036, 0
        %vm1069 = vcmp.eq.s32.totalorder %v1037, 0
        %vm1070 = vcmp.eq.s32.totalorder %v1038, 0
        %vm1071 = vcmp.eq.s32.totalorder %v1039, 0
        %vm1072 = vcmp.eq.s32.totalorder %v1040, 0
        %vm1073 = vcmp.eq.s32.totalorder %v1041, 0
        %vm1074 = vcmp.eq.s32.totalorder %v1042, 0
        %vm1075 = vcmp.eq.s32.totalorder %v1043, 0
        %vm1076 = vcmp.eq.s32.totalorder %v1044, 0
        %vm1077 = vcmp.eq.s32.totalorder %v1045, 0
        %vm1078 = vcmp.eq.s32.totalorder %v1046, 0
        %vm1079 = vcmp.eq.s32.totalorder %v1047, 0
        %vm1080 = vcmp.eq.s32.totalorder %v1048, 0
        %vm1081 = vcmp.eq.s32.totalorder %v1049, 0
        %vm1082 = vcmp.eq.s32.totalorder %v1050, 0
        %vm1083 = vcmp.eq.s32.totalorder %v1051, 0
        %vm1084 = vcmp.eq.s32.totalorder %v1052, 0
        %vm1085 = vcmp.eq.s32.totalorder %v1053, 0
        %vm1086 = vcmp.eq.s32.totalorder %v1054, 0
        %vm1087 = vcmp.eq.s32.totalorder %v1023, 63
        %vm1088 = vcmp.eq.s32.totalorder %v1024, 63
        %vm1089 = vcmp.eq.s32.totalorder %v1025, 63
        %vm1090 = vcmp.eq.s32.totalorder %v1026, 63
        %vm1091 = vcmp.eq.s32.totalorder %v1027, 63
        %vm1092 = vcmp.eq.s32.totalorder %v1028, 63
        %vm1093 = vcmp.eq.s32.totalorder %v1029, 63
        %vm1094 = vcmp.eq.s32.totalorder %v1030, 63
        %vm1095 = vcmp.eq.s32.totalorder %v1031, 63
        %vm1096 = vcmp.eq.s32.totalorder %v1032, 63
        %vm1097 = vcmp.eq.s32.totalorder %v1033, 63
        %vm1098 = vcmp.eq.s32.totalorder %v1034, 63
        %vm1099 = vcmp.eq.s32.totalorder %v1035, 63
        %vm1100 = vcmp.eq.s32.totalorder %v1036, 63
        %vm1101 = vcmp.eq.s32.totalorder %v1037, 63
        %vm1102 = vcmp.eq.s32.totalorder %v1038, 63
        %vm1103 = vcmp.eq.s32.totalorder %v1039, 63
        %vm1104 = vcmp.eq.s32.totalorder %v1040, 63
        %vm1105 = vcmp.eq.s32.totalorder %v1041, 63
        %vm1106 = vcmp.eq.s32.totalorder %v1042, 63
        %vm1107 = vcmp.eq.s32.totalorder %v1043, 63
        %vm1108 = vcmp.eq.s32.totalorder %v1044, 63
        %vm1109 = vcmp.eq.s32.totalorder %v1045, 63
        %vm1110 = vcmp.eq.s32.totalorder %v1046, 63
        %vm1111 = vcmp.eq.s32.totalorder %v1047, 63
        %vm1112 = vcmp.eq.s32.totalorder %v1048, 63
        %vm1113 = vcmp.eq.s32.totalorder %v1049, 63
        %vm1114 = vcmp.eq.s32.totalorder %v1050, 63
        %vm1115 = vcmp.eq.s32.totalorder %v1051, 63
        %vm1116 = vcmp.eq.s32.totalorder %v1052, 63
        %vm1117 = vcmp.eq.s32.totalorder %v1053, 63
        %vm1118 = vcmp.eq.s32.totalorder %v1054, 63
        %v1119 = vld [vmem:[%s1] sm:$0x3]
        %v1120 = vld [vmem:[%s2] sm:$0x3]
        %v1121 = vadd.f32 %v574, %v575
        %1122 = vadd.xlane.f32.xlu0 %v1121
        %v1123 = vpop.xlane.xlu0 %1122
        %v1124 = vadd.f32 %v576, %v577
        %1125 = vadd.xlane.f32.xlu0 %v1124
        %v1126 = vpop.xlane.xlu0 %1125
        %v1127 = vadd.f32 %v578, %v579
        %1128 = vadd.xlane.f32.xlu0 %v1127
        %v1129 = vpop.xlane.xlu0 %1128
        %v1130 = vadd.f32 %v580, %v581
        %1131 = vadd.xlane.f32.xlu0 %v1130
        %v1132 = vpop.xlane.xlu0 %1131
        %v1133 = vadd.f32 %v582, %v583
        %1134 = vadd.xlane.f32.xlu0 %v1133
        %v1135 = vpop.xlane.xlu0 %1134
        %v1136 = vadd.f32 %v584, %v585
        %1137 = vadd.xlane.f32.xlu0 %v1136
        %v1138 = vpop.xlane.xlu0 %1137
        %v1139 = vadd.f32 %v586, %v587
        %1140 = vadd.xlane.f32.xlu0 %v1139
        %v1141 = vpop.xlane.xlu0 %1140
        %v1142 = vadd.f32 %v588, %v589
        %1143 = vadd.xlane.f32.xlu0 %v1142
        %v1144 = vpop.xlane.xlu0 %1143
        %v1145 = vadd.f32 %v590, %v591
        %1146 = vadd.xlane.f32.xlu0 %v1145
        %v1147 = vpop.xlane.xlu0 %1146
        %v1148 = vadd.f32 %v592, %v593
        %1149 = vadd.xlane.f32.xlu0 %v1148
        %v1150 = vpop.xlane.xlu0 %1149
        %v1151 = vadd.f32 %v594, %v595
        %1152 = vadd.xlane.f32.xlu0 %v1151
        %v1153 = vpop.xlane.xlu0 %1152
        %v1154 = vadd.f32 %v596, %v597
        %1155 = vadd.xlane.f32.xlu0 %v1154
        %v1156 = vpop.xlane.xlu0 %1155
        %v1157 = vadd.f32 %v598, %v599
        %1158 = vadd.xlane.f32.xlu0 %v1157
        %v1159 = vpop.xlane.xlu0 %1158
        %v1160 = vadd.f32 %v600, %v601
        %1161 = vadd.xlane.f32.xlu0 %v1160
        %v1162 = vpop.xlane.xlu0 %1161
        %v1163 = vadd.f32 %v602, %v603
        %1164 = vadd.xlane.f32.xlu0 %v1163
        %v1165 = vpop.xlane.xlu0 %1164
        %v1166 = vadd.f32 %v604, %v605
        %1167 = vadd.xlane.f32.xlu0 %v1166
        %v1168 = vpop.xlane.xlu0 %1167
        %v1169 = vadd.f32 %v606, %v607
        %1170 = vadd.xlane.f32.xlu0 %v1169
        %v1171 = vpop.xlane.xlu0 %1170
        %v1172 = vadd.f32 %v608, %v609
        %1173 = vadd.xlane.f32.xlu0 %v1172
        %v1174 = vpop.xlane.xlu0 %1173
        %v1175 = vadd.f32 %v610, %v611
        %1176 = vadd.xlane.f32.xlu0 %v1175
        %v1177 = vpop.xlane.xlu0 %1176
        %v1178 = vadd.f32 %v612, %v613
        %1179 = vadd.xlane.f32.xlu0 %v1178
        %v1180 = vpop.xlane.xlu0 %1179
        %v1181 = vadd.f32 %v614, %v615
        %1182 = vadd.xlane.f32.xlu0 %v1181
        %v1183 = vpop.xlane.xlu0 %1182
        %v1184 = vadd.f32 %v616, %v617
        %1185 = vadd.xlane.f32.xlu0 %v1184
        %v1186 = vpop.xlane.xlu0 %1185
        %v1187 = vadd.f32 %v618, %v619
        %1188 = vadd.xlane.f32.xlu0 %v1187
        %v1189 = vpop.xlane.xlu0 %1188
        %v1190 = vadd.f32 %v620, %v621
        %1191 = vadd.xlane.f32.xlu0 %v1190
        %v1192 = vpop.xlane.xlu0 %1191
        %v1193 = vadd.f32 %v622, %v623
        %1194 = vadd.xlane.f32.xlu0 %v1193
        %v1195 = vpop.xlane.xlu0 %1194
        %v1196 = vadd.f32 %v624, %v625
        %1197 = vadd.xlane.f32.xlu0 %v1196
        %v1198 = vpop.xlane.xlu0 %1197
        %v1199 = vadd.f32 %v626, %v627
        %1200 = vadd.xlane.f32.xlu0 %v1199
        %v1201 = vpop.xlane.xlu0 %1200
        %v1202 = vadd.f32 %v628, %v629
        %1203 = vadd.xlane.f32.xlu0 %v1202
        %v1204 = vpop.xlane.xlu0 %1203
        %v1205 = vadd.f32 %v630, %v631
        %1206 = vadd.xlane.f32.xlu0 %v1205
        %v1207 = vpop.xlane.xlu0 %1206
        %v1208 = vadd.f32 %v632, %v633
        %1209 = vadd.xlane.f32.xlu0 %v1208
        %v1210 = vpop.xlane.xlu0 %1209
        %v1211 = vadd.f32 %v634, %v635
        %1212 = vadd.xlane.f32.xlu0 %v1211
        %v1213 = vpop.xlane.xlu0 %1212
        %v1214 = vadd.f32 %v636, %v637
        %1215 = vadd.xlane.f32.xlu0 %v1214
        %v1216 = vpop.xlane.xlu0 %1215
        %v1217 = vrcp.pop 256.0
        %v1218 = vmul.f32 %v1123, %v1217
        %v1219 = vmul.f32 %v1126, %v1217
        %v1220 = vmul.f32 %v1129, %v1217
        %v1221 = vmul.f32 %v1132, %v1217
        %v1222 = vmul.f32 %v1135, %v1217
        %v1223 = vmul.f32 %v1138, %v1217
        %v1224 = vmul.f32 %v1141, %v1217
        %v1225 = vmul.f32 %v1144, %v1217
        %v1226 = vmul.f32 %v1147, %v1217
        %v1227 = vmul.f32 %v1150, %v1217
        %v1228 = vmul.f32 %v1153, %v1217
        %v1229 = vmul.f32 %v1156, %v1217
        %v1230 = vmul.f32 %v1159, %v1217
        %v1231 = vmul.f32 %v1162, %v1217
        %v1232 = vmul.f32 %v1165, %v1217
        %v1233 = vmul.f32 %v1168, %v1217
        %v1234 = vmul.f32 %v1171, %v1217
        %v1235 = vmul.f32 %v1174, %v1217
        %v1236 = vmul.f32 %v1177, %v1217
        %v1237 = vmul.f32 %v1180, %v1217
        %v1238 = vmul.f32 %v1183, %v1217
        %v1239 = vmul.f32 %v1186, %v1217
        %v1240 = vmul.f32 %v1189, %v1217
        %v1241 = vmul.f32 %v1192, %v1217
        %v1242 = vmul.f32 %v1195, %v1217
        %v1243 = vmul.f32 %v1198, %v1217
        %v1244 = vmul.f32 %v1201, %v1217
        %v1245 = vmul.f32 %v1204, %v1217
        %v1246 = vmul.f32 %v1207, %v1217
        %v1247 = vmul.f32 %v1210, %v1217
        %v1248 = vmul.f32 %v1213, %v1217
        %v1249 = vmul.f32 %v1216, %v1217
        %v1250 = vsub.f32 %v574, %v1218
        %v1251 = vsub.f32 %v575, %v1218
        %v1252 = vsub.f32 %v576, %v1219
        %v1253 = vsub.f32 %v577, %v1219
        %v1254 = vsub.f32 %v578, %v1220
        %v1255 = vsub.f32 %v579, %v1220
        %v1256 = vsub.f32 %v580, %v1221
        %v1257 = vsub.f32 %v581, %v1221
        %v1258 = vsub.f32 %v582, %v1222
        %v1259 = vsub.f32 %v583, %v1222
        %v1260 = vsub.f32 %v584, %v1223
        %v1261 = vsub.f32 %v585, %v1223
        %v1262 = vsub.f32 %v586, %v1224
        %v1263 = vsub.f32 %v587, %v1224
        %v1264 = vsub.f32 %v588, %v1225
        %v1265 = vsub.f32 %v589, %v1225
        %v1266 = vsub.f32 %v590, %v1226
        %v1267 = vsub.f32 %v591, %v1226
        %v1268 = vsub.f32 %v592, %v1227
        %v1269 = vsub.f32 %v593, %v1227
        %v1270 = vsub.f32 %v594, %v1228
        %v1271 = vsub.f32 %v595, %v1228
        %v1272 = vsub.f32 %v596, %v1229
        %v1273 = vsub.f32 %v597, %v1229
        %v1274 = vsub.f32 %v598, %v1230
        %v1275 = vsub.f32 %v599, %v1230
        %v1276 = vsub.f32 %v600, %v1231
        %v1277 = vsub.f32 %v601, %v1231
        %v1278 = vsub.f32 %v602, %v1232
        %v1279 = vsub.f32 %v603, %v1232
        %v1280 = vsub.f32 %v604, %v1233
        %v1281 = vsub.f32 %v605, %v1233
        %v1282 = vsub.f32 %v606, %v1234
        %v1283 = vsub.f32 %v607, %v1234
        %v1284 = vsub.f32 %v608, %v1235
        %v1285 = vsub.f32 %v609, %v1235
        %v1286 = vsub.f32 %v610, %v1236
        %v1287 = vsub.f32 %v611, %v1236
        %v1288 = vsub.f32 %v612, %v1237
        %v1289 = vsub.f32 %v613, %v1237
        %v1290 = vsub.f32 %v614, %v1238
        %v1291 = vsub.f32 %v615, %v1238
        %v1292 = vsub.f32 %v616, %v1239
        %v1293 = vsub.f32 %v617, %v1239
        %v1294 = vsub.f32 %v618, %v1240
        %v1295 = vsub.f32 %v619, %v1240
        %v1296 = vsub.f32 %v620, %v1241
        %v1297 = vsub.f32 %v621, %v1241
        %v1298 = vsub.f32 %v622, %v1242
        %v1299 = vsub.f32 %v623, %v1242
        %v1300 = vsub.f32 %v624, %v1243
        %v1301 = vsub.f32 %v625, %v1243
        %v1302 = vsub.f32 %v626, %v1244
        %v1303 = vsub.f32 %v627, %v1244
        %v1304 = vsub.f32 %v628, %v1245
        %v1305 = vsub.f32 %v629, %v1245
        %v1306 = vsub.f32 %v630, %v1246
        %v1307 = vsub.f32 %v631, %v1246
        %v1308 = vsub.f32 %v632, %v1247
        %v1309 = vsub.f32 %v633, %v1247
        %v1310 = vsub.f32 %v634, %v1248
        %v1311 = vsub.f32 %v635, %v1248
        %v1312 = vsub.f32 %v636, %v1249
        %v1313 = vsub.f32 %v637, %v1249
        %v1314 = vmul.f32 %v1250, %v1250
        %v1315 = vmul.f32 %v1251, %v1251
        %v1316 = vmul.f32 %v1252, %v1252
        %v1317 = vmul.f32 %v1253, %v1253
        %v1318 = vmul.f32 %v1254, %v1254
        %v1319 = vmul.f32 %v1255, %v1255
        %v1320 = vmul.f32 %v1256, %v1256
        %v1321 = vmul.f32 %v1257, %v1257
        %v1322 = vmul.f32 %v1258, %v1258
        %v1323 = vmul.f32 %v1259, %v1259
        %v1324 = vmul.f32 %v1260, %v1260
        %v1325 = vmul.f32 %v1261, %v1261
        %v1326 = vmul.f32 %v1262, %v1262
        %v1327 = vmul.f32 %v1263, %v1263
        %v1328 = vmul.f32 %v1264, %v1264
        %v1329 = vmul.f32 %v1265, %v1265
        %v1330 = vmul.f32 %v1266, %v1266
        %v1331 = vmul.f32 %v1267, %v1267
        %v1332 = vmul.f32 %v1268, %v1268
        %v1333 = vmul.f32 %v1269, %v1269
        %v1334 = vmul.f32 %v1270, %v1270
        %v1335 = vmul.f32 %v1271, %v1271
        %v1336 = vmul.f32 %v1272, %v1272
        %v1337 = vmul.f32 %v1273, %v1273
        %v1338 = vmul.f32 %v1274, %v1274
        %v1339 = vmul.f32 %v1275, %v1275
        %v1340 = vmul.f32 %v1276, %v1276
        %v1341 = vmul.f32 %v1277, %v1277
        %v1342 = vmul.f32 %v1278, %v1278
        %v1343 = vmul.f32 %v1279, %v1279
        %v1344 = vmul.f32 %v1280, %v1280
        %v1345 = vmul.f32 %v1281, %v1281
        %v1346 = vmul.f32 %v1282, %v1282
        %v1347 = vmul.f32 %v1283, %v1283
        %v1348 = vmul.f32 %v1284, %v1284
        %v1349 = vmul.f32 %v1285, %v1285
        %v1350 = vmul.f32 %v1286, %v1286
        %v1351 = vmul.f32 %v1287, %v1287
        %v1352 = vmul.f32 %v1288, %v1288
        %v1353 = vmul.f32 %v1289, %v1289
        %v1354 = vmul.f32 %v1290, %v1290
        %v1355 = vmul.f32 %v1291, %v1291
        %v1356 = vmul.f32 %v1292, %v1292
        %v1357 = vmul.f32 %v1293, %v1293
        %v1358 = vmul.f32 %v1294, %v1294
        %v1359 = vmul.f32 %v1295, %v1295
        %v1360 = vmul.f32 %v1296, %v1296
        %v1361 = vmul.f32 %v1297, %v1297
        %v1362 = vmul.f32 %v1298, %v1298
        %v1363 = vmul.f32 %v1299, %v1299
        %v1364 = vmul.f32 %v1300, %v1300
        %v1365 = vmul.f32 %v1301, %v1301
        %v1366 = vmul.f32 %v1302, %v1302
        %v1367 = vmul.f32 %v1303, %v1303
        %v1368 = vmul.f32 %v1304, %v1304
        %v1369 = vmul.f32 %v1305, %v1305
        %v1370 = vmul.f32 %v1306, %v1306
        %v1371 = vmul.f32 %v1307, %v1307
        %v1372 = vmul.f32 %v1308, %v1308
        %v1373 = vmul.f32 %v1309, %v1309
        %v1374 = vmul.f32 %v1310, %v1310
        %v1375 = vmul.f32 %v1311, %v1311
        %v1376 = vmul.f32 %v1312, %v1312
        %v1377 = vmul.f32 %v1313, %v1313
        %v1378 = vadd.f32 %v1314, %v1315
        %1379 = vadd.xlane.f32.xlu0 %v1378
        %v1380 = vpop.xlane.xlu0 %1379
        %v1381 = vadd.f32 %v1316, %v1317
        %1382 = vadd.xlane.f32.xlu0 %v1381
        %v1383 = vpop.xlane.xlu0 %1382
        %v1384 = vadd.f32 %v1318, %v1319
        %1385 = vadd.xlane.f32.xlu0 %v1384
        %v1386 = vpop.xlane.xlu0 %1385
        %v1387 = vadd.f32 %v1320, %v1321
        %1388 = vadd.xlane.f32.xlu0 %v1387
        %v1389 = vpop.xlane.xlu0 %1388
        %v1390 = vadd.f32 %v1322, %v1323
        %1391 = vadd.xlane.f32.xlu0 %v1390
        %v1392 = vpop.xlane.xlu0 %1391
        %v1393 = vadd.f32 %v1324, %v1325
        %1394 = vadd.xlane.f32.xlu0 %v1393
        %v1395 = vpop.xlane.xlu0 %1394
        %v1396 = vadd.f32 %v1326, %v1327
        %1397 = vadd.xlane.f32.xlu0 %v1396
        %v1398 = vpop.xlane.xlu0 %1397
        %v1399 = vadd.f32 %v1328, %v1329
        %1400 = vadd.xlane.f32.xlu0 %v1399
        %v1401 = vpop.xlane.xlu0 %1400
        %v1402 = vadd.f32 %v1330, %v1331
        %1403 = vadd.xlane.f32.xlu0 %v1402
        %v1404 = vpop.xlane.xlu0 %1403
        %v1405 = vadd.f32 %v1332, %v1333
        %1406 = vadd.xlane.f32.xlu0 %v1405
        %v1407 = vpop.xlane.xlu0 %1406
        %v1408 = vadd.f32 %v1334, %v1335
        %1409 = vadd.xlane.f32.xlu0 %v1408
        %v1410 = vpop.xlane.xlu0 %1409
        %v1411 = vadd.f32 %v1336, %v1337
        %1412 = vadd.xlane.f32.xlu0 %v1411
        %v1413 = vpop.xlane.xlu0 %1412
        %v1414 = vadd.f32 %v1338, %v1339
        %1415 = vadd.xlane.f32.xlu0 %v1414
        %v1416 = vpop.xlane.xlu0 %1415
        %v1417 = vadd.f32 %v1340, %v1341
        %1418 = vadd.xlane.f32.xlu0 %v1417
        %v1419 = vpop.xlane.xlu0 %1418
        %v1420 = vadd.f32 %v1342, %v1343
        %1421 = vadd.xlane.f32.xlu0 %v1420
        %v1422 = vpop.xlane.xlu0 %1421
        %v1423 = vadd.f32 %v1344, %v1345
        %1424 = vadd.xlane.f32.xlu0 %v1423
        %v1425 = vpop.xlane.xlu0 %1424
        %v1426 = vadd.f32 %v1346, %v1347
        %1427 = vadd.xlane.f32.xlu0 %v1426
        %v1428 = vpop.xlane.xlu0 %1427
        %v1429 = vadd.f32 %v1348, %v1349
        %1430 = vadd.xlane.f32.xlu0 %v1429
        %v1431 = vpop.xlane.xlu0 %1430
        %v1432 = vadd.f32 %v1350, %v1351
        %1433 = vadd.xlane.f32.xlu0 %v1432
        %v1434 = vpop.xlane.xlu0 %1433
        %v1435 = vadd.f32 %v1352, %v1353
        %1436 = vadd.xlane.f32.xlu0 %v1435
        %v1437 = vpop.xlane.xlu0 %1436
        %v1438 = vadd.f32 %v1354, %v1355
        %1439 = vadd.xlane.f32.xlu0 %v1438
        %v1440 = vpop.xlane.xlu0 %1439
        %v1441 = vadd.f32 %v1356, %v1357
        %1442 = vadd.xlane.f32.xlu0 %v1441
        %v1443 = vpop.xlane.xlu0 %1442
        %v1444 = vadd.f32 %v1358, %v1359
        %1445 = vadd.xlane.f32.xlu0 %v1444
        %v1446 = vpop.xlane.xlu0 %1445
        %v1447 = vadd.f32 %v1360, %v1361
        %1448 = vadd.xlane.f32.xlu0 %v1447
        %v1449 = vpop.xlane.xlu0 %1448
        %v1450 = vadd.f32 %v1362, %v1363
        %1451 = vadd.xlane.f32.xlu0 %v1450
        %v1452 = vpop.xlane.xlu0 %1451
        %v1453 = vadd.f32 %v1364, %v1365
        %1454 = vadd.xlane.f32.xlu0 %v1453
        %v1455 = vpop.xlane.xlu0 %1454
        %v1456 = vadd.f32 %v1366, %v1367
        %1457 = vadd.xlane.f32.xlu0 %v1456
        %v1458 = vpop.xlane.xlu0 %1457
        %v1459 = vadd.f32 %v1368, %v1369
        %1460 = vadd.xlane.f32.xlu0 %v1459
        %v1461 = vpop.xlane.xlu0 %1460
        %v1462 = vadd.f32 %v1370, %v1371
        %1463 = vadd.xlane.f32.xlu0 %v1462
        %v1464 = vpop.xlane.xlu0 %1463
        %v1465 = vadd.f32 %v1372, %v1373
        %1466 = vadd.xlane.f32.xlu0 %v1465
        %v1467 = vpop.xlane.xlu0 %1466
        %v1468 = vadd.f32 %v1374, %v1375
        %1469 = vadd.xlane.f32.xlu0 %v1468
        %v1470 = vpop.xlane.xlu0 %1469
        %v1471 = vadd.f32 %v1376, %v1377
        %1472 = vadd.xlane.f32.xlu0 %v1471
        %v1473 = vpop.xlane.xlu0 %1472
        %v1474 = vmul.f32 %v1380, %v1217
        %v1475 = vmul.f32 %v1383, %v1217
        %v1476 = vmul.f32 %v1386, %v1217
        %v1477 = vmul.f32 %v1389, %v1217
        %v1478 = vmul.f32 %v1392, %v1217
        %v1479 = vmul.f32 %v1395, %v1217
        %v1480 = vmul.f32 %v1398, %v1217
        %v1481 = vmul.f32 %v1401, %v1217
        %v1482 = vmul.f32 %v1404, %v1217
        %v1483 = vmul.f32 %v1407, %v1217
        %v1484 = vmul.f32 %v1410, %v1217
        %v1485 = vmul.f32 %v1413, %v1217
        %v1486 = vmul.f32 %v1416, %v1217
        %v1487 = vmul.f32 %v1419, %v1217
        %v1488 = vmul.f32 %v1422, %v1217
        %v1489 = vmul.f32 %v1425, %v1217
        %v1490 = vmul.f32 %v1428, %v1217
        %v1491 = vmul.f32 %v1431, %v1217
        %v1492 = vmul.f32 %v1434, %v1217
        %v1493 = vmul.f32 %v1437, %v1217
        %v1494 = vmul.f32 %v1440, %v1217
        %v1495 = vmul.f32 %v1443, %v1217
        %v1496 = vmul.f32 %v1446, %v1217
        %v1497 = vmul.f32 %v1449, %v1217
        %v1498 = vmul.f32 %v1452, %v1217
        %v1499 = vmul.f32 %v1455, %v1217
        %v1500 = vmul.f32 %v1458, %v1217
        %v1501 = vmul.f32 %v1461, %v1217
        %v1502 = vmul.f32 %v1464, %v1217
        %v1503 = vmul.f32 %v1467, %v1217
        %v1504 = vmul.f32 %v1470, %v1217
        %v1505 = vmul.f32 %v1473, %v1217
        %v1506 = vadd.f32 %v1474, 1e-05
        %v1507 = vadd.f32 %v1475, 1e-05
        %v1508 = vadd.f32 %v1476, 1e-05
        %v1509 = vadd.f32 %v1477, 1e-05
        %v1510 = vadd.f32 %v1478, 1e-05
        %v1511 = vadd.f32 %v1479, 1e-05
        %v1512 = vadd.f32 %v1480, 1e-05
        %v1513 = vadd.f32 %v1481, 1e-05
        %v1514 = vadd.f32 %v1482, 1e-05
        %v1515 = vadd.f32 %v1483, 1e-05
        %v1516 = vadd.f32 %v1484, 1e-05
        %v1517 = vadd.f32 %v1485, 1e-05
        %v1518 = vadd.f32 %v1486, 1e-05
        %v1519 = vadd.f32 %v1487, 1e-05
        %v1520 = vadd.f32 %v1488, 1e-05
        %v1521 = vadd.f32 %v1489, 1e-05
        %v1522 = vadd.f32 %v1490, 1e-05
        %v1523 = vadd.f32 %v1491, 1e-05
        %v1524 = vadd.f32 %v1492, 1e-05
        %v1525 = vadd.f32 %v1493, 1e-05
        %v1526 = vadd.f32 %v1494, 1e-05
        %v1527 = vadd.f32 %v1495, 1e-05
        %v1528 = vadd.f32 %v1496, 1e-05
        %v1529 = vadd.f32 %v1497, 1e-05
        %v1530 = vadd.f32 %v1498, 1e-05
        %v1531 = vadd.f32 %v1499, 1e-05
        %v1532 = vadd.f32 %v1500, 1e-05
        %v1533 = vadd.f32 %v1501, 1e-05
        %v1534 = vadd.f32 %v1502, 1e-05
        %v1535 = vadd.f32 %v1503, 1e-05
        %v1536 = vadd.f32 %v1504, 1e-05
        %v1537 = vadd.f32 %v1505, 1e-05
        %v1538 = vrsqrt.pop %v1506
        %v1539 = vrsqrt.pop %v1507
        %v1540 = vrsqrt.pop %v1508
        %v1541 = vrsqrt.pop %v1509
        %v1542 = vrsqrt.pop %v1510
        %v1543 = vrsqrt.pop %v1511
        %v1544 = vrsqrt.pop %v1512
        %v1545 = vrsqrt.pop %v1513
        %v1546 = vrsqrt.pop %v1514
        %v1547 = vrsqrt.pop %v1515
        %v1548 = vrsqrt.pop %v1516
        %v1549 = vrsqrt.pop %v1517
        %v1550 = vrsqrt.pop %v1518
        %v1551 = vrsqrt.pop %v1519
        %v1552 = vrsqrt.pop %v1520
        %v1553 = vrsqrt.pop %v1521
        %v1554 = vrsqrt.pop %v1522
        %v1555 = vrsqrt.pop %v1523
        %v1556 = vrsqrt.pop %v1524
        %v1557 = vrsqrt.pop %v1525
        %v1558 = vrsqrt.pop %v1526
        %v1559 = vrsqrt.pop %v1527
        %v1560 = vrsqrt.pop %v1528
        %v1561 = vrsqrt.pop %v1529
        %v1562 = vrsqrt.pop %v1530
        %v1563 = vrsqrt.pop %v1531
        %v1564 = vrsqrt.pop %v1532
        %v1565 = vrsqrt.pop %v1533
        %v1566 = vrsqrt.pop %v1534
        %v1567 = vrsqrt.pop %v1535
        %v1568 = vrsqrt.pop %v1536
        %v1569 = vrsqrt.pop %v1537
        %v1570 = vmul.f32 %v1250, %v1538
        %v1571 = vmul.f32 %v1251, %v1538
        %v1572 = vmul.f32 %v1252, %v1539
        %v1573 = vmul.f32 %v1253, %v1539
        %v1574 = vmul.f32 %v1254, %v1540
        %v1575 = vmul.f32 %v1255, %v1540
        %v1576 = vmul.f32 %v1256, %v1541
        %v1577 = vmul.f32 %v1257, %v1541
        %v1578 = vmul.f32 %v1258, %v1542
        %v1579 = vmul.f32 %v1259, %v1542
        %v1580 = vmul.f32 %v1260, %v1543
        %v1581 = vmul.f32 %v1261, %v1543
        %v1582 = vmul.f32 %v1262, %v1544
        %v1583 = vmul.f32 %v1263, %v1544
        %v1584 = vmul.f32 %v1264, %v1545
        %v1585 = vmul.f32 %v1265, %v1545
        %v1586 = vmul.f32 %v1266, %v1546
        %v1587 = vmul.f32 %v1267, %v1546
        %v1588 = vmul.f32 %v1268, %v1547
        %v1589 = vmul.f32 %v1269, %v1547
        %v1590 = vmul.f32 %v1270, %v1548
        %v1591 = vmul.f32 %v1271, %v1548
        %v1592 = vmul.f32 %v1272, %v1549
        %v1593 = vmul.f32 %v1273, %v1549
        %v1594 = vmul.f32 %v1274, %v1550
        %v1595 = vmul.f32 %v1275, %v1550
        %v1596 = vmul.f32 %v1276, %v1551
        %v1597 = vmul.f32 %v1277, %v1551
        %v1598 = vmul.f32 %v1278, %v1552
        %v1599 = vmul.f32 %v1279, %v1552
        %v1600 = vmul.f32 %v1280, %v1553
        %v1601 = vmul.f32 %v1281, %v1553
        %v1602 = vmul.f32 %v1282, %v1554
        %v1603 = vmul.f32 %v1283, %v1554
        %v1604 = vmul.f32 %v1284, %v1555
        %v1605 = vmul.f32 %v1285, %v1555
        %v1606 = vmul.f32 %v1286, %v1556
        %v1607 = vmul.f32 %v1287, %v1556
        %v1608 = vmul.f32 %v1288, %v1557
        %v1609 = vmul.f32 %v1289, %v1557
        %v1610 = vmul.f32 %v1290, %v1558
        %v1611 = vmul.f32 %v1291, %v1558
        %v1612 = vmul.f32 %v1292, %v1559
        %v1613 = vmul.f32 %v1293, %v1559
        %v1614 = vmul.f32 %v1294, %v1560
        %v1615 = vmul.f32 %v1295, %v1560
        %v1616 = vmul.f32 %v1296, %v1561
        %v1617 = vmul.f32 %v1297, %v1561
        %v1618 = vmul.f32 %v1298, %v1562
        %v1619 = vmul.f32 %v1299, %v1562
        %v1620 = vmul.f32 %v1300, %v1563
        %v1621 = vmul.f32 %v1301, %v1563
        %v1622 = vmul.f32 %v1302, %v1564
        %v1623 = vmul.f32 %v1303, %v1564
        %v1624 = vmul.f32 %v1304, %v1565
        %v1625 = vmul.f32 %v1305, %v1565
        %v1626 = vmul.f32 %v1306, %v1566
        %v1627 = vmul.f32 %v1307, %v1566
        %v1628 = vmul.f32 %v1308, %v1567
        %v1629 = vmul.f32 %v1309, %v1567
        %v1630 = vmul.f32 %v1310, %v1568
        %v1631 = vmul.f32 %v1311, %v1568
        %v1632 = vmul.f32 %v1312, %v1569
        %v1633 = vmul.f32 %v1313, %v1569
        %v1635 = vlaneseq
        %v1636 = vshrl.u32 %v1635, 7
        %v1637 = vsub.s32 0, %v1636
        %v1638 = vrot.slane %v1119, %v1637
        %v1639 = vlaneseq
        %v1640 = vshrl.u32 %v1639, 7
        %v1641 = vsub.s32 1, %v1640
        %v1642 = vrot.slane %v1119, %v1641
        %v1645 = vmul.f32 %v1570, %v1638
        %v1646 = vmul.f32 %v1571, %v1642
        %v1647 = vmul.f32 %v1572, %v1638
        %v1648 = vmul.f32 %v1573, %v1642
        %v1649 = vmul.f32 %v1574, %v1638
        %v1650 = vmul.f32 %v1575, %v1642
        %v1651 = vmul.f32 %v1576, %v1638
        %v1652 = vmul.f32 %v1577, %v1642
        %v1653 = vmul.f32 %v1578, %v1638
        %v1654 = vmul.f32 %v1579, %v1642
        %v1655 = vmul.f32 %v1580, %v1638
        %v1656 = vmul.f32 %v1581, %v1642
        %v1657 = vmul.f32 %v1582, %v1638
        %v1658 = vmul.f32 %v1583, %v1642
        %v1659 = vmul.f32 %v1584, %v1638
        %v1660 = vmul.f32 %v1585, %v1642
        %v1661 = vmul.f32 %v1586, %v1638
        %v1662 = vmul.f32 %v1587, %v1642
        %v1663 = vmul.f32 %v1588, %v1638
        %v1664 = vmul.f32 %v1589, %v1642
        %v1665 = vmul.f32 %v1590, %v1638
        %v1666 = vmul.f32 %v1591, %v1642
        %v1667 = vmul.f32 %v1592, %v1638
        %v1668 = vmul.f32 %v1593, %v1642
        %v1669 = vmul.f32 %v1594, %v1638
        %v1670 = vmul.f32 %v1595, %v1642
        %v1671 = vmul.f32 %v1596, %v1638
        %v1672 = vmul.f32 %v1597, %v1642
        %v1673 = vmul.f32 %v1598, %v1638
        %v1674 = vmul.f32 %v1599, %v1642
        %v1675 = vmul.f32 %v1600, %v1638
        %v1676 = vmul.f32 %v1601, %v1642
        %v1677 = vmul.f32 %v1602, %v1638
        %v1678 = vmul.f32 %v1603, %v1642
        %v1679 = vmul.f32 %v1604, %v1638
        %v1680 = vmul.f32 %v1605, %v1642
        %v1681 = vmul.f32 %v1606, %v1638
        %v1682 = vmul.f32 %v1607, %v1642
        %v1683 = vmul.f32 %v1608, %v1638
        %v1684 = vmul.f32 %v1609, %v1642
        %v1685 = vmul.f32 %v1610, %v1638
        %v1686 = vmul.f32 %v1611, %v1642
        %v1687 = vmul.f32 %v1612, %v1638
        %v1688 = vmul.f32 %v1613, %v1642
        %v1689 = vmul.f32 %v1614, %v1638
        %v1690 = vmul.f32 %v1615, %v1642
        %v1691 = vmul.f32 %v1616, %v1638
        %v1692 = vmul.f32 %v1617, %v1642
        %v1693 = vmul.f32 %v1618, %v1638
        %v1694 = vmul.f32 %v1619, %v1642
        %v1695 = vmul.f32 %v1620, %v1638
        %v1696 = vmul.f32 %v1621, %v1642
        %v1697 = vmul.f32 %v1622, %v1638
        %v1698 = vmul.f32 %v1623, %v1642
        %v1699 = vmul.f32 %v1624, %v1638
        %v1700 = vmul.f32 %v1625, %v1642
        %v1701 = vmul.f32 %v1626, %v1638
        %v1702 = vmul.f32 %v1627, %v1642
        %v1703 = vmul.f32 %v1628, %v1638
        %v1704 = vmul.f32 %v1629, %v1642
        %v1705 = vmul.f32 %v1630, %v1638
        %v1706 = vmul.f32 %v1631, %v1642
        %v1707 = vmul.f32 %v1632, %v1638
        %v1708 = vmul.f32 %v1633, %v1642
        %v1710 = vlaneseq
        %v1711 = vshrl.u32 %v1710, 7
        %v1712 = vsub.s32 0, %v1711
        %v1713 = vrot.slane %v1120, %v1712
        %v1714 = vlaneseq
        %v1715 = vshrl.u32 %v1714, 7
        %v1716 = vsub.s32 1, %v1715
        %v1717 = vrot.slane %v1120, %v1716
        %v1720 = vadd.f32 %v1645, %v1713
        %v1721 = vadd.f32 %v1646, %v1717
        %v1722 = vadd.f32 %v1647, %v1713
        %v1723 = vadd.f32 %v1648, %v1717
        %v1724 = vadd.f32 %v1649, %v1713
        %v1725 = vadd.f32 %v1650, %v1717
        %v1726 = vadd.f32 %v1651, %v1713
        %v1727 = vadd.f32 %v1652, %v1717
        %v1728 = vadd.f32 %v1653, %v1713
        %v1729 = vadd.f32 %v1654, %v1717
        %v1730 = vadd.f32 %v1655, %v1713
        %v1731 = vadd.f32 %v1656, %v1717
        %v1732 = vadd.f32 %v1657, %v1713
        %v1733 = vadd.f32 %v1658, %v1717
        %v1734 = vadd.f32 %v1659, %v1713
        %v1735 = vadd.f32 %v1660, %v1717
        %v1736 = vadd.f32 %v1661, %v1713
        %v1737 = vadd.f32 %v1662, %v1717
        %v1738 = vadd.f32 %v1663, %v1713
        %v1739 = vadd.f32 %v1664, %v1717
        %v1740 = vadd.f32 %v1665, %v1713
        %v1741 = vadd.f32 %v1666, %v1717
        %v1742 = vadd.f32 %v1667, %v1713
        %v1743 = vadd.f32 %v1668, %v1717
        %v1744 = vadd.f32 %v1669, %v1713
        %v1745 = vadd.f32 %v1670, %v1717
        %v1746 = vadd.f32 %v1671, %v1713
        %v1747 = vadd.f32 %v1672, %v1717
        %v1748 = vadd.f32 %v1673, %v1713
        %v1749 = vadd.f32 %v1674, %v1717
        %v1750 = vadd.f32 %v1675, %v1713
        %v1751 = vadd.f32 %v1676, %v1717
        %v1752 = vadd.f32 %v1677, %v1713
        %v1753 = vadd.f32 %v1678, %v1717
        %v1754 = vadd.f32 %v1679, %v1713
        %v1755 = vadd.f32 %v1680, %v1717
        %v1756 = vadd.f32 %v1681, %v1713
        %v1757 = vadd.f32 %v1682, %v1717
        %v1758 = vadd.f32 %v1683, %v1713
        %v1759 = vadd.f32 %v1684, %v1717
        %v1760 = vadd.f32 %v1685, %v1713
        %v1761 = vadd.f32 %v1686, %v1717
        %v1762 = vadd.f32 %v1687, %v1713
        %v1763 = vadd.f32 %v1688, %v1717
        %v1764 = vadd.f32 %v1689, %v1713
        %v1765 = vadd.f32 %v1690, %v1717
        %v1766 = vadd.f32 %v1691, %v1713
        %v1767 = vadd.f32 %v1692, %v1717
        %v1768 = vadd.f32 %v1693, %v1713
        %v1769 = vadd.f32 %v1694, %v1717
        %v1770 = vadd.f32 %v1695, %v1713
        %v1771 = vadd.f32 %v1696, %v1717
        %v1772 = vadd.f32 %v1697, %v1713
        %v1773 = vadd.f32 %v1698, %v1717
        %v1774 = vadd.f32 %v1699, %v1713
        %v1775 = vadd.f32 %v1700, %v1717
        %v1776 = vadd.f32 %v1701, %v1713
        %v1777 = vadd.f32 %v1702, %v1717
        %v1778 = vadd.f32 %v1703, %v1713
        %v1779 = vadd.f32 %v1704, %v1717
        %v1780 = vadd.f32 %v1705, %v1713
        %v1781 = vadd.f32 %v1706, %v1717
        %v1782 = vadd.f32 %v1707, %v1713
        %v1783 = vadd.f32 %v1708, %v1717
        %v1784 = vmax.f32 %v1720, 0.0
        %v1785 = vmax.f32 %v1721, 0.0
        %v1786 = vmax.f32 %v1722, 0.0
        %v1787 = vmax.f32 %v1723, 0.0
        %v1788 = vmax.f32 %v1724, 0.0
        %v1789 = vmax.f32 %v1725, 0.0
        %v1790 = vmax.f32 %v1726, 0.0
        %v1791 = vmax.f32 %v1727, 0.0
        %v1792 = vmax.f32 %v1728, 0.0
        %v1793 = vmax.f32 %v1729, 0.0
        %v1794 = vmax.f32 %v1730, 0.0
        %v1795 = vmax.f32 %v1731, 0.0
        %v1796 = vmax.f32 %v1732, 0.0
        %v1797 = vmax.f32 %v1733, 0.0
        %v1798 = vmax.f32 %v1734, 0.0
        %v1799 = vmax.f32 %v1735, 0.0
        %v1800 = vmax.f32 %v1736, 0.0
        %v1801 = vmax.f32 %v1737, 0.0
        %v1802 = vmax.f32 %v1738, 0.0
        %v1803 = vmax.f32 %v1739, 0.0
        %v1804 = vmax.f32 %v1740, 0.0
        %v1805 = vmax.f32 %v1741, 0.0
        %v1806 = vmax.f32 %v1742, 0.0
        %v1807 = vmax.f32 %v1743, 0.0
        %v1808 = vmax.f32 %v1744, 0.0
        %v1809 = vmax.f32 %v1745, 0.0
        %v1810 = vmax.f32 %v1746, 0.0
        %v1811 = vmax.f32 %v1747, 0.0
        %v1812 = vmax.f32 %v1748, 0.0
        %v1813 = vmax.f32 %v1749, 0.0
        %v1814 = vmax.f32 %v1750, 0.0
        %v1815 = vmax.f32 %v1751, 0.0
        %v1816 = vmax.f32 %v1752, 0.0
        %v1817 = vmax.f32 %v1753, 0.0
        %v1818 = vmax.f32 %v1754, 0.0
        %v1819 = vmax.f32 %v1755, 0.0
        %v1820 = vmax.f32 %v1756, 0.0
        %v1821 = vmax.f32 %v1757, 0.0
        %v1822 = vmax.f32 %v1758, 0.0
        %v1823 = vmax.f32 %v1759, 0.0
        %v1824 = vmax.f32 %v1760, 0.0
        %v1825 = vmax.f32 %v1761, 0.0
        %v1826 = vmax.f32 %v1762, 0.0
        %v1827 = vmax.f32 %v1763, 0.0
        %v1828 = vmax.f32 %v1764, 0.0
        %v1829 = vmax.f32 %v1765, 0.0
        %v1830 = vmax.f32 %v1766, 0.0
        %v1831 = vmax.f32 %v1767, 0.0
        %v1832 = vmax.f32 %v1768, 0.0
        %v1833 = vmax.f32 %v1769, 0.0
        %v1834 = vmax.f32 %v1770, 0.0
        %v1835 = vmax.f32 %v1771, 0.0
        %v1836 = vmax.f32 %v1772, 0.0
        %v1837 = vmax.f32 %v1773, 0.0
        %v1838 = vmax.f32 %v1774, 0.0
        %v1839 = vmax.f32 %v1775, 0.0
        %v1840 = vmax.f32 %v1776, 0.0
        %v1841 = vmax.f32 %v1777, 0.0
        %v1842 = vmax.f32 %v1778, 0.0
        %v1843 = vmax.f32 %v1779, 0.0
        %v1844 = vmax.f32 %v1780, 0.0
        %v1845 = vmax.f32 %v1781, 0.0
        %v1846 = vmax.f32 %v1782, 0.0
        %v1847 = vmax.f32 %v1783, 0.0
        %v1848 = vld [vmem:[%s4] sm:$0x3]
        %v1849 = vpack.c.bf16 %v1786, %v1784
        %v1850 = vpack.c.bf16 %v1787, %v1785
        %v1851 = vpack.c.bf16 %v1790, %v1788
        %v1852 = vpack.c.bf16 %v1791, %v1789
        %v1853 = vpack.c.bf16 %v1794, %v1792
        %v1854 = vpack.c.bf16 %v1795, %v1793
        %v1855 = vpack.c.bf16 %v1798, %v1796
        %v1856 = vpack.c.bf16 %v1799, %v1797
        %v1857 = vpack.c.bf16 %v1802, %v1800
        %v1858 = vpack.c.bf16 %v1803, %v1801
        %v1859 = vpack.c.bf16 %v1806, %v1804
        %v1860 = vpack.c.bf16 %v1807, %v1805
        %v1861 = vpack.c.bf16 %v1810, %v1808
        %v1862 = vpack.c.bf16 %v1811, %v1809
        %v1863 = vpack.c.bf16 %v1814, %v1812
        %v1864 = vpack.c.bf16 %v1815, %v1813
        %v1865 = vpack.c.bf16 %v1818, %v1816
        %v1866 = vpack.c.bf16 %v1819, %v1817
        %v1867 = vpack.c.bf16 %v1822, %v1820
        %v1868 = vpack.c.bf16 %v1823, %v1821
        %v1869 = vpack.c.bf16 %v1826, %v1824
        %v1870 = vpack.c.bf16 %v1827, %v1825
        %v1871 = vpack.c.bf16 %v1830, %v1828
        %v1872 = vpack.c.bf16 %v1831, %v1829
        %v1873 = vpack.c.bf16 %v1834, %v1832
        %v1874 = vpack.c.bf16 %v1835, %v1833
        %v1875 = vpack.c.bf16 %v1838, %v1836
        %v1876 = vpack.c.bf16 %v1839, %v1837
        %v1877 = vpack.c.bf16 %v1842, %v1840
        %v1878 = vpack.c.bf16 %v1843, %v1841
        %v1879 = vpack.c.bf16 %v1846, %v1844
        %v1880 = vpack.c.bf16 %v1847, %v1845
        %v1881 = vld [vmem:[#allocation5] sm:$0xff]
        %v1882 = vld [vmem:[#allocation5 + $0x8] sm:$0xff]
        %v1883 = vld [vmem:[#allocation5 + $0x10] sm:$0xff]
        %v1884 = vld [vmem:[#allocation5 + $0x18] sm:$0xff]
        %v1885 = vld [vmem:[#allocation5 + $0x20] sm:$0xff]
        %v1886 = vld [vmem:[#allocation5 + $0x28] sm:$0xff]
        %v1887 = vld [vmem:[#allocation5 + $0x30] sm:$0xff]
        %v1888 = vld [vmem:[#allocation5 + $0x38] sm:$0xff]
        %v1889 = vld [vmem:[#allocation5 + $0x40] sm:$0xff]
        %v1890 = vld [vmem:[#allocation5 + $0x48] sm:$0xff]
        %v1891 = vld [vmem:[#allocation5 + $0x50] sm:$0xff]
        %v1892 = vld [vmem:[#allocation5 + $0x58] sm:$0xff]
        %v1893 = vld [vmem:[#allocation5 + $0x60] sm:$0xff]
        %v1894 = vld [vmem:[#allocation5 + $0x68] sm:$0xff]
        %v1895 = vld [vmem:[#allocation5 + $0x70] sm:$0xff]
        %v1896 = vld [vmem:[#allocation5 + $0x78] sm:$0xff]
        %v1897 = vld [vmem:[#allocation5 + $0x80] sm:$0xff]
        %v1898 = vld [vmem:[#allocation5 + $0x88] sm:$0xff]
        %v1899 = vld [vmem:[#allocation5 + $0x90] sm:$0xff]
        %v1900 = vld [vmem:[#allocation5 + $0x98] sm:$0xff]
        %v1901 = vld [vmem:[#allocation5 + $0xa0] sm:$0xff]
        %v1902 = vld [vmem:[#allocation5 + $0xa8] sm:$0xff]
        %v1903 = vld [vmem:[#allocation5 + $0xb0] sm:$0xff]
        %v1904 = vld [vmem:[#allocation5 + $0xb8] sm:$0xff]
        %v1905 = vld [vmem:[#allocation5 + $0xc0] sm:$0xff]
        %v1906 = vld [vmem:[#allocation5 + $0xc8] sm:$0xff]
        %v1907 = vld [vmem:[#allocation5 + $0xd0] sm:$0xff]
        %v1908 = vld [vmem:[#allocation5 + $0xd8] sm:$0xff]
        %v1909 = vld [vmem:[#allocation5 + $0xe0] sm:$0xff]
        %v1910 = vld [vmem:[#allocation5 + $0xe8] sm:$0xff]
        %v1911 = vld [vmem:[#allocation5 + $0xf0] sm:$0xff]
        %v1912 = vld [vmem:[#allocation5 + $0xf8] sm:$0xff]
        %v1945 = vunpack.c.l.b16 %v1881
        %v1946 = vunpack.c.h.b16 %v1881
        %v1947 = vunpack.c.l.b16 %v1882
        %v1948 = vunpack.c.h.b16 %v1882
        %v1949 = vunpack.c.l.b16 %v1883
        %v1950 = vunpack.c.h.b16 %v1883
        %v1951 = vunpack.c.l.b16 %v1884
        %v1952 = vunpack.c.h.b16 %v1884
        %v1953 = vunpack.c.l.b16 %v1885
        %v1954 = vunpack.c.h.b16 %v1885
        %v1955 = vunpack.c.l.b16 %v1886
        %v1956 = vunpack.c.h.b16 %v1886
        %v1957 = vunpack.c.l.b16 %v1887
        %v1958 = vunpack.c.h.b16 %v1887
        %v1959 = vunpack.c.l.b16 %v1888
        %v1960 = vunpack.c.h.b16 %v1888
        %v1961 = vunpack.c.l.b16 %v1889
        %v1962 = vunpack.c.h.b16 %v1889
        %v1963 = vunpack.c.l.b16 %v1890
        %v1964 = vunpack.c.h.b16 %v1890
        %v1965 = vunpack.c.l.b16 %v1891
        %v1966 = vunpack.c.h.b16 %v1891
        %v1967 = vunpack.c.l.b16 %v1892
        %v1968 = vunpack.c.h.b16 %v1892
        %v1969 = vunpack.c.l.b16 %v1893
        %v1970 = vunpack.c.h.b16 %v1893
        %v1971 = vunpack.c.l.b16 %v1894
        %v1972 = vunpack.c.h.b16 %v1894
        %v1973 = vunpack.c.l.b16 %v1895
        %v1974 = vunpack.c.h.b16 %v1895
        %v1975 = vunpack.c.l.b16 %v1896
        %v1976 = vunpack.c.h.b16 %v1896
        %v1977 = vunpack.c.l.b16 %v1897
        %v1978 = vunpack.c.h.b16 %v1897
        %v1979 = vunpack.c.l.b16 %v1898
        %v1980 = vunpack.c.h.b16 %v1898
        %v1981 = vunpack.c.l.b16 %v1899
        %v1982 = vunpack.c.h.b16 %v1899
        %v1983 = vunpack.c.l.b16 %v1900
        %v1984 = vunpack.c.h.b16 %v1900
        %v1985 = vunpack.c.l.b16 %v1901
        %v1986 = vunpack.c.h.b16 %v1901
        %v1987 = vunpack.c.l.b16 %v1902
        %v1988 = vunpack.c.h.b16 %v1902
        %v1989 = vunpack.c.l.b16 %v1903
        %v1990 = vunpack.c.h.b16 %v1903
        %v1991 = vunpack.c.l.b16 %v1904
        %v1992 = vunpack.c.h.b16 %v1904
        %v1993 = vunpack.c.l.b16 %v1905
        %v1994 = vunpack.c.h.b16 %v1905
        %v1995 = vunpack.c.l.b16 %v1906
        %v1996 = vunpack.c.h.b16 %v1906
        %v1997 = vunpack.c.l.b16 %v1907
        %v1998 = vunpack.c.h.b16 %v1907
        %v1999 = vunpack.c.l.b16 %v1908
        %v2000 = vunpack.c.h.b16 %v1908
        %v2001 = vunpack.c.l.b16 %v1909
        %v2002 = vunpack.c.h.b16 %v1909
        %v2003 = vunpack.c.l.b16 %v1910
        %v2004 = vunpack.c.h.b16 %v1910
        %v2005 = vunpack.c.l.b16 %v1911
        %v2006 = vunpack.c.h.b16 %v1911
        %v2007 = vunpack.c.l.b16 %v1912
        %v2008 = vunpack.c.h.b16 %v1912
        %v2009 = vpack.c.b16 %v1947, %v1945
        %v2010 = vpack.c.b16 %v1948, %v1946
        %v2011 = vpack.c.b16 %v1951, %v1949
        %v2012 = vpack.c.b16 %v1952, %v1950
        %v2013 = vpack.c.b16 %v1955, %v1953
        %v2014 = vpack.c.b16 %v1956, %v1954
        %v2015 = vpack.c.b16 %v1959, %v1957
        %v2016 = vpack.c.b16 %v1960, %v1958
        %v2017 = vpack.c.b16 %v1963, %v1961
        %v2018 = vpack.c.b16 %v1964, %v1962
        %v2019 = vpack.c.b16 %v1967, %v1965
        %v2020 = vpack.c.b16 %v1968, %v1966
        %v2021 = vpack.c.b16 %v1971, %v1969
        %v2022 = vpack.c.b16 %v1972, %v1970
        %v2023 = vpack.c.b16 %v1975, %v1973
        %v2024 = vpack.c.b16 %v1976, %v1974
        %v2025 = vpack.c.b16 %v1979, %v1977
        %v2026 = vpack.c.b16 %v1980, %v1978
        %v2027 = vpack.c.b16 %v1983, %v1981
        %v2028 = vpack.c.b16 %v1984, %v1982
        %v2029 = vpack.c.b16 %v1987, %v1985
        %v2030 = vpack.c.b16 %v1988, %v1986
        %v2031 = vpack.c.b16 %v1991, %v1989
        %v2032 = vpack.c.b16 %v1992, %v1990
        %v2033 = vpack.c.b16 %v1995, %v1993
        %v2034 = vpack.c.b16 %v1996, %v1994
        %v2035 = vpack.c.b16 %v1999, %v1997
        %v2036 = vpack.c.b16 %v2000, %v1998
        %v2037 = vpack.c.b16 %v2003, %v2001
        %v2038 = vpack.c.b16 %v2004, %v2002
        %v2039 = vpack.c.b16 %v2007, %v2005
        %v2040 = vpack.c.b16 %v2008, %v2006
        %2073 = vmatprep.subr.bf16.mxu0 %v2010
        %2074 = vmatpush1.bf16.msra.mxu0 %v2009
        %2075 = vmatprep.subr.bf16.mxu0 %v2012
        %2076 = vmatpush1.bf16.msra.mxu0 %v2011
        %2077 = vmatprep.subr.bf16.mxu0 %v2014
        %2078 = vmatpush1.bf16.msra.mxu0 %v2013
        %2079 = vmatprep.subr.bf16.mxu0 %v2016
        %2080 = vmatpush1.bf16.msra.mxu0 %v2015
        %2081 = vmatprep.subr.bf16.mxu0 %v2018
        %2082 = vmatpush1.bf16.msra.mxu0 %v2017
        %2083 = vmatprep.subr.bf16.mxu0 %v2020
        %2084 = vmatpush1.bf16.msra.mxu0 %v2019
        %2085 = vmatprep.subr.bf16.mxu0 %v2022
        %2086 = vmatpush1.bf16.msra.mxu0 %v2021
        %2087 = vmatprep.subr.bf16.mxu0 %v2024
        %2088 = vmatpush1.bf16.msra.mxu0 %v2023
        %2089 = vmatprep.subr.bf16.mxu0 %v2026
        %2090 = vmatpush1.bf16.msra.mxu0 %v2025
        %2091 = vmatprep.subr.bf16.mxu0 %v2028
        %2092 = vmatpush1.bf16.msra.mxu0 %v2027
        %2093 = vmatprep.subr.bf16.mxu0 %v2030
        %2094 = vmatpush1.bf16.msra.mxu0 %v2029
        %2095 = vmatprep.subr.bf16.mxu0 %v2032
        %2096 = vmatpush1.bf16.msra.mxu0 %v2031
        %2097 = vmatprep.subr.bf16.mxu0 %v2034
        %2098 = vmatpush1.bf16.msra.mxu0 %v2033
        %2099 = vmatprep.subr.bf16.mxu0 %v2036
        %2100 = vmatpush1.bf16.msra.mxu0 %v2035
        %2101 = vmatprep.subr.bf16.mxu0 %v2038
        %2102 = vmatpush1.bf16.msra.mxu0 %v2037
        %2103 = vmatprep.subr.bf16.mxu0 %v2040
        %2104 = vmatpush1.bf16.msra.mxu0 %v2039
        %2105 = vmatprep.mubr.bf16.mxu0 %v1850
        %2106 = vmatmul.mubr.bf16.gmra.mrb[0].mxu0 %v1849
        %v2107 = vpop.f32.mrb[0].mxu0
        %v2108 = vadd.f32 0.0, %v2107
        %v2109 = vpop.f32.mrb[0].mxu0
        %v2110 = vadd.f32 0.0, %v2109
        %v2111 = vpop.f32.mrb[0].mxu0
        %v2112 = vadd.f32 0.0, %v2111
        %v2113 = vpop.f32.mrb[0].mxu0
        %v2114 = vadd.f32 0.0, %v2113
        %2115 = vmatprep.mubr.bf16.mxu0 %v1852
        %2116 = vmatmul.mubr.bf16.gmra.mrb[0].mxu0 %v1851
        %v2117 = vpop.f32.mrb[0].mxu0
        %v2118 = vadd.f32 0.0, %v2117
        %v2119 = vpop.f32.mrb[0].mxu0
        %v2120 = vadd.f32 0.0, %v2119
        %v2121 = vpop.f32.mrb[0].mxu0
        %v2122 = vadd.f32 0.0, %v2121
        %v2123 = vpop.f32.mrb[0].mxu0
        %v2124 = vadd.f32 0.0, %v2123
        %2125 = vmatprep.mubr.bf16.mxu0 %v1854
        %2126 = vmatmul.mubr.bf16.gmra.mrb[0].mxu0 %v1853
        %v2127 = vpop.f32.mrb[0].mxu0
        %v2128 = vadd.f32 0.0, %v2127
        %v2129 = vpop.f32.mrb[0].mxu0
        %v2130 = vadd.f32 0.0, %v2129
        %v2131 = vpop.f32.mrb[0].mxu0
        %v2132 = vadd.f32 0.0, %v2131
        %v2133 = vpop.f32.mrb[0].mxu0
        %v2134 = vadd.f32 0.0, %v2133
        %2135 = vmatprep.mubr.bf16.mxu0 %v1856
        %2136 = vmatmul.mubr.bf16.gmra.mrb[0].mxu0 %v1855
        %v2137 = vpop.f32.mrb[0].mxu0
        %v2138 = vadd.f32 0.0, %v2137
        %v2139 = vpop.f32.mrb[0].mxu0
        %v2140 = vadd.f32 0.0, %v2139
        %v2141 = vpop.f32.mrb[0].mxu0
        %v2142 = vadd.f32 0.0, %v2141
        %v2143 = vpop.f32.mrb[0].mxu0
        %v2144 = vadd.f32 0.0, %v2143
        %2145 = vmatprep.mubr.bf16.mxu0 %v1858
        %2146 = vmatmul.mubr.bf16.gmra.mrb[0].mxu0 %v1857
        %v2147 = vpop.f32.mrb[0].mxu0
        %v2148 = vadd.f32 0.0, %v2147
        %v2149 = vpop.f32.mrb[0].mxu0
        %v2150 = vadd.f32 0.0, %v2149
        %v2151 = vpop.f32.mrb[0].mxu0
        %v2152 = vadd.f32 0.0, %v2151
        %v2153 = vpop.f32.mrb[0].mxu0
        %v2154 = vadd.f32 0.0, %v2153
        %2155 = vmatprep.mubr.bf16.mxu0 %v1860
        %2156 = vmatmul.mubr.bf16.gmra.mrb[0].mxu0 %v1859
        %v2157 = vpop.f32.mrb[0].mxu0
        %v2158 = vadd.f32 0.0, %v2157
        %v2159 = vpop.f32.mrb[0].mxu0
        %v2160 = vadd.f32 0.0, %v2159
        %v2161 = vpop.f32.mrb[0].mxu0
        %v2162 = vadd.f32 0.0, %v2161
        %v2163 = vpop.f32.mrb[0].mxu0
        %v2164 = vadd.f32 0.0, %v2163
        %2165 = vmatprep.mubr.bf16.mxu0 %v1862
        %2166 = vmatmul.mubr.bf16.gmra.mrb[0].mxu0 %v1861
        %v2167 = vpop.f32.mrb[0].mxu0
        %v2168 = vadd.f32 0.0, %v2167
        %v2169 = vpop.f32.mrb[0].mxu0
        %v2170 = vadd.f32 0.0, %v2169
        %v2171 = vpop.f32.mrb[0].mxu0
        %v2172 = vadd.f32 0.0, %v2171
        %v2173 = vpop.f32.mrb[0].mxu0
        %v2174 = vadd.f32 0.0, %v2173
        %2175 = vmatprep.mubr.bf16.mxu0 %v1864
        %2176 = vmatmul.mubr.bf16.gmra.mrb[0].mxu0 %v1863
        %v2177 = vpop.f32.mrb[0].mxu0
        %v2178 = vadd.f32 0.0, %v2177
        %v2179 = vpop.f32.mrb[0].mxu0
        %v2180 = vadd.f32 0.0, %v2179
        %v2181 = vpop.f32.mrb[0].mxu0
        %v2182 = vadd.f32 0.0, %v2181
        %v2183 = vpop.f32.mrb[0].mxu0
        %v2184 = vadd.f32 0.0, %v2183
        %2185 = vmatprep.mubr.bf16.mxu0 %v1866
        %2186 = vmatmul.mubr.bf16.gmra.mrb[0].mxu0 %v1865
        %v2187 = vpop.f32.mrb[0].mxu0
        %v2188 = vadd.f32 0.0, %v2187
        %v2189 = vpop.f32.mrb[0].mxu0
        %v2190 = vadd.f32 0.0, %v2189
        %v2191 = vpop.f32.mrb[0].mxu0
        %v2192 = vadd.f32 0.0, %v2191
        %v2193 = vpop.f32.mrb[0].mxu0
        %v2194 = vadd.f32 0.0, %v2193
        %2195 = vmatprep.mubr.bf16.mxu0 %v1868
        %2196 = vmatmul.mubr.bf16.gmra.mrb[0].mxu0 %v1867
        %v2197 = vpop.f32.mrb[0].mxu0
        %v2198 = vadd.f32 0.0, %v2197
        %v2199 = vpop.f32.mrb[0].mxu0
        %v2200 = vadd.f32 0.0, %v2199
        %v2201 = vpop.f32.mrb[0].mxu0
        %v2202 = vadd.f32 0.0, %v2201
        %v2203 = vpop.f32.mrb[0].mxu0
        %v2204 = vadd.f32 0.0, %v2203
        %2205 = vmatprep.mubr.bf16.mxu0 %v1870
        %2206 = vmatmul.mubr.bf16.gmra.mrb[0].mxu0 %v1869
        %v2207 = vpop.f32.mrb[0].mxu0
        %v2208 = vadd.f32 0.0, %v2207
        %v2209 = vpop.f32.mrb[0].mxu0
        %v2210 = vadd.f32 0.0, %v2209
        %v2211 = vpop.f32.mrb[0].mxu0
        %v2212 = vadd.f32 0.0, %v2211
        %v2213 = vpop.f32.mrb[0].mxu0
        %v2214 = vadd.f32 0.0, %v2213
        %2215 = vmatprep.mubr.bf16.mxu0 %v1872
        %2216 = vmatmul.mubr.bf16.gmra.mrb[0].mxu0 %v1871
        %v2217 = vpop.f32.mrb[0].mxu0
        %v2218 = vadd.f32 0.0, %v2217
        %v2219 = vpop.f32.mrb[0].mxu0
        %v2220 = vadd.f32 0.0, %v2219
        %v2221 = vpop.f32.mrb[0].mxu0
        %v2222 = vadd.f32 0.0, %v2221
        %v2223 = vpop.f32.mrb[0].mxu0
        %v2224 = vadd.f32 0.0, %v2223
        %2225 = vmatprep.mubr.bf16.mxu0 %v1874
        %2226 = vmatmul.mubr.bf16.gmra.mrb[0].mxu0 %v1873
        %v2227 = vpop.f32.mrb[0].mxu0
        %v2228 = vadd.f32 0.0, %v2227
        %v2229 = vpop.f32.mrb[0].mxu0
        %v2230 = vadd.f32 0.0, %v2229
        %v2231 = vpop.f32.mrb[0].mxu0
        %v2232 = vadd.f32 0.0, %v2231
        %v2233 = vpop.f32.mrb[0].mxu0
        %v2234 = vadd.f32 0.0, %v2233
        %2235 = vmatprep.mubr.bf16.mxu0 %v1876
        %2236 = vmatmul.mubr.bf16.gmra.mrb[0].mxu0 %v1875
        %v2237 = vpop.f32.mrb[0].mxu0
        %v2238 = vadd.f32 0.0, %v2237
        %v2239 = vpop.f32.mrb[0].mxu0
        %v2240 = vadd.f32 0.0, %v2239
        %v2241 = vpop.f32.mrb[0].mxu0
        %v2242 = vadd.f32 0.0, %v2241
        %v2243 = vpop.f32.mrb[0].mxu0
        %v2244 = vadd.f32 0.0, %v2243
        %2245 = vmatprep.mubr.bf16.mxu0 %v1878
        %2246 = vmatmul.mubr.bf16.gmra.mrb[0].mxu0 %v1877
        %v2247 = vpop.f32.mrb[0].mxu0
        %v2248 = vadd.f32 0.0, %v2247
        %v2249 = vpop.f32.mrb[0].mxu0
        %v2250 = vadd.f32 0.0, %v2249
        %v2251 = vpop.f32.mrb[0].mxu0
        %v2252 = vadd.f32 0.0, %v2251
        %v2253 = vpop.f32.mrb[0].mxu0
        %v2254 = vadd.f32 0.0, %v2253
        %2255 = vmatprep.mubr.bf16.mxu0 %v1880
        %2256 = vmatmul.mubr.bf16.gmra.mrb[0].mxu0 %v1879
        %v2257 = vpop.f32.mrb[0].mxu0
        %v2258 = vadd.f32 0.0, %v2257
        %v2259 = vpop.f32.mrb[0].mxu0
        %v2260 = vadd.f32 0.0, %v2259
        %v2261 = vpop.f32.mrb[0].mxu0
        %v2262 = vadd.f32 0.0, %v2261
        %v2263 = vpop.f32.mrb[0].mxu0
        %v2264 = vadd.f32 0.0, %v2263
        %2265 = vdwg.mxu0
        %s2266 = scalar_lea.vmem [#allocation5], 256
        %v2267 = vld [vmem:[%s2266] sm:$0xff]
        %v2268 = vld [vmem:[%s2266 + $0x8] sm:$0xff]
        %v2269 = vld [vmem:[%s2266 + $0x10] sm:$0xff]
        %v2270 = vld [vmem:[%s2266 + $0x18] sm:$0xff]
        %v2271 = vld [vmem:[%s2266 + $0x20] sm:$0xff]
        %v2272 = vld [vmem:[%s2266 + $0x28] sm:$0xff]
        %v2273 = vld [vmem:[%s2266 + $0x30] sm:$0xff]
        %v2274 = vld [vmem:[%s2266 + $0x38] sm:$0xff]
        %v2275 = vld [vmem:[%s2266 + $0x40] sm:$0xff]
        %v2276 = vld [vmem:[%s2266 + $0x48] sm:$0xff]
        %v2277 = vld [vmem:[%s2266 + $0x50] sm:$0xff]
        %v2278 = vld [vmem:[%s2266 + $0x58] sm:$0xff]
        %v2279 = vld [vmem:[%s2266 + $0x60] sm:$0xff]
        %v2280 = vld [vmem:[%s2266 + $0x68] sm:$0xff]
        %v2281 = vld [vmem:[%s2266 + $0x70] sm:$0xff]
        %v2282 = vld [vmem:[%s2266 + $0x78] sm:$0xff]
        %v2283 = vld [vmem:[%s2266 + $0x80] sm:$0xff]
        %v2284 = vld [vmem:[%s2266 + $0x88] sm:$0xff]
        %v2285 = vld [vmem:[%s2266 + $0x90] sm:$0xff]
        %v2286 = vld [vmem:[%s2266 + $0x98] sm:$0xff]
        %v2287 = vld [vmem:[%s2266 + $0xa0] sm:$0xff]
        %v2288 = vld [vmem:[%s2266 + $0xa8] sm:$0xff]
        %v2289 = vld [vmem:[%s2266 + $0xb0] sm:$0xff]
        %v2290 = vld [vmem:[%s2266 + $0xb8] sm:$0xff]
        %v2291 = vld [vmem:[%s2266 + $0xc0] sm:$0xff]
        %v2292 = vld [vmem:[%s2266 + $0xc8] sm:$0xff]
        %v2293 = vld [vmem:[%s2266 + $0xd0] sm:$0xff]
        %v2294 = vld [vmem:[%s2266 + $0xd8] sm:$0xff]
        %v2295 = vld [vmem:[%s2266 + $0xe0] sm:$0xff]
        %v2296 = vld [vmem:[%s2266 + $0xe8] sm:$0xff]
        %v2297 = vld [vmem:[%s2266 + $0xf0] sm:$0xff]
        %v2298 = vld [vmem:[%s2266 + $0xf8] sm:$0xff]
        %v2331 = vunpack.c.l.b16 %v2267
        %v2332 = vunpack.c.h.b16 %v2267
        %v2333 = vunpack.c.l.b16 %v2268
        %v2334 = vunpack.c.h.b16 %v2268
        %v2335 = vunpack.c.l.b16 %v2269
        %v2336 = vunpack.c.h.b16 %v2269
        %v2337 = vunpack.c.l.b16 %v2270
        %v2338 = vunpack.c.h.b16 %v2270
        %v2339 = vunpack.c.l.b16 %v2271
        %v2340 = vunpack.c.h.b16 %v2271
        %v2341 = vunpack.c.l.b16 %v2272
        %v2342 = vunpack.c.h.b16 %v2272
        %v2343 = vunpack.c.l.b16 %v2273
        %v2344 = vunpack.c.h.b16 %v2273
        %v2345 = vunpack.c.l.b16 %v2274
        %v2346 = vunpack.c.h.b16 %v2274
        %v2347 = vunpack.c.l.b16 %v2275
        %v2348 = vunpack.c.h.b16 %v2275
        %v2349 = vunpack.c.l.b16 %v2276
        %v2350 = vunpack.c.h.b16 %v2276
        %v2351 = vunpack.c.l.b16 %v2277
        %v2352 = vunpack.c.h.b16 %v2277
        %v2353 = vunpack.c.l.b16 %v2278
        %v2354 = vunpack.c.h.b16 %v2278
        %v2355 = vunpack.c.l.b16 %v2279
        %v2356 = vunpack.c.h.b16 %v2279
        %v2357 = vunpack.c.l.b16 %v2280
        %v2358 = vunpack.c.h.b16 %v2280
        %v2359 = vunpack.c.l.b16 %v2281
        %v2360 = vunpack.c.h.b16 %v2281
        %v2361 = vunpack.c.l.b16 %v2282
        %v2362 = vunpack.c.h.b16 %v2282
        %v2363 = vunpack.c.l.b16 %v2283
        %v2364 = vunpack.c.h.b16 %v2283
        %v2365 = vunpack.c.l.b16 %v2284
        %v2366 = vunpack.c.h.b16 %v2284
        %v2367 = vunpack.c.l.b16 %v2285
        %v2368 = vunpack.c.h.b16 %v2285
        %v2369 = vunpack.c.l.b16 %v2286
        %v2370 = vunpack.c.h.b16 %v2286
        %v2371 = vunpack.c.l.b16 %v2287
        %v2372 = vunpack.c.h.b16 %v2287
        %v2373 = vunpack.c.l.b16 %v2288
        %v2374 = vunpack.c.h.b16 %v2288
        %v2375 = vunpack.c.l.b16 %v2289
        %v2376 = vunpack.c.h.b16 %v2289
        %v2377 = vunpack.c.l.b16 %v2290
        %v2378 = vunpack.c.h.b16 %v2290
        %v2379 = vunpack.c.l.b16 %v2291
        %v2380 = vunpack.c.h.b16 %v2291
        %v2381 = vunpack.c.l.b16 %v2292
        %v2382 = vunpack.c.h.b16 %v2292
        %v2383 = vunpack.c.l.b16 %v2293
        %v2384 = vunpack.c.h.b16 %v2293
        %v2385 = vunpack.c.l.b16 %v2294
        %v2386 = vunpack.c.h.b16 %v2294
        %v2387 = vunpack.c.l.b16 %v2295
        %v2388 = vunpack.c.h.b16 %v2295
        %v2389 = vunpack.c.l.b16 %v2296
        %v2390 = vunpack.c.h.b16 %v2296
        %v2391 = vunpack.c.l.b16 %v2297
        %v2392 = vunpack.c.h.b16 %v2297
        %v2393 = vunpack.c.l.b16 %v2298
        %v2394 = vunpack.c.h.b16 %v2298
        %v2395 = vpack.c.b16 %v2333, %v2331
        %v2396 = vpack.c.b16 %v2334, %v2332
        %v2397 = vpack.c.b16 %v2337, %v2335
        %v2398 = vpack.c.b16 %v2338, %v2336
        %v2399 = vpack.c.b16 %v2341, %v2339
        %v2400 = vpack.c.b16 %v2342, %v2340
        %v2401 = vpack.c.b16 %v2345, %v2343
        %v2402 = vpack.c.b16 %v2346, %v2344
        %v2403 = vpack.c.b16 %v2349, %v2347
        %v2404 = vpack.c.b16 %v2350, %v2348
        %v2405 = vpack.c.b16 %v2353, %v2351
        %v2406 = vpack.c.b16 %v2354, %v2352
        %v2407 = vpack.c.b16 %v2357, %v2355
        %v2408 = vpack.c.b16 %v2358, %v2356
        %v2409 = vpack.c.b16 %v2361, %v2359
        %v2410 = vpack.c.b16 %v2362, %v2360
        %v2411 = vpack.c.b16 %v2365, %v2363
        %v2412 = vpack.c.b16 %v2366, %v2364
        %v2413 = vpack.c.b16 %v2369, %v2367
        %v2414 = vpack.c.b16 %v2370, %v2368
        %v2415 = vpack.c.b16 %v2373, %v2371
        %v2416 = vpack.c.b16 %v2374, %v2372
        %v2417 = vpack.c.b16 %v2377, %v2375
        %v2418 = vpack.c.b16 %v2378, %v2376
        %v2419 = vpack.c.b16 %v2381, %v2379
        %v2420 = vpack.c.b16 %v2382, %v2380
        %v2421 = vpack.c.b16 %v2385, %v2383
        %v2422 = vpack.c.b16 %v2386, %v2384
        %v2423 = vpack.c.b16 %v2389, %v2387
        %v2424 = vpack.c.b16 %v2390, %v2388
        %v2425 = vpack.c.b16 %v2393, %v2391
        %v2426 = vpack.c.b16 %v2394, %v2392
        %2459 = vmatprep.subr.bf16.mxu0 %v2396
        %2460 = vmatpush1.bf16.msra.mxu0 %v2395
        %2461 = vmatprep.subr.bf16.mxu0 %v2398
        %2462 = vmatpush1.bf16.msra.mxu0 %v2397
        %2463 = vmatprep.subr.bf16.mxu0 %v2400
        %2464 = vmatpush1.bf16.msra.mxu0 %v2399
        %2465 = vmatprep.subr.bf16.mxu0 %v2402
        %2466 = vmatpush1.bf16.msra.mxu0 %v2401
        %2467 = vmatprep.subr.bf16.mxu0 %v2404
        %2468 = vmatpush1.bf16.msra.mxu0 %v2403
        %2469 = vmatprep.subr.bf16.mxu0 %v2406
        %2470 = vmatpush1.bf16.msra.mxu0 %v2405
        %2471 = vmatprep.subr.bf16.mxu0 %v2408
        %2472 = vmatpush1.bf16.msra.mxu0 %v2407
        %2473 = vmatprep.subr.bf16.mxu0 %v2410
        %2474 = vmatpush1.bf16.msra.mxu0 %v2409
        %2475 = vmatprep.subr.bf16.mxu0 %v2412
        %2476 = vmatpush1.bf16.msra.mxu0 %v2411
        %2477 = vmatprep.subr.bf16.mxu0 %v2414
        %2478 = vmatpush1.bf16.msra.mxu0 %v2413
        %2479 = vmatprep.subr.bf16.mxu0 %v2416
        %2480 = vmatpush1.bf16.msra.mxu0 %v2415
        %2481 = vmatprep.subr.bf16.mxu0 %v2418
        %2482 = vmatpush1.bf16.msra.mxu0 %v2417
        %2483 = vmatprep.subr.bf16.mxu0 %v2420
        %2484 = vmatpush1.bf16.msra.mxu0 %v2419
        %2485 = vmatprep.subr.bf16.mxu0 %v2422
        %2486 = vmatpush1.bf16.msra.mxu0 %v2421
        %2487 = vmatprep.subr.bf16.mxu0 %v2424
        %2488 = vmatpush1.bf16.msra.mxu0 %v2423
        %2489 = vmatprep.subr.bf16.mxu0 %v2426
        %2490 = vmatpush1.bf16.msra.mxu0 %v2425
        %2491 = vmatprep.mubr.bf16.mxu0 %v1850
        %2492 = vmatmul.mubr.bf16.gmra.mrb[0].mxu0 %v1849
        %v2493 = vpop.f32.mrb[0].mxu0
        %v2494 = vadd.f32 0.0, %v2493
        %v2495 = vpop.f32.mrb[0].mxu0
        %v2496 = vadd.f32 0.0, %v2495
        %v2497 = vpop.f32.mrb[0].mxu0
        %v2498 = vadd.f32 0.0, %v2497
        %v2499 = vpop.f32.mrb[0].mxu0
        %v2500 = vadd.f32 0.0, %v2499
        %2501 = vmatprep.mubr.bf16.mxu0 %v1852
        %2502 = vmatmul.mubr.bf16.gmra.mrb[0].mxu0 %v1851
        %v2503 = vpop.f32.mrb[0].mxu0
        %v2504 = vadd.f32 0.0, %v2503
        %v2505 = vpop.f32.mrb[0].mxu0
        %v2506 = vadd.f32 0.0, %v2505
        %v2507 = vpop.f32.mrb[0].mxu0
        %v2508 = vadd.f32 0.0, %v2507
        %v2509 = vpop.f32.mrb[0].mxu0
        %v2510 = vadd.f32 0.0, %v2509
        %2511 = vmatprep.mubr.bf16.mxu0 %v1854
        %2512 = vmatmul.mubr.bf16.gmra.mrb[0].mxu0 %v1853
        %v2513 = vpop.f32.mrb[0].mxu0
        %v2514 = vadd.f32 0.0, %v2513
        %v2515 = vpop.f32.mrb[0].mxu0
        %v2516 = vadd.f32 0.0, %v2515
        %v2517 = vpop.f32.mrb[0].mxu0
        %v2518 = vadd.f32 0.0, %v2517
        %v2519 = vpop.f32.mrb[0].mxu0
        %v2520 = vadd.f32 0.0, %v2519
        %2521 = vmatprep.mubr.bf16.mxu0 %v1856
        %2522 = vmatmul.mubr.bf16.gmra.mrb[0].mxu0 %v1855
        %v2523 = vpop.f32.mrb[0].mxu0
        %v2524 = vadd.f32 0.0, %v2523
        %v2525 = vpop.f32.mrb[0].mxu0
        %v2526 = vadd.f32 0.0, %v2525
        %v2527 = vpop.f32.mrb[0].mxu0
        %v2528 = vadd.f32 0.0, %v2527
        %v2529 = vpop.f32.mrb[0].mxu0
        %v2530 = vadd.f32 0.0, %v2529
        %2531 = vmatprep.mubr.bf16.mxu0 %v1858
        %2532 = vmatmul.mubr.bf16.gmra.mrb[0].mxu0 %v1857
        %v2533 = vpop.f32.mrb[0].mxu0
        %v2534 = vadd.f32 0.0, %v2533
        %v2535 = vpop.f32.mrb[0].mxu0
        %v2536 = vadd.f32 0.0, %v2535
        %v2537 = vpop.f32.mrb[0].mxu0
        %v2538 = vadd.f32 0.0, %v2537
        %v2539 = vpop.f32.mrb[0].mxu0
        %v2540 = vadd.f32 0.0, %v2539
        %2541 = vmatprep.mubr.bf16.mxu0 %v1860
        %2542 = vmatmul.mubr.bf16.gmra.mrb[0].mxu0 %v1859
        %v2543 = vpop.f32.mrb[0].mxu0
        %v2544 = vadd.f32 0.0, %v2543
        %v2545 = vpop.f32.mrb[0].mxu0
        %v2546 = vadd.f32 0.0, %v2545
        %v2547 = vpop.f32.mrb[0].mxu0
        %v2548 = vadd.f32 0.0, %v2547
        %v2549 = vpop.f32.mrb[0].mxu0
        %v2550 = vadd.f32 0.0, %v2549
        %2551 = vmatprep.mubr.bf16.mxu0 %v1862
        %2552 = vmatmul.mubr.bf16.gmra.mrb[0].mxu0 %v1861
        %v2553 = vpop.f32.mrb[0].mxu0
        %v2554 = vadd.f32 0.0, %v2553
        %v2555 = vpop.f32.mrb[0].mxu0
        %v2556 = vadd.f32 0.0, %v2555
        %v2557 = vpop.f32.mrb[0].mxu0
        %v2558 = vadd.f32 0.0, %v2557
        %v2559 = vpop.f32.mrb[0].mxu0
        %v2560 = vadd.f32 0.0, %v2559
        %2561 = vmatprep.mubr.bf16.mxu0 %v1864
        %2562 = vmatmul.mubr.bf16.gmra.mrb[0].mxu0 %v1863
        %v2563 = vpop.f32.mrb[0].mxu0
        %v2564 = vadd.f32 0.0, %v2563
        %v2565 = vpop.f32.mrb[0].mxu0
        %v2566 = vadd.f32 0.0, %v2565
        %v2567 = vpop.f32.mrb[0].mxu0
        %v2568 = vadd.f32 0.0, %v2567
        %v2569 = vpop.f32.mrb[0].mxu0
        %v2570 = vadd.f32 0.0, %v2569
        %2571 = vmatprep.mubr.bf16.mxu0 %v1866
        %2572 = vmatmul.mubr.bf16.gmra.mrb[0].mxu0 %v1865
        %v2573 = vpop.f32.mrb[0].mxu0
        %v2574 = vadd.f32 0.0, %v2573
        %v2575 = vpop.f32.mrb[0].mxu0
        %v2576 = vadd.f32 0.0, %v2575
        %v2577 = vpop.f32.mrb[0].mxu0
        %v2578 = vadd.f32 0.0, %v2577
        %v2579 = vpop.f32.mrb[0].mxu0
        %v2580 = vadd.f32 0.0, %v2579
        %2581 = vmatprep.mubr.bf16.mxu0 %v1868
        %2582 = vmatmul.mubr.bf16.gmra.mrb[0].mxu0 %v1867
        %v2583 = vpop.f32.mrb[0].mxu0
        %v2584 = vadd.f32 0.0, %v2583
        %v2585 = vpop.f32.mrb[0].mxu0
        %v2586 = vadd.f32 0.0, %v2585
        %v2587 = vpop.f32.mrb[0].mxu0
        %v2588 = vadd.f32 0.0, %v2587
        %v2589 = vpop.f32.mrb[0].mxu0
        %v2590 = vadd.f32 0.0, %v2589
        %2591 = vmatprep.mubr.bf16.mxu0 %v1870
        %2592 = vmatmul.mubr.bf16.gmra.mrb[0].mxu0 %v1869
        %v2593 = vpop.f32.mrb[0].mxu0
        %v2594 = vadd.f32 0.0, %v2593
        %v2595 = vpop.f32.mrb[0].mxu0
        %v2596 = vadd.f32 0.0, %v2595
        %v2597 = vpop.f32.mrb[0].mxu0
        %v2598 = vadd.f32 0.0, %v2597
        %v2599 = vpop.f32.mrb[0].mxu0
        %v2600 = vadd.f32 0.0, %v2599
        %2601 = vmatprep.mubr.bf16.mxu0 %v1872
        %2602 = vmatmul.mubr.bf16.gmra.mrb[0].mxu0 %v1871
        %v2603 = vpop.f32.mrb[0].mxu0
        %v2604 = vadd.f32 0.0, %v2603
        %v2605 = vpop.f32.mrb[0].mxu0
        %v2606 = vadd.f32 0.0, %v2605
        %v2607 = vpop.f32.mrb[0].mxu0
        %v2608 = vadd.f32 0.0, %v2607
        %v2609 = vpop.f32.mrb[0].mxu0
        %v2610 = vadd.f32 0.0, %v2609
        %2611 = vmatprep.mubr.bf16.mxu0 %v1874
        %2612 = vmatmul.mubr.bf16.gmra.mrb[0].mxu0 %v1873
        %v2613 = vpop.f32.mrb[0].mxu0
        %v2614 = vadd.f32 0.0, %v2613
        %v2615 = vpop.f32.mrb[0].mxu0
        %v2616 = vadd.f32 0.0, %v2615
        %v2617 = vpop.f32.mrb[0].mxu0
        %v2618 = vadd.f32 0.0, %v2617
        %v2619 = vpop.f32.mrb[0].mxu0
        %v2620 = vadd.f32 0.0, %v2619
        %2621 = vmatprep.mubr.bf16.mxu0 %v1876
        %2622 = vmatmul.mubr.bf16.gmra.mrb[0].mxu0 %v1875
        %v2623 = vpop.f32.mrb[0].mxu0
        %v2624 = vadd.f32 0.0, %v2623
        %v2625 = vpop.f32.mrb[0].mxu0
        %v2626 = vadd.f32 0.0, %v2625
        %v2627 = vpop.f32.mrb[0].mxu0
        %v2628 = vadd.f32 0.0, %v2627
        %v2629 = vpop.f32.mrb[0].mxu0
        %v2630 = vadd.f32 0.0, %v2629
        %2631 = vmatprep.mubr.bf16.mxu0 %v1878
        %2632 = vmatmul.mubr.bf16.gmra.mrb[0].mxu0 %v1877
        %v2633 = vpop.f32.mrb[0].mxu0
        %v2634 = vadd.f32 0.0, %v2633
        %v2635 = vpop.f32.mrb[0].mxu0
        %v2636 = vadd.f32 0.0, %v2635
        %v2637 = vpop.f32.mrb[0].mxu0
        %v2638 = vadd.f32 0.0, %v2637
        %v2639 = vpop.f32.mrb[0].mxu0
        %v2640 = vadd.f32 0.0, %v2639
        %2641 = vmatprep.mubr.bf16.mxu0 %v1880
        %2642 = vmatmul.mubr.bf16.gmra.mrb[0].mxu0 %v1879
        %v2643 = vpop.f32.mrb[0].mxu0
        %v2644 = vadd.f32 0.0, %v2643
        %v2645 = vpop.f32.mrb[0].mxu0
        %v2646 = vadd.f32 0.0, %v2645
        %v2647 = vpop.f32.mrb[0].mxu0
        %v2648 = vadd.f32 0.0, %v2647
        %v2649 = vpop.f32.mrb[0].mxu0
        %v2650 = vadd.f32 0.0, %v2649
        %2651 = vdwg.mxu0
        %s2652 = scalar_lea.vmem [#allocation5], 512
        %v2653 = vld [vmem:[%s2652] sm:$0xff]
        %v2654 = vld [vmem:[%s2652 + $0x8] sm:$0xff]
        %v2655 = vld [vmem:[%s2652 + $0x10] sm:$0xff]
        %v2656 = vld [vmem:[%s2652 + $0x18] sm:$0xff]
        %v2657 = vld [vmem:[%s2652 + $0x20] sm:$0xff]
        %v2658 = vld [vmem:[%s2652 + $0x28] sm:$0xff]
        %v2659 = vld [vmem:[%s2652 + $0x30] sm:$0xff]
        %v2660 = vld [vmem:[%s2652 + $0x38] sm:$0xff]
        %v2661 = vld [vmem:[%s2652 + $0x40] sm:$0xff]
        %v2662 = vld [vmem:[%s2652 + $0x48] sm:$0xff]
        %v2663 = vld [vmem:[%s2652 + $0x50] sm:$0xff]
        %v2664 = vld [vmem:[%s2652 + $0x58] sm:$0xff]
        %v2665 = vld [vmem:[%s2652 + $0x60] sm:$0xff]
        %v2666 = vld [vmem:[%s2652 + $0x68] sm:$0xff]
        %v2667 = vld [vmem:[%s2652 + $0x70] sm:$0xff]
        %v2668 = vld [vmem:[%s2652 + $0x78] sm:$0xff]
        %v2669 = vld [vmem:[%s2652 + $0x80] sm:$0xff]
        %v2670 = vld [vmem:[%s2652 + $0x88] sm:$0xff]
        %v2671 = vld [vmem:[%s2652 + $0x90] sm:$0xff]
        %v2672 = vld [vmem:[%s2652 + $0x98] sm:$0xff]
        %v2673 = vld [vmem:[%s2652 + $0xa0] sm:$0xff]
        %v2674 = vld [vmem:[%s2652 + $0xa8] sm:$0xff]
        %v2675 = vld [vmem:[%s2652 + $0xb0] sm:$0xff]
        %v2676 = vld [vmem:[%s2652 + $0xb8] sm:$0xff]
        %v2677 = vld [vmem:[%s2652 + $0xc0] sm:$0xff]
        %v2678 = vld [vmem:[%s2652 + $0xc8] sm:$0xff]
        %v2679 = vld [vmem:[%s2652 + $0xd0] sm:$0xff]
        %v2680 = vld [vmem:[%s2652 + $0xd8] sm:$0xff]
        %v2681 = vld [vmem:[%s2652 + $0xe0] sm:$0xff]
        %v2682 = vld [vmem:[%s2652 + $0xe8] sm:$0xff]
        %v2683 = vld [vmem:[%s2652 + $0xf0] sm:$0xff]
        %v2684 = vld [vmem:[%s2652 + $0xf8] sm:$0xff]
        %v2717 = vunpack.c.l.b16 %v2653
        %v2718 = vunpack.c.h.b16 %v2653
        %v2719 = vunpack.c.l.b16 %v2654
        %v2720 = vunpack.c.h.b16 %v2654
        %v2721 = vunpack.c.l.b16 %v2655
        %v2722 = vunpack.c.h.b16 %v2655
        %v2723 = vunpack.c.l.b16 %v2656
        %v2724 = vunpack.c.h.b16 %v2656
        %v2725 = vunpack.c.l.b16 %v2657
        %v2726 = vunpack.c.h.b16 %v2657
        %v2727 = vunpack.c.l.b16 %v2658
        %v2728 = vunpack.c.h.b16 %v2658
        %v2729 = vunpack.c.l.b16 %v2659
        %v2730 = vunpack.c.h.b16 %v2659
        %v2731 = vunpack.c.l.b16 %v2660
        %v2732 = vunpack.c.h.b16 %v2660
        %v2733 = vunpack.c.l.b16 %v2661
        %v2734 = vunpack.c.h.b16 %v2661
        %v2735 = vunpack.c.l.b16 %v2662
        %v2736 = vunpack.c.h.b16 %v2662
        %v2737 = vunpack.c.l.b16 %v2663
        %v2738 = vunpack.c.h.b16 %v2663
        %v2739 = vunpack.c.l.b16 %v2664
        %v2740 = vunpack.c.h.b16 %v2664
        %v2741 = vunpack.c.l.b16 %v2665
        %v2742 = vunpack.c.h.b16 %v2665
        %v2743 = vunpack.c.l.b16 %v2666
        %v2744 = vunpack.c.h.b16 %v2666
        %v2745 = vunpack.c.l.b16 %v2667
        %v2746 = vunpack.c.h.b16 %v2667
        %v2747 = vunpack.c.l.b16 %v2668
        %v2748 = vunpack.c.h.b16 %v2668
        %v2749 = vunpack.c.l.b16 %v2669
        %v2750 = vunpack.c.h.b16 %v2669
        %v2751 = vunpack.c.l.b16 %v2670
        %v2752 = vunpack.c.h.b16 %v2670
        %v2753 = vunpack.c.l.b16 %v2671
        %v2754 = vunpack.c.h.b16 %v2671
        %v2755 = vunpack.c.l.b16 %v2672
        %v2756 = vunpack.c.h.b16 %v2672
        %v2757 = vunpack.c.l.b16 %v2673
        %v2758 = vunpack.c.h.b16 %v2673
        %v2759 = vunpack.c.l.b16 %v2674
        %v2760 = vunpack.c.h.b16 %v2674
        %v2761 = vunpack.c.l.b16 %v2675
        %v2762 = vunpack.c.h.b16 %v2675
        %v2763 = vunpack.c.l.b16 %v2676
        %v2764 = vunpack.c.h.b16 %v2676
        %v2765 = vunpack.c.l.b16 %v2677
        %v2766 = vunpack.c.h.b16 %v2677
        %v2767 = vunpack.c.l.b16 %v2678
        %v2768 = vunpack.c.h.b16 %v2678
        %v2769 = vunpack.c.l.b16 %v2679
        %v2770 = vunpack.c.h.b16 %v2679
        %v2771 = vunpack.c.l.b16 %v2680
        %v2772 = vunpack.c.h.b16 %v2680
        %v2773 = vunpack.c.l.b16 %v2681
        %v2774 = vunpack.c.h.b16 %v2681
        %v2775 = vunpack.c.l.b16 %v2682
        %v2776 = vunpack.c.h.b16 %v2682
        %v2777 = vunpack.c.l.b16 %v2683
        %v2778 = vunpack.c.h.b16 %v2683
        %v2779 = vunpack.c.l.b16 %v2684
        %v2780 = vunpack.c.h.b16 %v2684
        %v2781 = vpack.c.b16 %v2719, %v2717
        %v2782 = vpack.c.b16 %v2720, %v2718
        %v2783 = vpack.c.b16 %v2723, %v2721
        %v2784 = vpack.c.b16 %v2724, %v2722
        %v2785 = vpack.c.b16 %v2727, %v2725
        %v2786 = vpack.c.b16 %v2728, %v2726
        %v2787 = vpack.c.b16 %v2731, %v2729
        %v2788 = vpack.c.b16 %v2732, %v2730
        %v2789 = vpack.c.b16 %v2735, %v2733
        %v2790 = vpack.c.b16 %v2736, %v2734
        %v2791 = vpack.c.b16 %v2739, %v2737
        %v2792 = vpack.c.b16 %v2740, %v2738
        %v2793 = vpack.c.b16 %v2743, %v2741
        %v2794 = vpack.c.b16 %v2744, %v2742
        %v2795 = vpack.c.b16 %v2747, %v2745
        %v2796 = vpack.c.b16 %v2748, %v2746
        %v2797 = vpack.c.b16 %v2751, %v2749
        %v2798 = vpack.c.b16 %v2752, %v2750
        %v2799 = vpack.c.b16 %v2755, %v2753
        %v2800 = vpack.c.b16 %v2756, %v2754
        %v2801 = vpack.c.b16 %v2759, %v2757
        %v2802 = vpack.c.b16 %v2760, %v2758
        %v2803 = vpack.c.b16 %v2763, %v2761
        %v2804 = vpack.c.b16 %v2764, %v2762
        %v2805 = vpack.c.b16 %v2767, %v2765
        %v2806 = vpack.c.b16 %v2768, %v2766
        %v2807 = vpack.c.b16 %v2771, %v2769
        %v2808 = vpack.c.b16 %v2772, %v2770
        %v2809 = vpack.c.b16 %v2775, %v2773
        %v2810 = vpack.c.b16 %v2776, %v2774
        %v2811 = vpack.c.b16 %v2779, %v2777
        %v2812 = vpack.c.b16 %v2780, %v2778
        %2845 = vmatprep.subr.bf16.mxu0 %v2782
        %2846 = vmatpush1.bf16.msra.mxu0 %v2781
        %2847 = vmatprep.subr.bf16.mxu0 %v2784
        %2848 = vmatpush1.bf16.msra.mxu0 %v2783
        %2849 = vmatprep.subr.bf16.mxu0 %v2786
        %2850 = vmatpush1.bf16.msra.mxu0 %v2785
        %2851 = vmatprep.subr.bf16.mxu0 %v2788
        %2852 = vmatpush1.bf16.msra.mxu0 %v2787
        %2853 = vmatprep.subr.bf16.mxu0 %v2790
        %2854 = vmatpush1.bf16.msra.mxu0 %v2789
        %2855 = vmatprep.subr.bf16.mxu0 %v2792
        %2856 = vmatpush1.bf16.msra.mxu0 %v2791
        %2857 = vmatprep.subr.bf16.mxu0 %v2794
        %2858 = vmatpush1.bf16.msra.mxu0 %v2793
        %2859 = vmatprep.subr.bf16.mxu0 %v2796
        %2860 = vmatpush1.bf16.msra.mxu0 %v2795
        %2861 = vmatprep.subr.bf16.mxu0 %v2798
        %2862 = vmatpush1.bf16.msra.mxu0 %v2797
        %2863 = vmatprep.subr.bf16.mxu0 %v2800
        %2864 = vmatpush1.bf16.msra.mxu0 %v2799
        %2865 = vmatprep.subr.bf16.mxu0 %v2802
        %2866 = vmatpush1.bf16.msra.mxu0 %v2801
        %2867 = vmatprep.subr.bf16.mxu0 %v2804
        %2868 = vmatpush1.bf16.msra.mxu0 %v2803
        %2869 = vmatprep.subr.bf16.mxu0 %v2806
        %2870 = vmatpush1.bf16.msra.mxu0 %v2805
        %2871 = vmatprep.subr.bf16.mxu0 %v2808
        %2872 = vmatpush1.bf16.msra.mxu0 %v2807
        %2873 = vmatprep.subr.bf16.mxu0 %v2810
        %2874 = vmatpush1.bf16.msra.mxu0 %v2809
        %2875 = vmatprep.subr.bf16.mxu0 %v2812
        %2876 = vmatpush1.bf16.msra.mxu0 %v2811
        %2877 = vmatprep.mubr.bf16.mxu0 %v1850
        %2878 = vmatmul.mubr.bf16.gmra.mrb[0].mxu0 %v1849
        %v2879 = vpop.f32.mrb[0].mxu0
        %v2880 = vadd.f32 0.0, %v2879
        %v2881 = vpop.f32.mrb[0].mxu0
        %v2882 = vadd.f32 0.0, %v2881
        %v2883 = vpop.f32.mrb[0].mxu0
        %v2884 = vadd.f32 0.0, %v2883
        %v2885 = vpop.f32.mrb[0].mxu0
        %v2886 = vadd.f32 0.0, %v2885
        %2887 = vmatprep.mubr.bf16.mxu0 %v1852
        %2888 = vmatmul.mubr.bf16.gmra.mrb[0].mxu0 %v1851
        %v2889 = vpop.f32.mrb[0].mxu0
        %v2890 = vadd.f32 0.0, %v2889
        %v2891 = vpop.f32.mrb[0].mxu0
        %v2892 = vadd.f32 0.0, %v2891
        %v2893 = vpop.f32.mrb[0].mxu0
        %v2894 = vadd.f32 0.0, %v2893
        %v2895 = vpop.f32.mrb[0].mxu0
        %v2896 = vadd.f32 0.0, %v2895
        %2897 = vmatprep.mubr.bf16.mxu0 %v1854
        %2898 = vmatmul.mubr.bf16.gmra.mrb[0].mxu0 %v1853
        %v2899 = vpop.f32.mrb[0].mxu0
        %v2900 = vadd.f32 0.0, %v2899
        %v2901 = vpop.f32.mrb[0].mxu0
        %v2902 = vadd.f32 0.0, %v2901
        %v2903 = vpop.f32.mrb[0].mxu0
        %v2904 = vadd.f32 0.0, %v2903
        %v2905 = vpop.f32.mrb[0].mxu0
        %v2906 = vadd.f32 0.0, %v2905
        %2907 = vmatprep.mubr.bf16.mxu0 %v1856
        %2908 = vmatmul.mubr.bf16.gmra.mrb[0].mxu0 %v1855
        %v2909 = vpop.f32.mrb[0].mxu0
        %v2910 = vadd.f32 0.0, %v2909
        %v2911 = vpop.f32.mrb[0].mxu0
        %v2912 = vadd.f32 0.0, %v2911
        %v2913 = vpop.f32.mrb[0].mxu0
        %v2914 = vadd.f32 0.0, %v2913
        %v2915 = vpop.f32.mrb[0].mxu0
        %v2916 = vadd.f32 0.0, %v2915
        %2917 = vmatprep.mubr.bf16.mxu0 %v1858
        %2918 = vmatmul.mubr.bf16.gmra.mrb[0].mxu0 %v1857
        %v2919 = vpop.f32.mrb[0].mxu0
        %v2920 = vadd.f32 0.0, %v2919
        %v2921 = vpop.f32.mrb[0].mxu0
        %v2922 = vadd.f32 0.0, %v2921
        %v2923 = vpop.f32.mrb[0].mxu0
        %v2924 = vadd.f32 0.0, %v2923
        %v2925 = vpop.f32.mrb[0].mxu0
        %v2926 = vadd.f32 0.0, %v2925
        %2927 = vmatprep.mubr.bf16.mxu0 %v1860
        %2928 = vmatmul.mubr.bf16.gmra.mrb[0].mxu0 %v1859
        %v2929 = vpop.f32.mrb[0].mxu0
        %v2930 = vadd.f32 0.0, %v2929
        %v2931 = vpop.f32.mrb[0].mxu0
        %v2932 = vadd.f32 0.0, %v2931
        %v2933 = vpop.f32.mrb[0].mxu0
        %v2934 = vadd.f32 0.0, %v2933
        %v2935 = vpop.f32.mrb[0].mxu0
        %v2936 = vadd.f32 0.0, %v2935
        %2937 = vmatprep.mubr.bf16.mxu0 %v1862
        %2938 = vmatmul.mubr.bf16.gmra.mrb[0].mxu0 %v1861
        %v2939 = vpop.f32.mrb[0].mxu0
        %v2940 = vadd.f32 0.0, %v2939
        %v2941 = vpop.f32.mrb[0].mxu0
        %v2942 = vadd.f32 0.0, %v2941
        %v2943 = vpop.f32.mrb[0].mxu0
        %v2944 = vadd.f32 0.0, %v2943
        %v2945 = vpop.f32.mrb[0].mxu0
        %v2946 = vadd.f32 0.0, %v2945
        %2947 = vmatprep.mubr.bf16.mxu0 %v1864
        %2948 = vmatmul.mubr.bf16.gmra.mrb[0].mxu0 %v1863
        %v2949 = vpop.f32.mrb[0].mxu0
        %v2950 = vadd.f32 0.0, %v2949
        %v2951 = vpop.f32.mrb[0].mxu0
        %v2952 = vadd.f32 0.0, %v2951
        %v2953 = vpop.f32.mrb[0].mxu0
        %v2954 = vadd.f32 0.0, %v2953
        %v2955 = vpop.f32.mrb[0].mxu0
        %v2956 = vadd.f32 0.0, %v2955
        %2957 = vmatprep.mubr.bf16.mxu0 %v1866
        %2958 = vmatmul.mubr.bf16.gmra.mrb[0].mxu0 %v1865
        %v2959 = vpop.f32.mrb[0].mxu0
        %v2960 = vadd.f32 0.0, %v2959
        %v2961 = vpop.f32.mrb[0].mxu0
        %v2962 = vadd.f32 0.0, %v2961
        %v2963 = vpop.f32.mrb[0].mxu0
        %v2964 = vadd.f32 0.0, %v2963
        %v2965 = vpop.f32.mrb[0].mxu0
        %v2966 = vadd.f32 0.0, %v2965
        %2967 = vmatprep.mubr.bf16.mxu0 %v1868
        %2968 = vmatmul.mubr.bf16.gmra.mrb[0].mxu0 %v1867
        %v2969 = vpop.f32.mrb[0].mxu0
        %v2970 = vadd.f32 0.0, %v2969
        %v2971 = vpop.f32.mrb[0].mxu0
        %v2972 = vadd.f32 0.0, %v2971
        %v2973 = vpop.f32.mrb[0].mxu0
        %v2974 = vadd.f32 0.0, %v2973
        %v2975 = vpop.f32.mrb[0].mxu0
        %v2976 = vadd.f32 0.0, %v2975
        %2977 = vmatprep.mubr.bf16.mxu0 %v1870
        %2978 = vmatmul.mubr.bf16.gmra.mrb[0].mxu0 %v1869
        %v2979 = vpop.f32.mrb[0].mxu0
        %v2980 = vadd.f32 0.0, %v2979
        %v2981 = vpop.f32.mrb[0].mxu0
        %v2982 = vadd.f32 0.0, %v2981
        %v2983 = vpop.f32.mrb[0].mxu0
        %v2984 = vadd.f32 0.0, %v2983
        %v2985 = vpop.f32.mrb[0].mxu0
        %v2986 = vadd.f32 0.0, %v2985
        %2987 = vmatprep.mubr.bf16.mxu0 %v1872
        %2988 = vmatmul.mubr.bf16.gmra.mrb[0].mxu0 %v1871
        %v2989 = vpop.f32.mrb[0].mxu0
        %v2990 = vadd.f32 0.0, %v2989
        %v2991 = vpop.f32.mrb[0].mxu0
        %v2992 = vadd.f32 0.0, %v2991
        %v2993 = vpop.f32.mrb[0].mxu0
        %v2994 = vadd.f32 0.0, %v2993
        %v2995 = vpop.f32.mrb[0].mxu0
        %v2996 = vadd.f32 0.0, %v2995
        %2997 = vmatprep.mubr.bf16.mxu0 %v1874
        %2998 = vmatmul.mubr.bf16.gmra.mrb[0].mxu0 %v1873
        %v2999 = vpop.f32.mrb[0].mxu0
        %v3000 = vadd.f32 0.0, %v2999
        %v3001 = vpop.f32.mrb[0].mxu0
        %v3002 = vadd.f32 0.0, %v3001
        %v3003 = vpop.f32.mrb[0].mxu0
        %v3004 = vadd.f32 0.0, %v3003
        %v3005 = vpop.f32.mrb[0].mxu0
        %v3006 = vadd.f32 0.0, %v3005
        %3007 = vmatprep.mubr.bf16.mxu0 %v1876
        %3008 = vmatmul.mubr.bf16.gmra.mrb[0].mxu0 %v1875
        %v3009 = vpop.f32.mrb[0].mxu0
        %v3010 = vadd.f32 0.0, %v3009
        %v3011 = vpop.f32.mrb[0].mxu0
        %v3012 = vadd.f32 0.0, %v3011
        %v3013 = vpop.f32.mrb[0].mxu0
        %v3014 = vadd.f32 0.0, %v3013
        %v3015 = vpop.f32.mrb[0].mxu0
        %v3016 = vadd.f32 0.0, %v3015
        %3017 = vmatprep.mubr.bf16.mxu0 %v1878
        %3018 = vmatmul.mubr.bf16.gmra.mrb[0].mxu0 %v1877
        %v3019 = vpop.f32.mrb[0].mxu0
        %v3020 = vadd.f32 0.0, %v3019
        %v3021 = vpop.f32.mrb[0].mxu0
        %v3022 = vadd.f32 0.0, %v3021
        %v3023 = vpop.f32.mrb[0].mxu0
        %v3024 = vadd.f32 0.0, %v3023
        %v3025 = vpop.f32.mrb[0].mxu0
        %v3026 = vadd.f32 0.0, %v3025
        %3027 = vmatprep.mubr.bf16.mxu0 %v1880
        %3028 = vmatmul.mubr.bf16.gmra.mrb[0].mxu0 %v1879
        %v3029 = vpop.f32.mrb[0].mxu0
        %v3030 = vadd.f32 0.0, %v3029
        %v3031 = vpop.f32.mrb[0].mxu0
        %v3032 = vadd.f32 0.0, %v3031
        %v3033 = vpop.f32.mrb[0].mxu0
        %v3034 = vadd.f32 0.0, %v3033
        %v3035 = vpop.f32.mrb[0].mxu0
        %v3036 = vadd.f32 0.0, %v3035
        %3037 = vdwg.mxu0
        %v3038 = vrot.slane %v2108, 7
        %v3039 = vrot.slane %v2110, 7
        %v3040 = vrot.slane %v2112, 7
        %v3041 = vrot.slane %v2114, 7
        %v3042 = vrot.slane %v2118, 7
        %v3043 = vrot.slane %v2120, 7
        %v3044 = vrot.slane %v2122, 7
        %v3045 = vrot.slane %v2124, 7
        %v3046 = vrot.slane %v2128, 7
        %v3047 = vrot.slane %v2130, 7
        %v3048 = vrot.slane %v2132, 7
        %v3049 = vrot.slane %v2134, 7
        %v3050 = vrot.slane %v2138, 7
        %v3051 = vrot.slane %v2140, 7
        %v3052 = vrot.slane %v2142, 7
        %v3053 = vrot.slane %v2144, 7
        %v3054 = vrot.slane %v2148, 7
        %v3055 = vrot.slane %v2150, 7
        %v3056 = vrot.slane %v2152, 7
        %v3057 = vrot.slane %v2154, 7
        %v3058 = vrot.slane %v2158, 7
        %v3059 = vrot.slane %v2160, 7
        %v3060 = vrot.slane %v2162, 7
        %v3061 = vrot.slane %v2164, 7
        %v3062 = vrot.slane %v2168, 7
        %v3063 = vrot.slane %v2170, 7
        %v3064 = vrot.slane %v2172, 7
        %v3065 = vrot.slane %v2174, 7
        %v3066 = vrot.slane %v2178, 7
        %v3067 = vrot.slane %v2180, 7
        %v3068 = vrot.slane %v2182, 7
        %v3069 = vrot.slane %v2184, 7
        %v3070 = vrot.slane %v2188, 7
        %v3071 = vrot.slane %v2190, 7
        %v3072 = vrot.slane %v2192, 7
        %v3073 = vrot.slane %v2194, 7
        %v3074 = vrot.slane %v2198, 7
        %v3075 = vrot.slane %v2200, 7
        %v3076 = vrot.slane %v2202, 7
        %v3077 = vrot.slane %v2204, 7
        %v3078 = vrot.slane %v2208, 7
        %v3079 = vrot.slane %v2210, 7
        %v3080 = vrot.slane %v2212, 7
        %v3081 = vrot.slane %v2214, 7
        %v3082 = vrot.slane %v2218, 7
        %v3083 = vrot.slane %v2220, 7
        %v3084 = vrot.slane %v2222, 7
        %v3085 = vrot.slane %v2224, 7
        %v3086 = vrot.slane %v2228, 7
        %v3087 = vrot.slane %v2230, 7
        %v3088 = vrot.slane %v2232, 7
        %v3089 = vrot.slane %v2234, 7
        %v3090 = vrot.slane %v2238, 7
        %v3091 = vrot.slane %v2240, 7
        %v3092 = vrot.slane %v2242, 7
        %v3093 = vrot.slane %v2244, 7
        %v3094 = vrot.slane %v2248, 7
        %v3095 = vrot.slane %v2250, 7
        %v3096 = vrot.slane %v2252, 7
        %v3097 = vrot.slane %v2254, 7
        %v3098 = vrot.slane %v2258, 7
        %v3099 = vrot.slane %v2260, 7
        %v3100 = vrot.slane %v2262, 7
        %v3101 = vrot.slane %v2264, 7
        %vm3102 = vcmp.lt.s32.totalorder %v639, 1
        %v3103 = vsel %vm3102, %v3098, %v3100
        %v3104 = vsel %vm3102, %v3099, %v3101
        %v3105 = vsel %vm3102, %v3096, %v3098
        %v3106 = vsel %vm3102, %v3097, %v3099
        %v3107 = vsel %vm3102, %v3094, %v3096
        %v3108 = vsel %vm3102, %v3095, %v3097
        %v3109 = vsel %vm3102, %v3092, %v3094
        %v3110 = vsel %vm3102, %v3093, %v3095
        %v3111 = vsel %vm3102, %v3090, %v3092
        %v3112 = vsel %vm3102, %v3091, %v3093
        %v3113 = vsel %vm3102, %v3088, %v3090
        %v3114 = vsel %vm3102, %v3089, %v3091
        %v3115 = vsel %vm3102, %v3086, %v3088
        %v3116 = vsel %vm3102, %v3087, %v3089
        %v3117 = vsel %vm3102, %v3084, %v3086
        %v3118 = vsel %vm3102, %v3085, %v3087
        %v3119 = vsel %vm3102, %v3082, %v3084
        %v3120 = vsel %vm3102, %v3083, %v3085
        %v3121 = vsel %vm3102, %v3080, %v3082
        %v3122 = vsel %vm3102, %v3081, %v3083
        %v3123 = vsel %vm3102, %v3078, %v3080
        %v3124 = vsel %vm3102, %v3079, %v3081
        %v3125 = vsel %vm3102, %v3076, %v3078
        %v3126 = vsel %vm3102, %v3077, %v3079
        %v3127 = vsel %vm3102, %v3074, %v3076
        %v3128 = vsel %vm3102, %v3075, %v3077
        %v3129 = vsel %vm3102, %v3072, %v3074
        %v3130 = vsel %vm3102, %v3073, %v3075
        %v3131 = vsel %vm3102, %v3070, %v3072
        %v3132 = vsel %vm3102, %v3071, %v3073
        %v3133 = vsel %vm3102, %v3068, %v3070
        %v3134 = vsel %vm3102, %v3069, %v3071
        %v3135 = vsel %vm3102, %v3066, %v3068
        %v3136 = vsel %vm3102, %v3067, %v3069
        %v3137 = vsel %vm3102, %v3064, %v3066
        %v3138 = vsel %vm3102, %v3065, %v3067
        %v3139 = vsel %vm3102, %v3062, %v3064
        %v3140 = vsel %vm3102, %v3063, %v3065
        %v3141 = vsel %vm3102, %v3060, %v3062
        %v3142 = vsel %vm3102, %v3061, %v3063
        %v3143 = vsel %vm3102, %v3058, %v3060
        %v3144 = vsel %vm3102, %v3059, %v3061
        %v3145 = vsel %vm3102, %v3056, %v3058
        %v3146 = vsel %vm3102, %v3057, %v3059
        %v3147 = vsel %vm3102, %v3054, %v3056
        %v3148 = vsel %vm3102, %v3055, %v3057
        %v3149 = vsel %vm3102, %v3052, %v3054
        %v3150 = vsel %vm3102, %v3053, %v3055
        %v3151 = vsel %vm3102, %v3050, %v3052
        %v3152 = vsel %vm3102, %v3051, %v3053
        %v3153 = vsel %vm3102, %v3048, %v3050
        %v3154 = vsel %vm3102, %v3049, %v3051
        %v3155 = vsel %vm3102, %v3046, %v3048
        %v3156 = vsel %vm3102, %v3047, %v3049
        %v3157 = vsel %vm3102, %v3044, %v3046
        %v3158 = vsel %vm3102, %v3045, %v3047
        %v3159 = vsel %vm3102, %v3042, %v3044
        %v3160 = vsel %vm3102, %v3043, %v3045
        %v3161 = vsel %vm3102, %v3040, %v3042
        %v3162 = vsel %vm3102, %v3041, %v3043
        %v3163 = vsel %vm3102, %v3038, %v3040
        %v3164 = vsel %vm3102, %v3039, %v3041
        %v3165 = vsel %vm3102, %v3100, %v3038
        %v3166 = vsel %vm3102, %v3101, %v3039
        %v3167 = vsel %vm1055, 1, 0
        %v3168 = vsel %vm1056, 1, 0
        %v3169 = vsel %vm1057, 1, 0
        %v3170 = vsel %vm1058, 1, 0
        %v3171 = vsel %vm1059, 1, 0
        %v3172 = vsel %vm1060, 1, 0
        %v3173 = vsel %vm1061, 1, 0
        %v3174 = vsel %vm1062, 1, 0
        %v3175 = vsel %vm1063, 1, 0
        %v3176 = vsel %vm1064, 1, 0
        %v3177 = vsel %vm1065, 1, 0
        %v3178 = vsel %vm1066, 1, 0
        %v3179 = vsel %vm1067, 1, 0
        %v3180 = vsel %vm1068, 1, 0
        %v3181 = vsel %vm1069, 1, 0
        %v3182 = vsel %vm1070, 1, 0
        %v3183 = vsel %vm1071, 1, 0
        %v3184 = vsel %vm1072, 1, 0
        %v3185 = vsel %vm1073, 1, 0
        %v3186 = vsel %vm1074, 1, 0
        %v3187 = vsel %vm1075, 1, 0
        %v3188 = vsel %vm1076, 1, 0
        %v3189 = vsel %vm1077, 1, 0
        %v3190 = vsel %vm1078, 1, 0
        %v3191 = vsel %vm1079, 1, 0
        %v3192 = vsel %vm1080, 1, 0
        %v3193 = vsel %vm1081, 1, 0
        %v3194 = vsel %vm1082, 1, 0
        %v3195 = vsel %vm1083, 1, 0
        %v3196 = vsel %vm1084, 1, 0
        %v3197 = vsel %vm1085, 1, 0
        %v3198 = vsel %vm1086, 1, 0
        %vm3199 = vcmp.eq.s32.totalorder %v3167, 1
        %vm3200 = vcmp.eq.s32.totalorder %v3168, 1
        %vm3201 = vcmp.eq.s32.totalorder %v3169, 1
        %vm3202 = vcmp.eq.s32.totalorder %v3170, 1
        %vm3203 = vcmp.eq.s32.totalorder %v3171, 1
        %vm3204 = vcmp.eq.s32.totalorder %v3172, 1
        %vm3205 = vcmp.eq.s32.totalorder %v3173, 1
        %vm3206 = vcmp.eq.s32.totalorder %v3174, 1
        %vm3207 = vcmp.eq.s32.totalorder %v3175, 1
        %vm3208 = vcmp.eq.s32.totalorder %v3176, 1
        %vm3209 = vcmp.eq.s32.totalorder %v3177, 1
        %vm3210 = vcmp.eq.s32.totalorder %v3178, 1
        %vm3211 = vcmp.eq.s32.totalorder %v3179, 1
        %vm3212 = vcmp.eq.s32.totalorder %v3180, 1
        %vm3213 = vcmp.eq.s32.totalorder %v3181, 1
        %vm3214 = vcmp.eq.s32.totalorder %v3182, 1
        %vm3215 = vcmp.eq.s32.totalorder %v3183, 1
        %vm3216 = vcmp.eq.s32.totalorder %v3184, 1
        %vm3217 = vcmp.eq.s32.totalorder %v3185, 1
        %vm3218 = vcmp.eq.s32.totalorder %v3186, 1
        %vm3219 = vcmp.eq.s32.totalorder %v3187, 1
        %vm3220 = vcmp.eq.s32.totalorder %v3188, 1
        %vm3221 = vcmp.eq.s32.totalorder %v3189, 1
        %vm3222 = vcmp.eq.s32.totalorder %v3190, 1
        %vm3223 = vcmp.eq.s32.totalorder %v3191, 1
        %vm3224 = vcmp.eq.s32.totalorder %v3192, 1
        %vm3225 = vcmp.eq.s32.totalorder %v3193, 1
        %vm3226 = vcmp.eq.s32.totalorder %v3194, 1
        %vm3227 = vcmp.eq.s32.totalorder %v3195, 1
        %vm3228 = vcmp.eq.s32.totalorder %v3196, 1
        %vm3229 = vcmp.eq.s32.totalorder %v3197, 1
        %vm3230 = vcmp.eq.s32.totalorder %v3198, 1
        %v3231 = vsel %vm3199, 0.0, %v3165
        %v3232 = vsel %vm3199, 0.0, %v3166
        %v3233 = vsel %vm3200, 0.0, %v3163
        %v3234 = vsel %vm3200, 0.0, %v3164
        %v3235 = vsel %vm3201, 0.0, %v3161
        %v3236 = vsel %vm3201, 0.0, %v3162
        %v3237 = vsel %vm3202, 0.0, %v3159
        %v3238 = vsel %vm3202, 0.0, %v3160
        %v3239 = vsel %vm3203, 0.0, %v3157
        %v3240 = vsel %vm3203, 0.0, %v3158
        %v3241 = vsel %vm3204, 0.0, %v3155
        %v3242 = vsel %vm3204, 0.0, %v3156
        %v3243 = vsel %vm3205, 0.0, %v3153
        %v3244 = vsel %vm3205, 0.0, %v3154
        %v3245 = vsel %vm3206, 0.0, %v3151
        %v3246 = vsel %vm3206, 0.0, %v3152
        %v3247 = vsel %vm3207, 0.0, %v3149
        %v3248 = vsel %vm3207, 0.0, %v3150
        %v3249 = vsel %vm3208, 0.0, %v3147
        %v3250 = vsel %vm3208, 0.0, %v3148
        %v3251 = vsel %vm3209, 0.0, %v3145
        %v3252 = vsel %vm3209, 0.0, %v3146
        %v3253 = vsel %vm3210, 0.0, %v3143
        %v3254 = vsel %vm3210, 0.0, %v3144
        %v3255 = vsel %vm3211, 0.0, %v3141
        %v3256 = vsel %vm3211, 0.0, %v3142
        %v3257 = vsel %vm3212, 0.0, %v3139
        %v3258 = vsel %vm3212, 0.0, %v3140
        %v3259 = vsel %vm3213, 0.0, %v3137
        %v3260 = vsel %vm3213, 0.0, %v3138
        %v3261 = vsel %vm3214, 0.0, %v3135
        %v3262 = vsel %vm3214, 0.0, %v3136
        %v3263 = vsel %vm3215, 0.0, %v3133
        %v3264 = vsel %vm3215, 0.0, %v3134
        %v3265 = vsel %vm3216, 0.0, %v3131
        %v3266 = vsel %vm3216, 0.0, %v3132
        %v3267 = vsel %vm3217, 0.0, %v3129
        %v3268 = vsel %vm3217, 0.0, %v3130
        %v3269 = vsel %vm3218, 0.0, %v3127
        %v3270 = vsel %vm3218, 0.0, %v3128
        %v3271 = vsel %vm3219, 0.0, %v3125
        %v3272 = vsel %vm3219, 0.0, %v3126
        %v3273 = vsel %vm3220, 0.0, %v3123
        %v3274 = vsel %vm3220, 0.0, %v3124
        %v3275 = vsel %vm3221, 0.0, %v3121
        %v3276 = vsel %vm3221, 0.0, %v3122
        %v3277 = vsel %vm3222, 0.0, %v3119
        %v3278 = vsel %vm3222, 0.0, %v3120
        %v3279 = vsel %vm3223, 0.0, %v3117
        %v3280 = vsel %vm3223, 0.0, %v3118
        %v3281 = vsel %vm3224, 0.0, %v3115
        %v3282 = vsel %vm3224, 0.0, %v3116
        %v3283 = vsel %vm3225, 0.0, %v3113
        %v3284 = vsel %vm3225, 0.0, %v3114
        %v3285 = vsel %vm3226, 0.0, %v3111
        %v3286 = vsel %vm3226, 0.0, %v3112
        %v3287 = vsel %vm3227, 0.0, %v3109
        %v3288 = vsel %vm3227, 0.0, %v3110
        %v3289 = vsel %vm3228, 0.0, %v3107
        %v3290 = vsel %vm3228, 0.0, %v3108
        %v3291 = vsel %vm3229, 0.0, %v3105
        %v3292 = vsel %vm3229, 0.0, %v3106
        %v3293 = vsel %vm3230, 0.0, %v3103
        %v3294 = vsel %vm3230, 0.0, %v3104
        %v3295 = vrot.slane %v2880, 1
        %v3296 = vrot.slane %v2882, 1
        %v3297 = vrot.slane %v2884, 1
        %v3298 = vrot.slane %v2886, 1
        %v3299 = vrot.slane %v2890, 1
        %v3300 = vrot.slane %v2892, 1
        %v3301 = vrot.slane %v2894, 1
        %v3302 = vrot.slane %v2896, 1
        %v3303 = vrot.slane %v2900, 1
        %v3304 = vrot.slane %v2902, 1
        %v3305 = vrot.slane %v2904, 1
        %v3306 = vrot.slane %v2906, 1
        %v3307 = vrot.slane %v2910, 1
        %v3308 = vrot.slane %v2912, 1
        %v3309 = vrot.slane %v2914, 1
        %v3310 = vrot.slane %v2916, 1
        %v3311 = vrot.slane %v2920, 1
        %v3312 = vrot.slane %v2922, 1
        %v3313 = vrot.slane %v2924, 1
        %v3314 = vrot.slane %v2926, 1
        %v3315 = vrot.slane %v2930, 1
        %v3316 = vrot.slane %v2932, 1
        %v3317 = vrot.slane %v2934, 1
        %v3318 = vrot.slane %v2936, 1
        %v3319 = vrot.slane %v2940, 1
        %v3320 = vrot.slane %v2942, 1
        %v3321 = vrot.slane %v2944, 1
        %v3322 = vrot.slane %v2946, 1
        %v3323 = vrot.slane %v2950, 1
        %v3324 = vrot.slane %v2952, 1
        %v3325 = vrot.slane %v2954, 1
        %v3326 = vrot.slane %v2956, 1
        %v3327 = vrot.slane %v2960, 1
        %v3328 = vrot.slane %v2962, 1
        %v3329 = vrot.slane %v2964, 1
        %v3330 = vrot.slane %v2966, 1
        %v3331 = vrot.slane %v2970, 1
        %v3332 = vrot.slane %v2972, 1
        %v3333 = vrot.slane %v2974, 1
        %v3334 = vrot.slane %v2976, 1
        %v3335 = vrot.slane %v2980, 1
        %v3336 = vrot.slane %v2982, 1
        %v3337 = vrot.slane %v2984, 1
        %v3338 = vrot.slane %v2986, 1
        %v3339 = vrot.slane %v2990, 1
        %v3340 = vrot.slane %v2992, 1
        %v3341 = vrot.slane %v2994, 1
        %v3342 = vrot.slane %v2996, 1
        %v3343 = vrot.slane %v3000, 1
        %v3344 = vrot.slane %v3002, 1
        %v3345 = vrot.slane %v3004, 1
        %v3346 = vrot.slane %v3006, 1
        %v3347 = vrot.slane %v3010, 1
        %v3348 = vrot.slane %v3012, 1
        %v3349 = vrot.slane %v3014, 1
        %v3350 = vrot.slane %v3016, 1
        %v3351 = vrot.slane %v3020, 1
        %v3352 = vrot.slane %v3022, 1
        %v3353 = vrot.slane %v3024, 1
        %v3354 = vrot.slane %v3026, 1
        %v3355 = vrot.slane %v3030, 1
        %v3356 = vrot.slane %v3032, 1
        %v3357 = vrot.slane %v3034, 1
        %v3358 = vrot.slane %v3036, 1
        %vm3359 = vcmp.lt.s32.totalorder %v639, 7
        %v3360 = vsel %vm3359, %v3355, %v3357
        %v3361 = vsel %vm3359, %v3356, %v3358
        %v3362 = vsel %vm3359, %v3353, %v3355
        %v3363 = vsel %vm3359, %v3354, %v3356
        %v3364 = vsel %vm3359, %v3351, %v3353
        %v3365 = vsel %vm3359, %v3352, %v3354
        %v3366 = vsel %vm3359, %v3349, %v3351
        %v3367 = vsel %vm3359, %v3350, %v3352
        %v3368 = vsel %vm3359, %v3347, %v3349
        %v3369 = vsel %vm3359, %v3348, %v3350
        %v3370 = vsel %vm3359, %v3345, %v3347
        %v3371 = vsel %vm3359, %v3346, %v3348
        %v3372 = vsel %vm3359, %v3343, %v3345
        %v3373 = vsel %vm3359, %v3344, %v3346
        %v3374 = vsel %vm3359, %v3341, %v3343
        %v3375 = vsel %vm3359, %v3342, %v3344
        %v3376 = vsel %vm3359, %v3339, %v3341
        %v3377 = vsel %vm3359, %v3340, %v3342
        %v3378 = vsel %vm3359, %v3337, %v3339
        %v3379 = vsel %vm3359, %v3338, %v3340
        %v3380 = vsel %vm3359, %v3335, %v3337
        %v3381 = vsel %vm3359, %v3336, %v3338
        %v3382 = vsel %vm3359, %v3333, %v3335
        %v3383 = vsel %vm3359, %v3334, %v3336
        %v3384 = vsel %vm3359, %v3331, %v3333
        %v3385 = vsel %vm3359, %v3332, %v3334
        %v3386 = vsel %vm3359, %v3329, %v3331
        %v3387 = vsel %vm3359, %v3330, %v3332
        %v3388 = vsel %vm3359, %v3327, %v3329
        %v3389 = vsel %vm3359, %v3328, %v3330
        %v3390 = vsel %vm3359, %v3325, %v3327
        %v3391 = vsel %vm3359, %v3326, %v3328
        %v3392 = vsel %vm3359, %v3323, %v3325
        %v3393 = vsel %vm3359, %v3324, %v3326
        %v3394 = vsel %vm3359, %v3321, %v3323
        %v3395 = vsel %vm3359, %v3322, %v3324
        %v3396 = vsel %vm3359, %v3319, %v3321
        %v3397 = vsel %vm3359, %v3320, %v3322
        %v3398 = vsel %vm3359, %v3317, %v3319
        %v3399 = vsel %vm3359, %v3318, %v3320
        %v3400 = vsel %vm3359, %v3315, %v3317
        %v3401 = vsel %vm3359, %v3316, %v3318
        %v3402 = vsel %vm3359, %v3313, %v3315
        %v3403 = vsel %vm3359, %v3314, %v3316
        %v3404 = vsel %vm3359, %v3311, %v3313
        %v3405 = vsel %vm3359, %v3312, %v3314
        %v3406 = vsel %vm3359, %v3309, %v3311
        %v3407 = vsel %vm3359, %v3310, %v3312
        %v3408 = vsel %vm3359, %v3307, %v3309
        %v3409 = vsel %vm3359, %v3308, %v3310
        %v3410 = vsel %vm3359, %v3305, %v3307
        %v3411 = vsel %vm3359, %v3306, %v3308
        %v3412 = vsel %vm3359, %v3303, %v3305
        %v3413 = vsel %vm3359, %v3304, %v3306
        %v3414 = vsel %vm3359, %v3301, %v3303
        %v3415 = vsel %vm3359, %v3302, %v3304
        %v3416 = vsel %vm3359, %v3299, %v3301
        %v3417 = vsel %vm3359, %v3300, %v3302
        %v3418 = vsel %vm3359, %v3297, %v3299
        %v3419 = vsel %vm3359, %v3298, %v3300
        %v3420 = vsel %vm3359, %v3295, %v3297
        %v3421 = vsel %vm3359, %v3296, %v3298
        %v3422 = vsel %vm3359, %v3357, %v3295
        %v3423 = vsel %vm3359, %v3358, %v3296
        %v3424 = vsel %vm1087, 1, 0
        %v3425 = vsel %vm1088, 1, 0
        %v3426 = vsel %vm1089, 1, 0
        %v3427 = vsel %vm1090, 1, 0
        %v3428 = vsel %vm1091, 1, 0
        %v3429 = vsel %vm1092, 1, 0
        %v3430 = vsel %vm1093, 1, 0
        %v3431 = vsel %vm1094, 1, 0
        %v3432 = vsel %vm1095, 1, 0
        %v3433 = vsel %vm1096, 1, 0
        %v3434 = vsel %vm1097, 1, 0
        %v3435 = vsel %vm1098, 1, 0
        %v3436 = vsel %vm1099, 1, 0
        %v3437 = vsel %vm1100, 1, 0
        %v3438 = vsel %vm1101, 1, 0
        %v3439 = vsel %vm1102, 1, 0
        %v3440 = vsel %vm1103, 1, 0
        %v3441 = vsel %vm1104, 1, 0
        %v3442 = vsel %vm1105, 1, 0
        %v3443 = vsel %vm1106, 1, 0
        %v3444 = vsel %vm1107, 1, 0
        %v3445 = vsel %vm1108, 1, 0
        %v3446 = vsel %vm1109, 1, 0
        %v3447 = vsel %vm1110, 1, 0
        %v3448 = vsel %vm1111, 1, 0
        %v3449 = vsel %vm1112, 1, 0
        %v3450 = vsel %vm1113, 1, 0
        %v3451 = vsel %vm1114, 1, 0
        %v3452 = vsel %vm1115, 1, 0
        %v3453 = vsel %vm1116, 1, 0
        %v3454 = vsel %vm1117, 1, 0
        %v3455 = vsel %vm1118, 1, 0
        %vm3456 = vcmp.eq.s32.totalorder %v3424, 1
        %vm3457 = vcmp.eq.s32.totalorder %v3425, 1
        %vm3458 = vcmp.eq.s32.totalorder %v3426, 1
        %vm3459 = vcmp.eq.s32.totalorder %v3427, 1
        %vm3460 = vcmp.eq.s32.totalorder %v3428, 1
        %vm3461 = vcmp.eq.s32.totalorder %v3429, 1
        %vm3462 = vcmp.eq.s32.totalorder %v3430, 1
        %vm3463 = vcmp.eq.s32.totalorder %v3431, 1
        %vm3464 = vcmp.eq.s32.totalorder %v3432, 1
        %vm3465 = vcmp.eq.s32.totalorder %v3433, 1
        %vm3466 = vcmp.eq.s32.totalorder %v3434, 1
        %vm3467 = vcmp.eq.s32.totalorder %v3435, 1
        %vm3468 = vcmp.eq.s32.totalorder %v3436, 1
        %vm3469 = vcmp.eq.s32.totalorder %v3437, 1
        %vm3470 = vcmp.eq.s32.totalorder %v3438, 1
        %vm3471 = vcmp.eq.s32.totalorder %v3439, 1
        %vm3472 = vcmp.eq.s32.totalorder %v3440, 1
        %vm3473 = vcmp.eq.s32.totalorder %v3441, 1
        %vm3474 = vcmp.eq.s32.totalorder %v3442, 1
        %vm3475 = vcmp.eq.s32.totalorder %v3443, 1
        %vm3476 = vcmp.eq.s32.totalorder %v3444, 1
        %vm3477 = vcmp.eq.s32.totalorder %v3445, 1
        %vm3478 = vcmp.eq.s32.totalorder %v3446, 1
        %vm3479 = vcmp.eq.s32.totalorder %v3447, 1
        %vm3480 = vcmp.eq.s32.totalorder %v3448, 1
        %vm3481 = vcmp.eq.s32.totalorder %v3449, 1
        %vm3482 = vcmp.eq.s32.totalorder %v3450, 1
        %vm3483 = vcmp.eq.s32.totalorder %v3451, 1
        %vm3484 = vcmp.eq.s32.totalorder %v3452, 1
        %vm3485 = vcmp.eq.s32.totalorder %v3453, 1
        %vm3486 = vcmp.eq.s32.totalorder %v3454, 1
        %vm3487 = vcmp.eq.s32.totalorder %v3455, 1
        %v3488 = vsel %vm3456, 0.0, %v3420
        %v3489 = vsel %vm3456, 0.0, %v3421
        %v3490 = vsel %vm3457, 0.0, %v3418
        %v3491 = vsel %vm3457, 0.0, %v3419
        %v3492 = vsel %vm3458, 0.0, %v3416
        %v3493 = vsel %vm3458, 0.0, %v3417
        %v3494 = vsel %vm3459, 0.0, %v3414
        %v3495 = vsel %vm3459, 0.0, %v3415
        %v3496 = vsel %vm3460, 0.0, %v3412
        %v3497 = vsel %vm3460, 0.0, %v3413
        %v3498 = vsel %vm3461, 0.0, %v3410
        %v3499 = vsel %vm3461, 0.0, %v3411
        %v3500 = vsel %vm3462, 0.0, %v3408
        %v3501 = vsel %vm3462, 0.0, %v3409
        %v3502 = vsel %vm3463, 0.0, %v3406
        %v3503 = vsel %vm3463, 0.0, %v3407
        %v3504 = vsel %vm3464, 0.0, %v3404
        %v3505 = vsel %vm3464, 0.0, %v3405
        %v3506 = vsel %vm3465, 0.0, %v3402
        %v3507 = vsel %vm3465, 0.0, %v3403
        %v3508 = vsel %vm3466, 0.0, %v3400
        %v3509 = vsel %vm3466, 0.0, %v3401
        %v3510 = vsel %vm3467, 0.0, %v3398
        %v3511 = vsel %vm3467, 0.0, %v3399
        %v3512 = vsel %vm3468, 0.0, %v3396
        %v3513 = vsel %vm3468, 0.0, %v3397
        %v3514 = vsel %vm3469, 0.0, %v3394
        %v3515 = vsel %vm3469, 0.0, %v3395
        %v3516 = vsel %vm3470, 0.0, %v3392
        %v3517 = vsel %vm3470, 0.0, %v3393
        %v3518 = vsel %vm3471, 0.0, %v3390
        %v3519 = vsel %vm3471, 0.0, %v3391
        %v3520 = vsel %vm3472, 0.0, %v3388
        %v3521 = vsel %vm3472, 0.0, %v3389
        %v3522 = vsel %vm3473, 0.0, %v3386
        %v3523 = vsel %vm3473, 0.0, %v3387
        %v3524 = vsel %vm3474, 0.0, %v3384
        %v3525 = vsel %vm3474, 0.0, %v3385
        %v3526 = vsel %vm3475, 0.0, %v3382
        %v3527 = vsel %vm3475, 0.0, %v3383
        %v3528 = vsel %vm3476, 0.0, %v3380
        %v3529 = vsel %vm3476, 0.0, %v3381
        %v3530 = vsel %vm3477, 0.0, %v3378
        %v3531 = vsel %vm3477, 0.0, %v3379
        %v3532 = vsel %vm3478, 0.0, %v3376
        %v3533 = vsel %vm3478, 0.0, %v3377
        %v3534 = vsel %vm3479, 0.0, %v3374
        %v3535 = vsel %vm3479, 0.0, %v3375
        %v3536 = vsel %vm3480, 0.0, %v3372
        %v3537 = vsel %vm3480, 0.0, %v3373
        %v3538 = vsel %vm3481, 0.0, %v3370
        %v3539 = vsel %vm3481, 0.0, %v3371
        %v3540 = vsel %vm3482, 0.0, %v3368
        %v3541 = vsel %vm3482, 0.0, %v3369
        %v3542 = vsel %vm3483, 0.0, %v3366
        %v3543 = vsel %vm3483, 0.0, %v3367
        %v3544 = vsel %vm3484, 0.0, %v3364
        %v3545 = vsel %vm3484, 0.0, %v3365
        %v3546 = vsel %vm3485, 0.0, %v3362
        %v3547 = vsel %vm3485, 0.0, %v3363
        %v3548 = vsel %vm3486, 0.0, %v3360
        %v3549 = vsel %vm3486, 0.0, %v3361
        %v3550 = vsel %vm3487, 0.0, %v3422
        %v3551 = vsel %vm3487, 0.0, %v3423
        %v3552 = vadd.f32 %v3231, %v2494
        %v3553 = vadd.f32 %v3232, %v2496
        %v3554 = vadd.f32 %v3233, %v2498
        %v3555 = vadd.f32 %v3234, %v2500
        %v3556 = vadd.f32 %v3235, %v2504
        %v3557 = vadd.f32 %v3236, %v2506
        %v3558 = vadd.f32 %v3237, %v2508
        %v3559 = vadd.f32 %v3238, %v2510
        %v3560 = vadd.f32 %v3239, %v2514
        %v3561 = vadd.f32 %v3240, %v2516
        %v3562 = vadd.f32 %v3241, %v2518
        %v3563 = vadd.f32 %v3242, %v2520
        %v3564 = vadd.f32 %v3243, %v2524
        %v3565 = vadd.f32 %v3244, %v2526
        %v3566 = vadd.f32 %v3245, %v2528
        %v3567 = vadd.f32 %v3246, %v2530
        %v3568 = vadd.f32 %v3247, %v2534
        %v3569 = vadd.f32 %v3248, %v2536
        %v3570 = vadd.f32 %v3249, %v2538
        %v3571 = vadd.f32 %v3250, %v2540
        %v3572 = vadd.f32 %v3251, %v2544
        %v3573 = vadd.f32 %v3252, %v2546
        %v3574 = vadd.f32 %v3253, %v2548
        %v3575 = vadd.f32 %v3254, %v2550
        %v3576 = vadd.f32 %v3255, %v2554
        %v3577 = vadd.f32 %v3256, %v2556
        %v3578 = vadd.f32 %v3257, %v2558
        %v3579 = vadd.f32 %v3258, %v2560
        %v3580 = vadd.f32 %v3259, %v2564
        %v3581 = vadd.f32 %v3260, %v2566
        %v3582 = vadd.f32 %v3261, %v2568
        %v3583 = vadd.f32 %v3262, %v2570
        %v3584 = vadd.f32 %v3263, %v2574
        %v3585 = vadd.f32 %v3264, %v2576
        %v3586 = vadd.f32 %v3265, %v2578
        %v3587 = vadd.f32 %v3266, %v2580
        %v3588 = vadd.f32 %v3267, %v2584
        %v3589 = vadd.f32 %v3268, %v2586
        %v3590 = vadd.f32 %v3269, %v2588
        %v3591 = vadd.f32 %v3270, %v2590
        %v3592 = vadd.f32 %v3271, %v2594
        %v3593 = vadd.f32 %v3272, %v2596
        %v3594 = vadd.f32 %v3273, %v2598
        %v3595 = vadd.f32 %v3274, %v2600
        %v3596 = vadd.f32 %v3275, %v2604
        %v3597 = vadd.f32 %v3276, %v2606
        %v3598 = vadd.f32 %v3277, %v2608
        %v3599 = vadd.f32 %v3278, %v2610
        %v3600 = vadd.f32 %v3279, %v2614
        %v3601 = vadd.f32 %v3280, %v2616
        %v3602 = vadd.f32 %v3281, %v2618
        %v3603 = vadd.f32 %v3282, %v2620
        %v3604 = vadd.f32 %v3283, %v2624
        %v3605 = vadd.f32 %v3284, %v2626
        %v3606 = vadd.f32 %v3285, %v2628
        %v3607 = vadd.f32 %v3286, %v2630
        %v3608 = vadd.f32 %v3287, %v2634
        %v3609 = vadd.f32 %v3288, %v2636
        %v3610 = vadd.f32 %v3289, %v2638
        %v3611 = vadd.f32 %v3290, %v2640
        %v3612 = vadd.f32 %v3291, %v2644
        %v3613 = vadd.f32 %v3292, %v2646
        %v3614 = vadd.f32 %v3293, %v2648
        %v3615 = vadd.f32 %v3294, %v2650
        %v3616 = vadd.f32 %v3552, %v3488
        %v3617 = vadd.f32 %v3553, %v3489
        %v3618 = vadd.f32 %v3554, %v3490
        %v3619 = vadd.f32 %v3555, %v3491
        %v3620 = vadd.f32 %v3556, %v3492
        %v3621 = vadd.f32 %v3557, %v3493
        %v3622 = vadd.f32 %v3558, %v3494
        %v3623 = vadd.f32 %v3559, %v3495
        %v3624 = vadd.f32 %v3560, %v3496
        %v3625 = vadd.f32 %v3561, %v3497
        %v3626 = vadd.f32 %v3562, %v3498
        %v3627 = vadd.f32 %v3563, %v3499
        %v3628 = vadd.f32 %v3564, %v3500
        %v3629 = vadd.f32 %v3565, %v3501
        %v3630 = vadd.f32 %v3566, %v3502
        %v3631 = vadd.f32 %v3567, %v3503
        %v3632 = vadd.f32 %v3568, %v3504
        %v3633 = vadd.f32 %v3569, %v3505
        %v3634 = vadd.f32 %v3570, %v3506
        %v3635 = vadd.f32 %v3571, %v3507
        %v3636 = vadd.f32 %v3572, %v3508
        %v3637 = vadd.f32 %v3573, %v3509
        %v3638 = vadd.f32 %v3574, %v3510
        %v3639 = vadd.f32 %v3575, %v3511
        %v3640 = vadd.f32 %v3576, %v3512
        %v3641 = vadd.f32 %v3577, %v3513
        %v3642 = vadd.f32 %v3578, %v3514
        %v3643 = vadd.f32 %v3579, %v3515
        %v3644 = vadd.f32 %v3580, %v3516
        %v3645 = vadd.f32 %v3581, %v3517
        %v3646 = vadd.f32 %v3582, %v3518
        %v3647 = vadd.f32 %v3583, %v3519
        %v3648 = vadd.f32 %v3584, %v3520
        %v3649 = vadd.f32 %v3585, %v3521
        %v3650 = vadd.f32 %v3586, %v3522
        %v3651 = vadd.f32 %v3587, %v3523
        %v3652 = vadd.f32 %v3588, %v3524
        %v3653 = vadd.f32 %v3589, %v3525
        %v3654 = vadd.f32 %v3590, %v3526
        %v3655 = vadd.f32 %v3591, %v3527
        %v3656 = vadd.f32 %v3592, %v3528
        %v3657 = vadd.f32 %v3593, %v3529
        %v3658 = vadd.f32 %v3594, %v3530
        %v3659 = vadd.f32 %v3595, %v3531
        %v3660 = vadd.f32 %v3596, %v3532
        %v3661 = vadd.f32 %v3597, %v3533
        %v3662 = vadd.f32 %v3598, %v3534
        %v3663 = vadd.f32 %v3599, %v3535
        %v3664 = vadd.f32 %v3600, %v3536
        %v3665 = vadd.f32 %v3601, %v3537
        %v3666 = vadd.f32 %v3602, %v3538
        %v3667 = vadd.f32 %v3603, %v3539
        %v3668 = vadd.f32 %v3604, %v3540
        %v3669 = vadd.f32 %v3605, %v3541
        %v3670 = vadd.f32 %v3606, %v3542
        %v3671 = vadd.f32 %v3607, %v3543
        %v3672 = vadd.f32 %v3608, %v3544
        %v3673 = vadd.f32 %v3609, %v3545
        %v3674 = vadd.f32 %v3610, %v3546
        %v3675 = vadd.f32 %v3611, %v3547
        %v3676 = vadd.f32 %v3612, %v3548
        %v3677 = vadd.f32 %v3613, %v3549
        %v3678 = vadd.f32 %v3614, %v3550
        %v3679 = vadd.f32 %v3615, %v3551
        %v3681 = vlaneseq
        %v3682 = vshrl.u32 %v3681, 7
        %v3683 = vsub.s32 0, %v3682
        %v3684 = vrot.slane %v1848, %v3683
        %v3685 = vlaneseq
        %v3686 = vshrl.u32 %v3685, 7
        %v3687 = vsub.s32 1, %v3686
        %v3688 = vrot.slane %v1848, %v3687
        %v3691 = vadd.f32 %v3616, %v3684
        %v3692 = vadd.f32 %v3617, %v3688
        %v3693 = vadd.f32 %v3618, %v3684
        %v3694 = vadd.f32 %v3619, %v3688
        %v3695 = vadd.f32 %v3620, %v3684
        %v3696 = vadd.f32 %v3621, %v3688
        %v3697 = vadd.f32 %v3622, %v3684
        %v3698 = vadd.f32 %v3623, %v3688
        %v3699 = vadd.f32 %v3624, %v3684
        %v3700 = vadd.f32 %v3625, %v3688
        %v3701 = vadd.f32 %v3626, %v3684
        %v3702 = vadd.f32 %v3627, %v3688
        %v3703 = vadd.f32 %v3628, %v3684
        %v3704 = vadd.f32 %v3629, %v3688
        %v3705 = vadd.f32 %v3630, %v3684
        %v3706 = vadd.f32 %v3631, %v3688
        %v3707 = vadd.f32 %v3632, %v3684
        %v3708 = vadd.f32 %v3633, %v3688
        %v3709 = vadd.f32 %v3634, %v3684
        %v3710 = vadd.f32 %v3635, %v3688
        %v3711 = vadd.f32 %v3636, %v3684
        %v3712 = vadd.f32 %v3637, %v3688
        %v3713 = vadd.f32 %v3638, %v3684
        %v3714 = vadd.f32 %v3639, %v3688
        %v3715 = vadd.f32 %v3640, %v3684
        %v3716 = vadd.f32 %v3641, %v3688
        %v3717 = vadd.f32 %v3642, %v3684
        %v3718 = vadd.f32 %v3643, %v3688
        %v3719 = vadd.f32 %v3644, %v3684
        %v3720 = vadd.f32 %v3645, %v3688
        %v3721 = vadd.f32 %v3646, %v3684
        %v3722 = vadd.f32 %v3647, %v3688
        %v3723 = vadd.f32 %v3648, %v3684
        %v3724 = vadd.f32 %v3649, %v3688
        %v3725 = vadd.f32 %v3650, %v3684
        %v3726 = vadd.f32 %v3651, %v3688
        %v3727 = vadd.f32 %v3652, %v3684
        %v3728 = vadd.f32 %v3653, %v3688
        %v3729 = vadd.f32 %v3654, %v3684
        %v3730 = vadd.f32 %v3655, %v3688
        %v3731 = vadd.f32 %v3656, %v3684
        %v3732 = vadd.f32 %v3657, %v3688
        %v3733 = vadd.f32 %v3658, %v3684
        %v3734 = vadd.f32 %v3659, %v3688
        %v3735 = vadd.f32 %v3660, %v3684
        %v3736 = vadd.f32 %v3661, %v3688
        %v3737 = vadd.f32 %v3662, %v3684
        %v3738 = vadd.f32 %v3663, %v3688
        %v3739 = vadd.f32 %v3664, %v3684
        %v3740 = vadd.f32 %v3665, %v3688
        %v3741 = vadd.f32 %v3666, %v3684
        %v3742 = vadd.f32 %v3667, %v3688
        %v3743 = vadd.f32 %v3668, %v3684
        %v3744 = vadd.f32 %v3669, %v3688
        %v3745 = vadd.f32 %v3670, %v3684
        %v3746 = vadd.f32 %v3671, %v3688
        %v3747 = vadd.f32 %v3672, %v3684
        %v3748 = vadd.f32 %v3673, %v3688
        %v3749 = vadd.f32 %v3674, %v3684
        %v3750 = vadd.f32 %v3675, %v3688
        %v3751 = vadd.f32 %v3676, %v3684
        %v3752 = vadd.f32 %v3677, %v3688
        %v3753 = vadd.f32 %v3678, %v3684
        %v3754 = vadd.f32 %v3679, %v3688
        %v3755 = vld [vmem:[%s5] sm:$0x3]
        %v3756 = vld [vmem:[%s6] sm:$0x3]
        %v3757 = vadd.f32 %v3691, %v3692
        %3758 = vadd.xlane.f32.xlu0 %v3757
        %v3759 = vpop.xlane.xlu0 %3758
        %v3760 = vadd.f32 %v3693, %v3694
        %3761 = vadd.xlane.f32.xlu0 %v3760
        %v3762 = vpop.xlane.xlu0 %3761
        %v3763 = vadd.f32 %v3695, %v3696
        %3764 = vadd.xlane.f32.xlu0 %v3763
        %v3765 = vpop.xlane.xlu0 %3764
        %v3766 = vadd.f32 %v3697, %v3698
        %3767 = vadd.xlane.f32.xlu0 %v3766
        %v3768 = vpop.xlane.xlu0 %3767
        %v3769 = vadd.f32 %v3699, %v3700
        %3770 = vadd.xlane.f32.xlu0 %v3769
        %v3771 = vpop.xlane.xlu0 %3770
        %v3772 = vadd.f32 %v3701, %v3702
        %3773 = vadd.xlane.f32.xlu0 %v3772
        %v3774 = vpop.xlane.xlu0 %3773
        %v3775 = vadd.f32 %v3703, %v3704
        %3776 = vadd.xlane.f32.xlu0 %v3775
        %v3777 = vpop.xlane.xlu0 %3776
        %v3778 = vadd.f32 %v3705, %v3706
        %3779 = vadd.xlane.f32.xlu0 %v3778
        %v3780 = vpop.xlane.xlu0 %3779
        %v3781 = vadd.f32 %v3707, %v3708
        %3782 = vadd.xlane.f32.xlu0 %v3781
        %v3783 = vpop.xlane.xlu0 %3782
        %v3784 = vadd.f32 %v3709, %v3710
        %3785 = vadd.xlane.f32.xlu0 %v3784
        %v3786 = vpop.xlane.xlu0 %3785
        %v3787 = vadd.f32 %v3711, %v3712
        %3788 = vadd.xlane.f32.xlu0 %v3787
        %v3789 = vpop.xlane.xlu0 %3788
        %v3790 = vadd.f32 %v3713, %v3714
        %3791 = vadd.xlane.f32.xlu0 %v3790
        %v3792 = vpop.xlane.xlu0 %3791
        %v3793 = vadd.f32 %v3715, %v3716
        %3794 = vadd.xlane.f32.xlu0 %v3793
        %v3795 = vpop.xlane.xlu0 %3794
        %v3796 = vadd.f32 %v3717, %v3718
        %3797 = vadd.xlane.f32.xlu0 %v3796
        %v3798 = vpop.xlane.xlu0 %3797
        %v3799 = vadd.f32 %v3719, %v3720
        %3800 = vadd.xlane.f32.xlu0 %v3799
        %v3801 = vpop.xlane.xlu0 %3800
        %v3802 = vadd.f32 %v3721, %v3722
        %3803 = vadd.xlane.f32.xlu0 %v3802
        %v3804 = vpop.xlane.xlu0 %3803
        %v3805 = vadd.f32 %v3723, %v3724
        %3806 = vadd.xlane.f32.xlu0 %v3805
        %v3807 = vpop.xlane.xlu0 %3806
        %v3808 = vadd.f32 %v3725, %v3726
        %3809 = vadd.xlane.f32.xlu0 %v3808
        %v3810 = vpop.xlane.xlu0 %3809
        %v3811 = vadd.f32 %v3727, %v3728
        %3812 = vadd.xlane.f32.xlu0 %v3811
        %v3813 = vpop.xlane.xlu0 %3812
        %v3814 = vadd.f32 %v3729, %v3730
        %3815 = vadd.xlane.f32.xlu0 %v3814
        %v3816 = vpop.xlane.xlu0 %3815
        %v3817 = vadd.f32 %v3731, %v3732
        %3818 = vadd.xlane.f32.xlu0 %v3817
        %v3819 = vpop.xlane.xlu0 %3818
        %v3820 = vadd.f32 %v3733, %v3734
        %3821 = vadd.xlane.f32.xlu0 %v3820
        %v3822 = vpop.xlane.xlu0 %3821
        %v3823 = vadd.f32 %v3735, %v3736
        %3824 = vadd.xlane.f32.xlu0 %v3823
        %v3825 = vpop.xlane.xlu0 %3824
        %v3826 = vadd.f32 %v3737, %v3738
        %3827 = vadd.xlane.f32.xlu0 %v3826
        %v3828 = vpop.xlane.xlu0 %3827
        %v3829 = vadd.f32 %v3739, %v3740
        %3830 = vadd.xlane.f32.xlu0 %v3829
        %v3831 = vpop.xlane.xlu0 %3830
        %v3832 = vadd.f32 %v3741, %v3742
        %3833 = vadd.xlane.f32.xlu0 %v3832
        %v3834 = vpop.xlane.xlu0 %3833
        %v3835 = vadd.f32 %v3743, %v3744
        %3836 = vadd.xlane.f32.xlu0 %v3835
        %v3837 = vpop.xlane.xlu0 %3836
        %v3838 = vadd.f32 %v3745, %v3746
        %3839 = vadd.xlane.f32.xlu0 %v3838
        %v3840 = vpop.xlane.xlu0 %3839
        %v3841 = vadd.f32 %v3747, %v3748
        %3842 = vadd.xlane.f32.xlu0 %v3841
        %v3843 = vpop.xlane.xlu0 %3842
        %v3844 = vadd.f32 %v3749, %v3750
        %3845 = vadd.xlane.f32.xlu0 %v3844
        %v3846 = vpop.xlane.xlu0 %3845
        %v3847 = vadd.f32 %v3751, %v3752
        %3848 = vadd.xlane.f32.xlu0 %v3847
        %v3849 = vpop.xlane.xlu0 %3848
        %v3850 = vadd.f32 %v3753, %v3754
        %3851 = vadd.xlane.f32.xlu0 %v3850
        %v3852 = vpop.xlane.xlu0 %3851
        %v3853 = vmul.f32 %v3759, %v1217
        %v3854 = vmul.f32 %v3762, %v1217
        %v3855 = vmul.f32 %v3765, %v1217
        %v3856 = vmul.f32 %v3768, %v1217
        %v3857 = vmul.f32 %v3771, %v1217
        %v3858 = vmul.f32 %v3774, %v1217
        %v3859 = vmul.f32 %v3777, %v1217
        %v3860 = vmul.f32 %v3780, %v1217
        %v3861 = vmul.f32 %v3783, %v1217
        %v3862 = vmul.f32 %v3786, %v1217
        %v3863 = vmul.f32 %v3789, %v1217
        %v3864 = vmul.f32 %v3792, %v1217
        %v3865 = vmul.f32 %v3795, %v1217
        %v3866 = vmul.f32 %v3798, %v1217
        %v3867 = vmul.f32 %v3801, %v1217
        %v3868 = vmul.f32 %v3804, %v1217
        %v3869 = vmul.f32 %v3807, %v1217
        %v3870 = vmul.f32 %v3810, %v1217
        %v3871 = vmul.f32 %v3813, %v1217
        %v3872 = vmul.f32 %v3816, %v1217
        %v3873 = vmul.f32 %v3819, %v1217
        %v3874 = vmul.f32 %v3822, %v1217
        %v3875 = vmul.f32 %v3825, %v1217
        %v3876 = vmul.f32 %v3828, %v1217
        %v3877 = vmul.f32 %v3831, %v1217
        %v3878 = vmul.f32 %v3834, %v1217
        %v3879 = vmul.f32 %v3837, %v1217
        %v3880 = vmul.f32 %v3840, %v1217
        %v3881 = vmul.f32 %v3843, %v1217
        %v3882 = vmul.f32 %v3846, %v1217
        %v3883 = vmul.f32 %v3849, %v1217
        %v3884 = vmul.f32 %v3852, %v1217
        %v3885 = vsub.f32 %v3691, %v3853
        %v3886 = vsub.f32 %v3692, %v3853
        %v3887 = vsub.f32 %v3693, %v3854
        %v3888 = vsub.f32 %v3694, %v3854
        %v3889 = vsub.f32 %v3695, %v3855
        %v3890 = vsub.f32 %v3696, %v3855
        %v3891 = vsub.f32 %v3697, %v3856
        %v3892 = vsub.f32 %v3698, %v3856
        %v3893 = vsub.f32 %v3699, %v3857
        %v3894 = vsub.f32 %v3700, %v3857
        %v3895 = vsub.f32 %v3701, %v3858
        %v3896 = vsub.f32 %v3702, %v3858
        %v3897 = vsub.f32 %v3703, %v3859
        %v3898 = vsub.f32 %v3704, %v3859
        %v3899 = vsub.f32 %v3705, %v3860
        %v3900 = vsub.f32 %v3706, %v3860
        %v3901 = vsub.f32 %v3707, %v3861
        %v3902 = vsub.f32 %v3708, %v3861
        %v3903 = vsub.f32 %v3709, %v3862
        %v3904 = vsub.f32 %v3710, %v3862
        %v3905 = vsub.f32 %v3711, %v3863
        %v3906 = vsub.f32 %v3712, %v3863
        %v3907 = vsub.f32 %v3713, %v3864
        %v3908 = vsub.f32 %v3714, %v3864
        %v3909 = vsub.f32 %v3715, %v3865
        %v3910 = vsub.f32 %v3716, %v3865
        %v3911 = vsub.f32 %v3717, %v3866
        %v3912 = vsub.f32 %v3718, %v3866
        %v3913 = vsub.f32 %v3719, %v3867
        %v3914 = vsub.f32 %v3720, %v3867
        %v3915 = vsub.f32 %v3721, %v3868
        %v3916 = vsub.f32 %v3722, %v3868
        %v3917 = vsub.f32 %v3723, %v3869
        %v3918 = vsub.f32 %v3724, %v3869
        %v3919 = vsub.f32 %v3725, %v3870
        %v3920 = vsub.f32 %v3726, %v3870
        %v3921 = vsub.f32 %v3727, %v3871
        %v3922 = vsub.f32 %v3728, %v3871
        %v3923 = vsub.f32 %v3729, %v3872
        %v3924 = vsub.f32 %v3730, %v3872
        %v3925 = vsub.f32 %v3731, %v3873
        %v3926 = vsub.f32 %v3732, %v3873
        %v3927 = vsub.f32 %v3733, %v3874
        %v3928 = vsub.f32 %v3734, %v3874
        %v3929 = vsub.f32 %v3735, %v3875
        %v3930 = vsub.f32 %v3736, %v3875
        %v3931 = vsub.f32 %v3737, %v3876
        %v3932 = vsub.f32 %v3738, %v3876
        %v3933 = vsub.f32 %v3739, %v3877
        %v3934 = vsub.f32 %v3740, %v3877
        %v3935 = vsub.f32 %v3741, %v3878
        %v3936 = vsub.f32 %v3742, %v3878
        %v3937 = vsub.f32 %v3743, %v3879
        %v3938 = vsub.f32 %v3744, %v3879
        %v3939 = vsub.f32 %v3745, %v3880
        %v3940 = vsub.f32 %v3746, %v3880
        %v3941 = vsub.f32 %v3747, %v3881
        %v3942 = vsub.f32 %v3748, %v3881
        %v3943 = vsub.f32 %v3749, %v3882
        %v3944 = vsub.f32 %v3750, %v3882
        %v3945 = vsub.f32 %v3751, %v3883
        %v3946 = vsub.f32 %v3752, %v3883
        %v3947 = vsub.f32 %v3753, %v3884
        %v3948 = vsub.f32 %v3754, %v3884
        %v3949 = vmul.f32 %v3885, %v3885
        %v3950 = vmul.f32 %v3886, %v3886
        %v3951 = vmul.f32 %v3887, %v3887
        %v3952 = vmul.f32 %v3888, %v3888
        %v3953 = vmul.f32 %v3889, %v3889
        %v3954 = vmul.f32 %v3890, %v3890
        %v3955 = vmul.f32 %v3891, %v3891
        %v3956 = vmul.f32 %v3892, %v3892
        %v3957 = vmul.f32 %v3893, %v3893
        %v3958 = vmul.f32 %v3894, %v3894
        %v3959 = vmul.f32 %v3895, %v3895
        %v3960 = vmul.f32 %v3896, %v3896
        %v3961 = vmul.f32 %v3897, %v3897
        %v3962 = vmul.f32 %v3898, %v3898
        %v3963 = vmul.f32 %v3899, %v3899
        %v3964 = vmul.f32 %v3900, %v3900
        %v3965 = vmul.f32 %v3901, %v3901
        %v3966 = vmul.f32 %v3902, %v3902
        %v3967 = vmul.f32 %v3903, %v3903
        %v3968 = vmul.f32 %v3904, %v3904
        %v3969 = vmul.f32 %v3905, %v3905
        %v3970 = vmul.f32 %v3906, %v3906
        %v3971 = vmul.f32 %v3907, %v3907
        %v3972 = vmul.f32 %v3908, %v3908
        %v3973 = vmul.f32 %v3909, %v3909
        %v3974 = vmul.f32 %v3910, %v3910
        %v3975 = vmul.f32 %v3911, %v3911
        %v3976 = vmul.f32 %v3912, %v3912
        %v3977 = vmul.f32 %v3913, %v3913
        %v3978 = vmul.f32 %v3914, %v3914
        %v3979 = vmul.f32 %v3915, %v3915
        %v3980 = vmul.f32 %v3916, %v3916
        %v3981 = vmul.f32 %v3917, %v3917
        %v3982 = vmul.f32 %v3918, %v3918
        %v3983 = vmul.f32 %v3919, %v3919
        %v3984 = vmul.f32 %v3920, %v3920
        %v3985 = vmul.f32 %v3921, %v3921
        %v3986 = vmul.f32 %v3922, %v3922
        %v3987 = vmul.f32 %v3923, %v3923
        %v3988 = vmul.f32 %v3924, %v3924
        %v3989 = vmul.f32 %v3925, %v3925
        %v3990 = vmul.f32 %v3926, %v3926
        %v3991 = vmul.f32 %v3927, %v3927
        %v3992 = vmul.f32 %v3928, %v3928
        %v3993 = vmul.f32 %v3929, %v3929
        %v3994 = vmul.f32 %v3930, %v3930
        %v3995 = vmul.f32 %v3931, %v3931
        %v3996 = vmul.f32 %v3932, %v3932
        %v3997 = vmul.f32 %v3933, %v3933
        %v3998 = vmul.f32 %v3934, %v3934
        %v3999 = vmul.f32 %v3935, %v3935
        %v4000 = vmul.f32 %v3936, %v3936
        %v4001 = vmul.f32 %v3937, %v3937
        %v4002 = vmul.f32 %v3938, %v3938
        %v4003 = vmul.f32 %v3939, %v3939
        %v4004 = vmul.f32 %v3940, %v3940
        %v4005 = vmul.f32 %v3941, %v3941
        %v4006 = vmul.f32 %v3942, %v3942
        %v4007 = vmul.f32 %v3943, %v3943
        %v4008 = vmul.f32 %v3944, %v3944
        %v4009 = vmul.f32 %v3945, %v3945
        %v4010 = vmul.f32 %v3946, %v3946
        %v4011 = vmul.f32 %v3947, %v3947
        %v4012 = vmul.f32 %v3948, %v3948
        %v4013 = vadd.f32 %v3949, %v3950
        %4014 = vadd.xlane.f32.xlu0 %v4013
        %v4015 = vpop.xlane.xlu0 %4014
        %v4016 = vadd.f32 %v3951, %v3952
        %4017 = vadd.xlane.f32.xlu0 %v4016
        %v4018 = vpop.xlane.xlu0 %4017
        %v4019 = vadd.f32 %v3953, %v3954
        %4020 = vadd.xlane.f32.xlu0 %v4019
        %v4021 = vpop.xlane.xlu0 %4020
        %v4022 = vadd.f32 %v3955, %v3956
        %4023 = vadd.xlane.f32.xlu0 %v4022
        %v4024 = vpop.xlane.xlu0 %4023
        %v4025 = vadd.f32 %v3957, %v3958
        %4026 = vadd.xlane.f32.xlu0 %v4025
        %v4027 = vpop.xlane.xlu0 %4026
        %v4028 = vadd.f32 %v3959, %v3960
        %4029 = vadd.xlane.f32.xlu0 %v4028
        %v4030 = vpop.xlane.xlu0 %4029
        %v4031 = vadd.f32 %v3961, %v3962
        %4032 = vadd.xlane.f32.xlu0 %v4031
        %v4033 = vpop.xlane.xlu0 %4032
        %v4034 = vadd.f32 %v3963, %v3964
        %4035 = vadd.xlane.f32.xlu0 %v4034
        %v4036 = vpop.xlane.xlu0 %4035
        %v4037 = vadd.f32 %v3965, %v3966
        %4038 = vadd.xlane.f32.xlu0 %v4037
        %v4039 = vpop.xlane.xlu0 %4038
        %v4040 = vadd.f32 %v3967, %v3968
        %4041 = vadd.xlane.f32.xlu0 %v4040
        %v4042 = vpop.xlane.xlu0 %4041
        %v4043 = vadd.f32 %v3969, %v3970
        %4044 = vadd.xlane.f32.xlu0 %v4043
        %v4045 = vpop.xlane.xlu0 %4044
        %v4046 = vadd.f32 %v3971, %v3972
        %4047 = vadd.xlane.f32.xlu0 %v4046
        %v4048 = vpop.xlane.xlu0 %4047
        %v4049 = vadd.f32 %v3973, %v3974
        %4050 = vadd.xlane.f32.xlu0 %v4049
        %v4051 = vpop.xlane.xlu0 %4050
        %v4052 = vadd.f32 %v3975, %v3976
        %4053 = vadd.xlane.f32.xlu0 %v4052
        %v4054 = vpop.xlane.xlu0 %4053
        %v4055 = vadd.f32 %v3977, %v3978
        %4056 = vadd.xlane.f32.xlu0 %v4055
        %v4057 = vpop.xlane.xlu0 %4056
        %v4058 = vadd.f32 %v3979, %v3980
        %4059 = vadd.xlane.f32.xlu0 %v4058
        %v4060 = vpop.xlane.xlu0 %4059
        %v4061 = vadd.f32 %v3981, %v3982
        %4062 = vadd.xlane.f32.xlu0 %v4061
        %v4063 = vpop.xlane.xlu0 %4062
        %v4064 = vadd.f32 %v3983, %v3984
        %4065 = vadd.xlane.f32.xlu0 %v4064
        %v4066 = vpop.xlane.xlu0 %4065
        %v4067 = vadd.f32 %v3985, %v3986
        %4068 = vadd.xlane.f32.xlu0 %v4067
        %v4069 = vpop.xlane.xlu0 %4068
        %v4070 = vadd.f32 %v3987, %v3988
        %4071 = vadd.xlane.f32.xlu0 %v4070
        %v4072 = vpop.xlane.xlu0 %4071
        %v4073 = vadd.f32 %v3989, %v3990
        %4074 = vadd.xlane.f32.xlu0 %v4073
        %v4075 = vpop.xlane.xlu0 %4074
        %v4076 = vadd.f32 %v3991, %v3992
        %4077 = vadd.xlane.f32.xlu0 %v4076
        %v4078 = vpop.xlane.xlu0 %4077
        %v4079 = vadd.f32 %v3993, %v3994
        %4080 = vadd.xlane.f32.xlu0 %v4079
        %v4081 = vpop.xlane.xlu0 %4080
        %v4082 = vadd.f32 %v3995, %v3996
        %4083 = vadd.xlane.f32.xlu0 %v4082
        %v4084 = vpop.xlane.xlu0 %4083
        %v4085 = vadd.f32 %v3997, %v3998
        %4086 = vadd.xlane.f32.xlu0 %v4085
        %v4087 = vpop.xlane.xlu0 %4086
        %v4088 = vadd.f32 %v3999, %v4000
        %4089 = vadd.xlane.f32.xlu0 %v4088
        %v4090 = vpop.xlane.xlu0 %4089
        %v4091 = vadd.f32 %v4001, %v4002
        %4092 = vadd.xlane.f32.xlu0 %v4091
        %v4093 = vpop.xlane.xlu0 %4092
        %v4094 = vadd.f32 %v4003, %v4004
        %4095 = vadd.xlane.f32.xlu0 %v4094
        %v4096 = vpop.xlane.xlu0 %4095
        %v4097 = vadd.f32 %v4005, %v4006
        %4098 = vadd.xlane.f32.xlu0 %v4097
        %v4099 = vpop.xlane.xlu0 %4098
        %v4100 = vadd.f32 %v4007, %v4008
        %4101 = vadd.xlane.f32.xlu0 %v4100
        %v4102 = vpop.xlane.xlu0 %4101
        %v4103 = vadd.f32 %v4009, %v4010
        %4104 = vadd.xlane.f32.xlu0 %v4103
        %v4105 = vpop.xlane.xlu0 %4104
        %v4106 = vadd.f32 %v4011, %v4012
        %4107 = vadd.xlane.f32.xlu0 %v4106
        %v4108 = vpop.xlane.xlu0 %4107
        %v4109 = vmul.f32 %v4015, %v1217
        %v4110 = vmul.f32 %v4018, %v1217
        %v4111 = vmul.f32 %v4021, %v1217
        %v4112 = vmul.f32 %v4024, %v1217
        %v4113 = vmul.f32 %v4027, %v1217
        %v4114 = vmul.f32 %v4030, %v1217
        %v4115 = vmul.f32 %v4033, %v1217
        %v4116 = vmul.f32 %v4036, %v1217
        %v4117 = vmul.f32 %v4039, %v1217
        %v4118 = vmul.f32 %v4042, %v1217
        %v4119 = vmul.f32 %v4045, %v1217
        %v4120 = vmul.f32 %v4048, %v1217
        %v4121 = vmul.f32 %v4051, %v1217
        %v4122 = vmul.f32 %v4054, %v1217
        %v4123 = vmul.f32 %v4057, %v1217
        %v4124 = vmul.f32 %v4060, %v1217
        %v4125 = vmul.f32 %v4063, %v1217
        %v4126 = vmul.f32 %v4066, %v1217
        %v4127 = vmul.f32 %v4069, %v1217
        %v4128 = vmul.f32 %v4072, %v1217
        %v4129 = vmul.f32 %v4075, %v1217
        %v4130 = vmul.f32 %v4078, %v1217
        %v4131 = vmul.f32 %v4081, %v1217
        %v4132 = vmul.f32 %v4084, %v1217
        %v4133 = vmul.f32 %v4087, %v1217
        %v4134 = vmul.f32 %v4090, %v1217
        %v4135 = vmul.f32 %v4093, %v1217
        %v4136 = vmul.f32 %v4096, %v1217
        %v4137 = vmul.f32 %v4099, %v1217
        %v4138 = vmul.f32 %v4102, %v1217
        %v4139 = vmul.f32 %v4105, %v1217
        %v4140 = vmul.f32 %v4108, %v1217
        %v4141 = vadd.f32 %v4109, 1e-05
        %v4142 = vadd.f32 %v4110, 1e-05
        %v4143 = vadd.f32 %v4111, 1e-05
        %v4144 = vadd.f32 %v4112, 1e-05
        %v4145 = vadd.f32 %v4113, 1e-05
        %v4146 = vadd.f32 %v4114, 1e-05
        %v4147 = vadd.f32 %v4115, 1e-05
        %v4148 = vadd.f32 %v4116, 1e-05
        %v4149 = vadd.f32 %v4117, 1e-05
        %v4150 = vadd.f32 %v4118, 1e-05
        %v4151 = vadd.f32 %v4119, 1e-05
        %v4152 = vadd.f32 %v4120, 1e-05
        %v4153 = vadd.f32 %v4121, 1e-05
        %v4154 = vadd.f32 %v4122, 1e-05
        %v4155 = vadd.f32 %v4123, 1e-05
        %v4156 = vadd.f32 %v4124, 1e-05
        %v4157 = vadd.f32 %v4125, 1e-05
        %v4158 = vadd.f32 %v4126, 1e-05
        %v4159 = vadd.f32 %v4127, 1e-05
        %v4160 = vadd.f32 %v4128, 1e-05
        %v4161 = vadd.f32 %v4129, 1e-05
        %v4162 = vadd.f32 %v4130, 1e-05
        %v4163 = vadd.f32 %v4131, 1e-05
        %v4164 = vadd.f32 %v4132, 1e-05
        %v4165 = vadd.f32 %v4133, 1e-05
        %v4166 = vadd.f32 %v4134, 1e-05
        %v4167 = vadd.f32 %v4135, 1e-05
        %v4168 = vadd.f32 %v4136, 1e-05
        %v4169 = vadd.f32 %v4137, 1e-05
        %v4170 = vadd.f32 %v4138, 1e-05
        %v4171 = vadd.f32 %v4139, 1e-05
        %v4172 = vadd.f32 %v4140, 1e-05
        %v4173 = vrsqrt.pop %v4141
        %v4174 = vrsqrt.pop %v4142
        %v4175 = vrsqrt.pop %v4143
        %v4176 = vrsqrt.pop %v4144
        %v4177 = vrsqrt.pop %v4145
        %v4178 = vrsqrt.pop %v4146
        %v4179 = vrsqrt.pop %v4147
        %v4180 = vrsqrt.pop %v4148
        %v4181 = vrsqrt.pop %v4149
        %v4182 = vrsqrt.pop %v4150
        %v4183 = vrsqrt.pop %v4151
        %v4184 = vrsqrt.pop %v4152
        %v4185 = vrsqrt.pop %v4153
        %v4186 = vrsqrt.pop %v4154
        %v4187 = vrsqrt.pop %v4155
        %v4188 = vrsqrt.pop %v4156
        %v4189 = vrsqrt.pop %v4157
        %v4190 = vrsqrt.pop %v4158
        %v4191 = vrsqrt.pop %v4159
        %v4192 = vrsqrt.pop %v4160
        %v4193 = vrsqrt.pop %v4161
        %v4194 = vrsqrt.pop %v4162
        %v4195 = vrsqrt.pop %v4163
        %v4196 = vrsqrt.pop %v4164
        %v4197 = vrsqrt.pop %v4165
        %v4198 = vrsqrt.pop %v4166
        %v4199 = vrsqrt.pop %v4167
        %v4200 = vrsqrt.pop %v4168
        %v4201 = vrsqrt.pop %v4169
        %v4202 = vrsqrt.pop %v4170
        %v4203 = vrsqrt.pop %v4171
        %v4204 = vrsqrt.pop %v4172
        %v4205 = vmul.f32 %v3885, %v4173
        %v4206 = vmul.f32 %v3886, %v4173
        %v4207 = vmul.f32 %v3887, %v4174
        %v4208 = vmul.f32 %v3888, %v4174
        %v4209 = vmul.f32 %v3889, %v4175
        %v4210 = vmul.f32 %v3890, %v4175
        %v4211 = vmul.f32 %v3891, %v4176
        %v4212 = vmul.f32 %v3892, %v4176
        %v4213 = vmul.f32 %v3893, %v4177
        %v4214 = vmul.f32 %v3894, %v4177
        %v4215 = vmul.f32 %v3895, %v4178
        %v4216 = vmul.f32 %v3896, %v4178
        %v4217 = vmul.f32 %v3897, %v4179
        %v4218 = vmul.f32 %v3898, %v4179
        %v4219 = vmul.f32 %v3899, %v4180
        %v4220 = vmul.f32 %v3900, %v4180
        %v4221 = vmul.f32 %v3901, %v4181
        %v4222 = vmul.f32 %v3902, %v4181
        %v4223 = vmul.f32 %v3903, %v4182
        %v4224 = vmul.f32 %v3904, %v4182
        %v4225 = vmul.f32 %v3905, %v4183
        %v4226 = vmul.f32 %v3906, %v4183
        %v4227 = vmul.f32 %v3907, %v4184
        %v4228 = vmul.f32 %v3908, %v4184
        %v4229 = vmul.f32 %v3909, %v4185
        %v4230 = vmul.f32 %v3910, %v4185
        %v4231 = vmul.f32 %v3911, %v4186
        %v4232 = vmul.f32 %v3912, %v4186
        %v4233 = vmul.f32 %v3913, %v4187
        %v4234 = vmul.f32 %v3914, %v4187
        %v4235 = vmul.f32 %v3915, %v4188
        %v4236 = vmul.f32 %v3916, %v4188
        %v4237 = vmul.f32 %v3917, %v4189
        %v4238 = vmul.f32 %v3918, %v4189
        %v4239 = vmul.f32 %v3919, %v4190
        %v4240 = vmul.f32 %v3920, %v4190
        %v4241 = vmul.f32 %v3921, %v4191
        %v4242 = vmul.f32 %v3922, %v4191
        %v4243 = vmul.f32 %v3923, %v4192
        %v4244 = vmul.f32 %v3924, %v4192
        %v4245 = vmul.f32 %v3925, %v4193
        %v4246 = vmul.f32 %v3926, %v4193
        %v4247 = vmul.f32 %v3927, %v4194
        %v4248 = vmul.f32 %v3928, %v4194
        %v4249 = vmul.f32 %v3929, %v4195
        %v4250 = vmul.f32 %v3930, %v4195
        %v4251 = vmul.f32 %v3931, %v4196
        %v4252 = vmul.f32 %v3932, %v4196
        %v4253 = vmul.f32 %v3933, %v4197
        %v4254 = vmul.f32 %v3934, %v4197
        %v4255 = vmul.f32 %v3935, %v4198
        %v4256 = vmul.f32 %v3936, %v4198
        %v4257 = vmul.f32 %v3937, %v4199
        %v4258 = vmul.f32 %v3938, %v4199
        %v4259 = vmul.f32 %v3939, %v4200
        %v4260 = vmul.f32 %v3940, %v4200
        %v4261 = vmul.f32 %v3941, %v4201
        %v4262 = vmul.f32 %v3942, %v4201
        %v4263 = vmul.f32 %v3943, %v4202
        %v4264 = vmul.f32 %v3944, %v4202
        %v4265 = vmul.f32 %v3945, %v4203
        %v4266 = vmul.f32 %v3946, %v4203
        %v4267 = vmul.f32 %v3947, %v4204
        %v4268 = vmul.f32 %v3948, %v4204
        %v4270 = vlaneseq
        %v4271 = vshrl.u32 %v4270, 7
        %v4272 = vsub.s32 0, %v4271
        %v4273 = vrot.slane %v3755, %v4272
        %v4274 = vlaneseq
        %v4275 = vshrl.u32 %v4274, 7
        %v4276 = vsub.s32 1, %v4275
        %v4277 = vrot.slane %v3755, %v4276
        %v4280 = vmul.f32 %v4205, %v4273
        %v4281 = vmul.f32 %v4206, %v4277
        %v4282 = vmul.f32 %v4207, %v4273
        %v4283 = vmul.f32 %v4208, %v4277
        %v4284 = vmul.f32 %v4209, %v4273
        %v4285 = vmul.f32 %v4210, %v4277
        %v4286 = vmul.f32 %v4211, %v4273
        %v4287 = vmul.f32 %v4212, %v4277
        %v4288 = vmul.f32 %v4213, %v4273
        %v4289 = vmul.f32 %v4214, %v4277
        %v4290 = vmul.f32 %v4215, %v4273
        %v4291 = vmul.f32 %v4216, %v4277
        %v4292 = vmul.f32 %v4217, %v4273
        %v4293 = vmul.f32 %v4218, %v4277
        %v4294 = vmul.f32 %v4219, %v4273
        %v4295 = vmul.f32 %v4220, %v4277
        %v4296 = vmul.f32 %v4221, %v4273
        %v4297 = vmul.f32 %v4222, %v4277
        %v4298 = vmul.f32 %v4223, %v4273
        %v4299 = vmul.f32 %v4224, %v4277
        %v4300 = vmul.f32 %v4225, %v4273
        %v4301 = vmul.f32 %v4226, %v4277
        %v4302 = vmul.f32 %v4227, %v4273
        %v4303 = vmul.f32 %v4228, %v4277
        %v4304 = vmul.f32 %v4229, %v4273
        %v4305 = vmul.f32 %v4230, %v4277
        %v4306 = vmul.f32 %v4231, %v4273
        %v4307 = vmul.f32 %v4232, %v4277
        %v4308 = vmul.f32 %v4233, %v4273
        %v4309 = vmul.f32 %v4234, %v4277
        %v4310 = vmul.f32 %v4235, %v4273
        %v4311 = vmul.f32 %v4236, %v4277
        %v4312 = vmul.f32 %v4237, %v4273
        %v4313 = vmul.f32 %v4238, %v4277
        %v4314 = vmul.f32 %v4239, %v4273
        %v4315 = vmul.f32 %v4240, %v4277
        %v4316 = vmul.f32 %v4241, %v4273
        %v4317 = vmul.f32 %v4242, %v4277
        %v4318 = vmul.f32 %v4243, %v4273
        %v4319 = vmul.f32 %v4244, %v4277
        %v4320 = vmul.f32 %v4245, %v4273
        %v4321 = vmul.f32 %v4246, %v4277
        %v4322 = vmul.f32 %v4247, %v4273
        %v4323 = vmul.f32 %v4248, %v4277
        %v4324 = vmul.f32 %v4249, %v4273
        %v4325 = vmul.f32 %v4250, %v4277
        %v4326 = vmul.f32 %v4251, %v4273
        %v4327 = vmul.f32 %v4252, %v4277
        %v4328 = vmul.f32 %v4253, %v4273
        %v4329 = vmul.f32 %v4254, %v4277
        %v4330 = vmul.f32 %v4255, %v4273
        %v4331 = vmul.f32 %v4256, %v4277
        %v4332 = vmul.f32 %v4257, %v4273
        %v4333 = vmul.f32 %v4258, %v4277
        %v4334 = vmul.f32 %v4259, %v4273
        %v4335 = vmul.f32 %v4260, %v4277
        %v4336 = vmul.f32 %v4261, %v4273
        %v4337 = vmul.f32 %v4262, %v4277
        %v4338 = vmul.f32 %v4263, %v4273
        %v4339 = vmul.f32 %v4264, %v4277
        %v4340 = vmul.f32 %v4265, %v4273
        %v4341 = vmul.f32 %v4266, %v4277
        %v4342 = vmul.f32 %v4267, %v4273
        %v4343 = vmul.f32 %v4268, %v4277
        %v4345 = vlaneseq
        %v4346 = vshrl.u32 %v4345, 7
        %v4347 = vsub.s32 0, %v4346
        %v4348 = vrot.slane %v3756, %v4347
        %v4349 = vlaneseq
        %v4350 = vshrl.u32 %v4349, 7
        %v4351 = vsub.s32 1, %v4350
        %v4352 = vrot.slane %v3756, %v4351
        %v4355 = vadd.f32 %v4280, %v4348
        %v4356 = vadd.f32 %v4281, %v4352
        %v4357 = vadd.f32 %v4282, %v4348
        %v4358 = vadd.f32 %v4283, %v4352
        %v4359 = vadd.f32 %v4284, %v4348
        %v4360 = vadd.f32 %v4285, %v4352
        %v4361 = vadd.f32 %v4286, %v4348
        %v4362 = vadd.f32 %v4287, %v4352
        %v4363 = vadd.f32 %v4288, %v4348
        %v4364 = vadd.f32 %v4289, %v4352
        %v4365 = vadd.f32 %v4290, %v4348
        %v4366 = vadd.f32 %v4291, %v4352
        %v4367 = vadd.f32 %v4292, %v4348
        %v4368 = vadd.f32 %v4293, %v4352
        %v4369 = vadd.f32 %v4294, %v4348
        %v4370 = vadd.f32 %v4295, %v4352
        %v4371 = vadd.f32 %v4296, %v4348
        %v4372 = vadd.f32 %v4297, %v4352
        %v4373 = vadd.f32 %v4298, %v4348
        %v4374 = vadd.f32 %v4299, %v4352
        %v4375 = vadd.f32 %v4300, %v4348
        %v4376 = vadd.f32 %v4301, %v4352
        %v4377 = vadd.f32 %v4302, %v4348
        %v4378 = vadd.f32 %v4303, %v4352
        %v4379 = vadd.f32 %v4304, %v4348
        %v4380 = vadd.f32 %v4305, %v4352
        %v4381 = vadd.f32 %v4306, %v4348
        %v4382 = vadd.f32 %v4307, %v4352
        %v4383 = vadd.f32 %v4308, %v4348
        %v4384 = vadd.f32 %v4309, %v4352
        %v4385 = vadd.f32 %v4310, %v4348
        %v4386 = vadd.f32 %v4311, %v4352
        %v4387 = vadd.f32 %v4312, %v4348
        %v4388 = vadd.f32 %v4313, %v4352
        %v4389 = vadd.f32 %v4314, %v4348
        %v4390 = vadd.f32 %v4315, %v4352
        %v4391 = vadd.f32 %v4316, %v4348
        %v4392 = vadd.f32 %v4317, %v4352
        %v4393 = vadd.f32 %v4318, %v4348
        %v4394 = vadd.f32 %v4319, %v4352
        %v4395 = vadd.f32 %v4320, %v4348
        %v4396 = vadd.f32 %v4321, %v4352
        %v4397 = vadd.f32 %v4322, %v4348
        %v4398 = vadd.f32 %v4323, %v4352
        %v4399 = vadd.f32 %v4324, %v4348
        %v4400 = vadd.f32 %v4325, %v4352
        %v4401 = vadd.f32 %v4326, %v4348
        %v4402 = vadd.f32 %v4327, %v4352
        %v4403 = vadd.f32 %v4328, %v4348
        %v4404 = vadd.f32 %v4329, %v4352
        %v4405 = vadd.f32 %v4330, %v4348
        %v4406 = vadd.f32 %v4331, %v4352
        %v4407 = vadd.f32 %v4332, %v4348
        %v4408 = vadd.f32 %v4333, %v4352
        %v4409 = vadd.f32 %v4334, %v4348
        %v4410 = vadd.f32 %v4335, %v4352
        %v4411 = vadd.f32 %v4336, %v4348
        %v4412 = vadd.f32 %v4337, %v4352
        %v4413 = vadd.f32 %v4338, %v4348
        %v4414 = vadd.f32 %v4339, %v4352
        %v4415 = vadd.f32 %v4340, %v4348
        %v4416 = vadd.f32 %v4341, %v4352
        %v4417 = vadd.f32 %v4342, %v4348
        %v4418 = vadd.f32 %v4343, %v4352
        %v4419 = vmax.f32 %v4355, 0.0
        %v4420 = vmax.f32 %v4356, 0.0
        %v4421 = vmax.f32 %v4357, 0.0
        %v4422 = vmax.f32 %v4358, 0.0
        %v4423 = vmax.f32 %v4359, 0.0
        %v4424 = vmax.f32 %v4360, 0.0
        %v4425 = vmax.f32 %v4361, 0.0
        %v4426 = vmax.f32 %v4362, 0.0
        %v4427 = vmax.f32 %v4363, 0.0
        %v4428 = vmax.f32 %v4364, 0.0
        %v4429 = vmax.f32 %v4365, 0.0
        %v4430 = vmax.f32 %v4366, 0.0
        %v4431 = vmax.f32 %v4367, 0.0
        %v4432 = vmax.f32 %v4368, 0.0
        %v4433 = vmax.f32 %v4369, 0.0
        %v4434 = vmax.f32 %v4370, 0.0
        %v4435 = vmax.f32 %v4371, 0.0
        %v4436 = vmax.f32 %v4372, 0.0
        %v4437 = vmax.f32 %v4373, 0.0
        %v4438 = vmax.f32 %v4374, 0.0
        %v4439 = vmax.f32 %v4375, 0.0
        %v4440 = vmax.f32 %v4376, 0.0
        %v4441 = vmax.f32 %v4377, 0.0
        %v4442 = vmax.f32 %v4378, 0.0
        %v4443 = vmax.f32 %v4379, 0.0
        %v4444 = vmax.f32 %v4380, 0.0
        %v4445 = vmax.f32 %v4381, 0.0
        %v4446 = vmax.f32 %v4382, 0.0
        %v4447 = vmax.f32 %v4383, 0.0
        %v4448 = vmax.f32 %v4384, 0.0
        %v4449 = vmax.f32 %v4385, 0.0
        %v4450 = vmax.f32 %v4386, 0.0
        %v4451 = vmax.f32 %v4387, 0.0
        %v4452 = vmax.f32 %v4388, 0.0
        %v4453 = vmax.f32 %v4389, 0.0
        %v4454 = vmax.f32 %v4390, 0.0
        %v4455 = vmax.f32 %v4391, 0.0
        %v4456 = vmax.f32 %v4392, 0.0
        %v4457 = vmax.f32 %v4393, 0.0
        %v4458 = vmax.f32 %v4394, 0.0
        %v4459 = vmax.f32 %v4395, 0.0
        %v4460 = vmax.f32 %v4396, 0.0
        %v4461 = vmax.f32 %v4397, 0.0
        %v4462 = vmax.f32 %v4398, 0.0
        %v4463 = vmax.f32 %v4399, 0.0
        %v4464 = vmax.f32 %v4400, 0.0
        %v4465 = vmax.f32 %v4401, 0.0
        %v4466 = vmax.f32 %v4402, 0.0
        %v4467 = vmax.f32 %v4403, 0.0
        %v4468 = vmax.f32 %v4404, 0.0
        %v4469 = vmax.f32 %v4405, 0.0
        %v4470 = vmax.f32 %v4406, 0.0
        %v4471 = vmax.f32 %v4407, 0.0
        %v4472 = vmax.f32 %v4408, 0.0
        %v4473 = vmax.f32 %v4409, 0.0
        %v4474 = vmax.f32 %v4410, 0.0
        %v4475 = vmax.f32 %v4411, 0.0
        %v4476 = vmax.f32 %v4412, 0.0
        %v4477 = vmax.f32 %v4413, 0.0
        %v4478 = vmax.f32 %v4414, 0.0
        %v4479 = vmax.f32 %v4415, 0.0
        %v4480 = vmax.f32 %v4416, 0.0
        %v4481 = vmax.f32 %v4417, 0.0
        %v4482 = vmax.f32 %v4418, 0.0
        %v4483 = vld [vmem:[%s8] sm:$0x3]
        %v4484 = vpack.c.bf16 %v4421, %v4419
        %v4485 = vpack.c.bf16 %v4422, %v4420
        %v4486 = vpack.c.bf16 %v4425, %v4423
        %v4487 = vpack.c.bf16 %v4426, %v4424
        %v4488 = vpack.c.bf16 %v4429, %v4427
        %v4489 = vpack.c.bf16 %v4430, %v4428
        %v4490 = vpack.c.bf16 %v4433, %v4431
        %v4491 = vpack.c.bf16 %v4434, %v4432
        %v4492 = vpack.c.bf16 %v4437, %v4435
        %v4493 = vpack.c.bf16 %v4438, %v4436
        %v4494 = vpack.c.bf16 %v4441, %v4439
        %v4495 = vpack.c.bf16 %v4442, %v4440
        %v4496 = vpack.c.bf16 %v4445, %v4443
        %v4497 = vpack.c.bf16 %v4446, %v4444
        %v4498 = vpack.c.bf16 %v4449, %v4447
        %v4499 = vpack.c.bf16 %v4450, %v4448
        %v4500 = vpack.c.bf16 %v4453, %v4451
        %v4501 = vpack.c.bf16 %v4454, %v4452
        %v4502 = vpack.c.bf16 %v4457, %v4455
        %v4503 = vpack.c.bf16 %v4458, %v4456
        %v4504 = vpack.c.bf16 %v4461, %v4459
        %v4505 = vpack.c.bf16 %v4462, %v4460
        %v4506 = vpack.c.bf16 %v4465, %v4463
        %v4507 = vpack.c.bf16 %v4466, %v4464
        %v4508 = vpack.c.bf16 %v4469, %v4467
        %v4509 = vpack.c.bf16 %v4470, %v4468
        %v4510 = vpack.c.bf16 %v4473, %v4471
        %v4511 = vpack.c.bf16 %v4474, %v4472
        %v4512 = vpack.c.bf16 %v4477, %v4475
        %v4513 = vpack.c.bf16 %v4478, %v4476
        %v4514 = vpack.c.bf16 %v4481, %v4479
        %v4515 = vpack.c.bf16 %v4482, %v4480
        %v4516 = vld [vmem:[#allocation7] sm:$0xff]
        %v4517 = vld [vmem:[#allocation7 + $0x8] sm:$0xff]
        %v4518 = vld [vmem:[#allocation7 + $0x10] sm:$0xff]
        %v4519 = vld [vmem:[#allocation7 + $0x18] sm:$0xff]
        %v4520 = vld [vmem:[#allocation7 + $0x20] sm:$0xff]
        %v4521 = vld [vmem:[#allocation7 + $0x28] sm:$0xff]
        %v4522 = vld [vmem:[#allocation7 + $0x30] sm:$0xff]
        %v4523 = vld [vmem:[#allocation7 + $0x38] sm:$0xff]
        %v4524 = vld [vmem:[#allocation7 + $0x40] sm:$0xff]
        %v4525 = vld [vmem:[#allocation7 + $0x48] sm:$0xff]
        %v4526 = vld [vmem:[#allocation7 + $0x50] sm:$0xff]
        %v4527 = vld [vmem:[#allocation7 + $0x58] sm:$0xff]
        %v4528 = vld [vmem:[#allocation7 + $0x60] sm:$0xff]
        %v4529 = vld [vmem:[#allocation7 + $0x68] sm:$0xff]
        %v4530 = vld [vmem:[#allocation7 + $0x70] sm:$0xff]
        %v4531 = vld [vmem:[#allocation7 + $0x78] sm:$0xff]
        %v4532 = vld [vmem:[#allocation7 + $0x80] sm:$0xff]
        %v4533 = vld [vmem:[#allocation7 + $0x88] sm:$0xff]
        %v4534 = vld [vmem:[#allocation7 + $0x90] sm:$0xff]
        %v4535 = vld [vmem:[#allocation7 + $0x98] sm:$0xff]
        %v4536 = vld [vmem:[#allocation7 + $0xa0] sm:$0xff]
        %v4537 = vld [vmem:[#allocation7 + $0xa8] sm:$0xff]
        %v4538 = vld [vmem:[#allocation7 + $0xb0] sm:$0xff]
        %v4539 = vld [vmem:[#allocation7 + $0xb8] sm:$0xff]
        %v4540 = vld [vmem:[#allocation7 + $0xc0] sm:$0xff]
        %v4541 = vld [vmem:[#allocation7 + $0xc8] sm:$0xff]
        %v4542 = vld [vmem:[#allocation7 + $0xd0] sm:$0xff]
        %v4543 = vld [vmem:[#allocation7 + $0xd8] sm:$0xff]
        %v4544 = vld [vmem:[#allocation7 + $0xe0] sm:$0xff]
        %v4545 = vld [vmem:[#allocation7 + $0xe8] sm:$0xff]
        %v4546 = vld [vmem:[#allocation7 + $0xf0] sm:$0xff]
        %v4547 = vld [vmem:[#allocation7 + $0xf8] sm:$0xff]
        %v4580 = vunpack.c.l.b16 %v4516
        %v4581 = vunpack.c.h.b16 %v4516
        %v4582 = vunpack.c.l.b16 %v4517
        %v4583 = vunpack.c.h.b16 %v4517
        %v4584 = vunpack.c.l.b16 %v4518
        %v4585 = vunpack.c.h.b16 %v4518
        %v4586 = vunpack.c.l.b16 %v4519
        %v4587 = vunpack.c.h.b16 %v4519
        %v4588 = vunpack.c.l.b16 %v4520
        %v4589 = vunpack.c.h.b16 %v4520
        %v4590 = vunpack.c.l.b16 %v4521
        %v4591 = vunpack.c.h.b16 %v4521
        %v4592 = vunpack.c.l.b16 %v4522
        %v4593 = vunpack.c.h.b16 %v4522
        %v4594 = vunpack.c.l.b16 %v4523
        %v4595 = vunpack.c.h.b16 %v4523
        %v4596 = vunpack.c.l.b16 %v4524
        %v4597 = vunpack.c.h.b16 %v4524
        %v4598 = vunpack.c.l.b16 %v4525
        %v4599 = vunpack.c.h.b16 %v4525
        %v4600 = vunpack.c.l.b16 %v4526
        %v4601 = vunpack.c.h.b16 %v4526
        %v4602 = vunpack.c.l.b16 %v4527
        %v4603 = vunpack.c.h.b16 %v4527
        %v4604 = vunpack.c.l.b16 %v4528
        %v4605 = vunpack.c.h.b16 %v4528
        %v4606 = vunpack.c.l.b16 %v4529
        %v4607 = vunpack.c.h.b16 %v4529
        %v4608 = vunpack.c.l.b16 %v4530
        %v4609 = vunpack.c.h.b16 %v4530
        %v4610 = vunpack.c.l.b16 %v4531
        %v4611 = vunpack.c.h.b16 %v4531
        %v4612 = vunpack.c.l.b16 %v4532
        %v4613 = vunpack.c.h.b16 %v4532
        %v4614 = vunpack.c.l.b16 %v4533
        %v4615 = vunpack.c.h.b16 %v4533
        %v4616 = vunpack.c.l.b16 %v4534
        %v4617 = vunpack.c.h.b16 %v4534
        %v4618 = vunpack.c.l.b16 %v4535
        %v4619 = vunpack.c.h.b16 %v4535
        %v4620 = vunpack.c.l.b16 %v4536
        %v4621 = vunpack.c.h.b16 %v4536
        %v4622 = vunpack.c.l.b16 %v4537
        %v4623 = vunpack.c.h.b16 %v4537
        %v4624 = vunpack.c.l.b16 %v4538
        %v4625 = vunpack.c.h.b16 %v4538
        %v4626 = vunpack.c.l.b16 %v4539
        %v4627 = vunpack.c.h.b16 %v4539
        %v4628 = vunpack.c.l.b16 %v4540
        %v4629 = vunpack.c.h.b16 %v4540
        %v4630 = vunpack.c.l.b16 %v4541
        %v4631 = vunpack.c.h.b16 %v4541
        %v4632 = vunpack.c.l.b16 %v4542
        %v4633 = vunpack.c.h.b16 %v4542
        %v4634 = vunpack.c.l.b16 %v4543
        %v4635 = vunpack.c.h.b16 %v4543
        %v4636 = vunpack.c.l.b16 %v4544
        %v4637 = vunpack.c.h.b16 %v4544
        %v4638 = vunpack.c.l.b16 %v4545
        %v4639 = vunpack.c.h.b16 %v4545
        %v4640 = vunpack.c.l.b16 %v4546
        %v4641 = vunpack.c.h.b16 %v4546
        %v4642 = vunpack.c.l.b16 %v4547
        %v4643 = vunpack.c.h.b16 %v4547
        %v4644 = vpack.c.b16 %v4582, %v4580
        %v4645 = vpack.c.b16 %v4583, %v4581
        %v4646 = vpack.c.b16 %v4586, %v4584
        %v4647 = vpack.c.b16 %v4587, %v4585
        %v4648 = vpack.c.b16 %v4590, %v4588
        %v4649 = vpack.c.b16 %v4591, %v4589
        %v4650 = vpack.c.b16 %v4594, %v4592
        %v4651 = vpack.c.b16 %v4595, %v4593
        %v4652 = vpack.c.b16 %v4598, %v4596
        %v4653 = vpack.c.b16 %v4599, %v4597
        %v4654 = vpack.c.b16 %v4602, %v4600
        %v4655 = vpack.c.b16 %v4603, %v4601
        %v4656 = vpack.c.b16 %v4606, %v4604
        %v4657 = vpack.c.b16 %v4607, %v4605
        %v4658 = vpack.c.b16 %v4610, %v4608
        %v4659 = vpack.c.b16 %v4611, %v4609
        %v4660 = vpack.c.b16 %v4614, %v4612
        %v4661 = vpack.c.b16 %v4615, %v4613
        %v4662 = vpack.c.b16 %v4618, %v4616
        %v4663 = vpack.c.b16 %v4619, %v4617
        %v4664 = vpack.c.b16 %v4622, %v4620
        %v4665 = vpack.c.b16 %v4623, %v4621
        %v4666 = vpack.c.b16 %v4626, %v4624
        %v4667 = vpack.c.b16 %v4627, %v4625
        %v4668 = vpack.c.b16 %v4630, %v4628
        %v4669 = vpack.c.b16 %v4631, %v4629
        %v4670 = vpack.c.b16 %v4634, %v4632
        %v4671 = vpack.c.b16 %v4635, %v4633
        %v4672 = vpack.c.b16 %v4638, %v4636
        %v4673 = vpack.c.b16 %v4639, %v4637
        %v4674 = vpack.c.b16 %v4642, %v4640
        %v4675 = vpack.c.b16 %v4643, %v4641
        %4708 = vmatprep.subr.bf16.mxu0 %v4645
        %4709 = vmatpush1.bf16.msra.mxu0 %v4644
        %4710 = vmatprep.subr.bf16.mxu0 %v4647
        %4711 = vmatpush1.bf16.msra.mxu0 %v4646
        %4712 = vmatprep.subr.bf16.mxu0 %v4649
        %4713 = vmatpush1.bf16.msra.mxu0 %v4648
        %4714 = vmatprep.subr.bf16.mxu0 %v4651
        %4715 = vmatpush1.bf16.msra.mxu0 %v4650
        %4716 = vmatprep.subr.bf16.mxu0 %v4653
        %4717 = vmatpush1.bf16.msra.mxu0 %v4652
        %4718 = vmatprep.subr.bf16.mxu0 %v4655
        %4719 = vmatpush1.bf16.msra.mxu0 %v4654
        %4720 = vmatprep.subr.bf16.mxu0 %v4657
        %4721 = vmatpush1.bf16.msra.mxu0 %v4656
        %4722 = vmatprep.subr.bf16.mxu0 %v4659
        %4723 = vmatpush1.bf16.msra.mxu0 %v4658
        %4724 = vmatprep.subr.bf16.mxu0 %v4661
        %4725 = vmatpush1.bf16.msra.mxu0 %v4660
        %4726 = vmatprep.subr.bf16.mxu0 %v4663
        %4727 = vmatpush1.bf16.msra.mxu0 %v4662
        %4728 = vmatprep.subr.bf16.mxu0 %v4665
        %4729 = vmatpush1.bf16.msra.mxu0 %v4664
        %4730 = vmatprep.subr.bf16.mxu0 %v4667
        %4731 = vmatpush1.bf16.msra.mxu0 %v4666
        %4732 = vmatprep.subr.bf16.mxu0 %v4669
        %4733 = vmatpush1.bf16.msra.mxu0 %v4668
        %4734 = vmatprep.subr.bf16.mxu0 %v4671
        %4735 = vmatpush1.bf16.msra.mxu0 %v4670
        %4736 = vmatprep.subr.bf16.mxu0 %v4673
        %4737 = vmatpush1.bf16.msra.mxu0 %v4672
        %4738 = vmatprep.subr.bf16.mxu0 %v4675
        %4739 = vmatpush1.bf16.msra.mxu0 %v4674
        %4740 = vmatprep.mubr.bf16.mxu0 %v4485
        %4741 = vmatmul.mubr.bf16.gmra.mrb[0].mxu0 %v4484
        %v4742 = vpop.f32.mrb[0].mxu0
        %v4743 = vadd.f32 0.0, %v4742
        %v4744 = vpop.f32.mrb[0].mxu0
        %v4745 = vadd.f32 0.0, %v4744
        %v4746 = vpop.f32.mrb[0].mxu0
        %v4747 = vadd.f32 0.0, %v4746
        %v4748 = vpop.f32.mrb[0].mxu0
        %v4749 = vadd.f32 0.0, %v4748
        %4750 = vmatprep.mubr.bf16.mxu0 %v4487
        %4751 = vmatmul.mubr.bf16.gmra.mrb[0].mxu0 %v4486
        %v4752 = vpop.f32.mrb[0].mxu0
        %v4753 = vadd.f32 0.0, %v4752
        %v4754 = vpop.f32.mrb[0].mxu0
        %v4755 = vadd.f32 0.0, %v4754
        %v4756 = vpop.f32.mrb[0].mxu0
        %v4757 = vadd.f32 0.0, %v4756
        %v4758 = vpop.f32.mrb[0].mxu0
        %v4759 = vadd.f32 0.0, %v4758
        %4760 = vmatprep.mubr.bf16.mxu0 %v4489
        %4761 = vmatmul.mubr.bf16.gmra.mrb[0].mxu0 %v4488
        %v4762 = vpop.f32.mrb[0].mxu0
        %v4763 = vadd.f32 0.0, %v4762
        %v4764 = vpop.f32.mrb[0].mxu0
        %v4765 = vadd.f32 0.0, %v4764
        %v4766 = vpop.f32.mrb[0].mxu0
        %v4767 = vadd.f32 0.0, %v4766
        %v4768 = vpop.f32.mrb[0].mxu0
        %v4769 = vadd.f32 0.0, %v4768
        %4770 = vmatprep.mubr.bf16.mxu0 %v4491
        %4771 = vmatmul.mubr.bf16.gmra.mrb[0].mxu0 %v4490
        %v4772 = vpop.f32.mrb[0].mxu0
        %v4773 = vadd.f32 0.0, %v4772
        %v4774 = vpop.f32.mrb[0].mxu0
        %v4775 = vadd.f32 0.0, %v4774
        %v4776 = vpop.f32.mrb[0].mxu0
        %v4777 = vadd.f32 0.0, %v4776
        %v4778 = vpop.f32.mrb[0].mxu0
        %v4779 = vadd.f32 0.0, %v4778
        %4780 = vmatprep.mubr.bf16.mxu0 %v4493
        %4781 = vmatmul.mubr.bf16.gmra.mrb[0].mxu0 %v4492
        %v4782 = vpop.f32.mrb[0].mxu0
        %v4783 = vadd.f32 0.0, %v4782
        %v4784 = vpop.f32.mrb[0].mxu0
        %v4785 = vadd.f32 0.0, %v4784
        %v4786 = vpop.f32.mrb[0].mxu0
        %v4787 = vadd.f32 0.0, %v4786
        %v4788 = vpop.f32.mrb[0].mxu0
        %v4789 = vadd.f32 0.0, %v4788
        %4790 = vmatprep.mubr.bf16.mxu0 %v4495
        %4791 = vmatmul.mubr.bf16.gmra.mrb[0].mxu0 %v4494
        %v4792 = vpop.f32.mrb[0].mxu0
        %v4793 = vadd.f32 0.0, %v4792
        %v4794 = vpop.f32.mrb[0].mxu0
        %v4795 = vadd.f32 0.0, %v4794
        %v4796 = vpop.f32.mrb[0].mxu0
        %v4797 = vadd.f32 0.0, %v4796
        %v4798 = vpop.f32.mrb[0].mxu0
        %v4799 = vadd.f32 0.0, %v4798
        %4800 = vmatprep.mubr.bf16.mxu0 %v4497
        %4801 = vmatmul.mubr.bf16.gmra.mrb[0].mxu0 %v4496
        %v4802 = vpop.f32.mrb[0].mxu0
        %v4803 = vadd.f32 0.0, %v4802
        %v4804 = vpop.f32.mrb[0].mxu0
        %v4805 = vadd.f32 0.0, %v4804
        %v4806 = vpop.f32.mrb[0].mxu0
        %v4807 = vadd.f32 0.0, %v4806
        %v4808 = vpop.f32.mrb[0].mxu0
        %v4809 = vadd.f32 0.0, %v4808
        %4810 = vmatprep.mubr.bf16.mxu0 %v4499
        %4811 = vmatmul.mubr.bf16.gmra.mrb[0].mxu0 %v4498
        %v4812 = vpop.f32.mrb[0].mxu0
        %v4813 = vadd.f32 0.0, %v4812
        %v4814 = vpop.f32.mrb[0].mxu0
        %v4815 = vadd.f32 0.0, %v4814
        %v4816 = vpop.f32.mrb[0].mxu0
        %v4817 = vadd.f32 0.0, %v4816
        %v4818 = vpop.f32.mrb[0].mxu0
        %v4819 = vadd.f32 0.0, %v4818
        %4820 = vmatprep.mubr.bf16.mxu0 %v4501
        %4821 = vmatmul.mubr.bf16.gmra.mrb[0].mxu0 %v4500
        %v4822 = vpop.f32.mrb[0].mxu0
        %v4823 = vadd.f32 0.0, %v4822
        %v4824 = vpop.f32.mrb[0].mxu0
        %v4825 = vadd.f32 0.0, %v4824
        %v4826 = vpop.f32.mrb[0].mxu0
        %v4827 = vadd.f32 0.0, %v4826
        %v4828 = vpop.f32.mrb[0].mxu0
        %v4829 = vadd.f32 0.0, %v4828
        %4830 = vmatprep.mubr.bf16.mxu0 %v4503
        %4831 = vmatmul.mubr.bf16.gmra.mrb[0].mxu0 %v4502
        %v4832 = vpop.f32.mrb[0].mxu0
        %v4833 = vadd.f32 0.0, %v4832
        %v4834 = vpop.f32.mrb[0].mxu0
        %v4835 = vadd.f32 0.0, %v4834
        %v4836 = vpop.f32.mrb[0].mxu0
        %v4837 = vadd.f32 0.0, %v4836
        %v4838 = vpop.f32.mrb[0].mxu0
        %v4839 = vadd.f32 0.0, %v4838
        %4840 = vmatprep.mubr.bf16.mxu0 %v4505
        %4841 = vmatmul.mubr.bf16.gmra.mrb[0].mxu0 %v4504
        %v4842 = vpop.f32.mrb[0].mxu0
        %v4843 = vadd.f32 0.0, %v4842
        %v4844 = vpop.f32.mrb[0].mxu0
        %v4845 = vadd.f32 0.0, %v4844
        %v4846 = vpop.f32.mrb[0].mxu0
        %v4847 = vadd.f32 0.0, %v4846
        %v4848 = vpop.f32.mrb[0].mxu0
        %v4849 = vadd.f32 0.0, %v4848
        %4850 = vmatprep.mubr.bf16.mxu0 %v4507
        %4851 = vmatmul.mubr.bf16.gmra.mrb[0].mxu0 %v4506
        %v4852 = vpop.f32.mrb[0].mxu0
        %v4853 = vadd.f32 0.0, %v4852
        %v4854 = vpop.f32.mrb[0].mxu0
        %v4855 = vadd.f32 0.0, %v4854
        %v4856 = vpop.f32.mrb[0].mxu0
        %v4857 = vadd.f32 0.0, %v4856
        %v4858 = vpop.f32.mrb[0].mxu0
        %v4859 = vadd.f32 0.0, %v4858
        %4860 = vmatprep.mubr.bf16.mxu0 %v4509
        %4861 = vmatmul.mubr.bf16.gmra.mrb[0].mxu0 %v4508
        %v4862 = vpop.f32.mrb[0].mxu0
        %v4863 = vadd.f32 0.0, %v4862
        %v4864 = vpop.f32.mrb[0].mxu0
        %v4865 = vadd.f32 0.0, %v4864
        %v4866 = vpop.f32.mrb[0].mxu0
        %v4867 = vadd.f32 0.0, %v4866
        %v4868 = vpop.f32.mrb[0].mxu0
        %v4869 = vadd.f32 0.0, %v4868
        %4870 = vmatprep.mubr.bf16.mxu0 %v4511
        %4871 = vmatmul.mubr.bf16.gmra.mrb[0].mxu0 %v4510
        %v4872 = vpop.f32.mrb[0].mxu0
        %v4873 = vadd.f32 0.0, %v4872
        %v4874 = vpop.f32.mrb[0].mxu0
        %v4875 = vadd.f32 0.0, %v4874
        %v4876 = vpop.f32.mrb[0].mxu0
        %v4877 = vadd.f32 0.0, %v4876
        %v4878 = vpop.f32.mrb[0].mxu0
        %v4879 = vadd.f32 0.0, %v4878
        %4880 = vmatprep.mubr.bf16.mxu0 %v4513
        %4881 = vmatmul.mubr.bf16.gmra.mrb[0].mxu0 %v4512
        %v4882 = vpop.f32.mrb[0].mxu0
        %v4883 = vadd.f32 0.0, %v4882
        %v4884 = vpop.f32.mrb[0].mxu0
        %v4885 = vadd.f32 0.0, %v4884
        %v4886 = vpop.f32.mrb[0].mxu0
        %v4887 = vadd.f32 0.0, %v4886
        %v4888 = vpop.f32.mrb[0].mxu0
        %v4889 = vadd.f32 0.0, %v4888
        %4890 = vmatprep.mubr.bf16.mxu0 %v4515
        %4891 = vmatmul.mubr.bf16.gmra.mrb[0].mxu0 %v4514
        %v4892 = vpop.f32.mrb[0].mxu0
        %v4893 = vadd.f32 0.0, %v4892
        %v4894 = vpop.f32.mrb[0].mxu0
        %v4895 = vadd.f32 0.0, %v4894
        %v4896 = vpop.f32.mrb[0].mxu0
        %v4897 = vadd.f32 0.0, %v4896
        %v4898 = vpop.f32.mrb[0].mxu0
        %v4899 = vadd.f32 0.0, %v4898
        %4900 = vdwg.mxu0
        %s4901 = scalar_lea.vmem [#allocation7], 256
        %v4902 = vld [vmem:[%s4901] sm:$0xff]
        %v4903 = vld [vmem:[%s4901 + $0x8] sm:$0xff]
        %v4904 = vld [vmem:[%s4901 + $0x10] sm:$0xff]
        %v4905 = vld [vmem:[%s4901 + $0x18] sm:$0xff]
        %v4906 = vld [vmem:[%s4901 + $0x20] sm:$0xff]
        %v4907 = vld [vmem:[%s4901 + $0x28] sm:$0xff]
        %v4908 = vld [vmem:[%s4901 + $0x30] sm:$0xff]
        %v4909 = vld [vmem:[%s4901 + $0x38] sm:$0xff]
        %v4910 = vld [vmem:[%s4901 + $0x40] sm:$0xff]
        %v4911 = vld [vmem:[%s4901 + $0x48] sm:$0xff]
        %v4912 = vld [vmem:[%s4901 + $0x50] sm:$0xff]
        %v4913 = vld [vmem:[%s4901 + $0x58] sm:$0xff]
        %v4914 = vld [vmem:[%s4901 + $0x60] sm:$0xff]
        %v4915 = vld [vmem:[%s4901 + $0x68] sm:$0xff]
        %v4916 = vld [vmem:[%s4901 + $0x70] sm:$0xff]
        %v4917 = vld [vmem:[%s4901 + $0x78] sm:$0xff]
        %v4918 = vld [vmem:[%s4901 + $0x80] sm:$0xff]
        %v4919 = vld [vmem:[%s4901 + $0x88] sm:$0xff]
        %v4920 = vld [vmem:[%s4901 + $0x90] sm:$0xff]
        %v4921 = vld [vmem:[%s4901 + $0x98] sm:$0xff]
        %v4922 = vld [vmem:[%s4901 + $0xa0] sm:$0xff]
        %v4923 = vld [vmem:[%s4901 + $0xa8] sm:$0xff]
        %v4924 = vld [vmem:[%s4901 + $0xb0] sm:$0xff]
        %v4925 = vld [vmem:[%s4901 + $0xb8] sm:$0xff]
        %v4926 = vld [vmem:[%s4901 + $0xc0] sm:$0xff]
        %v4927 = vld [vmem:[%s4901 + $0xc8] sm:$0xff]
        %v4928 = vld [vmem:[%s4901 + $0xd0] sm:$0xff]
        %v4929 = vld [vmem:[%s4901 + $0xd8] sm:$0xff]
        %v4930 = vld [vmem:[%s4901 + $0xe0] sm:$0xff]
        %v4931 = vld [vmem:[%s4901 + $0xe8] sm:$0xff]
        %v4932 = vld [vmem:[%s4901 + $0xf0] sm:$0xff]
        %v4933 = vld [vmem:[%s4901 + $0xf8] sm:$0xff]
        %v4966 = vunpack.c.l.b16 %v4902
        %v4967 = vunpack.c.h.b16 %v4902
        %v4968 = vunpack.c.l.b16 %v4903
        %v4969 = vunpack.c.h.b16 %v4903
        %v4970 = vunpack.c.l.b16 %v4904
        %v4971 = vunpack.c.h.b16 %v4904
        %v4972 = vunpack.c.l.b16 %v4905
        %v4973 = vunpack.c.h.b16 %v4905
        %v4974 = vunpack.c.l.b16 %v4906
        %v4975 = vunpack.c.h.b16 %v4906
        %v4976 = vunpack.c.l.b16 %v4907
        %v4977 = vunpack.c.h.b16 %v4907
        %v4978 = vunpack.c.l.b16 %v4908
        %v4979 = vunpack.c.h.b16 %v4908
        %v4980 = vunpack.c.l.b16 %v4909
        %v4981 = vunpack.c.h.b16 %v4909
        %v4982 = vunpack.c.l.b16 %v4910
        %v4983 = vunpack.c.h.b16 %v4910
        %v4984 = vunpack.c.l.b16 %v4911
        %v4985 = vunpack.c.h.b16 %v4911
        %v4986 = vunpack.c.l.b16 %v4912
        %v4987 = vunpack.c.h.b16 %v4912
        %v4988 = vunpack.c.l.b16 %v4913
        %v4989 = vunpack.c.h.b16 %v4913
        %v4990 = vunpack.c.l.b16 %v4914
        %v4991 = vunpack.c.h.b16 %v4914
        %v4992 = vunpack.c.l.b16 %v4915
        %v4993 = vunpack.c.h.b16 %v4915
        %v4994 = vunpack.c.l.b16 %v4916
        %v4995 = vunpack.c.h.b16 %v4916
        %v4996 = vunpack.c.l.b16 %v4917
        %v4997 = vunpack.c.h.b16 %v4917
        %v4998 = vunpack.c.l.b16 %v4918
        %v4999 = vunpack.c.h.b16 %v4918
        %v5000 = vunpack.c.l.b16 %v4919
        %v5001 = vunpack.c.h.b16 %v4919
        %v5002 = vunpack.c.l.b16 %v4920
        %v5003 = vunpack.c.h.b16 %v4920
        %v5004 = vunpack.c.l.b16 %v4921
        %v5005 = vunpack.c.h.b16 %v4921
        %v5006 = vunpack.c.l.b16 %v4922
        %v5007 = vunpack.c.h.b16 %v4922
        %v5008 = vunpack.c.l.b16 %v4923
        %v5009 = vunpack.c.h.b16 %v4923
        %v5010 = vunpack.c.l.b16 %v4924
        %v5011 = vunpack.c.h.b16 %v4924
        %v5012 = vunpack.c.l.b16 %v4925
        %v5013 = vunpack.c.h.b16 %v4925
        %v5014 = vunpack.c.l.b16 %v4926
        %v5015 = vunpack.c.h.b16 %v4926
        %v5016 = vunpack.c.l.b16 %v4927
        %v5017 = vunpack.c.h.b16 %v4927
        %v5018 = vunpack.c.l.b16 %v4928
        %v5019 = vunpack.c.h.b16 %v4928
        %v5020 = vunpack.c.l.b16 %v4929
        %v5021 = vunpack.c.h.b16 %v4929
        %v5022 = vunpack.c.l.b16 %v4930
        %v5023 = vunpack.c.h.b16 %v4930
        %v5024 = vunpack.c.l.b16 %v4931
        %v5025 = vunpack.c.h.b16 %v4931
        %v5026 = vunpack.c.l.b16 %v4932
        %v5027 = vunpack.c.h.b16 %v4932
        %v5028 = vunpack.c.l.b16 %v4933
        %v5029 = vunpack.c.h.b16 %v4933
        %v5030 = vpack.c.b16 %v4968, %v4966
        %v5031 = vpack.c.b16 %v4969, %v4967
        %v5032 = vpack.c.b16 %v4972, %v4970
        %v5033 = vpack.c.b16 %v4973, %v4971
        %v5034 = vpack.c.b16 %v4976, %v4974
        %v5035 = vpack.c.b16 %v4977, %v4975
        %v5036 = vpack.c.b16 %v4980, %v4978
        %v5037 = vpack.c.b16 %v4981, %v4979
        %v5038 = vpack.c.b16 %v4984, %v4982
        %v5039 = vpack.c.b16 %v4985, %v4983
        %v5040 = vpack.c.b16 %v4988, %v4986
        %v5041 = vpack.c.b16 %v4989, %v4987
        %v5042 = vpack.c.b16 %v4992, %v4990
        %v5043 = vpack.c.b16 %v4993, %v4991
        %v5044 = vpack.c.b16 %v4996, %v4994
        %v5045 = vpack.c.b16 %v4997, %v4995
        %v5046 = vpack.c.b16 %v5000, %v4998
        %v5047 = vpack.c.b16 %v5001, %v4999
        %v5048 = vpack.c.b16 %v5004, %v5002
        %v5049 = vpack.c.b16 %v5005, %v5003
        %v5050 = vpack.c.b16 %v5008, %v5006
        %v5051 = vpack.c.b16 %v5009, %v5007
        %v5052 = vpack.c.b16 %v5012, %v5010
        %v5053 = vpack.c.b16 %v5013, %v5011
        %v5054 = vpack.c.b16 %v5016, %v5014
        %v5055 = vpack.c.b16 %v5017, %v5015
        %v5056 = vpack.c.b16 %v5020, %v5018
        %v5057 = vpack.c.b16 %v5021, %v5019
        %v5058 = vpack.c.b16 %v5024, %v5022
        %v5059 = vpack.c.b16 %v5025, %v5023
        %v5060 = vpack.c.b16 %v5028, %v5026
        %v5061 = vpack.c.b16 %v5029, %v5027
        %5094 = vmatprep.subr.bf16.mxu0 %v5031
        %5095 = vmatpush1.bf16.msra.mxu0 %v5030
        %5096 = vmatprep.subr.bf16.mxu0 %v5033
        %5097 = vmatpush1.bf16.msra.mxu0 %v5032
        %5098 = vmatprep.subr.bf16.mxu0 %v5035
        %5099 = vmatpush1.bf16.msra.mxu0 %v5034
        %5100 = vmatprep.subr.bf16.mxu0 %v5037
        %5101 = vmatpush1.bf16.msra.mxu0 %v5036
        %5102 = vmatprep.subr.bf16.mxu0 %v5039
        %5103 = vmatpush1.bf16.msra.mxu0 %v5038
        %5104 = vmatprep.subr.bf16.mxu0 %v5041
        %5105 = vmatpush1.bf16.msra.mxu0 %v5040
        %5106 = vmatprep.subr.bf16.mxu0 %v5043
        %5107 = vmatpush1.bf16.msra.mxu0 %v5042
        %5108 = vmatprep.subr.bf16.mxu0 %v5045
        %5109 = vmatpush1.bf16.msra.mxu0 %v5044
        %5110 = vmatprep.subr.bf16.mxu0 %v5047
        %5111 = vmatpush1.bf16.msra.mxu0 %v5046
        %5112 = vmatprep.subr.bf16.mxu0 %v5049
        %5113 = vmatpush1.bf16.msra.mxu0 %v5048
        %5114 = vmatprep.subr.bf16.mxu0 %v5051
        %5115 = vmatpush1.bf16.msra.mxu0 %v5050
        %5116 = vmatprep.subr.bf16.mxu0 %v5053
        %5117 = vmatpush1.bf16.msra.mxu0 %v5052
        %5118 = vmatprep.subr.bf16.mxu0 %v5055
        %5119 = vmatpush1.bf16.msra.mxu0 %v5054
        %5120 = vmatprep.subr.bf16.mxu0 %v5057
        %5121 = vmatpush1.bf16.msra.mxu0 %v5056
        %5122 = vmatprep.subr.bf16.mxu0 %v5059
        %5123 = vmatpush1.bf16.msra.mxu0 %v5058
        %5124 = vmatprep.subr.bf16.mxu0 %v5061
        %5125 = vmatpush1.bf16.msra.mxu0 %v5060
        %5126 = vmatprep.mubr.bf16.mxu0 %v4485
        %5127 = vmatmul.mubr.bf16.gmra.mrb[0].mxu0 %v4484
        %v5128 = vpop.f32.mrb[0].mxu0
        %v5129 = vadd.f32 0.0, %v5128
        %v5130 = vpop.f32.mrb[0].mxu0
        %v5131 = vadd.f32 0.0, %v5130
        %v5132 = vpop.f32.mrb[0].mxu0
        %v5133 = vadd.f32 0.0, %v5132
        %v5134 = vpop.f32.mrb[0].mxu0
        %v5135 = vadd.f32 0.0, %v5134
        %5136 = vmatprep.mubr.bf16.mxu0 %v4487
        %5137 = vmatmul.mubr.bf16.gmra.mrb[0].mxu0 %v4486
        %v5138 = vpop.f32.mrb[0].mxu0
        %v5139 = vadd.f32 0.0, %v5138
        %v5140 = vpop.f32.mrb[0].mxu0
        %v5141 = vadd.f32 0.0, %v5140
        %v5142 = vpop.f32.mrb[0].mxu0
        %v5143 = vadd.f32 0.0, %v5142
        %v5144 = vpop.f32.mrb[0].mxu0
        %v5145 = vadd.f32 0.0, %v5144
        %5146 = vmatprep.mubr.bf16.mxu0 %v4489
        %5147 = vmatmul.mubr.bf16.gmra.mrb[0].mxu0 %v4488
        %v5148 = vpop.f32.mrb[0].mxu0
        %v5149 = vadd.f32 0.0, %v5148
        %v5150 = vpop.f32.mrb[0].mxu0
        %v5151 = vadd.f32 0.0, %v5150
        %v5152 = vpop.f32.mrb[0].mxu0
        %v5153 = vadd.f32 0.0, %v5152
        %v5154 = vpop.f32.mrb[0].mxu0
        %v5155 = vadd.f32 0.0, %v5154
        %5156 = vmatprep.mubr.bf16.mxu0 %v4491
        %5157 = vmatmul.mubr.bf16.gmra.mrb[0].mxu0 %v4490
        %v5158 = vpop.f32.mrb[0].mxu0
        %v5159 = vadd.f32 0.0, %v5158
        %v5160 = vpop.f32.mrb[0].mxu0
        %v5161 = vadd.f32 0.0, %v5160
        %v5162 = vpop.f32.mrb[0].mxu0
        %v5163 = vadd.f32 0.0, %v5162
        %v5164 = vpop.f32.mrb[0].mxu0
        %v5165 = vadd.f32 0.0, %v5164
        %5166 = vmatprep.mubr.bf16.mxu0 %v4493
        %5167 = vmatmul.mubr.bf16.gmra.mrb[0].mxu0 %v4492
        %v5168 = vpop.f32.mrb[0].mxu0
        %v5169 = vadd.f32 0.0, %v5168
        %v5170 = vpop.f32.mrb[0].mxu0
        %v5171 = vadd.f32 0.0, %v5170
        %v5172 = vpop.f32.mrb[0].mxu0
        %v5173 = vadd.f32 0.0, %v5172
        %v5174 = vpop.f32.mrb[0].mxu0
        %v5175 = vadd.f32 0.0, %v5174
        %5176 = vmatprep.mubr.bf16.mxu0 %v4495
        %5177 = vmatmul.mubr.bf16.gmra.mrb[0].mxu0 %v4494
        %v5178 = vpop.f32.mrb[0].mxu0
        %v5179 = vadd.f32 0.0, %v5178
        %v5180 = vpop.f32.mrb[0].mxu0
        %v5181 = vadd.f32 0.0, %v5180
        %v5182 = vpop.f32.mrb[0].mxu0
        %v5183 = vadd.f32 0.0, %v5182
        %v5184 = vpop.f32.mrb[0].mxu0
        %v5185 = vadd.f32 0.0, %v5184
        %5186 = vmatprep.mubr.bf16.mxu0 %v4497
        %5187 = vmatmul.mubr.bf16.gmra.mrb[0].mxu0 %v4496
        %v5188 = vpop.f32.mrb[0].mxu0
        %v5189 = vadd.f32 0.0, %v5188
        %v5190 = vpop.f32.mrb[0].mxu0
        %v5191 = vadd.f32 0.0, %v5190
        %v5192 = vpop.f32.mrb[0].mxu0
        %v5193 = vadd.f32 0.0, %v5192
        %v5194 = vpop.f32.mrb[0].mxu0
        %v5195 = vadd.f32 0.0, %v5194
        %5196 = vmatprep.mubr.bf16.mxu0 %v4499
        %5197 = vmatmul.mubr.bf16.gmra.mrb[0].mxu0 %v4498
        %v5198 = vpop.f32.mrb[0].mxu0
        %v5199 = vadd.f32 0.0, %v5198
        %v5200 = vpop.f32.mrb[0].mxu0
        %v5201 = vadd.f32 0.0, %v5200
        %v5202 = vpop.f32.mrb[0].mxu0
        %v5203 = vadd.f32 0.0, %v5202
        %v5204 = vpop.f32.mrb[0].mxu0
        %v5205 = vadd.f32 0.0, %v5204
        %5206 = vmatprep.mubr.bf16.mxu0 %v4501
        %5207 = vmatmul.mubr.bf16.gmra.mrb[0].mxu0 %v4500
        %v5208 = vpop.f32.mrb[0].mxu0
        %v5209 = vadd.f32 0.0, %v5208
        %v5210 = vpop.f32.mrb[0].mxu0
        %v5211 = vadd.f32 0.0, %v5210
        %v5212 = vpop.f32.mrb[0].mxu0
        %v5213 = vadd.f32 0.0, %v5212
        %v5214 = vpop.f32.mrb[0].mxu0
        %v5215 = vadd.f32 0.0, %v5214
        %5216 = vmatprep.mubr.bf16.mxu0 %v4503
        %5217 = vmatmul.mubr.bf16.gmra.mrb[0].mxu0 %v4502
        %v5218 = vpop.f32.mrb[0].mxu0
        %v5219 = vadd.f32 0.0, %v5218
        %v5220 = vpop.f32.mrb[0].mxu0
        %v5221 = vadd.f32 0.0, %v5220
        %v5222 = vpop.f32.mrb[0].mxu0
        %v5223 = vadd.f32 0.0, %v5222
        %v5224 = vpop.f32.mrb[0].mxu0
        %v5225 = vadd.f32 0.0, %v5224
        %5226 = vmatprep.mubr.bf16.mxu0 %v4505
        %5227 = vmatmul.mubr.bf16.gmra.mrb[0].mxu0 %v4504
        %v5228 = vpop.f32.mrb[0].mxu0
        %v5229 = vadd.f32 0.0, %v5228
        %v5230 = vpop.f32.mrb[0].mxu0
        %v5231 = vadd.f32 0.0, %v5230
        %v5232 = vpop.f32.mrb[0].mxu0
        %v5233 = vadd.f32 0.0, %v5232
        %v5234 = vpop.f32.mrb[0].mxu0
        %v5235 = vadd.f32 0.0, %v5234
        %5236 = vmatprep.mubr.bf16.mxu0 %v4507
        %5237 = vmatmul.mubr.bf16.gmra.mrb[0].mxu0 %v4506
        %v5238 = vpop.f32.mrb[0].mxu0
        %v5239 = vadd.f32 0.0, %v5238
        %v5240 = vpop.f32.mrb[0].mxu0
        %v5241 = vadd.f32 0.0, %v5240
        %v5242 = vpop.f32.mrb[0].mxu0
        %v5243 = vadd.f32 0.0, %v5242
        %v5244 = vpop.f32.mrb[0].mxu0
        %v5245 = vadd.f32 0.0, %v5244
        %5246 = vmatprep.mubr.bf16.mxu0 %v4509
        %5247 = vmatmul.mubr.bf16.gmra.mrb[0].mxu0 %v4508
        %v5248 = vpop.f32.mrb[0].mxu0
        %v5249 = vadd.f32 0.0, %v5248
        %v5250 = vpop.f32.mrb[0].mxu0
        %v5251 = vadd.f32 0.0, %v5250
        %v5252 = vpop.f32.mrb[0].mxu0
        %v5253 = vadd.f32 0.0, %v5252
        %v5254 = vpop.f32.mrb[0].mxu0
        %v5255 = vadd.f32 0.0, %v5254
        %5256 = vmatprep.mubr.bf16.mxu0 %v4511
        %5257 = vmatmul.mubr.bf16.gmra.mrb[0].mxu0 %v4510
        %v5258 = vpop.f32.mrb[0].mxu0
        %v5259 = vadd.f32 0.0, %v5258
        %v5260 = vpop.f32.mrb[0].mxu0
        %v5261 = vadd.f32 0.0, %v5260
        %v5262 = vpop.f32.mrb[0].mxu0
        %v5263 = vadd.f32 0.0, %v5262
        %v5264 = vpop.f32.mrb[0].mxu0
        %v5265 = vadd.f32 0.0, %v5264
        %5266 = vmatprep.mubr.bf16.mxu0 %v4513
        %5267 = vmatmul.mubr.bf16.gmra.mrb[0].mxu0 %v4512
        %v5268 = vpop.f32.mrb[0].mxu0
        %v5269 = vadd.f32 0.0, %v5268
        %v5270 = vpop.f32.mrb[0].mxu0
        %v5271 = vadd.f32 0.0, %v5270
        %v5272 = vpop.f32.mrb[0].mxu0
        %v5273 = vadd.f32 0.0, %v5272
        %v5274 = vpop.f32.mrb[0].mxu0
        %v5275 = vadd.f32 0.0, %v5274
        %5276 = vmatprep.mubr.bf16.mxu0 %v4515
        %5277 = vmatmul.mubr.bf16.gmra.mrb[0].mxu0 %v4514
        %v5278 = vpop.f32.mrb[0].mxu0
        %v5279 = vadd.f32 0.0, %v5278
        %v5280 = vpop.f32.mrb[0].mxu0
        %v5281 = vadd.f32 0.0, %v5280
        %v5282 = vpop.f32.mrb[0].mxu0
        %v5283 = vadd.f32 0.0, %v5282
        %v5284 = vpop.f32.mrb[0].mxu0
        %v5285 = vadd.f32 0.0, %v5284
        %5286 = vdwg.mxu0
        %s5287 = scalar_lea.vmem [#allocation7], 512
        %v5288 = vld [vmem:[%s5287] sm:$0xff]
        %v5289 = vld [vmem:[%s5287 + $0x8] sm:$0xff]
        %v5290 = vld [vmem:[%s5287 + $0x10] sm:$0xff]
        %v5291 = vld [vmem:[%s5287 + $0x18] sm:$0xff]
        %v5292 = vld [vmem:[%s5287 + $0x20] sm:$0xff]
        %v5293 = vld [vmem:[%s5287 + $0x28] sm:$0xff]
        %v5294 = vld [vmem:[%s5287 + $0x30] sm:$0xff]
        %v5295 = vld [vmem:[%s5287 + $0x38] sm:$0xff]
        %v5296 = vld [vmem:[%s5287 + $0x40] sm:$0xff]
        %v5297 = vld [vmem:[%s5287 + $0x48] sm:$0xff]
        %v5298 = vld [vmem:[%s5287 + $0x50] sm:$0xff]
        %v5299 = vld [vmem:[%s5287 + $0x58] sm:$0xff]
        %v5300 = vld [vmem:[%s5287 + $0x60] sm:$0xff]
        %v5301 = vld [vmem:[%s5287 + $0x68] sm:$0xff]
        %v5302 = vld [vmem:[%s5287 + $0x70] sm:$0xff]
        %v5303 = vld [vmem:[%s5287 + $0x78] sm:$0xff]
        %v5304 = vld [vmem:[%s5287 + $0x80] sm:$0xff]
        %v5305 = vld [vmem:[%s5287 + $0x88] sm:$0xff]
        %v5306 = vld [vmem:[%s5287 + $0x90] sm:$0xff]
        %v5307 = vld [vmem:[%s5287 + $0x98] sm:$0xff]
        %v5308 = vld [vmem:[%s5287 + $0xa0] sm:$0xff]
        %v5309 = vld [vmem:[%s5287 + $0xa8] sm:$0xff]
        %v5310 = vld [vmem:[%s5287 + $0xb0] sm:$0xff]
        %v5311 = vld [vmem:[%s5287 + $0xb8] sm:$0xff]
        %v5312 = vld [vmem:[%s5287 + $0xc0] sm:$0xff]
        %v5313 = vld [vmem:[%s5287 + $0xc8] sm:$0xff]
        %v5314 = vld [vmem:[%s5287 + $0xd0] sm:$0xff]
        %v5315 = vld [vmem:[%s5287 + $0xd8] sm:$0xff]
        %v5316 = vld [vmem:[%s5287 + $0xe0] sm:$0xff]
        %v5317 = vld [vmem:[%s5287 + $0xe8] sm:$0xff]
        %v5318 = vld [vmem:[%s5287 + $0xf0] sm:$0xff]
        %v5319 = vld [vmem:[%s5287 + $0xf8] sm:$0xff]
        %v5352 = vunpack.c.l.b16 %v5288
        %v5353 = vunpack.c.h.b16 %v5288
        %v5354 = vunpack.c.l.b16 %v5289
        %v5355 = vunpack.c.h.b16 %v5289
        %v5356 = vunpack.c.l.b16 %v5290
        %v5357 = vunpack.c.h.b16 %v5290
        %v5358 = vunpack.c.l.b16 %v5291
        %v5359 = vunpack.c.h.b16 %v5291
        %v5360 = vunpack.c.l.b16 %v5292
        %v5361 = vunpack.c.h.b16 %v5292
        %v5362 = vunpack.c.l.b16 %v5293
        %v5363 = vunpack.c.h.b16 %v5293
        %v5364 = vunpack.c.l.b16 %v5294
        %v5365 = vunpack.c.h.b16 %v5294
        %v5366 = vunpack.c.l.b16 %v5295
        %v5367 = vunpack.c.h.b16 %v5295
        %v5368 = vunpack.c.l.b16 %v5296
        %v5369 = vunpack.c.h.b16 %v5296
        %v5370 = vunpack.c.l.b16 %v5297
        %v5371 = vunpack.c.h.b16 %v5297
        %v5372 = vunpack.c.l.b16 %v5298
        %v5373 = vunpack.c.h.b16 %v5298
        %v5374 = vunpack.c.l.b16 %v5299
        %v5375 = vunpack.c.h.b16 %v5299
        %v5376 = vunpack.c.l.b16 %v5300
        %v5377 = vunpack.c.h.b16 %v5300
        %v5378 = vunpack.c.l.b16 %v5301
        %v5379 = vunpack.c.h.b16 %v5301
        %v5380 = vunpack.c.l.b16 %v5302
        %v5381 = vunpack.c.h.b16 %v5302
        %v5382 = vunpack.c.l.b16 %v5303
        %v5383 = vunpack.c.h.b16 %v5303
        %v5384 = vunpack.c.l.b16 %v5304
        %v5385 = vunpack.c.h.b16 %v5304
        %v5386 = vunpack.c.l.b16 %v5305
        %v5387 = vunpack.c.h.b16 %v5305
        %v5388 = vunpack.c.l.b16 %v5306
        %v5389 = vunpack.c.h.b16 %v5306
        %v5390 = vunpack.c.l.b16 %v5307
        %v5391 = vunpack.c.h.b16 %v5307
        %v5392 = vunpack.c.l.b16 %v5308
        %v5393 = vunpack.c.h.b16 %v5308
        %v5394 = vunpack.c.l.b16 %v5309
        %v5395 = vunpack.c.h.b16 %v5309
        %v5396 = vunpack.c.l.b16 %v5310
        %v5397 = vunpack.c.h.b16 %v5310
        %v5398 = vunpack.c.l.b16 %v5311
        %v5399 = vunpack.c.h.b16 %v5311
        %v5400 = vunpack.c.l.b16 %v5312
        %v5401 = vunpack.c.h.b16 %v5312
        %v5402 = vunpack.c.l.b16 %v5313
        %v5403 = vunpack.c.h.b16 %v5313
        %v5404 = vunpack.c.l.b16 %v5314
        %v5405 = vunpack.c.h.b16 %v5314
        %v5406 = vunpack.c.l.b16 %v5315
        %v5407 = vunpack.c.h.b16 %v5315
        %v5408 = vunpack.c.l.b16 %v5316
        %v5409 = vunpack.c.h.b16 %v5316
        %v5410 = vunpack.c.l.b16 %v5317
        %v5411 = vunpack.c.h.b16 %v5317
        %v5412 = vunpack.c.l.b16 %v5318
        %v5413 = vunpack.c.h.b16 %v5318
        %v5414 = vunpack.c.l.b16 %v5319
        %v5415 = vunpack.c.h.b16 %v5319
        %v5416 = vpack.c.b16 %v5354, %v5352
        %v5417 = vpack.c.b16 %v5355, %v5353
        %v5418 = vpack.c.b16 %v5358, %v5356
        %v5419 = vpack.c.b16 %v5359, %v5357
        %v5420 = vpack.c.b16 %v5362, %v5360
        %v5421 = vpack.c.b16 %v5363, %v5361
        %v5422 = vpack.c.b16 %v5366, %v5364
        %v5423 = vpack.c.b16 %v5367, %v5365
        %v5424 = vpack.c.b16 %v5370, %v5368
        %v5425 = vpack.c.b16 %v5371, %v5369
        %v5426 = vpack.c.b16 %v5374, %v5372
        %v5427 = vpack.c.b16 %v5375, %v5373
        %v5428 = vpack.c.b16 %v5378, %v5376
        %v5429 = vpack.c.b16 %v5379, %v5377
        %v5430 = vpack.c.b16 %v5382, %v5380
        %v5431 = vpack.c.b16 %v5383, %v5381
        %v5432 = vpack.c.b16 %v5386, %v5384
        %v5433 = vpack.c.b16 %v5387, %v5385
        %v5434 = vpack.c.b16 %v5390, %v5388
        %v5435 = vpack.c.b16 %v5391, %v5389
        %v5436 = vpack.c.b16 %v5394, %v5392
        %v5437 = vpack.c.b16 %v5395, %v5393
        %v5438 = vpack.c.b16 %v5398, %v5396
        %v5439 = vpack.c.b16 %v5399, %v5397
        %v5440 = vpack.c.b16 %v5402, %v5400
        %v5441 = vpack.c.b16 %v5403, %v5401
        %v5442 = vpack.c.b16 %v5406, %v5404
        %v5443 = vpack.c.b16 %v5407, %v5405
        %v5444 = vpack.c.b16 %v5410, %v5408
        %v5445 = vpack.c.b16 %v5411, %v5409
        %v5446 = vpack.c.b16 %v5414, %v5412
        %v5447 = vpack.c.b16 %v5415, %v5413
        %5480 = vmatprep.subr.bf16.mxu0 %v5417
        %5481 = vmatpush1.bf16.msra.mxu0 %v5416
        %5482 = vmatprep.subr.bf16.mxu0 %v5419
        %5483 = vmatpush1.bf16.msra.mxu0 %v5418
        %5484 = vmatprep.subr.bf16.mxu0 %v5421
        %5485 = vmatpush1.bf16.msra.mxu0 %v5420
        %5486 = vmatprep.subr.bf16.mxu0 %v5423
        %5487 = vmatpush1.bf16.msra.mxu0 %v5422
        %5488 = vmatprep.subr.bf16.mxu0 %v5425
        %5489 = vmatpush1.bf16.msra.mxu0 %v5424
        %5490 = vmatprep.subr.bf16.mxu0 %v5427
        %5491 = vmatpush1.bf16.msra.mxu0 %v5426
        %5492 = vmatprep.subr.bf16.mxu0 %v5429
        %5493 = vmatpush1.bf16.msra.mxu0 %v5428
        %5494 = vmatprep.subr.bf16.mxu0 %v5431
        %5495 = vmatpush1.bf16.msra.mxu0 %v5430
        %5496 = vmatprep.subr.bf16.mxu0 %v5433
        %5497 = vmatpush1.bf16.msra.mxu0 %v5432
        %5498 = vmatprep.subr.bf16.mxu0 %v5435
        %5499 = vmatpush1.bf16.msra.mxu0 %v5434
        %5500 = vmatprep.subr.bf16.mxu0 %v5437
        %5501 = vmatpush1.bf16.msra.mxu0 %v5436
        %5502 = vmatprep.subr.bf16.mxu0 %v5439
        %5503 = vmatpush1.bf16.msra.mxu0 %v5438
        %5504 = vmatprep.subr.bf16.mxu0 %v5441
        %5505 = vmatpush1.bf16.msra.mxu0 %v5440
        %5506 = vmatprep.subr.bf16.mxu0 %v5443
        %5507 = vmatpush1.bf16.msra.mxu0 %v5442
        %5508 = vmatprep.subr.bf16.mxu0 %v5445
        %5509 = vmatpush1.bf16.msra.mxu0 %v5444
        %5510 = vmatprep.subr.bf16.mxu0 %v5447
        %5511 = vmatpush1.bf16.msra.mxu0 %v5446
        %5512 = vmatprep.mubr.bf16.mxu0 %v4485
        %5513 = vmatmul.mubr.bf16.gmra.mrb[0].mxu0 %v4484
        %v5514 = vpop.f32.mrb[0].mxu0
        %v5515 = vadd.f32 0.0, %v5514
        %v5516 = vpop.f32.mrb[0].mxu0
        %v5517 = vadd.f32 0.0, %v5516
        %v5518 = vpop.f32.mrb[0].mxu0
        %v5519 = vadd.f32 0.0, %v5518
        %v5520 = vpop.f32.mrb[0].mxu0
        %v5521 = vadd.f32 0.0, %v5520
        %5522 = vmatprep.mubr.bf16.mxu0 %v4487
        %5523 = vmatmul.mubr.bf16.gmra.mrb[0].mxu0 %v4486
        %v5524 = vpop.f32.mrb[0].mxu0
        %v5525 = vadd.f32 0.0, %v5524
        %v5526 = vpop.f32.mrb[0].mxu0
        %v5527 = vadd.f32 0.0, %v5526
        %v5528 = vpop.f32.mrb[0].mxu0
        %v5529 = vadd.f32 0.0, %v5528
        %v5530 = vpop.f32.mrb[0].mxu0
        %v5531 = vadd.f32 0.0, %v5530
        %5532 = vmatprep.mubr.bf16.mxu0 %v4489
        %5533 = vmatmul.mubr.bf16.gmra.mrb[0].mxu0 %v4488
        %v5534 = vpop.f32.mrb[0].mxu0
        %v5535 = vadd.f32 0.0, %v5534
        %v5536 = vpop.f32.mrb[0].mxu0
        %v5537 = vadd.f32 0.0, %v5536
        %v5538 = vpop.f32.mrb[0].mxu0
        %v5539 = vadd.f32 0.0, %v5538
        %v5540 = vpop.f32.mrb[0].mxu0
        %v5541 = vadd.f32 0.0, %v5540
        %5542 = vmatprep.mubr.bf16.mxu0 %v4491
        %5543 = vmatmul.mubr.bf16.gmra.mrb[0].mxu0 %v4490
        %v5544 = vpop.f32.mrb[0].mxu0
        %v5545 = vadd.f32 0.0, %v5544
        %v5546 = vpop.f32.mrb[0].mxu0
        %v5547 = vadd.f32 0.0, %v5546
        %v5548 = vpop.f32.mrb[0].mxu0
        %v5549 = vadd.f32 0.0, %v5548
        %v5550 = vpop.f32.mrb[0].mxu0
        %v5551 = vadd.f32 0.0, %v5550
        %5552 = vmatprep.mubr.bf16.mxu0 %v4493
        %5553 = vmatmul.mubr.bf16.gmra.mrb[0].mxu0 %v4492
        %v5554 = vpop.f32.mrb[0].mxu0
        %v5555 = vadd.f32 0.0, %v5554
        %v5556 = vpop.f32.mrb[0].mxu0
        %v5557 = vadd.f32 0.0, %v5556
        %v5558 = vpop.f32.mrb[0].mxu0
        %v5559 = vadd.f32 0.0, %v5558
        %v5560 = vpop.f32.mrb[0].mxu0
        %v5561 = vadd.f32 0.0, %v5560
        %5562 = vmatprep.mubr.bf16.mxu0 %v4495
        %5563 = vmatmul.mubr.bf16.gmra.mrb[0].mxu0 %v4494
        %v5564 = vpop.f32.mrb[0].mxu0
        %v5565 = vadd.f32 0.0, %v5564
        %v5566 = vpop.f32.mrb[0].mxu0
        %v5567 = vadd.f32 0.0, %v5566
        %v5568 = vpop.f32.mrb[0].mxu0
        %v5569 = vadd.f32 0.0, %v5568
        %v5570 = vpop.f32.mrb[0].mxu0
        %v5571 = vadd.f32 0.0, %v5570
        %5572 = vmatprep.mubr.bf16.mxu0 %v4497
        %5573 = vmatmul.mubr.bf16.gmra.mrb[0].mxu0 %v4496
        %v5574 = vpop.f32.mrb[0].mxu0
        %v5575 = vadd.f32 0.0, %v5574
        %v5576 = vpop.f32.mrb[0].mxu0
        %v5577 = vadd.f32 0.0, %v5576
        %v5578 = vpop.f32.mrb[0].mxu0
        %v5579 = vadd.f32 0.0, %v5578
        %v5580 = vpop.f32.mrb[0].mxu0
        %v5581 = vadd.f32 0.0, %v5580
        %5582 = vmatprep.mubr.bf16.mxu0 %v4499
        %5583 = vmatmul.mubr.bf16.gmra.mrb[0].mxu0 %v4498
        %v5584 = vpop.f32.mrb[0].mxu0
        %v5585 = vadd.f32 0.0, %v5584
        %v5586 = vpop.f32.mrb[0].mxu0
        %v5587 = vadd.f32 0.0, %v5586
        %v5588 = vpop.f32.mrb[0].mxu0
        %v5589 = vadd.f32 0.0, %v5588
        %v5590 = vpop.f32.mrb[0].mxu0
        %v5591 = vadd.f32 0.0, %v5590
        %5592 = vmatprep.mubr.bf16.mxu0 %v4501
        %5593 = vmatmul.mubr.bf16.gmra.mrb[0].mxu0 %v4500
        %v5594 = vpop.f32.mrb[0].mxu0
        %v5595 = vadd.f32 0.0, %v5594
        %v5596 = vpop.f32.mrb[0].mxu0
        %v5597 = vadd.f32 0.0, %v5596
        %v5598 = vpop.f32.mrb[0].mxu0
        %v5599 = vadd.f32 0.0, %v5598
        %v5600 = vpop.f32.mrb[0].mxu0
        %v5601 = vadd.f32 0.0, %v5600
        %5602 = vmatprep.mubr.bf16.mxu0 %v4503
        %5603 = vmatmul.mubr.bf16.gmra.mrb[0].mxu0 %v4502
        %v5604 = vpop.f32.mrb[0].mxu0
        %v5605 = vadd.f32 0.0, %v5604
        %v5606 = vpop.f32.mrb[0].mxu0
        %v5607 = vadd.f32 0.0, %v5606
        %v5608 = vpop.f32.mrb[0].mxu0
        %v5609 = vadd.f32 0.0, %v5608
        %v5610 = vpop.f32.mrb[0].mxu0
        %v5611 = vadd.f32 0.0, %v5610
        %5612 = vmatprep.mubr.bf16.mxu0 %v4505
        %5613 = vmatmul.mubr.bf16.gmra.mrb[0].mxu0 %v4504
        %v5614 = vpop.f32.mrb[0].mxu0
        %v5615 = vadd.f32 0.0, %v5614
        %v5616 = vpop.f32.mrb[0].mxu0
        %v5617 = vadd.f32 0.0, %v5616
        %v5618 = vpop.f32.mrb[0].mxu0
        %v5619 = vadd.f32 0.0, %v5618
        %v5620 = vpop.f32.mrb[0].mxu0
        %v5621 = vadd.f32 0.0, %v5620
        %5622 = vmatprep.mubr.bf16.mxu0 %v4507
        %5623 = vmatmul.mubr.bf16.gmra.mrb[0].mxu0 %v4506
        %v5624 = vpop.f32.mrb[0].mxu0
        %v5625 = vadd.f32 0.0, %v5624
        %v5626 = vpop.f32.mrb[0].mxu0
        %v5627 = vadd.f32 0.0, %v5626
        %v5628 = vpop.f32.mrb[0].mxu0
        %v5629 = vadd.f32 0.0, %v5628
        %v5630 = vpop.f32.mrb[0].mxu0
        %v5631 = vadd.f32 0.0, %v5630
        %5632 = vmatprep.mubr.bf16.mxu0 %v4509
        %5633 = vmatmul.mubr.bf16.gmra.mrb[0].mxu0 %v4508
        %v5634 = vpop.f32.mrb[0].mxu0
        %v5635 = vadd.f32 0.0, %v5634
        %v5636 = vpop.f32.mrb[0].mxu0
        %v5637 = vadd.f32 0.0, %v5636
        %v5638 = vpop.f32.mrb[0].mxu0
        %v5639 = vadd.f32 0.0, %v5638
        %v5640 = vpop.f32.mrb[0].mxu0
        %v5641 = vadd.f32 0.0, %v5640
        %5642 = vmatprep.mubr.bf16.mxu0 %v4511
        %5643 = vmatmul.mubr.bf16.gmra.mrb[0].mxu0 %v4510
        %v5644 = vpop.f32.mrb[0].mxu0
        %v5645 = vadd.f32 0.0, %v5644
        %v5646 = vpop.f32.mrb[0].mxu0
        %v5647 = vadd.f32 0.0, %v5646
        %v5648 = vpop.f32.mrb[0].mxu0
        %v5649 = vadd.f32 0.0, %v5648
        %v5650 = vpop.f32.mrb[0].mxu0
        %v5651 = vadd.f32 0.0, %v5650
        %5652 = vmatprep.mubr.bf16.mxu0 %v4513
        %5653 = vmatmul.mubr.bf16.gmra.mrb[0].mxu0 %v4512
        %v5654 = vpop.f32.mrb[0].mxu0
        %v5655 = vadd.f32 0.0, %v5654
        %v5656 = vpop.f32.mrb[0].mxu0
        %v5657 = vadd.f32 0.0, %v5656
        %v5658 = vpop.f32.mrb[0].mxu0
        %v5659 = vadd.f32 0.0, %v5658
        %v5660 = vpop.f32.mrb[0].mxu0
        %v5661 = vadd.f32 0.0, %v5660
        %5662 = vmatprep.mubr.bf16.mxu0 %v4515
        %5663 = vmatmul.mubr.bf16.gmra.mrb[0].mxu0 %v4514
        %v5664 = vpop.f32.mrb[0].mxu0
        %v5665 = vadd.f32 0.0, %v5664
        %v5666 = vpop.f32.mrb[0].mxu0
        %v5667 = vadd.f32 0.0, %v5666
        %v5668 = vpop.f32.mrb[0].mxu0
        %v5669 = vadd.f32 0.0, %v5668
        %v5670 = vpop.f32.mrb[0].mxu0
        %v5671 = vadd.f32 0.0, %v5670
        %5672 = vdwg.mxu0
        %v5673 = vrot.slane %v4743, 7
        %v5674 = vrot.slane %v4745, 7
        %v5675 = vrot.slane %v4747, 7
        %v5676 = vrot.slane %v4749, 7
        %v5677 = vrot.slane %v4753, 7
        %v5678 = vrot.slane %v4755, 7
        %v5679 = vrot.slane %v4757, 7
        %v5680 = vrot.slane %v4759, 7
        %v5681 = vrot.slane %v4763, 7
        %v5682 = vrot.slane %v4765, 7
        %v5683 = vrot.slane %v4767, 7
        %v5684 = vrot.slane %v4769, 7
        %v5685 = vrot.slane %v4773, 7
        %v5686 = vrot.slane %v4775, 7
        %v5687 = vrot.slane %v4777, 7
        %v5688 = vrot.slane %v4779, 7
        %v5689 = vrot.slane %v4783, 7
        %v5690 = vrot.slane %v4785, 7
        %v5691 = vrot.slane %v4787, 7
        %v5692 = vrot.slane %v4789, 7
        %v5693 = vrot.slane %v4793, 7
        %v5694 = vrot.slane %v4795, 7
        %v5695 = vrot.slane %v4797, 7
        %v5696 = vrot.slane %v4799, 7
        %v5697 = vrot.slane %v4803, 7
        %v5698 = vrot.slane %v4805, 7
        %v5699 = vrot.slane %v4807, 7
        %v5700 = vrot.slane %v4809, 7
        %v5701 = vrot.slane %v4813, 7
        %v5702 = vrot.slane %v4815, 7
        %v5703 = vrot.slane %v4817, 7
        %v5704 = vrot.slane %v4819, 7
        %v5705 = vrot.slane %v4823, 7
        %v5706 = vrot.slane %v4825, 7
        %v5707 = vrot.slane %v4827, 7
        %v5708 = vrot.slane %v4829, 7
        %v5709 = vrot.slane %v4833, 7
        %v5710 = vrot.slane %v4835, 7
        %v5711 = vrot.slane %v4837, 7
        %v5712 = vrot.slane %v4839, 7
        %v5713 = vrot.slane %v4843, 7
        %v5714 = vrot.slane %v4845, 7
        %v5715 = vrot.slane %v4847, 7
        %v5716 = vrot.slane %v4849, 7
        %v5717 = vrot.slane %v4853, 7
        %v5718 = vrot.slane %v4855, 7
        %v5719 = vrot.slane %v4857, 7
        %v5720 = vrot.slane %v4859, 7
        %v5721 = vrot.slane %v4863, 7
        %v5722 = vrot.slane %v4865, 7
        %v5723 = vrot.slane %v4867, 7
        %v5724 = vrot.slane %v4869, 7
        %v5725 = vrot.slane %v4873, 7
        %v5726 = vrot.slane %v4875, 7
        %v5727 = vrot.slane %v4877, 7
        %v5728 = vrot.slane %v4879, 7
        %v5729 = vrot.slane %v4883, 7
        %v5730 = vrot.slane %v4885, 7
        %v5731 = vrot.slane %v4887, 7
        %v5732 = vrot.slane %v4889, 7
        %v5733 = vrot.slane %v4893, 7
        %v5734 = vrot.slane %v4895, 7
        %v5735 = vrot.slane %v4897, 7
        %v5736 = vrot.slane %v4899, 7
        %v5737 = vsel %vm3102, %v5733, %v5735
        %v5738 = vsel %vm3102, %v5734, %v5736
        %v5739 = vsel %vm3102, %v5731, %v5733
        %v5740 = vsel %vm3102, %v5732, %v5734
        %v5741 = vsel %vm3102, %v5729, %v5731
        %v5742 = vsel %vm3102, %v5730, %v5732
        %v5743 = vsel %vm3102, %v5727, %v5729
        %v5744 = vsel %vm3102, %v5728, %v5730
        %v5745 = vsel %vm3102, %v5725, %v5727
        %v5746 = vsel %vm3102, %v5726, %v5728
        %v5747 = vsel %vm3102, %v5723, %v5725
        %v5748 = vsel %vm3102, %v5724, %v5726
        %v5749 = vsel %vm3102, %v5721, %v5723
        %v5750 = vsel %vm3102, %v5722, %v5724
        %v5751 = vsel %vm3102, %v5719, %v5721
        %v5752 = vsel %vm3102, %v5720, %v5722
        %v5753 = vsel %vm3102, %v5717, %v5719
        %v5754 = vsel %vm3102, %v5718, %v5720
        %v5755 = vsel %vm3102, %v5715, %v5717
        %v5756 = vsel %vm3102, %v5716, %v5718
        %v5757 = vsel %vm3102, %v5713, %v5715
        %v5758 = vsel %vm3102, %v5714, %v5716
        %v5759 = vsel %vm3102, %v5711, %v5713
        %v5760 = vsel %vm3102, %v5712, %v5714
        %v5761 = vsel %vm3102, %v5709, %v5711
        %v5762 = vsel %vm3102, %v5710, %v5712
        %v5763 = vsel %vm3102, %v5707, %v5709
        %v5764 = vsel %vm3102, %v5708, %v5710
        %v5765 = vsel %vm3102, %v5705, %v5707
        %v5766 = vsel %vm3102, %v5706, %v5708
        %v5767 = vsel %vm3102, %v5703, %v5705
        %v5768 = vsel %vm3102, %v5704, %v5706
        %v5769 = vsel %vm3102, %v5701, %v5703
        %v5770 = vsel %vm3102, %v5702, %v5704
        %v5771 = vsel %vm3102, %v5699, %v5701
        %v5772 = vsel %vm3102, %v5700, %v5702
        %v5773 = vsel %vm3102, %v5697, %v5699
        %v5774 = vsel %vm3102, %v5698, %v5700
        %v5775 = vsel %vm3102, %v5695, %v5697
        %v5776 = vsel %vm3102, %v5696, %v5698
        %v5777 = vsel %vm3102, %v5693, %v5695
        %v5778 = vsel %vm3102, %v5694, %v5696
        %v5779 = vsel %vm3102, %v5691, %v5693
        %v5780 = vsel %vm3102, %v5692, %v5694
        %v5781 = vsel %vm3102, %v5689, %v5691
        %v5782 = vsel %vm3102, %v5690, %v5692
        %v5783 = vsel %vm3102, %v5687, %v5689
        %v5784 = vsel %vm3102, %v5688, %v5690
        %v5785 = vsel %vm3102, %v5685, %v5687
        %v5786 = vsel %vm3102, %v5686, %v5688
        %v5787 = vsel %vm3102, %v5683, %v5685
        %v5788 = vsel %vm3102, %v5684, %v5686
        %v5789 = vsel %vm3102, %v5681, %v5683
        %v5790 = vsel %vm3102, %v5682, %v5684
        %v5791 = vsel %vm3102, %v5679, %v5681
        %v5792 = vsel %vm3102, %v5680, %v5682
        %v5793 = vsel %vm3102, %v5677, %v5679
        %v5794 = vsel %vm3102, %v5678, %v5680
        %v5795 = vsel %vm3102, %v5675, %v5677
        %v5796 = vsel %vm3102, %v5676, %v5678
        %v5797 = vsel %vm3102, %v5673, %v5675
        %v5798 = vsel %vm3102, %v5674, %v5676
        %v5799 = vsel %vm3102, %v5735, %v5673
        %v5800 = vsel %vm3102, %v5736, %v5674
        %v5801 = vsel %vm3199, 0.0, %v5799
        %v5802 = vsel %vm3199, 0.0, %v5800
        %v5803 = vsel %vm3200, 0.0, %v5797
        %v5804 = vsel %vm3200, 0.0, %v5798
        %v5805 = vsel %vm3201, 0.0, %v5795
        %v5806 = vsel %vm3201, 0.0, %v5796
        %v5807 = vsel %vm3202, 0.0, %v5793
        %v5808 = vsel %vm3202, 0.0, %v5794
        %v5809 = vsel %vm3203, 0.0, %v5791
        %v5810 = vsel %vm3203, 0.0, %v5792
        %v5811 = vsel %vm3204, 0.0, %v5789
        %v5812 = vsel %vm3204, 0.0, %v5790
        %v5813 = vsel %vm3205, 0.0, %v5787
        %v5814 = vsel %vm3205, 0.0, %v5788
        %v5815 = vsel %vm3206, 0.0, %v5785
        %v5816 = vsel %vm3206, 0.0, %v5786
        %v5817 = vsel %vm3207, 0.0, %v5783
        %v5818 = vsel %vm3207, 0.0, %v5784
        %v5819 = vsel %vm3208, 0.0, %v5781
        %v5820 = vsel %vm3208, 0.0, %v5782
        %v5821 = vsel %vm3209, 0.0, %v5779
        %v5822 = vsel %vm3209, 0.0, %v5780
        %v5823 = vsel %vm3210, 0.0, %v5777
        %v5824 = vsel %vm3210, 0.0, %v5778
        %v5825 = vsel %vm3211, 0.0, %v5775
        %v5826 = vsel %vm3211, 0.0, %v5776
        %v5827 = vsel %vm3212, 0.0, %v5773
        %v5828 = vsel %vm3212, 0.0, %v5774
        %v5829 = vsel %vm3213, 0.0, %v5771
        %v5830 = vsel %vm3213, 0.0, %v5772
        %v5831 = vsel %vm3214, 0.0, %v5769
        %v5832 = vsel %vm3214, 0.0, %v5770
        %v5833 = vsel %vm3215, 0.0, %v5767
        %v5834 = vsel %vm3215, 0.0, %v5768
        %v5835 = vsel %vm3216, 0.0, %v5765
        %v5836 = vsel %vm3216, 0.0, %v5766
        %v5837 = vsel %vm3217, 0.0, %v5763
        %v5838 = vsel %vm3217, 0.0, %v5764
        %v5839 = vsel %vm3218, 0.0, %v5761
        %v5840 = vsel %vm3218, 0.0, %v5762
        %v5841 = vsel %vm3219, 0.0, %v5759
        %v5842 = vsel %vm3219, 0.0, %v5760
        %v5843 = vsel %vm3220, 0.0, %v5757
        %v5844 = vsel %vm3220, 0.0, %v5758
        %v5845 = vsel %vm3221, 0.0, %v5755
        %v5846 = vsel %vm3221, 0.0, %v5756
        %v5847 = vsel %vm3222, 0.0, %v5753
        %v5848 = vsel %vm3222, 0.0, %v5754
        %v5849 = vsel %vm3223, 0.0, %v5751
        %v5850 = vsel %vm3223, 0.0, %v5752
        %v5851 = vsel %vm3224, 0.0, %v5749
        %v5852 = vsel %vm3224, 0.0, %v5750
        %v5853 = vsel %vm3225, 0.0, %v5747
        %v5854 = vsel %vm3225, 0.0, %v5748
        %v5855 = vsel %vm3226, 0.0, %v5745
        %v5856 = vsel %vm3226, 0.0, %v5746
        %v5857 = vsel %vm3227, 0.0, %v5743
        %v5858 = vsel %vm3227, 0.0, %v5744
        %v5859 = vsel %vm3228, 0.0, %v5741
        %v5860 = vsel %vm3228, 0.0, %v5742
        %v5861 = vsel %vm3229, 0.0, %v5739
        %v5862 = vsel %vm3229, 0.0, %v5740
        %v5863 = vsel %vm3230, 0.0, %v5737
        %v5864 = vsel %vm3230, 0.0, %v5738
        %v5865 = vrot.slane %v5515, 1
        %v5866 = vrot.slane %v5517, 1
        %v5867 = vrot.slane %v5519, 1
        %v5868 = vrot.slane %v5521, 1
        %v5869 = vrot.slane %v5525, 1
        %v5870 = vrot.slane %v5527, 1
        %v5871 = vrot.slane %v5529, 1
        %v5872 = vrot.slane %v5531, 1
        %v5873 = vrot.slane %v5535, 1
        %v5874 = vrot.slane %v5537, 1
        %v5875 = vrot.slane %v5539, 1
        %v5876 = vrot.slane %v5541, 1
        %v5877 = vrot.slane %v5545, 1
        %v5878 = vrot.slane %v5547, 1
        %v5879 = vrot.slane %v5549, 1
        %v5880 = vrot.slane %v5551, 1
        %v5881 = vrot.slane %v5555, 1
        %v5882 = vrot.slane %v5557, 1
        %v5883 = vrot.slane %v5559, 1
        %v5884 = vrot.slane %v5561, 1
        %v5885 = vrot.slane %v5565, 1
        %v5886 = vrot.slane %v5567, 1
        %v5887 = vrot.slane %v5569, 1
        %v5888 = vrot.slane %v5571, 1
        %v5889 = vrot.slane %v5575, 1
        %v5890 = vrot.slane %v5577, 1
        %v5891 = vrot.slane %v5579, 1
        %v5892 = vrot.slane %v5581, 1
        %v5893 = vrot.slane %v5585, 1
        %v5894 = vrot.slane %v5587, 1
        %v5895 = vrot.slane %v5589, 1
        %v5896 = vrot.slane %v5591, 1
        %v5897 = vrot.slane %v5595, 1
        %v5898 = vrot.slane %v5597, 1
        %v5899 = vrot.slane %v5599, 1
        %v5900 = vrot.slane %v5601, 1
        %v5901 = vrot.slane %v5605, 1
        %v5902 = vrot.slane %v5607, 1
        %v5903 = vrot.slane %v5609, 1
        %v5904 = vrot.slane %v5611, 1
        %v5905 = vrot.slane %v5615, 1
        %v5906 = vrot.slane %v5617, 1
        %v5907 = vrot.slane %v5619, 1
        %v5908 = vrot.slane %v5621, 1
        %v5909 = vrot.slane %v5625, 1
        %v5910 = vrot.slane %v5627, 1
        %v5911 = vrot.slane %v5629, 1
        %v5912 = vrot.slane %v5631, 1
        %v5913 = vrot.slane %v5635, 1
        %v5914 = vrot.slane %v5637, 1
        %v5915 = vrot.slane %v5639, 1
        %v5916 = vrot.slane %v5641, 1
        %v5917 = vrot.slane %v5645, 1
        %v5918 = vrot.slane %v5647, 1
        %v5919 = vrot.slane %v5649, 1
        %v5920 = vrot.slane %v5651, 1
        %v5921 = vrot.slane %v5655, 1
        %v5922 = vrot.slane %v5657, 1
        %v5923 = vrot.slane %v5659, 1
        %v5924 = vrot.slane %v5661, 1
        %v5925 = vrot.slane %v5665, 1
        %v5926 = vrot.slane %v5667, 1
        %v5927 = vrot.slane %v5669, 1
        %v5928 = vrot.slane %v5671, 1
        %v5929 = vsel %vm3359, %v5925, %v5927
        %v5930 = vsel %vm3359, %v5926, %v5928
        %v5931 = vsel %vm3359, %v5923, %v5925
        %v5932 = vsel %vm3359, %v5924, %v5926
        %v5933 = vsel %vm3359, %v5921, %v5923
        %v5934 = vsel %vm3359, %v5922, %v5924
        %v5935 = vsel %vm3359, %v5919, %v5921
        %v5936 = vsel %vm3359, %v5920, %v5922
        %v5937 = vsel %vm3359, %v5917, %v5919
        %v5938 = vsel %vm3359, %v5918, %v5920
        %v5939 = vsel %vm3359, %v5915, %v5917
        %v5940 = vsel %vm3359, %v5916, %v5918
        %v5941 = vsel %vm3359, %v5913, %v5915
        %v5942 = vsel %vm3359, %v5914, %v5916
        %v5943 = vsel %vm3359, %v5911, %v5913
        %v5944 = vsel %vm3359, %v5912, %v5914
        %v5945 = vsel %vm3359, %v5909, %v5911
        %v5946 = vsel %vm3359, %v5910, %v5912
        %v5947 = vsel %vm3359, %v5907, %v5909
        %v5948 = vsel %vm3359, %v5908, %v5910
        %v5949 = vsel %vm3359, %v5905, %v5907
        %v5950 = vsel %vm3359, %v5906, %v5908
        %v5951 = vsel %vm3359, %v5903, %v5905
        %v5952 = vsel %vm3359, %v5904, %v5906
        %v5953 = vsel %vm3359, %v5901, %v5903
        %v5954 = vsel %vm3359, %v5902, %v5904
        %v5955 = vsel %vm3359, %v5899, %v5901
        %v5956 = vsel %vm3359, %v5900, %v5902
        %v5957 = vsel %vm3359, %v5897, %v5899
        %v5958 = vsel %vm3359, %v5898, %v5900
        %v5959 = vsel %vm3359, %v5895, %v5897
        %v5960 = vsel %vm3359, %v5896, %v5898
        %v5961 = vsel %vm3359, %v5893, %v5895
        %v5962 = vsel %vm3359, %v5894, %v5896
        %v5963 = vsel %vm3359, %v5891, %v5893
        %v5964 = vsel %vm3359, %v5892, %v5894
        %v5965 = vsel %vm3359, %v5889, %v5891
        %v5966 = vsel %vm3359, %v5890, %v5892
        %v5967 = vsel %vm3359, %v5887, %v5889
        %v5968 = vsel %vm3359, %v5888, %v5890
        %v5969 = vsel %vm3359, %v5885, %v5887
        %v5970 = vsel %vm3359, %v5886, %v5888
        %v5971 = vsel %vm3359, %v5883, %v5885
        %v5972 = vsel %vm3359, %v5884, %v5886
        %v5973 = vsel %vm3359, %v5881, %v5883
        %v5974 = vsel %vm3359, %v5882, %v5884
        %v5975 = vsel %vm3359, %v5879, %v5881
        %v5976 = vsel %vm3359, %v5880, %v5882
        %v5977 = vsel %vm3359, %v5877, %v5879
        %v5978 = vsel %vm3359, %v5878, %v5880
        %v5979 = vsel %vm3359, %v5875, %v5877
        %v5980 = vsel %vm3359, %v5876, %v5878
        %v5981 = vsel %vm3359, %v5873, %v5875
        %v5982 = vsel %vm3359, %v5874, %v5876
        %v5983 = vsel %vm3359, %v5871, %v5873
        %v5984 = vsel %vm3359, %v5872, %v5874
        %v5985 = vsel %vm3359, %v5869, %v5871
        %v5986 = vsel %vm3359, %v5870, %v5872
        %v5987 = vsel %vm3359, %v5867, %v5869
        %v5988 = vsel %vm3359, %v5868, %v5870
        %v5989 = vsel %vm3359, %v5865, %v5867
        %v5990 = vsel %vm3359, %v5866, %v5868
        %v5991 = vsel %vm3359, %v5927, %v5865
        %v5992 = vsel %vm3359, %v5928, %v5866
        %v5993 = vsel %vm3456, 0.0, %v5989
        %v5994 = vsel %vm3456, 0.0, %v5990
        %v5995 = vsel %vm3457, 0.0, %v5987
        %v5996 = vsel %vm3457, 0.0, %v5988
        %v5997 = vsel %vm3458, 0.0, %v5985
        %v5998 = vsel %vm3458, 0.0, %v5986
        %v5999 = vsel %vm3459, 0.0, %v5983
        %v6000 = vsel %vm3459, 0.0, %v5984
        %v6001 = vsel %vm3460, 0.0, %v5981
        %v6002 = vsel %vm3460, 0.0, %v5982
        %v6003 = vsel %vm3461, 0.0, %v5979
        %v6004 = vsel %vm3461, 0.0, %v5980
        %v6005 = vsel %vm3462, 0.0, %v5977
        %v6006 = vsel %vm3462, 0.0, %v5978
        %v6007 = vsel %vm3463, 0.0, %v5975
        %v6008 = vsel %vm3463, 0.0, %v5976
        %v6009 = vsel %vm3464, 0.0, %v5973
        %v6010 = vsel %vm3464, 0.0, %v5974
        %v6011 = vsel %vm3465, 0.0, %v5971
        %v6012 = vsel %vm3465, 0.0, %v5972
        %v6013 = vsel %vm3466, 0.0, %v5969
        %v6014 = vsel %vm3466, 0.0, %v5970
        %v6015 = vsel %vm3467, 0.0, %v5967
        %v6016 = vsel %vm3467, 0.0, %v5968
        %v6017 = vsel %vm3468, 0.0, %v5965
        %v6018 = vsel %vm3468, 0.0, %v5966
        %v6019 = vsel %vm3469, 0.0, %v5963
        %v6020 = vsel %vm3469, 0.0, %v5964
        %v6021 = vsel %vm3470, 0.0, %v5961
        %v6022 = vsel %vm3470, 0.0, %v5962
        %v6023 = vsel %vm3471, 0.0, %v5959
        %v6024 = vsel %vm3471, 0.0, %v5960
        %v6025 = vsel %vm3472, 0.0, %v5957
        %v6026 = vsel %vm3472, 0.0, %v5958
        %v6027 = vsel %vm3473, 0.0, %v5955
        %v6028 = vsel %vm3473, 0.0, %v5956
        %v6029 = vsel %vm3474, 0.0, %v5953
        %v6030 = vsel %vm3474, 0.0, %v5954
        %v6031 = vsel %vm3475, 0.0, %v5951
        %v6032 = vsel %vm3475, 0.0, %v5952
        %v6033 = vsel %vm3476, 0.0, %v5949
        %v6034 = vsel %vm3476, 0.0, %v5950
        %v6035 = vsel %vm3477, 0.0, %v5947
        %v6036 = vsel %vm3477, 0.0, %v5948
        %v6037 = vsel %vm3478, 0.0, %v5945
        %v6038 = vsel %vm3478, 0.0, %v5946
        %v6039 = vsel %vm3479, 0.0, %v5943
        %v6040 = vsel %vm3479, 0.0, %v5944
        %v6041 = vsel %vm3480, 0.0, %v5941
        %v6042 = vsel %vm3480, 0.0, %v5942
        %v6043 = vsel %vm3481, 0.0, %v5939
        %v6044 = vsel %vm3481, 0.0, %v5940
        %v6045 = vsel %vm3482, 0.0, %v5937
        %v6046 = vsel %vm3482, 0.0, %v5938
        %v6047 = vsel %vm3483, 0.0, %v5935
        %v6048 = vsel %vm3483, 0.0, %v5936
        %v6049 = vsel %vm3484, 0.0, %v5933
        %v6050 = vsel %vm3484, 0.0, %v5934
        %v6051 = vsel %vm3485, 0.0, %v5931
        %v6052 = vsel %vm3485, 0.0, %v5932
        %v6053 = vsel %vm3486, 0.0, %v5929
        %v6054 = vsel %vm3486, 0.0, %v5930
        %v6055 = vsel %vm3487, 0.0, %v5991
        %v6056 = vsel %vm3487, 0.0, %v5992
        %v6057 = vadd.f32 %v5801, %v5129
        %v6058 = vadd.f32 %v5802, %v5131
        %v6059 = vadd.f32 %v5803, %v5133
        %v6060 = vadd.f32 %v5804, %v5135
        %v6061 = vadd.f32 %v5805, %v5139
        %v6062 = vadd.f32 %v5806, %v5141
        %v6063 = vadd.f32 %v5807, %v5143
        %v6064 = vadd.f32 %v5808, %v5145
        %v6065 = vadd.f32 %v5809, %v5149
        %v6066 = vadd.f32 %v5810, %v5151
        %v6067 = vadd.f32 %v5811, %v5153
        %v6068 = vadd.f32 %v5812, %v5155
        %v6069 = vadd.f32 %v5813, %v5159
        %v6070 = vadd.f32 %v5814, %v5161
        %v6071 = vadd.f32 %v5815, %v5163
        %v6072 = vadd.f32 %v5816, %v5165
        %v6073 = vadd.f32 %v5817, %v5169
        %v6074 = vadd.f32 %v5818, %v5171
        %v6075 = vadd.f32 %v5819, %v5173
        %v6076 = vadd.f32 %v5820, %v5175
        %v6077 = vadd.f32 %v5821, %v5179
        %v6078 = vadd.f32 %v5822, %v5181
        %v6079 = vadd.f32 %v5823, %v5183
        %v6080 = vadd.f32 %v5824, %v5185
        %v6081 = vadd.f32 %v5825, %v5189
        %v6082 = vadd.f32 %v5826, %v5191
        %v6083 = vadd.f32 %v5827, %v5193
        %v6084 = vadd.f32 %v5828, %v5195
        %v6085 = vadd.f32 %v5829, %v5199
        %v6086 = vadd.f32 %v5830, %v5201
        %v6087 = vadd.f32 %v5831, %v5203
        %v6088 = vadd.f32 %v5832, %v5205
        %v6089 = vadd.f32 %v5833, %v5209
        %v6090 = vadd.f32 %v5834, %v5211
        %v6091 = vadd.f32 %v5835, %v5213
        %v6092 = vadd.f32 %v5836, %v5215
        %v6093 = vadd.f32 %v5837, %v5219
        %v6094 = vadd.f32 %v5838, %v5221
        %v6095 = vadd.f32 %v5839, %v5223
        %v6096 = vadd.f32 %v5840, %v5225
        %v6097 = vadd.f32 %v5841, %v5229
        %v6098 = vadd.f32 %v5842, %v5231
        %v6099 = vadd.f32 %v5843, %v5233
        %v6100 = vadd.f32 %v5844, %v5235
        %v6101 = vadd.f32 %v5845, %v5239
        %v6102 = vadd.f32 %v5846, %v5241
        %v6103 = vadd.f32 %v5847, %v5243
        %v6104 = vadd.f32 %v5848, %v5245
        %v6105 = vadd.f32 %v5849, %v5249
        %v6106 = vadd.f32 %v5850, %v5251
        %v6107 = vadd.f32 %v5851, %v5253
        %v6108 = vadd.f32 %v5852, %v5255
        %v6109 = vadd.f32 %v5853, %v5259
        %v6110 = vadd.f32 %v5854, %v5261
        %v6111 = vadd.f32 %v5855, %v5263
        %v6112 = vadd.f32 %v5856, %v5265
        %v6113 = vadd.f32 %v5857, %v5269
        %v6114 = vadd.f32 %v5858, %v5271
        %v6115 = vadd.f32 %v5859, %v5273
        %v6116 = vadd.f32 %v5860, %v5275
        %v6117 = vadd.f32 %v5861, %v5279
        %v6118 = vadd.f32 %v5862, %v5281
        %v6119 = vadd.f32 %v5863, %v5283
        %v6120 = vadd.f32 %v5864, %v5285
        %v6121 = vadd.f32 %v6057, %v5993
        %v6122 = vadd.f32 %v6058, %v5994
        %v6123 = vadd.f32 %v6059, %v5995
        %v6124 = vadd.f32 %v6060, %v5996
        %v6125 = vadd.f32 %v6061, %v5997
        %v6126 = vadd.f32 %v6062, %v5998
        %v6127 = vadd.f32 %v6063, %v5999
        %v6128 = vadd.f32 %v6064, %v6000
        %v6129 = vadd.f32 %v6065, %v6001
        %v6130 = vadd.f32 %v6066, %v6002
        %v6131 = vadd.f32 %v6067, %v6003
        %v6132 = vadd.f32 %v6068, %v6004
        %v6133 = vadd.f32 %v6069, %v6005
        %v6134 = vadd.f32 %v6070, %v6006
        %v6135 = vadd.f32 %v6071, %v6007
        %v6136 = vadd.f32 %v6072, %v6008
        %v6137 = vadd.f32 %v6073, %v6009
        %v6138 = vadd.f32 %v6074, %v6010
        %v6139 = vadd.f32 %v6075, %v6011
        %v6140 = vadd.f32 %v6076, %v6012
        %v6141 = vadd.f32 %v6077, %v6013
        %v6142 = vadd.f32 %v6078, %v6014
        %v6143 = vadd.f32 %v6079, %v6015
        %v6144 = vadd.f32 %v6080, %v6016
        %v6145 = vadd.f32 %v6081, %v6017
        %v6146 = vadd.f32 %v6082, %v6018
        %v6147 = vadd.f32 %v6083, %v6019
        %v6148 = vadd.f32 %v6084, %v6020
        %v6149 = vadd.f32 %v6085, %v6021
        %v6150 = vadd.f32 %v6086, %v6022
        %v6151 = vadd.f32 %v6087, %v6023
        %v6152 = vadd.f32 %v6088, %v6024
        %v6153 = vadd.f32 %v6089, %v6025
        %v6154 = vadd.f32 %v6090, %v6026
        %v6155 = vadd.f32 %v6091, %v6027
        %v6156 = vadd.f32 %v6092, %v6028
        %v6157 = vadd.f32 %v6093, %v6029
        %v6158 = vadd.f32 %v6094, %v6030
        %v6159 = vadd.f32 %v6095, %v6031
        %v6160 = vadd.f32 %v6096, %v6032
        %v6161 = vadd.f32 %v6097, %v6033
        %v6162 = vadd.f32 %v6098, %v6034
        %v6163 = vadd.f32 %v6099, %v6035
        %v6164 = vadd.f32 %v6100, %v6036
        %v6165 = vadd.f32 %v6101, %v6037
        %v6166 = vadd.f32 %v6102, %v6038
        %v6167 = vadd.f32 %v6103, %v6039
        %v6168 = vadd.f32 %v6104, %v6040
        %v6169 = vadd.f32 %v6105, %v6041
        %v6170 = vadd.f32 %v6106, %v6042
        %v6171 = vadd.f32 %v6107, %v6043
        %v6172 = vadd.f32 %v6108, %v6044
        %v6173 = vadd.f32 %v6109, %v6045
        %v6174 = vadd.f32 %v6110, %v6046
        %v6175 = vadd.f32 %v6111, %v6047
        %v6176 = vadd.f32 %v6112, %v6048
        %v6177 = vadd.f32 %v6113, %v6049
        %v6178 = vadd.f32 %v6114, %v6050
        %v6179 = vadd.f32 %v6115, %v6051
        %v6180 = vadd.f32 %v6116, %v6052
        %v6181 = vadd.f32 %v6117, %v6053
        %v6182 = vadd.f32 %v6118, %v6054
        %v6183 = vadd.f32 %v6119, %v6055
        %v6184 = vadd.f32 %v6120, %v6056
        %v6186 = vlaneseq
        %v6187 = vshrl.u32 %v6186, 7
        %v6188 = vsub.s32 0, %v6187
        %v6189 = vrot.slane %v4483, %v6188
        %v6190 = vlaneseq
        %v6191 = vshrl.u32 %v6190, 7
        %v6192 = vsub.s32 1, %v6191
        %v6193 = vrot.slane %v4483, %v6192
        %v6196 = vadd.f32 %v6121, %v6189
        %v6197 = vadd.f32 %v6122, %v6193
        %v6198 = vadd.f32 %v6123, %v6189
        %v6199 = vadd.f32 %v6124, %v6193
        %v6200 = vadd.f32 %v6125, %v6189
        %v6201 = vadd.f32 %v6126, %v6193
        %v6202 = vadd.f32 %v6127, %v6189
        %v6203 = vadd.f32 %v6128, %v6193
        %v6204 = vadd.f32 %v6129, %v6189
        %v6205 = vadd.f32 %v6130, %v6193
        %v6206 = vadd.f32 %v6131, %v6189
        %v6207 = vadd.f32 %v6132, %v6193
        %v6208 = vadd.f32 %v6133, %v6189
        %v6209 = vadd.f32 %v6134, %v6193
        %v6210 = vadd.f32 %v6135, %v6189
        %v6211 = vadd.f32 %v6136, %v6193
        %v6212 = vadd.f32 %v6137, %v6189
        %v6213 = vadd.f32 %v6138, %v6193
        %v6214 = vadd.f32 %v6139, %v6189
        %v6215 = vadd.f32 %v6140, %v6193
        %v6216 = vadd.f32 %v6141, %v6189
        %v6217 = vadd.f32 %v6142, %v6193
        %v6218 = vadd.f32 %v6143, %v6189
        %v6219 = vadd.f32 %v6144, %v6193
        %v6220 = vadd.f32 %v6145, %v6189
        %v6221 = vadd.f32 %v6146, %v6193
        %v6222 = vadd.f32 %v6147, %v6189
        %v6223 = vadd.f32 %v6148, %v6193
        %v6224 = vadd.f32 %v6149, %v6189
        %v6225 = vadd.f32 %v6150, %v6193
        %v6226 = vadd.f32 %v6151, %v6189
        %v6227 = vadd.f32 %v6152, %v6193
        %v6228 = vadd.f32 %v6153, %v6189
        %v6229 = vadd.f32 %v6154, %v6193
        %v6230 = vadd.f32 %v6155, %v6189
        %v6231 = vadd.f32 %v6156, %v6193
        %v6232 = vadd.f32 %v6157, %v6189
        %v6233 = vadd.f32 %v6158, %v6193
        %v6234 = vadd.f32 %v6159, %v6189
        %v6235 = vadd.f32 %v6160, %v6193
        %v6236 = vadd.f32 %v6161, %v6189
        %v6237 = vadd.f32 %v6162, %v6193
        %v6238 = vadd.f32 %v6163, %v6189
        %v6239 = vadd.f32 %v6164, %v6193
        %v6240 = vadd.f32 %v6165, %v6189
        %v6241 = vadd.f32 %v6166, %v6193
        %v6242 = vadd.f32 %v6167, %v6189
        %v6243 = vadd.f32 %v6168, %v6193
        %v6244 = vadd.f32 %v6169, %v6189
        %v6245 = vadd.f32 %v6170, %v6193
        %v6246 = vadd.f32 %v6171, %v6189
        %v6247 = vadd.f32 %v6172, %v6193
        %v6248 = vadd.f32 %v6173, %v6189
        %v6249 = vadd.f32 %v6174, %v6193
        %v6250 = vadd.f32 %v6175, %v6189
        %v6251 = vadd.f32 %v6176, %v6193
        %v6252 = vadd.f32 %v6177, %v6189
        %v6253 = vadd.f32 %v6178, %v6193
        %v6254 = vadd.f32 %v6179, %v6189
        %v6255 = vadd.f32 %v6180, %v6193
        %v6256 = vadd.f32 %v6181, %v6189
        %v6257 = vadd.f32 %v6182, %v6193
        %v6258 = vadd.f32 %v6183, %v6189
        %v6259 = vadd.f32 %v6184, %v6193
        %v6260 = vand.u32 2147483647, %v6196
        %v6261 = vand.u32 2147483647, %v6197
        %v6262 = vand.u32 2147483647, %v6198
        %v6263 = vand.u32 2147483647, %v6199
        %v6264 = vand.u32 2147483647, %v6200
        %v6265 = vand.u32 2147483647, %v6201
        %v6266 = vand.u32 2147483647, %v6202
        %v6267 = vand.u32 2147483647, %v6203
        %v6268 = vand.u32 2147483647, %v6204
        %v6269 = vand.u32 2147483647, %v6205
        %v6270 = vand.u32 2147483647, %v6206
        %v6271 = vand.u32 2147483647, %v6207
        %v6272 = vand.u32 2147483647, %v6208
        %v6273 = vand.u32 2147483647, %v6209
        %v6274 = vand.u32 2147483647, %v6210
        %v6275 = vand.u32 2147483647, %v6211
        %v6276 = vand.u32 2147483647, %v6212
        %v6277 = vand.u32 2147483647, %v6213
        %v6278 = vand.u32 2147483647, %v6214
        %v6279 = vand.u32 2147483647, %v6215
        %v6280 = vand.u32 2147483647, %v6216
        %v6281 = vand.u32 2147483647, %v6217
        %v6282 = vand.u32 2147483647, %v6218
        %v6283 = vand.u32 2147483647, %v6219
        %v6284 = vand.u32 2147483647, %v6220
        %v6285 = vand.u32 2147483647, %v6221
        %v6286 = vand.u32 2147483647, %v6222
        %v6287 = vand.u32 2147483647, %v6223
        %v6288 = vand.u32 2147483647, %v6224
        %v6289 = vand.u32 2147483647, %v6225
        %v6290 = vand.u32 2147483647, %v6226
        %v6291 = vand.u32 2147483647, %v6227
        %v6292 = vand.u32 2147483647, %v6228
        %v6293 = vand.u32 2147483647, %v6229
        %v6294 = vand.u32 2147483647, %v6230
        %v6295 = vand.u32 2147483647, %v6231
        %v6296 = vand.u32 2147483647, %v6232
        %v6297 = vand.u32 2147483647, %v6233
        %v6298 = vand.u32 2147483647, %v6234
        %v6299 = vand.u32 2147483647, %v6235
        %v6300 = vand.u32 2147483647, %v6236
        %v6301 = vand.u32 2147483647, %v6237
        %v6302 = vand.u32 2147483647, %v6238
        %v6303 = vand.u32 2147483647, %v6239
        %v6304 = vand.u32 2147483647, %v6240
        %v6305 = vand.u32 2147483647, %v6241
        %v6306 = vand.u32 2147483647, %v6242
        %v6307 = vand.u32 2147483647, %v6243
        %v6308 = vand.u32 2147483647, %v6244
        %v6309 = vand.u32 2147483647, %v6245
        %v6310 = vand.u32 2147483647, %v6246
        %v6311 = vand.u32 2147483647, %v6247
        %v6312 = vand.u32 2147483647, %v6248
        %v6313 = vand.u32 2147483647, %v6249
        %v6314 = vand.u32 2147483647, %v6250
        %v6315 = vand.u32 2147483647, %v6251
        %v6316 = vand.u32 2147483647, %v6252
        %v6317 = vand.u32 2147483647, %v6253
        %v6318 = vand.u32 2147483647, %v6254
        %v6319 = vand.u32 2147483647, %v6255
        %v6320 = vand.u32 2147483647, %v6256
        %v6321 = vand.u32 2147483647, %v6257
        %v6322 = vand.u32 2147483647, %v6258
        %v6323 = vand.u32 2147483647, %v6259
        %v6324 = vpack.c.bf16 %v6262, %v6260
        %v6325 = vpack.c.bf16 %v6263, %v6261
        %v6326 = vpack.c.bf16 %v6266, %v6264
        %v6327 = vpack.c.bf16 %v6267, %v6265
        %v6328 = vpack.c.bf16 %v6270, %v6268
        %v6329 = vpack.c.bf16 %v6271, %v6269
        %v6330 = vpack.c.bf16 %v6274, %v6272
        %v6331 = vpack.c.bf16 %v6275, %v6273
        %v6332 = vpack.c.bf16 %v6278, %v6276
        %v6333 = vpack.c.bf16 %v6279, %v6277
        %v6334 = vpack.c.bf16 %v6282, %v6280
        %v6335 = vpack.c.bf16 %v6283, %v6281
        %v6336 = vpack.c.bf16 %v6286, %v6284
        %v6337 = vpack.c.bf16 %v6287, %v6285
        %v6338 = vpack.c.bf16 %v6290, %v6288
        %v6339 = vpack.c.bf16 %v6291, %v6289
        %v6340 = vpack.c.bf16 %v6294, %v6292
        %v6341 = vpack.c.bf16 %v6295, %v6293
        %v6342 = vpack.c.bf16 %v6298, %v6296
        %v6343 = vpack.c.bf16 %v6299, %v6297
        %v6344 = vpack.c.bf16 %v6302, %v6300
        %v6345 = vpack.c.bf16 %v6303, %v6301
        %v6346 = vpack.c.bf16 %v6306, %v6304
        %v6347 = vpack.c.bf16 %v6307, %v6305
        %v6348 = vpack.c.bf16 %v6310, %v6308
        %v6349 = vpack.c.bf16 %v6311, %v6309
        %v6350 = vpack.c.bf16 %v6314, %v6312
        %v6351 = vpack.c.bf16 %v6315, %v6313
        %v6352 = vpack.c.bf16 %v6318, %v6316
        %v6353 = vpack.c.bf16 %v6319, %v6317
        %v6354 = vpack.c.bf16 %v6322, %v6320
        %v6355 = vpack.c.bf16 %v6323, %v6321
        %v6356 = vld [vmem:[#allocation8] sm:$0xff]
        %v6357 = vld [vmem:[#allocation8 + $0x8] sm:$0xff]
        %v6358 = vld [vmem:[#allocation8 + $0x10] sm:$0xff]
        %v6359 = vld [vmem:[#allocation8 + $0x18] sm:$0xff]
        %v6360 = vld [vmem:[#allocation8 + $0x20] sm:$0xff]
        %v6361 = vld [vmem:[#allocation8 + $0x28] sm:$0xff]
        %v6362 = vld [vmem:[#allocation8 + $0x30] sm:$0xff]
        %v6363 = vld [vmem:[#allocation8 + $0x38] sm:$0xff]
        %v6364 = vld [vmem:[#allocation8 + $0x40] sm:$0xff]
        %v6365 = vld [vmem:[#allocation8 + $0x48] sm:$0xff]
        %v6366 = vld [vmem:[#allocation8 + $0x50] sm:$0xff]
        %v6367 = vld [vmem:[#allocation8 + $0x58] sm:$0xff]
        %v6368 = vld [vmem:[#allocation8 + $0x60] sm:$0xff]
        %v6369 = vld [vmem:[#allocation8 + $0x68] sm:$0xff]
        %v6370 = vld [vmem:[#allocation8 + $0x70] sm:$0xff]
        %v6371 = vld [vmem:[#allocation8 + $0x78] sm:$0xff]
        %v6372 = vld [vmem:[#allocation8 + $0x80] sm:$0xff]
        %v6373 = vld [vmem:[#allocation8 + $0x88] sm:$0xff]
        %v6374 = vld [vmem:[#allocation8 + $0x90] sm:$0xff]
        %v6375 = vld [vmem:[#allocation8 + $0x98] sm:$0xff]
        %v6376 = vld [vmem:[#allocation8 + $0xa0] sm:$0xff]
        %v6377 = vld [vmem:[#allocation8 + $0xa8] sm:$0xff]
        %v6378 = vld [vmem:[#allocation8 + $0xb0] sm:$0xff]
        %v6379 = vld [vmem:[#allocation8 + $0xb8] sm:$0xff]
        %v6380 = vld [vmem:[#allocation8 + $0xc0] sm:$0xff]
        %v6381 = vld [vmem:[#allocation8 + $0xc8] sm:$0xff]
        %v6382 = vld [vmem:[#allocation8 + $0xd0] sm:$0xff]
        %v6383 = vld [vmem:[#allocation8 + $0xd8] sm:$0xff]
        %v6384 = vld [vmem:[#allocation8 + $0xe0] sm:$0xff]
        %v6385 = vld [vmem:[#allocation8 + $0xe8] sm:$0xff]
        %v6386 = vld [vmem:[#allocation8 + $0xf0] sm:$0xff]
        %v6387 = vld [vmem:[#allocation8 + $0xf8] sm:$0xff]
        %v6388 = vld [vmem:[%s10] sm:$0x3]
        %v6390 = vlaneseq
        %v6391 = vshrl.u32 %v6390, 7
        %v6392 = vsub.s32 0, %v6391
        %v6393 = vrot.slane %v6388, %v6392
        %v6394 = vlaneseq
        %v6395 = vshrl.u32 %v6394, 7
        %v6396 = vsub.s32 1, %v6395
        %v6397 = vrot.slane %v6388, %v6396
        %v6432 = vunpack.c.l.b16 %v6356
        %v6433 = vunpack.c.h.b16 %v6356
        %v6434 = vunpack.c.l.b16 %v6357
        %v6435 = vunpack.c.h.b16 %v6357
        %v6436 = vunpack.c.l.b16 %v6358
        %v6437 = vunpack.c.h.b16 %v6358
        %v6438 = vunpack.c.l.b16 %v6359
        %v6439 = vunpack.c.h.b16 %v6359
        %v6440 = vunpack.c.l.b16 %v6360
        %v6441 = vunpack.c.h.b16 %v6360
        %v6442 = vunpack.c.l.b16 %v6361
        %v6443 = vunpack.c.h.b16 %v6361
        %v6444 = vunpack.c.l.b16 %v6362
        %v6445 = vunpack.c.h.b16 %v6362
        %v6446 = vunpack.c.l.b16 %v6363
        %v6447 = vunpack.c.h.b16 %v6363
        %v6448 = vunpack.c.l.b16 %v6364
        %v6449 = vunpack.c.h.b16 %v6364
        %v6450 = vunpack.c.l.b16 %v6365
        %v6451 = vunpack.c.h.b16 %v6365
        %v6452 = vunpack.c.l.b16 %v6366
        %v6453 = vunpack.c.h.b16 %v6366
        %v6454 = vunpack.c.l.b16 %v6367
        %v6455 = vunpack.c.h.b16 %v6367
        %v6456 = vunpack.c.l.b16 %v6368
        %v6457 = vunpack.c.h.b16 %v6368
        %v6458 = vunpack.c.l.b16 %v6369
        %v6459 = vunpack.c.h.b16 %v6369
        %v6460 = vunpack.c.l.b16 %v6370
        %v6461 = vunpack.c.h.b16 %v6370
        %v6462 = vunpack.c.l.b16 %v6371
        %v6463 = vunpack.c.h.b16 %v6371
        %v6464 = vunpack.c.l.b16 %v6372
        %v6465 = vunpack.c.h.b16 %v6372
        %v6466 = vunpack.c.l.b16 %v6373
        %v6467 = vunpack.c.h.b16 %v6373
        %v6468 = vunpack.c.l.b16 %v6374
        %v6469 = vunpack.c.h.b16 %v6374
        %v6470 = vunpack.c.l.b16 %v6375
        %v6471 = vunpack.c.h.b16 %v6375
        %v6472 = vunpack.c.l.b16 %v6376
        %v6473 = vunpack.c.h.b16 %v6376
        %v6474 = vunpack.c.l.b16 %v6377
        %v6475 = vunpack.c.h.b16 %v6377
        %v6476 = vunpack.c.l.b16 %v6378
        %v6477 = vunpack.c.h.b16 %v6378
        %v6478 = vunpack.c.l.b16 %v6379
        %v6479 = vunpack.c.h.b16 %v6379
        %v6480 = vunpack.c.l.b16 %v6380
        %v6481 = vunpack.c.h.b16 %v6380
        %v6482 = vunpack.c.l.b16 %v6381
        %v6483 = vunpack.c.h.b16 %v6381
        %v6484 = vunpack.c.l.b16 %v6382
        %v6485 = vunpack.c.h.b16 %v6382
        %v6486 = vunpack.c.l.b16 %v6383
        %v6487 = vunpack.c.h.b16 %v6383
        %v6488 = vunpack.c.l.b16 %v6384
        %v6489 = vunpack.c.h.b16 %v6384
        %v6490 = vunpack.c.l.b16 %v6385
        %v6491 = vunpack.c.h.b16 %v6385
        %v6492 = vunpack.c.l.b16 %v6386
        %v6493 = vunpack.c.h.b16 %v6386
        %v6494 = vunpack.c.l.b16 %v6387
        %v6495 = vunpack.c.h.b16 %v6387
        %v6496 = vpack.c.b16 %v6434, %v6432
        %v6497 = vpack.c.b16 %v6435, %v6433
        %v6498 = vpack.c.b16 %v6438, %v6436
        %v6499 = vpack.c.b16 %v6439, %v6437
        %v6500 = vpack.c.b16 %v6442, %v6440
        %v6501 = vpack.c.b16 %v6443, %v6441
        %v6502 = vpack.c.b16 %v6446, %v6444
        %v6503 = vpack.c.b16 %v6447, %v6445
        %v6504 = vpack.c.b16 %v6450, %v6448
        %v6505 = vpack.c.b16 %v6451, %v6449
        %v6506 = vpack.c.b16 %v6454, %v6452
        %v6507 = vpack.c.b16 %v6455, %v6453
        %v6508 = vpack.c.b16 %v6458, %v6456
        %v6509 = vpack.c.b16 %v6459, %v6457
        %v6510 = vpack.c.b16 %v6462, %v6460
        %v6511 = vpack.c.b16 %v6463, %v6461
        %v6512 = vpack.c.b16 %v6466, %v6464
        %v6513 = vpack.c.b16 %v6467, %v6465
        %v6514 = vpack.c.b16 %v6470, %v6468
        %v6515 = vpack.c.b16 %v6471, %v6469
        %v6516 = vpack.c.b16 %v6474, %v6472
        %v6517 = vpack.c.b16 %v6475, %v6473
        %v6518 = vpack.c.b16 %v6478, %v6476
        %v6519 = vpack.c.b16 %v6479, %v6477
        %v6520 = vpack.c.b16 %v6482, %v6480
        %v6521 = vpack.c.b16 %v6483, %v6481
        %v6522 = vpack.c.b16 %v6486, %v6484
        %v6523 = vpack.c.b16 %v6487, %v6485
        %v6524 = vpack.c.b16 %v6490, %v6488
        %v6525 = vpack.c.b16 %v6491, %v6489
        %v6526 = vpack.c.b16 %v6494, %v6492
        %v6527 = vpack.c.b16 %v6495, %v6493
        %6560 = vmatprep.subr.bf16.mxu0 %v6497
        %6561 = vmatpush1.bf16.msra.mxu0 %v6496
        %6562 = vmatprep.subr.bf16.mxu0 %v6499
        %6563 = vmatpush1.bf16.msra.mxu0 %v6498
        %6564 = vmatprep.subr.bf16.mxu0 %v6501
        %6565 = vmatpush1.bf16.msra.mxu0 %v6500
        %6566 = vmatprep.subr.bf16.mxu0 %v6503
        %6567 = vmatpush1.bf16.msra.mxu0 %v6502
        %6568 = vmatprep.subr.bf16.mxu0 %v6505
        %6569 = vmatpush1.bf16.msra.mxu0 %v6504
        %6570 = vmatprep.subr.bf16.mxu0 %v6507
        %6571 = vmatpush1.bf16.msra.mxu0 %v6506
        %6572 = vmatprep.subr.bf16.mxu0 %v6509
        %6573 = vmatpush1.bf16.msra.mxu0 %v6508
        %6574 = vmatprep.subr.bf16.mxu0 %v6511
        %6575 = vmatpush1.bf16.msra.mxu0 %v6510
        %6576 = vmatprep.subr.bf16.mxu0 %v6513
        %6577 = vmatpush1.bf16.msra.mxu0 %v6512
        %6578 = vmatprep.subr.bf16.mxu0 %v6515
        %6579 = vmatpush1.bf16.msra.mxu0 %v6514
        %6580 = vmatprep.subr.bf16.mxu0 %v6517
        %6581 = vmatpush1.bf16.msra.mxu0 %v6516
        %6582 = vmatprep.subr.bf16.mxu0 %v6519
        %6583 = vmatpush1.bf16.msra.mxu0 %v6518
        %6584 = vmatprep.subr.bf16.mxu0 %v6521
        %6585 = vmatpush1.bf16.msra.mxu0 %v6520
        %6586 = vmatprep.subr.bf16.mxu0 %v6523
        %6587 = vmatpush1.bf16.msra.mxu0 %v6522
        %6588 = vmatprep.subr.bf16.mxu0 %v6525
        %6589 = vmatpush1.bf16.msra.mxu0 %v6524
        %6590 = vmatprep.subr.bf16.mxu0 %v6527
        %6591 = vmatpush1.bf16.msra.mxu0 %v6526
        %6592 = vmatprep.mubr.bf16.mxu0 %v6325
        %6593 = vmatmul.mubr.bf16.gmra.mrb[0].mxu0 %v6324
        %v6594 = vpop.f32.mrb[0].mxu0
        %v6595 = vadd.f32 %v6393, %v6594
        %v6596 = vpop.f32.mrb[0].mxu0
        %v6597 = vadd.f32 %v6397, %v6596
        %v6598 = vpop.f32.mrb[0].mxu0
        %v6599 = vadd.f32 %v6393, %v6598
        %v6600 = vpop.f32.mrb[0].mxu0
        %v6601 = vadd.f32 %v6397, %v6600
        %6602 = vmatprep.mubr.bf16.mxu0 %v6327
        %6603 = vmatmul.mubr.bf16.gmra.mrb[0].mxu0 %v6326
        %v6604 = vpop.f32.mrb[0].mxu0
        %v6605 = vadd.f32 %v6393, %v6604
        %v6606 = vpop.f32.mrb[0].mxu0
        %v6607 = vadd.f32 %v6397, %v6606
        %v6608 = vpop.f32.mrb[0].mxu0
        %v6609 = vadd.f32 %v6393, %v6608
        %v6610 = vpop.f32.mrb[0].mxu0
        %v6611 = vadd.f32 %v6397, %v6610
        %6612 = vmatprep.mubr.bf16.mxu0 %v6329
        %6613 = vmatmul.mubr.bf16.gmra.mrb[0].mxu0 %v6328
        %v6614 = vpop.f32.mrb[0].mxu0
        %v6615 = vadd.f32 %v6393, %v6614
        %v6616 = vpop.f32.mrb[0].mxu0
        %v6617 = vadd.f32 %v6397, %v6616
        %v6618 = vpop.f32.mrb[0].mxu0
        %v6619 = vadd.f32 %v6393, %v6618
        %v6620 = vpop.f32.mrb[0].mxu0
        %v6621 = vadd.f32 %v6397, %v6620
        %6622 = vmatprep.mubr.bf16.mxu0 %v6331
        %6623 = vmatmul.mubr.bf16.gmra.mrb[0].mxu0 %v6330
        %v6624 = vpop.f32.mrb[0].mxu0
        %v6625 = vadd.f32 %v6393, %v6624
        %v6626 = vpop.f32.mrb[0].mxu0
        %v6627 = vadd.f32 %v6397, %v6626
        %v6628 = vpop.f32.mrb[0].mxu0
        %v6629 = vadd.f32 %v6393, %v6628
        %v6630 = vpop.f32.mrb[0].mxu0
        %v6631 = vadd.f32 %v6397, %v6630
        %6632 = vmatprep.mubr.bf16.mxu0 %v6333
        %6633 = vmatmul.mubr.bf16.gmra.mrb[0].mxu0 %v6332
        %v6634 = vpop.f32.mrb[0].mxu0
        %v6635 = vadd.f32 %v6393, %v6634
        %v6636 = vpop.f32.mrb[0].mxu0
        %v6637 = vadd.f32 %v6397, %v6636
        %v6638 = vpop.f32.mrb[0].mxu0
        %v6639 = vadd.f32 %v6393, %v6638
        %v6640 = vpop.f32.mrb[0].mxu0
        %v6641 = vadd.f32 %v6397, %v6640
        %6642 = vmatprep.mubr.bf16.mxu0 %v6335
        %6643 = vmatmul.mubr.bf16.gmra.mrb[0].mxu0 %v6334
        %v6644 = vpop.f32.mrb[0].mxu0
        %v6645 = vadd.f32 %v6393, %v6644
        %v6646 = vpop.f32.mrb[0].mxu0
        %v6647 = vadd.f32 %v6397, %v6646
        %v6648 = vpop.f32.mrb[0].mxu0
        %v6649 = vadd.f32 %v6393, %v6648
        %v6650 = vpop.f32.mrb[0].mxu0
        %v6651 = vadd.f32 %v6397, %v6650
        %6652 = vmatprep.mubr.bf16.mxu0 %v6337
        %6653 = vmatmul.mubr.bf16.gmra.mrb[0].mxu0 %v6336
        %v6654 = vpop.f32.mrb[0].mxu0
        %v6655 = vadd.f32 %v6393, %v6654
        %v6656 = vpop.f32.mrb[0].mxu0
        %v6657 = vadd.f32 %v6397, %v6656
        %v6658 = vpop.f32.mrb[0].mxu0
        %v6659 = vadd.f32 %v6393, %v6658
        %v6660 = vpop.f32.mrb[0].mxu0
        %v6661 = vadd.f32 %v6397, %v6660
        %6662 = vmatprep.mubr.bf16.mxu0 %v6339
        %6663 = vmatmul.mubr.bf16.gmra.mrb[0].mxu0 %v6338
        %v6664 = vpop.f32.mrb[0].mxu0
        %v6665 = vadd.f32 %v6393, %v6664
        %v6666 = vpop.f32.mrb[0].mxu0
        %v6667 = vadd.f32 %v6397, %v6666
        %v6668 = vpop.f32.mrb[0].mxu0
        %v6669 = vadd.f32 %v6393, %v6668
        %v6670 = vpop.f32.mrb[0].mxu0
        %v6671 = vadd.f32 %v6397, %v6670
        %6672 = vmatprep.mubr.bf16.mxu0 %v6341
        %6673 = vmatmul.mubr.bf16.gmra.mrb[0].mxu0 %v6340
        %v6674 = vpop.f32.mrb[0].mxu0
        %v6675 = vadd.f32 %v6393, %v6674
        %v6676 = vpop.f32.mrb[0].mxu0
        %v6677 = vadd.f32 %v6397, %v6676
        %v6678 = vpop.f32.mrb[0].mxu0
        %v6679 = vadd.f32 %v6393, %v6678
        %v6680 = vpop.f32.mrb[0].mxu0
        %v6681 = vadd.f32 %v6397, %v6680
        %6682 = vmatprep.mubr.bf16.mxu0 %v6343
        %6683 = vmatmul.mubr.bf16.gmra.mrb[0].mxu0 %v6342
        %v6684 = vpop.f32.mrb[0].mxu0
        %v6685 = vadd.f32 %v6393, %v6684
        %v6686 = vpop.f32.mrb[0].mxu0
        %v6687 = vadd.f32 %v6397, %v6686
        %v6688 = vpop.f32.mrb[0].mxu0
        %v6689 = vadd.f32 %v6393, %v6688
        %v6690 = vpop.f32.mrb[0].mxu0
        %v6691 = vadd.f32 %v6397, %v6690
        %6692 = vmatprep.mubr.bf16.mxu0 %v6345
        %6693 = vmatmul.mubr.bf16.gmra.mrb[0].mxu0 %v6344
        %v6694 = vpop.f32.mrb[0].mxu0
        %v6695 = vadd.f32 %v6393, %v6694
        %v6696 = vpop.f32.mrb[0].mxu0
        %v6697 = vadd.f32 %v6397, %v6696
        %v6698 = vpop.f32.mrb[0].mxu0
        %v6699 = vadd.f32 %v6393, %v6698
        %v6700 = vpop.f32.mrb[0].mxu0
        %v6701 = vadd.f32 %v6397, %v6700
        %6702 = vmatprep.mubr.bf16.mxu0 %v6347
        %6703 = vmatmul.mubr.bf16.gmra.mrb[0].mxu0 %v6346
        %v6704 = vpop.f32.mrb[0].mxu0
        %v6705 = vadd.f32 %v6393, %v6704
        %v6706 = vpop.f32.mrb[0].mxu0
        %v6707 = vadd.f32 %v6397, %v6706
        %v6708 = vpop.f32.mrb[0].mxu0
        %v6709 = vadd.f32 %v6393, %v6708
        %v6710 = vpop.f32.mrb[0].mxu0
        %v6711 = vadd.f32 %v6397, %v6710
        %6712 = vmatprep.mubr.bf16.mxu0 %v6349
        %6713 = vmatmul.mubr.bf16.gmra.mrb[0].mxu0 %v6348
        %v6714 = vpop.f32.mrb[0].mxu0
        %v6715 = vadd.f32 %v6393, %v6714
        %v6716 = vpop.f32.mrb[0].mxu0
        %v6717 = vadd.f32 %v6397, %v6716
        %v6718 = vpop.f32.mrb[0].mxu0
        %v6719 = vadd.f32 %v6393, %v6718
        %v6720 = vpop.f32.mrb[0].mxu0
        %v6721 = vadd.f32 %v6397, %v6720
        %6722 = vmatprep.mubr.bf16.mxu0 %v6351
        %6723 = vmatmul.mubr.bf16.gmra.mrb[0].mxu0 %v6350
        %v6724 = vpop.f32.mrb[0].mxu0
        %v6725 = vadd.f32 %v6393, %v6724
        %v6726 = vpop.f32.mrb[0].mxu0
        %v6727 = vadd.f32 %v6397, %v6726
        %v6728 = vpop.f32.mrb[0].mxu0
        %v6729 = vadd.f32 %v6393, %v6728
        %v6730 = vpop.f32.mrb[0].mxu0
        %v6731 = vadd.f32 %v6397, %v6730
        %6732 = vmatprep.mubr.bf16.mxu0 %v6353
        %6733 = vmatmul.mubr.bf16.gmra.mrb[0].mxu0 %v6352
        %v6734 = vpop.f32.mrb[0].mxu0
        %v6735 = vadd.f32 %v6393, %v6734
        %v6736 = vpop.f32.mrb[0].mxu0
        %v6737 = vadd.f32 %v6397, %v6736
        %v6738 = vpop.f32.mrb[0].mxu0
        %v6739 = vadd.f32 %v6393, %v6738
        %v6740 = vpop.f32.mrb[0].mxu0
        %v6741 = vadd.f32 %v6397, %v6740
        %6742 = vmatprep.mubr.bf16.mxu0 %v6355
        %6743 = vmatmul.mubr.bf16.gmra.mrb[0].mxu0 %v6354
        %v6744 = vpop.f32.mrb[0].mxu0
        %v6745 = vadd.f32 %v6393, %v6744
        %v6746 = vpop.f32.mrb[0].mxu0
        %v6747 = vadd.f32 %v6397, %v6746
        %v6748 = vpop.f32.mrb[0].mxu0
        %v6749 = vadd.f32 %v6393, %v6748
        %v6750 = vpop.f32.mrb[0].mxu0
        %v6751 = vadd.f32 %v6397, %v6750
        %6752 = vdwg.mxu0
        %v6753 = vld [vmem:[%s11] sm:$0x3]
        %v6754 = vld [vmem:[%s12] sm:$0x3]
        %v6755 = vadd.f32 %v6595, %v6597
        %6756 = vadd.xlane.f32.xlu0 %v6755
        %v6757 = vpop.xlane.xlu0 %6756
        %v6758 = vadd.f32 %v6599, %v6601
        %6759 = vadd.xlane.f32.xlu0 %v6758
        %v6760 = vpop.xlane.xlu0 %6759
        %v6761 = vadd.f32 %v6605, %v6607
        %6762 = vadd.xlane.f32.xlu0 %v6761
        %v6763 = vpop.xlane.xlu0 %6762
        %v6764 = vadd.f32 %v6609, %v6611
        %6765 = vadd.xlane.f32.xlu0 %v6764
        %v6766 = vpop.xlane.xlu0 %6765
        %v6767 = vadd.f32 %v6615, %v6617
        %6768 = vadd.xlane.f32.xlu0 %v6767
        %v6769 = vpop.xlane.xlu0 %6768
        %v6770 = vadd.f32 %v6619, %v6621
        %6771 = vadd.xlane.f32.xlu0 %v6770
        %v6772 = vpop.xlane.xlu0 %6771
        %v6773 = vadd.f32 %v6625, %v6627
        %6774 = vadd.xlane.f32.xlu0 %v6773
        %v6775 = vpop.xlane.xlu0 %6774
        %v6776 = vadd.f32 %v6629, %v6631
        %6777 = vadd.xlane.f32.xlu0 %v6776
        %v6778 = vpop.xlane.xlu0 %6777
        %v6779 = vadd.f32 %v6635, %v6637
        %6780 = vadd.xlane.f32.xlu0 %v6779
        %v6781 = vpop.xlane.xlu0 %6780
        %v6782 = vadd.f32 %v6639, %v6641
        %6783 = vadd.xlane.f32.xlu0 %v6782
        %v6784 = vpop.xlane.xlu0 %6783
        %v6785 = vadd.f32 %v6645, %v6647
        %6786 = vadd.xlane.f32.xlu0 %v6785
        %v6787 = vpop.xlane.xlu0 %6786
        %v6788 = vadd.f32 %v6649, %v6651
        %6789 = vadd.xlane.f32.xlu0 %v6788
        %v6790 = vpop.xlane.xlu0 %6789
        %v6791 = vadd.f32 %v6655, %v6657
        %6792 = vadd.xlane.f32.xlu0 %v6791
        %v6793 = vpop.xlane.xlu0 %6792
        %v6794 = vadd.f32 %v6659, %v6661
        %6795 = vadd.xlane.f32.xlu0 %v6794
        %v6796 = vpop.xlane.xlu0 %6795
        %v6797 = vadd.f32 %v6665, %v6667
        %6798 = vadd.xlane.f32.xlu0 %v6797
        %v6799 = vpop.xlane.xlu0 %6798
        %v6800 = vadd.f32 %v6669, %v6671
        %6801 = vadd.xlane.f32.xlu0 %v6800
        %v6802 = vpop.xlane.xlu0 %6801
        %v6803 = vadd.f32 %v6675, %v6677
        %6804 = vadd.xlane.f32.xlu0 %v6803
        %v6805 = vpop.xlane.xlu0 %6804
        %v6806 = vadd.f32 %v6679, %v6681
        %6807 = vadd.xlane.f32.xlu0 %v6806
        %v6808 = vpop.xlane.xlu0 %6807
        %v6809 = vadd.f32 %v6685, %v6687
        %6810 = vadd.xlane.f32.xlu0 %v6809
        %v6811 = vpop.xlane.xlu0 %6810
        %v6812 = vadd.f32 %v6689, %v6691
        %6813 = vadd.xlane.f32.xlu0 %v6812
        %v6814 = vpop.xlane.xlu0 %6813
        %v6815 = vadd.f32 %v6695, %v6697
        %6816 = vadd.xlane.f32.xlu0 %v6815
        %v6817 = vpop.xlane.xlu0 %6816
        %v6818 = vadd.f32 %v6699, %v6701
        %6819 = vadd.xlane.f32.xlu0 %v6818
        %v6820 = vpop.xlane.xlu0 %6819
        %v6821 = vadd.f32 %v6705, %v6707
        %6822 = vadd.xlane.f32.xlu0 %v6821
        %v6823 = vpop.xlane.xlu0 %6822
        %v6824 = vadd.f32 %v6709, %v6711
        %6825 = vadd.xlane.f32.xlu0 %v6824
        %v6826 = vpop.xlane.xlu0 %6825
        %v6827 = vadd.f32 %v6715, %v6717
        %6828 = vadd.xlane.f32.xlu0 %v6827
        %v6829 = vpop.xlane.xlu0 %6828
        %v6830 = vadd.f32 %v6719, %v6721
        %6831 = vadd.xlane.f32.xlu0 %v6830
        %v6832 = vpop.xlane.xlu0 %6831
        %v6833 = vadd.f32 %v6725, %v6727
        %6834 = vadd.xlane.f32.xlu0 %v6833
        %v6835 = vpop.xlane.xlu0 %6834
        %v6836 = vadd.f32 %v6729, %v6731
        %6837 = vadd.xlane.f32.xlu0 %v6836
        %v6838 = vpop.xlane.xlu0 %6837
        %v6839 = vadd.f32 %v6735, %v6737
        %6840 = vadd.xlane.f32.xlu0 %v6839
        %v6841 = vpop.xlane.xlu0 %6840
        %v6842 = vadd.f32 %v6739, %v6741
        %6843 = vadd.xlane.f32.xlu0 %v6842
        %v6844 = vpop.xlane.xlu0 %6843
        %v6845 = vadd.f32 %v6745, %v6747
        %6846 = vadd.xlane.f32.xlu0 %v6845
        %v6847 = vpop.xlane.xlu0 %6846
        %v6848 = vadd.f32 %v6749, %v6751
        %6849 = vadd.xlane.f32.xlu0 %v6848
        %v6850 = vpop.xlane.xlu0 %6849
        %v6851 = vmul.f32 %v6757, %v1217
        %v6852 = vmul.f32 %v6760, %v1217
        %v6853 = vmul.f32 %v6763, %v1217
        %v6854 = vmul.f32 %v6766, %v1217
        %v6855 = vmul.f32 %v6769, %v1217
        %v6856 = vmul.f32 %v6772, %v1217
        %v6857 = vmul.f32 %v6775, %v1217
        %v6858 = vmul.f32 %v6778, %v1217
        %v6859 = vmul.f32 %v6781, %v1217
        %v6860 = vmul.f32 %v6784, %v1217
        %v6861 = vmul.f32 %v6787, %v1217
        %v6862 = vmul.f32 %v6790, %v1217
        %v6863 = vmul.f32 %v6793, %v1217
        %v6864 = vmul.f32 %v6796, %v1217
        %v6865 = vmul.f32 %v6799, %v1217
        %v6866 = vmul.f32 %v6802, %v1217
        %v6867 = vmul.f32 %v6805, %v1217
        %v6868 = vmul.f32 %v6808, %v1217
        %v6869 = vmul.f32 %v6811, %v1217
        %v6870 = vmul.f32 %v6814, %v1217
        %v6871 = vmul.f32 %v6817, %v1217
        %v6872 = vmul.f32 %v6820, %v1217
        %v6873 = vmul.f32 %v6823, %v1217
        %v6874 = vmul.f32 %v6826, %v1217
        %v6875 = vmul.f32 %v6829, %v1217
        %v6876 = vmul.f32 %v6832, %v1217
        %v6877 = vmul.f32 %v6835, %v1217
        %v6878 = vmul.f32 %v6838, %v1217
        %v6879 = vmul.f32 %v6841, %v1217
        %v6880 = vmul.f32 %v6844, %v1217
        %v6881 = vmul.f32 %v6847, %v1217
        %v6882 = vmul.f32 %v6850, %v1217
        %v6883 = vsub.f32 %v6595, %v6851
        %v6884 = vsub.f32 %v6597, %v6851
        %v6885 = vsub.f32 %v6599, %v6852
        %v6886 = vsub.f32 %v6601, %v6852
        %v6887 = vsub.f32 %v6605, %v6853
        %v6888 = vsub.f32 %v6607, %v6853
        %v6889 = vsub.f32 %v6609, %v6854
        %v6890 = vsub.f32 %v6611, %v6854
        %v6891 = vsub.f32 %v6615, %v6855
        %v6892 = vsub.f32 %v6617, %v6855
        %v6893 = vsub.f32 %v6619, %v6856
        %v6894 = vsub.f32 %v6621, %v6856
        %v6895 = vsub.f32 %v6625, %v6857
        %v6896 = vsub.f32 %v6627, %v6857
        %v6897 = vsub.f32 %v6629, %v6858
        %v6898 = vsub.f32 %v6631, %v6858
        %v6899 = vsub.f32 %v6635, %v6859
        %v6900 = vsub.f32 %v6637, %v6859
        %v6901 = vsub.f32 %v6639, %v6860
        %v6902 = vsub.f32 %v6641, %v6860
        %v6903 = vsub.f32 %v6645, %v6861
        %v6904 = vsub.f32 %v6647, %v6861
        %v6905 = vsub.f32 %v6649, %v6862
        %v6906 = vsub.f32 %v6651, %v6862
        %v6907 = vsub.f32 %v6655, %v6863
        %v6908 = vsub.f32 %v6657, %v6863
        %v6909 = vsub.f32 %v6659, %v6864
        %v6910 = vsub.f32 %v6661, %v6864
        %v6911 = vsub.f32 %v6665, %v6865
        %v6912 = vsub.f32 %v6667, %v6865
        %v6913 = vsub.f32 %v6669, %v6866
        %v6914 = vsub.f32 %v6671, %v6866
        %v6915 = vsub.f32 %v6675, %v6867
        %v6916 = vsub.f32 %v6677, %v6867
        %v6917 = vsub.f32 %v6679, %v6868
        %v6918 = vsub.f32 %v6681, %v6868
        %v6919 = vsub.f32 %v6685, %v6869
        %v6920 = vsub.f32 %v6687, %v6869
        %v6921 = vsub.f32 %v6689, %v6870
        %v6922 = vsub.f32 %v6691, %v6870
        %v6923 = vsub.f32 %v6695, %v6871
        %v6924 = vsub.f32 %v6697, %v6871
        %v6925 = vsub.f32 %v6699, %v6872
        %v6926 = vsub.f32 %v6701, %v6872
        %v6927 = vsub.f32 %v6705, %v6873
        %v6928 = vsub.f32 %v6707, %v6873
        %v6929 = vsub.f32 %v6709, %v6874
        %v6930 = vsub.f32 %v6711, %v6874
        %v6931 = vsub.f32 %v6715, %v6875
        %v6932 = vsub.f32 %v6717, %v6875
        %v6933 = vsub.f32 %v6719, %v6876
        %v6934 = vsub.f32 %v6721, %v6876
        %v6935 = vsub.f32 %v6725, %v6877
        %v6936 = vsub.f32 %v6727, %v6877
        %v6937 = vsub.f32 %v6729, %v6878
        %v6938 = vsub.f32 %v6731, %v6878
        %v6939 = vsub.f32 %v6735, %v6879
        %v6940 = vsub.f32 %v6737, %v6879
        %v6941 = vsub.f32 %v6739, %v6880
        %v6942 = vsub.f32 %v6741, %v6880
        %v6943 = vsub.f32 %v6745, %v6881
        %v6944 = vsub.f32 %v6747, %v6881
        %v6945 = vsub.f32 %v6749, %v6882
        %v6946 = vsub.f32 %v6751, %v6882
        %v6947 = vmul.f32 %v6883, %v6883
        %v6948 = vmul.f32 %v6884, %v6884
        %v6949 = vmul.f32 %v6885, %v6885
        %v6950 = vmul.f32 %v6886, %v6886
        %v6951 = vmul.f32 %v6887, %v6887
        %v6952 = vmul.f32 %v6888, %v6888
        %v6953 = vmul.f32 %v6889, %v6889
        %v6954 = vmul.f32 %v6890, %v6890
        %v6955 = vmul.f32 %v6891, %v6891
        %v6956 = vmul.f32 %v6892, %v6892
        %v6957 = vmul.f32 %v6893, %v6893
        %v6958 = vmul.f32 %v6894, %v6894
        %v6959 = vmul.f32 %v6895, %v6895
        %v6960 = vmul.f32 %v6896, %v6896
        %v6961 = vmul.f32 %v6897, %v6897
        %v6962 = vmul.f32 %v6898, %v6898
        %v6963 = vmul.f32 %v6899, %v6899
        %v6964 = vmul.f32 %v6900, %v6900
        %v6965 = vmul.f32 %v6901, %v6901
        %v6966 = vmul.f32 %v6902, %v6902
        %v6967 = vmul.f32 %v6903, %v6903
        %v6968 = vmul.f32 %v6904, %v6904
        %v6969 = vmul.f32 %v6905, %v6905
        %v6970 = vmul.f32 %v6906, %v6906
        %v6971 = vmul.f32 %v6907, %v6907
        %v6972 = vmul.f32 %v6908, %v6908
        %v6973 = vmul.f32 %v6909, %v6909
        %v6974 = vmul.f32 %v6910, %v6910
        %v6975 = vmul.f32 %v6911, %v6911
        %v6976 = vmul.f32 %v6912, %v6912
        %v6977 = vmul.f32 %v6913, %v6913
        %v6978 = vmul.f32 %v6914, %v6914
        %v6979 = vmul.f32 %v6915, %v6915
        %v6980 = vmul.f32 %v6916, %v6916
        %v6981 = vmul.f32 %v6917, %v6917
        %v6982 = vmul.f32 %v6918, %v6918
        %v6983 = vmul.f32 %v6919, %v6919
        %v6984 = vmul.f32 %v6920, %v6920
        %v6985 = vmul.f32 %v6921, %v6921
        %v6986 = vmul.f32 %v6922, %v6922
        %v6987 = vmul.f32 %v6923, %v6923
        %v6988 = vmul.f32 %v6924, %v6924
        %v6989 = vmul.f32 %v6925, %v6925
        %v6990 = vmul.f32 %v6926, %v6926
        %v6991 = vmul.f32 %v6927, %v6927
        %v6992 = vmul.f32 %v6928, %v6928
        %v6993 = vmul.f32 %v6929, %v6929
        %v6994 = vmul.f32 %v6930, %v6930
        %v6995 = vmul.f32 %v6931, %v6931
        %v6996 = vmul.f32 %v6932, %v6932
        %v6997 = vmul.f32 %v6933, %v6933
        %v6998 = vmul.f32 %v6934, %v6934
        %v6999 = vmul.f32 %v6935, %v6935
        %v7000 = vmul.f32 %v6936, %v6936
        %v7001 = vmul.f32 %v6937, %v6937
        %v7002 = vmul.f32 %v6938, %v6938
        %v7003 = vmul.f32 %v6939, %v6939
        %v7004 = vmul.f32 %v6940, %v6940
        %v7005 = vmul.f32 %v6941, %v6941
        %v7006 = vmul.f32 %v6942, %v6942
        %v7007 = vmul.f32 %v6943, %v6943
        %v7008 = vmul.f32 %v6944, %v6944
        %v7009 = vmul.f32 %v6945, %v6945
        %v7010 = vmul.f32 %v6946, %v6946
        %v7011 = vadd.f32 %v6947, %v6948
        %7012 = vadd.xlane.f32.xlu0 %v7011
        %v7013 = vpop.xlane.xlu0 %7012
        %v7014 = vadd.f32 %v6949, %v6950
        %7015 = vadd.xlane.f32.xlu0 %v7014
        %v7016 = vpop.xlane.xlu0 %7015
        %v7017 = vadd.f32 %v6951, %v6952
        %7018 = vadd.xlane.f32.xlu0 %v7017
        %v7019 = vpop.xlane.xlu0 %7018
        %v7020 = vadd.f32 %v6953, %v6954
        %7021 = vadd.xlane.f32.xlu0 %v7020
        %v7022 = vpop.xlane.xlu0 %7021
        %v7023 = vadd.f32 %v6955, %v6956
        %7024 = vadd.xlane.f32.xlu0 %v7023
        %v7025 = vpop.xlane.xlu0 %7024
        %v7026 = vadd.f32 %v6957, %v6958
        %7027 = vadd.xlane.f32.xlu0 %v7026
        %v7028 = vpop.xlane.xlu0 %7027
        %v7029 = vadd.f32 %v6959, %v6960
        %7030 = vadd.xlane.f32.xlu0 %v7029
        %v7031 = vpop.xlane.xlu0 %7030
        %v7032 = vadd.f32 %v6961, %v6962
        %7033 = vadd.xlane.f32.xlu0 %v7032
        %v7034 = vpop.xlane.xlu0 %7033
        %v7035 = vadd.f32 %v6963, %v6964
        %7036 = vadd.xlane.f32.xlu0 %v7035
        %v7037 = vpop.xlane.xlu0 %7036
        %v7038 = vadd.f32 %v6965, %v6966
        %7039 = vadd.xlane.f32.xlu0 %v7038
        %v7040 = vpop.xlane.xlu0 %7039
        %v7041 = vadd.f32 %v6967, %v6968
        %7042 = vadd.xlane.f32.xlu0 %v7041
        %v7043 = vpop.xlane.xlu0 %7042
        %v7044 = vadd.f32 %v6969, %v6970
        %7045 = vadd.xlane.f32.xlu0 %v7044
        %v7046 = vpop.xlane.xlu0 %7045
        %v7047 = vadd.f32 %v6971, %v6972
        %7048 = vadd.xlane.f32.xlu0 %v7047
        %v7049 = vpop.xlane.xlu0 %7048
        %v7050 = vadd.f32 %v6973, %v6974
        %7051 = vadd.xlane.f32.xlu0 %v7050
        %v7052 = vpop.xlane.xlu0 %7051
        %v7053 = vadd.f32 %v6975, %v6976
        %7054 = vadd.xlane.f32.xlu0 %v7053
        %v7055 = vpop.xlane.xlu0 %7054
        %v7056 = vadd.f32 %v6977, %v6978
        %7057 = vadd.xlane.f32.xlu0 %v7056
        %v7058 = vpop.xlane.xlu0 %7057
        %v7059 = vadd.f32 %v6979, %v6980
        %7060 = vadd.xlane.f32.xlu0 %v7059
        %v7061 = vpop.xlane.xlu0 %7060
        %v7062 = vadd.f32 %v6981, %v6982
        %7063 = vadd.xlane.f32.xlu0 %v7062
        %v7064 = vpop.xlane.xlu0 %7063
        %v7065 = vadd.f32 %v6983, %v6984
        %7066 = vadd.xlane.f32.xlu0 %v7065
        %v7067 = vpop.xlane.xlu0 %7066
        %v7068 = vadd.f32 %v6985, %v6986
        %7069 = vadd.xlane.f32.xlu0 %v7068
        %v7070 = vpop.xlane.xlu0 %7069
        %v7071 = vadd.f32 %v6987, %v6988
        %7072 = vadd.xlane.f32.xlu0 %v7071
        %v7073 = vpop.xlane.xlu0 %7072
        %v7074 = vadd.f32 %v6989, %v6990
        %7075 = vadd.xlane.f32.xlu0 %v7074
        %v7076 = vpop.xlane.xlu0 %7075
        %v7077 = vadd.f32 %v6991, %v6992
        %7078 = vadd.xlane.f32.xlu0 %v7077
        %v7079 = vpop.xlane.xlu0 %7078
        %v7080 = vadd.f32 %v6993, %v6994
        %7081 = vadd.xlane.f32.xlu0 %v7080
        %v7082 = vpop.xlane.xlu0 %7081
        %v7083 = vadd.f32 %v6995, %v6996
        %7084 = vadd.xlane.f32.xlu0 %v7083
        %v7085 = vpop.xlane.xlu0 %7084
        %v7086 = vadd.f32 %v6997, %v6998
        %7087 = vadd.xlane.f32.xlu0 %v7086
        %v7088 = vpop.xlane.xlu0 %7087
        %v7089 = vadd.f32 %v6999, %v7000
        %7090 = vadd.xlane.f32.xlu0 %v7089
        %v7091 = vpop.xlane.xlu0 %7090
        %v7092 = vadd.f32 %v7001, %v7002
        %7093 = vadd.xlane.f32.xlu0 %v7092
        %v7094 = vpop.xlane.xlu0 %7093
        %v7095 = vadd.f32 %v7003, %v7004
        %7096 = vadd.xlane.f32.xlu0 %v7095
        %v7097 = vpop.xlane.xlu0 %7096
        %v7098 = vadd.f32 %v7005, %v7006
        %7099 = vadd.xlane.f32.xlu0 %v7098
        %v7100 = vpop.xlane.xlu0 %7099
        %v7101 = vadd.f32 %v7007, %v7008
        %7102 = vadd.xlane.f32.xlu0 %v7101
        %v7103 = vpop.xlane.xlu0 %7102
        %v7104 = vadd.f32 %v7009, %v7010
        %7105 = vadd.xlane.f32.xlu0 %v7104
        %v7106 = vpop.xlane.xlu0 %7105
        %v7107 = vmul.f32 %v7013, %v1217
        %v7108 = vmul.f32 %v7016, %v1217
        %v7109 = vmul.f32 %v7019, %v1217
        %v7110 = vmul.f32 %v7022, %v1217
        %v7111 = vmul.f32 %v7025, %v1217
        %v7112 = vmul.f32 %v7028, %v1217
        %v7113 = vmul.f32 %v7031, %v1217
        %v7114 = vmul.f32 %v7034, %v1217
        %v7115 = vmul.f32 %v7037, %v1217
        %v7116 = vmul.f32 %v7040, %v1217
        %v7117 = vmul.f32 %v7043, %v1217
        %v7118 = vmul.f32 %v7046, %v1217
        %v7119 = vmul.f32 %v7049, %v1217
        %v7120 = vmul.f32 %v7052, %v1217
        %v7121 = vmul.f32 %v7055, %v1217
        %v7122 = vmul.f32 %v7058, %v1217
        %v7123 = vmul.f32 %v7061, %v1217
        %v7124 = vmul.f32 %v7064, %v1217
        %v7125 = vmul.f32 %v7067, %v1217
        %v7126 = vmul.f32 %v7070, %v1217
        %v7127 = vmul.f32 %v7073, %v1217
        %v7128 = vmul.f32 %v7076, %v1217
        %v7129 = vmul.f32 %v7079, %v1217
        %v7130 = vmul.f32 %v7082, %v1217
        %v7131 = vmul.f32 %v7085, %v1217
        %v7132 = vmul.f32 %v7088, %v1217
        %v7133 = vmul.f32 %v7091, %v1217
        %v7134 = vmul.f32 %v7094, %v1217
        %v7135 = vmul.f32 %v7097, %v1217
        %v7136 = vmul.f32 %v7100, %v1217
        %v7137 = vmul.f32 %v7103, %v1217
        %v7138 = vmul.f32 %v7106, %v1217
        %v7139 = vadd.f32 %v7107, 1e-05
        %v7140 = vadd.f32 %v7108, 1e-05
        %v7141 = vadd.f32 %v7109, 1e-05
        %v7142 = vadd.f32 %v7110, 1e-05
        %v7143 = vadd.f32 %v7111, 1e-05
        %v7144 = vadd.f32 %v7112, 1e-05
        %v7145 = vadd.f32 %v7113, 1e-05
        %v7146 = vadd.f32 %v7114, 1e-05
        %v7147 = vadd.f32 %v7115, 1e-05
        %v7148 = vadd.f32 %v7116, 1e-05
        %v7149 = vadd.f32 %v7117, 1e-05
        %v7150 = vadd.f32 %v7118, 1e-05
        %v7151 = vadd.f32 %v7119, 1e-05
        %v7152 = vadd.f32 %v7120, 1e-05
        %v7153 = vadd.f32 %v7121, 1e-05
        %v7154 = vadd.f32 %v7122, 1e-05
        %v7155 = vadd.f32 %v7123, 1e-05
        %v7156 = vadd.f32 %v7124, 1e-05
        %v7157 = vadd.f32 %v7125, 1e-05
        %v7158 = vadd.f32 %v7126, 1e-05
        %v7159 = vadd.f32 %v7127, 1e-05
        %v7160 = vadd.f32 %v7128, 1e-05
        %v7161 = vadd.f32 %v7129, 1e-05
        %v7162 = vadd.f32 %v7130, 1e-05
        %v7163 = vadd.f32 %v7131, 1e-05
        %v7164 = vadd.f32 %v7132, 1e-05
        %v7165 = vadd.f32 %v7133, 1e-05
        %v7166 = vadd.f32 %v7134, 1e-05
        %v7167 = vadd.f32 %v7135, 1e-05
        %v7168 = vadd.f32 %v7136, 1e-05
        %v7169 = vadd.f32 %v7137, 1e-05
        %v7170 = vadd.f32 %v7138, 1e-05
        %v7171 = vrsqrt.pop %v7139
        %v7172 = vrsqrt.pop %v7140
        %v7173 = vrsqrt.pop %v7141
        %v7174 = vrsqrt.pop %v7142
        %v7175 = vrsqrt.pop %v7143
        %v7176 = vrsqrt.pop %v7144
        %v7177 = vrsqrt.pop %v7145
        %v7178 = vrsqrt.pop %v7146
        %v7179 = vrsqrt.pop %v7147
        %v7180 = vrsqrt.pop %v7148
        %v7181 = vrsqrt.pop %v7149
        %v7182 = vrsqrt.pop %v7150
        %v7183 = vrsqrt.pop %v7151
        %v7184 = vrsqrt.pop %v7152
        %v7185 = vrsqrt.pop %v7153
        %v7186 = vrsqrt.pop %v7154
        %v7187 = vrsqrt.pop %v7155
        %v7188 = vrsqrt.pop %v7156
        %v7189 = vrsqrt.pop %v7157
        %v7190 = vrsqrt.pop %v7158
        %v7191 = vrsqrt.pop %v7159
        %v7192 = vrsqrt.pop %v7160
        %v7193 = vrsqrt.pop %v7161
        %v7194 = vrsqrt.pop %v7162
        %v7195 = vrsqrt.pop %v7163
        %v7196 = vrsqrt.pop %v7164
        %v7197 = vrsqrt.pop %v7165
        %v7198 = vrsqrt.pop %v7166
        %v7199 = vrsqrt.pop %v7167
        %v7200 = vrsqrt.pop %v7168
        %v7201 = vrsqrt.pop %v7169
        %v7202 = vrsqrt.pop %v7170
        %v7203 = vmul.f32 %v6883, %v7171
        %v7204 = vmul.f32 %v6884, %v7171
        %v7205 = vmul.f32 %v6885, %v7172
        %v7206 = vmul.f32 %v6886, %v7172
        %v7207 = vmul.f32 %v6887, %v7173
        %v7208 = vmul.f32 %v6888, %v7173
        %v7209 = vmul.f32 %v6889, %v7174
        %v7210 = vmul.f32 %v6890, %v7174
        %v7211 = vmul.f32 %v6891, %v7175
        %v7212 = vmul.f32 %v6892, %v7175
        %v7213 = vmul.f32 %v6893, %v7176
        %v7214 = vmul.f32 %v6894, %v7176
        %v7215 = vmul.f32 %v6895, %v7177
        %v7216 = vmul.f32 %v6896, %v7177
        %v7217 = vmul.f32 %v6897, %v7178
        %v7218 = vmul.f32 %v6898, %v7178
        %v7219 = vmul.f32 %v6899, %v7179
        %v7220 = vmul.f32 %v6900, %v7179
        %v7221 = vmul.f32 %v6901, %v7180
        %v7222 = vmul.f32 %v6902, %v7180
        %v7223 = vmul.f32 %v6903, %v7181
        %v7224 = vmul.f32 %v6904, %v7181
        %v7225 = vmul.f32 %v6905, %v7182
        %v7226 = vmul.f32 %v6906, %v7182
        %v7227 = vmul.f32 %v6907, %v7183
        %v7228 = vmul.f32 %v6908, %v7183
        %v7229 = vmul.f32 %v6909, %v7184
        %v7230 = vmul.f32 %v6910, %v7184
        %v7231 = vmul.f32 %v6911, %v7185
        %v7232 = vmul.f32 %v6912, %v7185
        %v7233 = vmul.f32 %v6913, %v7186
        %v7234 = vmul.f32 %v6914, %v7186
        %v7235 = vmul.f32 %v6915, %v7187
        %v7236 = vmul.f32 %v6916, %v7187
        %v7237 = vmul.f32 %v6917, %v7188
        %v7238 = vmul.f32 %v6918, %v7188
        %v7239 = vmul.f32 %v6919, %v7189
        %v7240 = vmul.f32 %v6920, %v7189
        %v7241 = vmul.f32 %v6921, %v7190
        %v7242 = vmul.f32 %v6922, %v7190
        %v7243 = vmul.f32 %v6923, %v7191
        %v7244 = vmul.f32 %v6924, %v7191
        %v7245 = vmul.f32 %v6925, %v7192
        %v7246 = vmul.f32 %v6926, %v7192
        %v7247 = vmul.f32 %v6927, %v7193
        %v7248 = vmul.f32 %v6928, %v7193
        %v7249 = vmul.f32 %v6929, %v7194
        %v7250 = vmul.f32 %v6930, %v7194
        %v7251 = vmul.f32 %v6931, %v7195
        %v7252 = vmul.f32 %v6932, %v7195
        %v7253 = vmul.f32 %v6933, %v7196
        %v7254 = vmul.f32 %v6934, %v7196
        %v7255 = vmul.f32 %v6935, %v7197
        %v7256 = vmul.f32 %v6936, %v7197
        %v7257 = vmul.f32 %v6937, %v7198
        %v7258 = vmul.f32 %v6938, %v7198
        %v7259 = vmul.f32 %v6939, %v7199
        %v7260 = vmul.f32 %v6940, %v7199
        %v7261 = vmul.f32 %v6941, %v7200
        %v7262 = vmul.f32 %v6942, %v7200
        %v7263 = vmul.f32 %v6943, %v7201
        %v7264 = vmul.f32 %v6944, %v7201
        %v7265 = vmul.f32 %v6945, %v7202
        %v7266 = vmul.f32 %v6946, %v7202
        %v7268 = vlaneseq
        %v7269 = vshrl.u32 %v7268, 7
        %v7270 = vsub.s32 0, %v7269
        %v7271 = vrot.slane %v6753, %v7270
        %v7272 = vlaneseq
        %v7273 = vshrl.u32 %v7272, 7
        %v7274 = vsub.s32 1, %v7273
        %v7275 = vrot.slane %v6753, %v7274
        %v7278 = vmul.f32 %v7203, %v7271
        %v7279 = vmul.f32 %v7204, %v7275
        %v7280 = vmul.f32 %v7205, %v7271
        %v7281 = vmul.f32 %v7206, %v7275
        %v7282 = vmul.f32 %v7207, %v7271
        %v7283 = vmul.f32 %v7208, %v7275
        %v7284 = vmul.f32 %v7209, %v7271
        %v7285 = vmul.f32 %v7210, %v7275
        %v7286 = vmul.f32 %v7211, %v7271
        %v7287 = vmul.f32 %v7212, %v7275
        %v7288 = vmul.f32 %v7213, %v7271
        %v7289 = vmul.f32 %v7214, %v7275
        %v7290 = vmul.f32 %v7215, %v7271
        %v7291 = vmul.f32 %v7216, %v7275
        %v7292 = vmul.f32 %v7217, %v7271
        %v7293 = vmul.f32 %v7218, %v7275
        %v7294 = vmul.f32 %v7219, %v7271
        %v7295 = vmul.f32 %v7220, %v7275
        %v7296 = vmul.f32 %v7221, %v7271
        %v7297 = vmul.f32 %v7222, %v7275
        %v7298 = vmul.f32 %v7223, %v7271
        %v7299 = vmul.f32 %v7224, %v7275
        %v7300 = vmul.f32 %v7225, %v7271
        %v7301 = vmul.f32 %v7226, %v7275
        %v7302 = vmul.f32 %v7227, %v7271
        %v7303 = vmul.f32 %v7228, %v7275
        %v7304 = vmul.f32 %v7229, %v7271
        %v7305 = vmul.f32 %v7230, %v7275
        %v7306 = vmul.f32 %v7231, %v7271
        %v7307 = vmul.f32 %v7232, %v7275
        %v7308 = vmul.f32 %v7233, %v7271
        %v7309 = vmul.f32 %v7234, %v7275
        %v7310 = vmul.f32 %v7235, %v7271
        %v7311 = vmul.f32 %v7236, %v7275
        %v7312 = vmul.f32 %v7237, %v7271
        %v7313 = vmul.f32 %v7238, %v7275
        %v7314 = vmul.f32 %v7239, %v7271
        %v7315 = vmul.f32 %v7240, %v7275
        %v7316 = vmul.f32 %v7241, %v7271
        %v7317 = vmul.f32 %v7242, %v7275
        %v7318 = vmul.f32 %v7243, %v7271
        %v7319 = vmul.f32 %v7244, %v7275
        %v7320 = vmul.f32 %v7245, %v7271
        %v7321 = vmul.f32 %v7246, %v7275
        %v7322 = vmul.f32 %v7247, %v7271
        %v7323 = vmul.f32 %v7248, %v7275
        %v7324 = vmul.f32 %v7249, %v7271
        %v7325 = vmul.f32 %v7250, %v7275
        %v7326 = vmul.f32 %v7251, %v7271
        %v7327 = vmul.f32 %v7252, %v7275
        %v7328 = vmul.f32 %v7253, %v7271
        %v7329 = vmul.f32 %v7254, %v7275
        %v7330 = vmul.f32 %v7255, %v7271
        %v7331 = vmul.f32 %v7256, %v7275
        %v7332 = vmul.f32 %v7257, %v7271
        %v7333 = vmul.f32 %v7258, %v7275
        %v7334 = vmul.f32 %v7259, %v7271
        %v7335 = vmul.f32 %v7260, %v7275
        %v7336 = vmul.f32 %v7261, %v7271
        %v7337 = vmul.f32 %v7262, %v7275
        %v7338 = vmul.f32 %v7263, %v7271
        %v7339 = vmul.f32 %v7264, %v7275
        %v7340 = vmul.f32 %v7265, %v7271
        %v7341 = vmul.f32 %v7266, %v7275
        %v7343 = vlaneseq
        %v7344 = vshrl.u32 %v7343, 7
        %v7345 = vsub.s32 0, %v7344
        %v7346 = vrot.slane %v6754, %v7345
        %v7347 = vlaneseq
        %v7348 = vshrl.u32 %v7347, 7
        %v7349 = vsub.s32 1, %v7348
        %v7350 = vrot.slane %v6754, %v7349
        %v7353 = vadd.f32 %v7278, %v7346
        %v7354 = vadd.f32 %v7279, %v7350
        %v7355 = vadd.f32 %v7280, %v7346
        %v7356 = vadd.f32 %v7281, %v7350
        %v7357 = vadd.f32 %v7282, %v7346
        %v7358 = vadd.f32 %v7283, %v7350
        %v7359 = vadd.f32 %v7284, %v7346
        %v7360 = vadd.f32 %v7285, %v7350
        %v7361 = vadd.f32 %v7286, %v7346
        %v7362 = vadd.f32 %v7287, %v7350
        %v7363 = vadd.f32 %v7288, %v7346
        %v7364 = vadd.f32 %v7289, %v7350
        %v7365 = vadd.f32 %v7290, %v7346
        %v7366 = vadd.f32 %v7291, %v7350
        %v7367 = vadd.f32 %v7292, %v7346
        %v7368 = vadd.f32 %v7293, %v7350
        %v7369 = vadd.f32 %v7294, %v7346
        %v7370 = vadd.f32 %v7295, %v7350
        %v7371 = vadd.f32 %v7296, %v7346
        %v7372 = vadd.f32 %v7297, %v7350
        %v7373 = vadd.f32 %v7298, %v7346
        %v7374 = vadd.f32 %v7299, %v7350
        %v7375 = vadd.f32 %v7300, %v7346
        %v7376 = vadd.f32 %v7301, %v7350
        %v7377 = vadd.f32 %v7302, %v7346
        %v7378 = vadd.f32 %v7303, %v7350
        %v7379 = vadd.f32 %v7304, %v7346
        %v7380 = vadd.f32 %v7305, %v7350
        %v7381 = vadd.f32 %v7306, %v7346
        %v7382 = vadd.f32 %v7307, %v7350
        %v7383 = vadd.f32 %v7308, %v7346
        %v7384 = vadd.f32 %v7309, %v7350
        %v7385 = vadd.f32 %v7310, %v7346
        %v7386 = vadd.f32 %v7311, %v7350
        %v7387 = vadd.f32 %v7312, %v7346
        %v7388 = vadd.f32 %v7313, %v7350
        %v7389 = vadd.f32 %v7314, %v7346
        %v7390 = vadd.f32 %v7315, %v7350
        %v7391 = vadd.f32 %v7316, %v7346
        %v7392 = vadd.f32 %v7317, %v7350
        %v7393 = vadd.f32 %v7318, %v7346
        %v7394 = vadd.f32 %v7319, %v7350
        %v7395 = vadd.f32 %v7320, %v7346
        %v7396 = vadd.f32 %v7321, %v7350
        %v7397 = vadd.f32 %v7322, %v7346
        %v7398 = vadd.f32 %v7323, %v7350
        %v7399 = vadd.f32 %v7324, %v7346
        %v7400 = vadd.f32 %v7325, %v7350
        %v7401 = vadd.f32 %v7326, %v7346
        %v7402 = vadd.f32 %v7327, %v7350
        %v7403 = vadd.f32 %v7328, %v7346
        %v7404 = vadd.f32 %v7329, %v7350
        %v7405 = vadd.f32 %v7330, %v7346
        %v7406 = vadd.f32 %v7331, %v7350
        %v7407 = vadd.f32 %v7332, %v7346
        %v7408 = vadd.f32 %v7333, %v7350
        %v7409 = vadd.f32 %v7334, %v7346
        %v7410 = vadd.f32 %v7335, %v7350
        %v7411 = vadd.f32 %v7336, %v7346
        %v7412 = vadd.f32 %v7337, %v7350
        %v7413 = vadd.f32 %v7338, %v7346
        %v7414 = vadd.f32 %v7339, %v7350
        %v7415 = vadd.f32 %v7340, %v7346
        %v7416 = vadd.f32 %v7341, %v7350
        %v7417 = vmax.f32 %v7353, 0.0
        %v7418 = vmax.f32 %v7354, 0.0
        %v7419 = vmax.f32 %v7355, 0.0
        %v7420 = vmax.f32 %v7356, 0.0
        %v7421 = vmax.f32 %v7357, 0.0
        %v7422 = vmax.f32 %v7358, 0.0
        %v7423 = vmax.f32 %v7359, 0.0
        %v7424 = vmax.f32 %v7360, 0.0
        %v7425 = vmax.f32 %v7361, 0.0
        %v7426 = vmax.f32 %v7362, 0.0
        %v7427 = vmax.f32 %v7363, 0.0
        %v7428 = vmax.f32 %v7364, 0.0
        %v7429 = vmax.f32 %v7365, 0.0
        %v7430 = vmax.f32 %v7366, 0.0
        %v7431 = vmax.f32 %v7367, 0.0
        %v7432 = vmax.f32 %v7368, 0.0
        %v7433 = vmax.f32 %v7369, 0.0
        %v7434 = vmax.f32 %v7370, 0.0
        %v7435 = vmax.f32 %v7371, 0.0
        %v7436 = vmax.f32 %v7372, 0.0
        %v7437 = vmax.f32 %v7373, 0.0
        %v7438 = vmax.f32 %v7374, 0.0
        %v7439 = vmax.f32 %v7375, 0.0
        %v7440 = vmax.f32 %v7376, 0.0
        %v7441 = vmax.f32 %v7377, 0.0
        %v7442 = vmax.f32 %v7378, 0.0
        %v7443 = vmax.f32 %v7379, 0.0
        %v7444 = vmax.f32 %v7380, 0.0
        %v7445 = vmax.f32 %v7381, 0.0
        %v7446 = vmax.f32 %v7382, 0.0
        %v7447 = vmax.f32 %v7383, 0.0
        %v7448 = vmax.f32 %v7384, 0.0
        %v7449 = vmax.f32 %v7385, 0.0
        %v7450 = vmax.f32 %v7386, 0.0
        %v7451 = vmax.f32 %v7387, 0.0
        %v7452 = vmax.f32 %v7388, 0.0
        %v7453 = vmax.f32 %v7389, 0.0
        %v7454 = vmax.f32 %v7390, 0.0
        %v7455 = vmax.f32 %v7391, 0.0
        %v7456 = vmax.f32 %v7392, 0.0
        %v7457 = vmax.f32 %v7393, 0.0
        %v7458 = vmax.f32 %v7394, 0.0
        %v7459 = vmax.f32 %v7395, 0.0
        %v7460 = vmax.f32 %v7396, 0.0
        %v7461 = vmax.f32 %v7397, 0.0
        %v7462 = vmax.f32 %v7398, 0.0
        %v7463 = vmax.f32 %v7399, 0.0
        %v7464 = vmax.f32 %v7400, 0.0
        %v7465 = vmax.f32 %v7401, 0.0
        %v7466 = vmax.f32 %v7402, 0.0
        %v7467 = vmax.f32 %v7403, 0.0
        %v7468 = vmax.f32 %v7404, 0.0
        %v7469 = vmax.f32 %v7405, 0.0
        %v7470 = vmax.f32 %v7406, 0.0
        %v7471 = vmax.f32 %v7407, 0.0
        %v7472 = vmax.f32 %v7408, 0.0
        %v7473 = vmax.f32 %v7409, 0.0
        %v7474 = vmax.f32 %v7410, 0.0
        %v7475 = vmax.f32 %v7411, 0.0
        %v7476 = vmax.f32 %v7412, 0.0
        %v7477 = vmax.f32 %v7413, 0.0
        %v7478 = vmax.f32 %v7414, 0.0
        %v7479 = vmax.f32 %v7415, 0.0
        %v7480 = vmax.f32 %v7416, 0.0
        %v7481 = vpack.c.bf16 %v7419, %v7417
        %v7482 = vpack.c.bf16 %v7420, %v7418
        %v7483 = vpack.c.bf16 %v7423, %v7421
        %v7484 = vpack.c.bf16 %v7424, %v7422
        %v7485 = vpack.c.bf16 %v7427, %v7425
        %v7486 = vpack.c.bf16 %v7428, %v7426
        %v7487 = vpack.c.bf16 %v7431, %v7429
        %v7488 = vpack.c.bf16 %v7432, %v7430
        %v7489 = vpack.c.bf16 %v7435, %v7433
        %v7490 = vpack.c.bf16 %v7436, %v7434
        %v7491 = vpack.c.bf16 %v7439, %v7437
        %v7492 = vpack.c.bf16 %v7440, %v7438
        %v7493 = vpack.c.bf16 %v7443, %v7441
        %v7494 = vpack.c.bf16 %v7444, %v7442
        %v7495 = vpack.c.bf16 %v7447, %v7445
        %v7496 = vpack.c.bf16 %v7448, %v7446
        %v7497 = vpack.c.bf16 %v7451, %v7449
        %v7498 = vpack.c.bf16 %v7452, %v7450
        %v7499 = vpack.c.bf16 %v7455, %v7453
        %v7500 = vpack.c.bf16 %v7456, %v7454
        %v7501 = vpack.c.bf16 %v7459, %v7457
        %v7502 = vpack.c.bf16 %v7460, %v7458
        %v7503 = vpack.c.bf16 %v7463, %v7461
        %v7504 = vpack.c.bf16 %v7464, %v7462
        %v7505 = vpack.c.bf16 %v7467, %v7465
        %v7506 = vpack.c.bf16 %v7468, %v7466
        %v7507 = vpack.c.bf16 %v7471, %v7469
        %v7508 = vpack.c.bf16 %v7472, %v7470
        %v7509 = vpack.c.bf16 %v7475, %v7473
        %v7510 = vpack.c.bf16 %v7476, %v7474
        %v7511 = vpack.c.bf16 %v7479, %v7477
        %v7512 = vpack.c.bf16 %v7480, %v7478
        %v7513 = vld [vmem:[#allocation10] sm:$0xff]
        %v7514 = vld [vmem:[#allocation10 + $0x8] sm:$0xff]
        %v7515 = vld [vmem:[#allocation10 + $0x10] sm:$0xff]
        %v7516 = vld [vmem:[#allocation10 + $0x18] sm:$0xff]
        %v7517 = vld [vmem:[#allocation10 + $0x20] sm:$0xff]
        %v7518 = vld [vmem:[#allocation10 + $0x28] sm:$0xff]
        %v7519 = vld [vmem:[#allocation10 + $0x30] sm:$0xff]
        %v7520 = vld [vmem:[#allocation10 + $0x38] sm:$0xff]
        %v7521 = vld [vmem:[#allocation10 + $0x40] sm:$0xff]
        %v7522 = vld [vmem:[#allocation10 + $0x48] sm:$0xff]
        %v7523 = vld [vmem:[#allocation10 + $0x50] sm:$0xff]
        %v7524 = vld [vmem:[#allocation10 + $0x58] sm:$0xff]
        %v7525 = vld [vmem:[#allocation10 + $0x60] sm:$0xff]
        %v7526 = vld [vmem:[#allocation10 + $0x68] sm:$0xff]
        %v7527 = vld [vmem:[#allocation10 + $0x70] sm:$0xff]
        %v7528 = vld [vmem:[#allocation10 + $0x78] sm:$0xff]
        %v7529 = vld [vmem:[#allocation10 + $0x80] sm:$0xff]
        %v7530 = vld [vmem:[#allocation10 + $0x88] sm:$0xff]
        %v7531 = vld [vmem:[#allocation10 + $0x90] sm:$0xff]
        %v7532 = vld [vmem:[#allocation10 + $0x98] sm:$0xff]
        %v7533 = vld [vmem:[#allocation10 + $0xa0] sm:$0xff]
        %v7534 = vld [vmem:[#allocation10 + $0xa8] sm:$0xff]
        %v7535 = vld [vmem:[#allocation10 + $0xb0] sm:$0xff]
        %v7536 = vld [vmem:[#allocation10 + $0xb8] sm:$0xff]
        %v7537 = vld [vmem:[#allocation10 + $0xc0] sm:$0xff]
        %v7538 = vld [vmem:[#allocation10 + $0xc8] sm:$0xff]
        %v7539 = vld [vmem:[#allocation10 + $0xd0] sm:$0xff]
        %v7540 = vld [vmem:[#allocation10 + $0xd8] sm:$0xff]
        %v7541 = vld [vmem:[#allocation10 + $0xe0] sm:$0xff]
        %v7542 = vld [vmem:[#allocation10 + $0xe8] sm:$0xff]
        %v7543 = vld [vmem:[#allocation10 + $0xf0] sm:$0xff]
        %v7544 = vld [vmem:[#allocation10 + $0xf8] sm:$0xff]
        %v7545 = vld [vmem:[%s14] sm:$0x3]
        %v7547 = vlaneseq
        %v7548 = vshrl.u32 %v7547, 7
        %v7549 = vsub.s32 0, %v7548
        %v7550 = vrot.slane %v7545, %v7549
        %v7551 = vlaneseq
        %v7552 = vshrl.u32 %v7551, 7
        %v7553 = vsub.s32 1, %v7552
        %v7554 = vrot.slane %v7545, %v7553
        %v7589 = vunpack.c.l.b16 %v7513
        %v7590 = vunpack.c.h.b16 %v7513
        %v7591 = vunpack.c.l.b16 %v7514
        %v7592 = vunpack.c.h.b16 %v7514
        %v7593 = vunpack.c.l.b16 %v7515
        %v7594 = vunpack.c.h.b16 %v7515
        %v7595 = vunpack.c.l.b16 %v7516
        %v7596 = vunpack.c.h.b16 %v7516
        %v7597 = vunpack.c.l.b16 %v7517
        %v7598 = vunpack.c.h.b16 %v7517
        %v7599 = vunpack.c.l.b16 %v7518
        %v7600 = vunpack.c.h.b16 %v7518
        %v7601 = vunpack.c.l.b16 %v7519
        %v7602 = vunpack.c.h.b16 %v7519
        %v7603 = vunpack.c.l.b16 %v7520
        %v7604 = vunpack.c.h.b16 %v7520
        %v7605 = vunpack.c.l.b16 %v7521
        %v7606 = vunpack.c.h.b16 %v7521
        %v7607 = vunpack.c.l.b16 %v7522
        %v7608 = vunpack.c.h.b16 %v7522
        %v7609 = vunpack.c.l.b16 %v7523
        %v7610 = vunpack.c.h.b16 %v7523
        %v7611 = vunpack.c.l.b16 %v7524
        %v7612 = vunpack.c.h.b16 %v7524
        %v7613 = vunpack.c.l.b16 %v7525
        %v7614 = vunpack.c.h.b16 %v7525
        %v7615 = vunpack.c.l.b16 %v7526
        %v7616 = vunpack.c.h.b16 %v7526
        %v7617 = vunpack.c.l.b16 %v7527
        %v7618 = vunpack.c.h.b16 %v7527
        %v7619 = vunpack.c.l.b16 %v7528
        %v7620 = vunpack.c.h.b16 %v7528
        %v7621 = vunpack.c.l.b16 %v7529
        %v7622 = vunpack.c.h.b16 %v7529
        %v7623 = vunpack.c.l.b16 %v7530
        %v7624 = vunpack.c.h.b16 %v7530
        %v7625 = vunpack.c.l.b16 %v7531
        %v7626 = vunpack.c.h.b16 %v7531
        %v7627 = vunpack.c.l.b16 %v7532
        %v7628 = vunpack.c.h.b16 %v7532
        %v7629 = vunpack.c.l.b16 %v7533
        %v7630 = vunpack.c.h.b16 %v7533
        %v7631 = vunpack.c.l.b16 %v7534
        %v7632 = vunpack.c.h.b16 %v7534
        %v7633 = vunpack.c.l.b16 %v7535
        %v7634 = vunpack.c.h.b16 %v7535
        %v7635 = vunpack.c.l.b16 %v7536
        %v7636 = vunpack.c.h.b16 %v7536
        %v7637 = vunpack.c.l.b16 %v7537
        %v7638 = vunpack.c.h.b16 %v7537
        %v7639 = vunpack.c.l.b16 %v7538
        %v7640 = vunpack.c.h.b16 %v7538
        %v7641 = vunpack.c.l.b16 %v7539
        %v7642 = vunpack.c.h.b16 %v7539
        %v7643 = vunpack.c.l.b16 %v7540
        %v7644 = vunpack.c.h.b16 %v7540
        %v7645 = vunpack.c.l.b16 %v7541
        %v7646 = vunpack.c.h.b16 %v7541
        %v7647 = vunpack.c.l.b16 %v7542
        %v7648 = vunpack.c.h.b16 %v7542
        %v7649 = vunpack.c.l.b16 %v7543
        %v7650 = vunpack.c.h.b16 %v7543
        %v7651 = vunpack.c.l.b16 %v7544
        %v7652 = vunpack.c.h.b16 %v7544
        %v7653 = vpack.c.b16 %v7591, %v7589
        %v7654 = vpack.c.b16 %v7592, %v7590
        %v7655 = vpack.c.b16 %v7595, %v7593
        %v7656 = vpack.c.b16 %v7596, %v7594
        %v7657 = vpack.c.b16 %v7599, %v7597
        %v7658 = vpack.c.b16 %v7600, %v7598
        %v7659 = vpack.c.b16 %v7603, %v7601
        %v7660 = vpack.c.b16 %v7604, %v7602
        %v7661 = vpack.c.b16 %v7607, %v7605
        %v7662 = vpack.c.b16 %v7608, %v7606
        %v7663 = vpack.c.b16 %v7611, %v7609
        %v7664 = vpack.c.b16 %v7612, %v7610
        %v7665 = vpack.c.b16 %v7615, %v7613
        %v7666 = vpack.c.b16 %v7616, %v7614
        %v7667 = vpack.c.b16 %v7619, %v7617
        %v7668 = vpack.c.b16 %v7620, %v7618
        %v7669 = vpack.c.b16 %v7623, %v7621
        %v7670 = vpack.c.b16 %v7624, %v7622
        %v7671 = vpack.c.b16 %v7627, %v7625
        %v7672 = vpack.c.b16 %v7628, %v7626
        %v7673 = vpack.c.b16 %v7631, %v7629
        %v7674 = vpack.c.b16 %v7632, %v7630
        %v7675 = vpack.c.b16 %v7635, %v7633
        %v7676 = vpack.c.b16 %v7636, %v7634
        %v7677 = vpack.c.b16 %v7639, %v7637
        %v7678 = vpack.c.b16 %v7640, %v7638
        %v7679 = vpack.c.b16 %v7643, %v7641
        %v7680 = vpack.c.b16 %v7644, %v7642
        %v7681 = vpack.c.b16 %v7647, %v7645
        %v7682 = vpack.c.b16 %v7648, %v7646
        %v7683 = vpack.c.b16 %v7651, %v7649
        %v7684 = vpack.c.b16 %v7652, %v7650
        %7717 = vmatprep.subr.bf16.mxu0 %v7654
        %7718 = vmatpush1.bf16.msra.mxu0 %v7653
        %7719 = vmatprep.subr.bf16.mxu0 %v7656
        %7720 = vmatpush1.bf16.msra.mxu0 %v7655
        %7721 = vmatprep.subr.bf16.mxu0 %v7658
        %7722 = vmatpush1.bf16.msra.mxu0 %v7657
        %7723 = vmatprep.subr.bf16.mxu0 %v7660
        %7724 = vmatpush1.bf16.msra.mxu0 %v7659
        %7725 = vmatprep.subr.bf16.mxu0 %v7662
        %7726 = vmatpush1.bf16.msra.mxu0 %v7661
        %7727 = vmatprep.subr.bf16.mxu0 %v7664
        %7728 = vmatpush1.bf16.msra.mxu0 %v7663
        %7729 = vmatprep.subr.bf16.mxu0 %v7666
        %7730 = vmatpush1.bf16.msra.mxu0 %v7665
        %7731 = vmatprep.subr.bf16.mxu0 %v7668
        %7732 = vmatpush1.bf16.msra.mxu0 %v7667
        %7733 = vmatprep.subr.bf16.mxu0 %v7670
        %7734 = vmatpush1.bf16.msra.mxu0 %v7669
        %7735 = vmatprep.subr.bf16.mxu0 %v7672
        %7736 = vmatpush1.bf16.msra.mxu0 %v7671
        %7737 = vmatprep.subr.bf16.mxu0 %v7674
        %7738 = vmatpush1.bf16.msra.mxu0 %v7673
        %7739 = vmatprep.subr.bf16.mxu0 %v7676
        %7740 = vmatpush1.bf16.msra.mxu0 %v7675
        %7741 = vmatprep.subr.bf16.mxu0 %v7678
        %7742 = vmatpush1.bf16.msra.mxu0 %v7677
        %7743 = vmatprep.subr.bf16.mxu0 %v7680
        %7744 = vmatpush1.bf16.msra.mxu0 %v7679
        %7745 = vmatprep.subr.bf16.mxu0 %v7682
        %7746 = vmatpush1.bf16.msra.mxu0 %v7681
        %7747 = vmatprep.subr.bf16.mxu0 %v7684
        %7748 = vmatpush1.bf16.msra.mxu0 %v7683
        %7749 = vmatprep.mubr.bf16.mxu0 %v7482
        %7750 = vmatmul.mubr.bf16.gmra.mrb[0].mxu0 %v7481
        %v7751 = vpop.f32.mrb[0].mxu0
        %v7752 = vadd.f32 %v7550, %v7751
        %v7753 = vpop.f32.mrb[0].mxu0
        %v7754 = vadd.f32 %v7554, %v7753
        %v7755 = vpop.f32.mrb[0].mxu0
        %v7756 = vadd.f32 %v7550, %v7755
        %v7757 = vpop.f32.mrb[0].mxu0
        %v7758 = vadd.f32 %v7554, %v7757
        %7759 = vmatprep.mubr.bf16.mxu0 %v7484
        %7760 = vmatmul.mubr.bf16.gmra.mrb[0].mxu0 %v7483
        %v7761 = vpop.f32.mrb[0].mxu0
        %v7762 = vadd.f32 %v7550, %v7761
        %v7763 = vpop.f32.mrb[0].mxu0
        %v7764 = vadd.f32 %v7554, %v7763
        %v7765 = vpop.f32.mrb[0].mxu0
        %v7766 = vadd.f32 %v7550, %v7765
        %v7767 = vpop.f32.mrb[0].mxu0
        %v7768 = vadd.f32 %v7554, %v7767
        %7769 = vmatprep.mubr.bf16.mxu0 %v7486
        %7770 = vmatmul.mubr.bf16.gmra.mrb[0].mxu0 %v7485
        %v7771 = vpop.f32.mrb[0].mxu0
        %v7772 = vadd.f32 %v7550, %v7771
        %v7773 = vpop.f32.mrb[0].mxu0
        %v7774 = vadd.f32 %v7554, %v7773
        %v7775 = vpop.f32.mrb[0].mxu0
        %v7776 = vadd.f32 %v7550, %v7775
        %v7777 = vpop.f32.mrb[0].mxu0
        %v7778 = vadd.f32 %v7554, %v7777
        %7779 = vmatprep.mubr.bf16.mxu0 %v7488
        %7780 = vmatmul.mubr.bf16.gmra.mrb[0].mxu0 %v7487
        %v7781 = vpop.f32.mrb[0].mxu0
        %v7782 = vadd.f32 %v7550, %v7781
        %v7783 = vpop.f32.mrb[0].mxu0
        %v7784 = vadd.f32 %v7554, %v7783
        %v7785 = vpop.f32.mrb[0].mxu0
        %v7786 = vadd.f32 %v7550, %v7785
        %v7787 = vpop.f32.mrb[0].mxu0
        %v7788 = vadd.f32 %v7554, %v7787
        %7789 = vmatprep.mubr.bf16.mxu0 %v7490
        %7790 = vmatmul.mubr.bf16.gmra.mrb[0].mxu0 %v7489
        %v7791 = vpop.f32.mrb[0].mxu0
        %v7792 = vadd.f32 %v7550, %v7791
        %v7793 = vpop.f32.mrb[0].mxu0
        %v7794 = vadd.f32 %v7554, %v7793
        %v7795 = vpop.f32.mrb[0].mxu0
        %v7796 = vadd.f32 %v7550, %v7795
        %v7797 = vpop.f32.mrb[0].mxu0
        %v7798 = vadd.f32 %v7554, %v7797
        %7799 = vmatprep.mubr.bf16.mxu0 %v7492
        %7800 = vmatmul.mubr.bf16.gmra.mrb[0].mxu0 %v7491
        %v7801 = vpop.f32.mrb[0].mxu0
        %v7802 = vadd.f32 %v7550, %v7801
        %v7803 = vpop.f32.mrb[0].mxu0
        %v7804 = vadd.f32 %v7554, %v7803
        %v7805 = vpop.f32.mrb[0].mxu0
        %v7806 = vadd.f32 %v7550, %v7805
        %v7807 = vpop.f32.mrb[0].mxu0
        %v7808 = vadd.f32 %v7554, %v7807
        %7809 = vmatprep.mubr.bf16.mxu0 %v7494
        %7810 = vmatmul.mubr.bf16.gmra.mrb[0].mxu0 %v7493
        %v7811 = vpop.f32.mrb[0].mxu0
        %v7812 = vadd.f32 %v7550, %v7811
        %v7813 = vpop.f32.mrb[0].mxu0
        %v7814 = vadd.f32 %v7554, %v7813
        %v7815 = vpop.f32.mrb[0].mxu0
        %v7816 = vadd.f32 %v7550, %v7815
        %v7817 = vpop.f32.mrb[0].mxu0
        %v7818 = vadd.f32 %v7554, %v7817
        %7819 = vmatprep.mubr.bf16.mxu0 %v7496
        %7820 = vmatmul.mubr.bf16.gmra.mrb[0].mxu0 %v7495
        %v7821 = vpop.f32.mrb[0].mxu0
        %v7822 = vadd.f32 %v7550, %v7821
        %v7823 = vpop.f32.mrb[0].mxu0
        %v7824 = vadd.f32 %v7554, %v7823
        %v7825 = vpop.f32.mrb[0].mxu0
        %v7826 = vadd.f32 %v7550, %v7825
        %v7827 = vpop.f32.mrb[0].mxu0
        %v7828 = vadd.f32 %v7554, %v7827
        %7829 = vmatprep.mubr.bf16.mxu0 %v7498
        %7830 = vmatmul.mubr.bf16.gmra.mrb[0].mxu0 %v7497
        %v7831 = vpop.f32.mrb[0].mxu0
        %v7832 = vadd.f32 %v7550, %v7831
        %v7833 = vpop.f32.mrb[0].mxu0
        %v7834 = vadd.f32 %v7554, %v7833
        %v7835 = vpop.f32.mrb[0].mxu0
        %v7836 = vadd.f32 %v7550, %v7835
        %v7837 = vpop.f32.mrb[0].mxu0
        %v7838 = vadd.f32 %v7554, %v7837
        %7839 = vmatprep.mubr.bf16.mxu0 %v7500
        %7840 = vmatmul.mubr.bf16.gmra.mrb[0].mxu0 %v7499
        %v7841 = vpop.f32.mrb[0].mxu0
        %v7842 = vadd.f32 %v7550, %v7841
        %v7843 = vpop.f32.mrb[0].mxu0
        %v7844 = vadd.f32 %v7554, %v7843
        %v7845 = vpop.f32.mrb[0].mxu0
        %v7846 = vadd.f32 %v7550, %v7845
        %v7847 = vpop.f32.mrb[0].mxu0
        %v7848 = vadd.f32 %v7554, %v7847
        %7849 = vmatprep.mubr.bf16.mxu0 %v7502
        %7850 = vmatmul.mubr.bf16.gmra.mrb[0].mxu0 %v7501
        %v7851 = vpop.f32.mrb[0].mxu0
        %v7852 = vadd.f32 %v7550, %v7851
        %v7853 = vpop.f32.mrb[0].mxu0
        %v7854 = vadd.f32 %v7554, %v7853
        %v7855 = vpop.f32.mrb[0].mxu0
        %v7856 = vadd.f32 %v7550, %v7855
        %v7857 = vpop.f32.mrb[0].mxu0
        %v7858 = vadd.f32 %v7554, %v7857
        %7859 = vmatprep.mubr.bf16.mxu0 %v7504
        %7860 = vmatmul.mubr.bf16.gmra.mrb[0].mxu0 %v7503
        %v7861 = vpop.f32.mrb[0].mxu0
        %v7862 = vadd.f32 %v7550, %v7861
        %v7863 = vpop.f32.mrb[0].mxu0
        %v7864 = vadd.f32 %v7554, %v7863
        %v7865 = vpop.f32.mrb[0].mxu0
        %v7866 = vadd.f32 %v7550, %v7865
        %v7867 = vpop.f32.mrb[0].mxu0
        %v7868 = vadd.f32 %v7554, %v7867
        %7869 = vmatprep.mubr.bf16.mxu0 %v7506
        %7870 = vmatmul.mubr.bf16.gmra.mrb[0].mxu0 %v7505
        %v7871 = vpop.f32.mrb[0].mxu0
        %v7872 = vadd.f32 %v7550, %v7871
        %v7873 = vpop.f32.mrb[0].mxu0
        %v7874 = vadd.f32 %v7554, %v7873
        %v7875 = vpop.f32.mrb[0].mxu0
        %v7876 = vadd.f32 %v7550, %v7875
        %v7877 = vpop.f32.mrb[0].mxu0
        %v7878 = vadd.f32 %v7554, %v7877
        %7879 = vmatprep.mubr.bf16.mxu0 %v7508
        %7880 = vmatmul.mubr.bf16.gmra.mrb[0].mxu0 %v7507
        %v7881 = vpop.f32.mrb[0].mxu0
        %v7882 = vadd.f32 %v7550, %v7881
        %v7883 = vpop.f32.mrb[0].mxu0
        %v7884 = vadd.f32 %v7554, %v7883
        %v7885 = vpop.f32.mrb[0].mxu0
        %v7886 = vadd.f32 %v7550, %v7885
        %v7887 = vpop.f32.mrb[0].mxu0
        %v7888 = vadd.f32 %v7554, %v7887
        %7889 = vmatprep.mubr.bf16.mxu0 %v7510
        %7890 = vmatmul.mubr.bf16.gmra.mrb[0].mxu0 %v7509
        %v7891 = vpop.f32.mrb[0].mxu0
        %v7892 = vadd.f32 %v7550, %v7891
        %v7893 = vpop.f32.mrb[0].mxu0
        %v7894 = vadd.f32 %v7554, %v7893
        %v7895 = vpop.f32.mrb[0].mxu0
        %v7896 = vadd.f32 %v7550, %v7895
        %v7897 = vpop.f32.mrb[0].mxu0
        %v7898 = vadd.f32 %v7554, %v7897
        %7899 = vmatprep.mubr.bf16.mxu0 %v7512
        %7900 = vmatmul.mubr.bf16.gmra.mrb[0].mxu0 %v7511
        %v7901 = vpop.f32.mrb[0].mxu0
        %v7902 = vadd.f32 %v7550, %v7901
        %v7903 = vpop.f32.mrb[0].mxu0
        %v7904 = vadd.f32 %v7554, %v7903
        %v7905 = vpop.f32.mrb[0].mxu0
        %v7906 = vadd.f32 %v7550, %v7905
        %v7907 = vpop.f32.mrb[0].mxu0
        %v7908 = vadd.f32 %v7554, %v7907
        %7909 = vdwg.mxu0
        %v7910 = vsub.f32 0.0, %v7752
        %v7911 = vsub.f32 0.0, %v7754
        %v7912 = vsub.f32 0.0, %v7756
        %v7913 = vsub.f32 0.0, %v7758
        %v7914 = vsub.f32 0.0, %v7762
        %v7915 = vsub.f32 0.0, %v7764
        %v7916 = vsub.f32 0.0, %v7766
        %v7917 = vsub.f32 0.0, %v7768
        %v7918 = vsub.f32 0.0, %v7772
        %v7919 = vsub.f32 0.0, %v7774
        %v7920 = vsub.f32 0.0, %v7776
        %v7921 = vsub.f32 0.0, %v7778
        %v7922 = vsub.f32 0.0, %v7782
        %v7923 = vsub.f32 0.0, %v7784
        %v7924 = vsub.f32 0.0, %v7786
        %v7925 = vsub.f32 0.0, %v7788
        %v7926 = vsub.f32 0.0, %v7792
        %v7927 = vsub.f32 0.0, %v7794
        %v7928 = vsub.f32 0.0, %v7796
        %v7929 = vsub.f32 0.0, %v7798
        %v7930 = vsub.f32 0.0, %v7802
        %v7931 = vsub.f32 0.0, %v7804
        %v7932 = vsub.f32 0.0, %v7806
        %v7933 = vsub.f32 0.0, %v7808
        %v7934 = vsub.f32 0.0, %v7812
        %v7935 = vsub.f32 0.0, %v7814
        %v7936 = vsub.f32 0.0, %v7816
        %v7937 = vsub.f32 0.0, %v7818
        %v7938 = vsub.f32 0.0, %v7822
        %v7939 = vsub.f32 0.0, %v7824
        %v7940 = vsub.f32 0.0, %v7826
        %v7941 = vsub.f32 0.0, %v7828
        %v7942 = vsub.f32 0.0, %v7832
        %v7943 = vsub.f32 0.0, %v7834
        %v7944 = vsub.f32 0.0, %v7836
        %v7945 = vsub.f32 0.0, %v7838
        %v7946 = vsub.f32 0.0, %v7842
        %v7947 = vsub.f32 0.0, %v7844
        %v7948 = vsub.f32 0.0, %v7846
        %v7949 = vsub.f32 0.0, %v7848
        %v7950 = vsub.f32 0.0, %v7852
        %v7951 = vsub.f32 0.0, %v7854
        %v7952 = vsub.f32 0.0, %v7856
        %v7953 = vsub.f32 0.0, %v7858
        %v7954 = vsub.f32 0.0, %v7862
        %v7955 = vsub.f32 0.0, %v7864
        %v7956 = vsub.f32 0.0, %v7866
        %v7957 = vsub.f32 0.0, %v7868
        %v7958 = vsub.f32 0.0, %v7872
        %v7959 = vsub.f32 0.0, %v7874
        %v7960 = vsub.f32 0.0, %v7876
        %v7961 = vsub.f32 0.0, %v7878
        %v7962 = vsub.f32 0.0, %v7882
        %v7963 = vsub.f32 0.0, %v7884
        %v7964 = vsub.f32 0.0, %v7886
        %v7965 = vsub.f32 0.0, %v7888
        %v7966 = vsub.f32 0.0, %v7892
        %v7967 = vsub.f32 0.0, %v7894
        %v7968 = vsub.f32 0.0, %v7896
        %v7969 = vsub.f32 0.0, %v7898
        %v7970 = vsub.f32 0.0, %v7902
        %v7971 = vsub.f32 0.0, %v7904
        %v7972 = vsub.f32 0.0, %v7906
        %v7973 = vsub.f32 0.0, %v7908
        %v7974 = vmul.f32 %v7910, 1.442695
        %v7975 = vpow.pop %v7974
        %v7976 = vmul.f32 %v7911, 1.442695
        %v7977 = vpow.pop %v7976
        %v7978 = vmul.f32 %v7912, 1.442695
        %v7979 = vpow.pop %v7978
        %v7980 = vmul.f32 %v7913, 1.442695
        %v7981 = vpow.pop %v7980
        %v7982 = vmul.f32 %v7914, 1.442695
        %v7983 = vpow.pop %v7982
        %v7984 = vmul.f32 %v7915, 1.442695
        %v7985 = vpow.pop %v7984
        %v7986 = vmul.f32 %v7916, 1.442695
        %v7987 = vpow.pop %v7986
        %v7988 = vmul.f32 %v7917, 1.442695
        %v7989 = vpow.pop %v7988
        %v7990 = vmul.f32 %v7918, 1.442695
        %v7991 = vpow.pop %v7990
        %v7992 = vmul.f32 %v7919, 1.442695
        %v7993 = vpow.pop %v7992
        %v7994 = vmul.f32 %v7920, 1.442695
        %v7995 = vpow.pop %v7994
        %v7996 = vmul.f32 %v7921, 1.442695
        %v7997 = vpow.pop %v7996
        %v7998 = vmul.f32 %v7922, 1.442695
        %v7999 = vpow.pop %v7998
        %v8000 = vmul.f32 %v7923, 1.442695
        %v8001 = vpow.pop %v8000
        %v8002 = vmul.f32 %v7924, 1.442695
        %v8003 = vpow.pop %v8002
        %v8004 = vmul.f32 %v7925, 1.442695
        %v8005 = vpow.pop %v8004
        %v8006 = vmul.f32 %v7926, 1.442695
        %v8007 = vpow.pop %v8006
        %v8008 = vmul.f32 %v7927, 1.442695
        %v8009 = vpow.pop %v8008
        %v8010 = vmul.f32 %v7928, 1.442695
        %v8011 = vpow.pop %v8010
        %v8012 = vmul.f32 %v7929, 1.442695
        %v8013 = vpow.pop %v8012
        %v8014 = vmul.f32 %v7930, 1.442695
        %v8015 = vpow.pop %v8014
        %v8016 = vmul.f32 %v7931, 1.442695
        %v8017 = vpow.pop %v8016
        %v8018 = vmul.f32 %v7932, 1.442695
        %v8019 = vpow.pop %v8018
        %v8020 = vmul.f32 %v7933, 1.442695
        %v8021 = vpow.pop %v8020
        %v8022 = vmul.f32 %v7934, 1.442695
        %v8023 = vpow.pop %v8022
        %v8024 = vmul.f32 %v7935, 1.442695
        %v8025 = vpow.pop %v8024
        %v8026 = vmul.f32 %v7936, 1.442695
        %v8027 = vpow.pop %v8026
        %v8028 = vmul.f32 %v7937, 1.442695
        %v8029 = vpow.pop %v8028
        %v8030 = vmul.f32 %v7938, 1.442695
        %v8031 = vpow.pop %v8030
        %v8032 = vmul.f32 %v7939, 1.442695
        %v8033 = vpow.pop %v8032
        %v8034 = vmul.f32 %v7940, 1.442695
        %v8035 = vpow.pop %v8034
        %v8036 = vmul.f32 %v7941, 1.442695
        %v8037 = vpow.pop %v8036
        %v8038 = vmul.f32 %v7942, 1.442695
        %v8039 = vpow.pop %v8038
        %v8040 = vmul.f32 %v7943, 1.442695
        %v8041 = vpow.pop %v8040
        %v8042 = vmul.f32 %v7944, 1.442695
        %v8043 = vpow.pop %v8042
        %v8044 = vmul.f32 %v7945, 1.442695
        %v8045 = vpow.pop %v8044
        %v8046 = vmul.f32 %v7946, 1.442695
        %v8047 = vpow.pop %v8046
        %v8048 = vmul.f32 %v7947, 1.442695
        %v8049 = vpow.pop %v8048
        %v8050 = vmul.f32 %v7948, 1.442695
        %v8051 = vpow.pop %v8050
        %v8052 = vmul.f32 %v7949, 1.442695
        %v8053 = vpow.pop %v8052
        %v8054 = vmul.f32 %v7950, 1.442695
        %v8055 = vpow.pop %v8054
        %v8056 = vmul.f32 %v7951, 1.442695
        %v8057 = vpow.pop %v8056
        %v8058 = vmul.f32 %v7952, 1.442695
        %v8059 = vpow.pop %v8058
        %v8060 = vmul.f32 %v7953, 1.442695
        %v8061 = vpow.pop %v8060
        %v8062 = vmul.f32 %v7954, 1.442695
        %v8063 = vpow.pop %v8062
        %v8064 = vmul.f32 %v7955, 1.442695
        %v8065 = vpow.pop %v8064
        %v8066 = vmul.f32 %v7956, 1.442695
        %v8067 = vpow.pop %v8066
        %v8068 = vmul.f32 %v7957, 1.442695
        %v8069 = vpow.pop %v8068
        %v8070 = vmul.f32 %v7958, 1.442695
        %v8071 = vpow.pop %v8070
        %v8072 = vmul.f32 %v7959, 1.442695
        %v8073 = vpow.pop %v8072
        %v8074 = vmul.f32 %v7960, 1.442695
        %v8075 = vpow.pop %v8074
        %v8076 = vmul.f32 %v7961, 1.442695
        %v8077 = vpow.pop %v8076
        %v8078 = vmul.f32 %v7962, 1.442695
        %v8079 = vpow.pop %v8078
        %v8080 = vmul.f32 %v7963, 1.442695
        %v8081 = vpow.pop %v8080
        %v8082 = vmul.f32 %v7964, 1.442695
        %v8083 = vpow.pop %v8082
        %v8084 = vmul.f32 %v7965, 1.442695
        %v8085 = vpow.pop %v8084
        %v8086 = vmul.f32 %v7966, 1.442695
        %v8087 = vpow.pop %v8086
        %v8088 = vmul.f32 %v7967, 1.442695
        %v8089 = vpow.pop %v8088
        %v8090 = vmul.f32 %v7968, 1.442695
        %v8091 = vpow.pop %v8090
        %v8092 = vmul.f32 %v7969, 1.442695
        %v8093 = vpow.pop %v8092
        %v8094 = vmul.f32 %v7970, 1.442695
        %v8095 = vpow.pop %v8094
        %v8096 = vmul.f32 %v7971, 1.442695
        %v8097 = vpow.pop %v8096
        %v8098 = vmul.f32 %v7972, 1.442695
        %v8099 = vpow.pop %v8098
        %v8100 = vmul.f32 %v7973, 1.442695
        %v8101 = vpow.pop %v8100
        %v8102 = vadd.f32 %v7975, 1.0
        %v8103 = vadd.f32 %v7977, 1.0
        %v8104 = vadd.f32 %v7979, 1.0
        %v8105 = vadd.f32 %v7981, 1.0
        %v8106 = vadd.f32 %v7983, 1.0
        %v8107 = vadd.f32 %v7985, 1.0
        %v8108 = vadd.f32 %v7987, 1.0
        %v8109 = vadd.f32 %v7989, 1.0
        %v8110 = vadd.f32 %v7991, 1.0
        %v8111 = vadd.f32 %v7993, 1.0
        %v8112 = vadd.f32 %v7995, 1.0
        %v8113 = vadd.f32 %v7997, 1.0
        %v8114 = vadd.f32 %v7999, 1.0
        %v8115 = vadd.f32 %v8001, 1.0
        %v8116 = vadd.f32 %v8003, 1.0
        %v8117 = vadd.f32 %v8005, 1.0
        %v8118 = vadd.f32 %v8007, 1.0
        %v8119 = vadd.f32 %v8009, 1.0
        %v8120 = vadd.f32 %v8011, 1.0
        %v8121 = vadd.f32 %v8013, 1.0
        %v8122 = vadd.f32 %v8015, 1.0
        %v8123 = vadd.f32 %v8017, 1.0
        %v8124 = vadd.f32 %v8019, 1.0
        %v8125 = vadd.f32 %v8021, 1.0
        %v8126 = vadd.f32 %v8023, 1.0
        %v8127 = vadd.f32 %v8025, 1.0
        %v8128 = vadd.f32 %v8027, 1.0
        %v8129 = vadd.f32 %v8029, 1.0
        %v8130 = vadd.f32 %v8031, 1.0
        %v8131 = vadd.f32 %v8033, 1.0
        %v8132 = vadd.f32 %v8035, 1.0
        %v8133 = vadd.f32 %v8037, 1.0
        %v8134 = vadd.f32 %v8039, 1.0
        %v8135 = vadd.f32 %v8041, 1.0
        %v8136 = vadd.f32 %v8043, 1.0
        %v8137 = vadd.f32 %v8045, 1.0
        %v8138 = vadd.f32 %v8047, 1.0
        %v8139 = vadd.f32 %v8049, 1.0
        %v8140 = vadd.f32 %v8051, 1.0
        %v8141 = vadd.f32 %v8053, 1.0
        %v8142 = vadd.f32 %v8055, 1.0
        %v8143 = vadd.f32 %v8057, 1.0
        %v8144 = vadd.f32 %v8059, 1.0
        %v8145 = vadd.f32 %v8061, 1.0
        %v8146 = vadd.f32 %v8063, 1.0
        %v8147 = vadd.f32 %v8065, 1.0
        %v8148 = vadd.f32 %v8067, 1.0
        %v8149 = vadd.f32 %v8069, 1.0
        %v8150 = vadd.f32 %v8071, 1.0
        %v8151 = vadd.f32 %v8073, 1.0
        %v8152 = vadd.f32 %v8075, 1.0
        %v8153 = vadd.f32 %v8077, 1.0
        %v8154 = vadd.f32 %v8079, 1.0
        %v8155 = vadd.f32 %v8081, 1.0
        %v8156 = vadd.f32 %v8083, 1.0
        %v8157 = vadd.f32 %v8085, 1.0
        %v8158 = vadd.f32 %v8087, 1.0
        %v8159 = vadd.f32 %v8089, 1.0
        %v8160 = vadd.f32 %v8091, 1.0
        %v8161 = vadd.f32 %v8093, 1.0
        %v8162 = vadd.f32 %v8095, 1.0
        %v8163 = vadd.f32 %v8097, 1.0
        %v8164 = vadd.f32 %v8099, 1.0
        %v8165 = vadd.f32 %v8101, 1.0
        %v8166 = vrcp.pop %v8102
        %v8167 = vrcp.pop %v8103
        %v8168 = vrcp.pop %v8104
        %v8169 = vrcp.pop %v8105
        %v8170 = vrcp.pop %v8106
        %v8171 = vrcp.pop %v8107
        %v8172 = vrcp.pop %v8108
        %v8173 = vrcp.pop %v8109
        %v8174 = vrcp.pop %v8110
        %v8175 = vrcp.pop %v8111
        %v8176 = vrcp.pop %v8112
        %v8177 = vrcp.pop %v8113
        %v8178 = vrcp.pop %v8114
        %v8179 = vrcp.pop %v8115
        %v8180 = vrcp.pop %v8116
        %v8181 = vrcp.pop %v8117
        %v8182 = vrcp.pop %v8118
        %v8183 = vrcp.pop %v8119
        %v8184 = vrcp.pop %v8120
        %v8185 = vrcp.pop %v8121
        %v8186 = vrcp.pop %v8122
        %v8187 = vrcp.pop %v8123
        %v8188 = vrcp.pop %v8124
        %v8189 = vrcp.pop %v8125
        %v8190 = vrcp.pop %v8126
        %v8191 = vrcp.pop %v8127
        %v8192 = vrcp.pop %v8128
        %v8193 = vrcp.pop %v8129
        %v8194 = vrcp.pop %v8130
        %v8195 = vrcp.pop %v8131
        %v8196 = vrcp.pop %v8132
        %v8197 = vrcp.pop %v8133
        %v8198 = vrcp.pop %v8134
        %v8199 = vrcp.pop %v8135
        %v8200 = vrcp.pop %v8136
        %v8201 = vrcp.pop %v8137
        %v8202 = vrcp.pop %v8138
        %v8203 = vrcp.pop %v8139
        %v8204 = vrcp.pop %v8140
        %v8205 = vrcp.pop %v8141
        %v8206 = vrcp.pop %v8142
        %v8207 = vrcp.pop %v8143
        %v8208 = vrcp.pop %v8144
        %v8209 = vrcp.pop %v8145
        %v8210 = vrcp.pop %v8146
        %v8211 = vrcp.pop %v8147
        %v8212 = vrcp.pop %v8148
        %v8213 = vrcp.pop %v8149
        %v8214 = vrcp.pop %v8150
        %v8215 = vrcp.pop %v8151
        %v8216 = vrcp.pop %v8152
        %v8217 = vrcp.pop %v8153
        %v8218 = vrcp.pop %v8154
        %v8219 = vrcp.pop %v8155
        %v8220 = vrcp.pop %v8156
        %v8221 = vrcp.pop %v8157
        %v8222 = vrcp.pop %v8158
        %v8223 = vrcp.pop %v8159
        %v8224 = vrcp.pop %v8160
        %v8225 = vrcp.pop %v8161
        %v8226 = vrcp.pop %v8162
        %v8227 = vrcp.pop %v8163
        %v8228 = vrcp.pop %v8164
        %v8229 = vrcp.pop %v8165
        %v8230 = vsub.f32 1.0, %v8166
        %v8231 = vsub.f32 1.0, %v8167
        %v8232 = vsub.f32 1.0, %v8168
        %v8233 = vsub.f32 1.0, %v8169
        %v8234 = vsub.f32 1.0, %v8170
        %v8235 = vsub.f32 1.0, %v8171
        %v8236 = vsub.f32 1.0, %v8172
        %v8237 = vsub.f32 1.0, %v8173
        %v8238 = vsub.f32 1.0, %v8174
        %v8239 = vsub.f32 1.0, %v8175
        %v8240 = vsub.f32 1.0, %v8176
        %v8241 = vsub.f32 1.0, %v8177
        %v8242 = vsub.f32 1.0, %v8178
        %v8243 = vsub.f32 1.0, %v8179
        %v8244 = vsub.f32 1.0, %v8180
        %v8245 = vsub.f32 1.0, %v8181
        %v8246 = vsub.f32 1.0, %v8182
        %v8247 = vsub.f32 1.0, %v8183
        %v8248 = vsub.f32 1.0, %v8184
        %v8249 = vsub.f32 1.0, %v8185
        %v8250 = vsub.f32 1.0, %v8186
        %v8251 = vsub.f32 1.0, %v8187
        %v8252 = vsub.f32 1.0, %v8188
        %v8253 = vsub.f32 1.0, %v8189
        %v8254 = vsub.f32 1.0, %v8190
        %v8255 = vsub.f32 1.0, %v8191
        %v8256 = vsub.f32 1.0, %v8192
        %v8257 = vsub.f32 1.0, %v8193
        %v8258 = vsub.f32 1.0, %v8194
        %v8259 = vsub.f32 1.0, %v8195
        %v8260 = vsub.f32 1.0, %v8196
        %v8261 = vsub.f32 1.0, %v8197
        %v8262 = vsub.f32 1.0, %v8198
        %v8263 = vsub.f32 1.0, %v8199
        %v8264 = vsub.f32 1.0, %v8200
        %v8265 = vsub.f32 1.0, %v8201
        %v8266 = vsub.f32 1.0, %v8202
        %v8267 = vsub.f32 1.0, %v8203
        %v8268 = vsub.f32 1.0, %v8204
        %v8269 = vsub.f32 1.0, %v8205
        %v8270 = vsub.f32 1.0, %v8206
        %v8271 = vsub.f32 1.0, %v8207
        %v8272 = vsub.f32 1.0, %v8208
        %v8273 = vsub.f32 1.0, %v8209
        %v8274 = vsub.f32 1.0, %v8210
        %v8275 = vsub.f32 1.0, %v8211
        %v8276 = vsub.f32 1.0, %v8212
        %v8277 = vsub.f32 1.0, %v8213
        %v8278 = vsub.f32 1.0, %v8214
        %v8279 = vsub.f32 1.0, %v8215
        %v8280 = vsub.f32 1.0, %v8216
        %v8281 = vsub.f32 1.0, %v8217
        %v8282 = vsub.f32 1.0, %v8218
        %v8283 = vsub.f32 1.0, %v8219
        %v8284 = vsub.f32 1.0, %v8220
        %v8285 = vsub.f32 1.0, %v8221
        %v8286 = vsub.f32 1.0, %v8222
        %v8287 = vsub.f32 1.0, %v8223
        %v8288 = vsub.f32 1.0, %v8224
        %v8289 = vsub.f32 1.0, %v8225
        %v8290 = vsub.f32 1.0, %v8226
        %v8291 = vsub.f32 1.0, %v8227
        %v8292 = vsub.f32 1.0, %v8228
        %v8293 = vsub.f32 1.0, %v8229
        %v8294 = vmul.f32 %v6196, %v8230
        %v8295 = vmul.f32 %v6197, %v8231
        %v8296 = vmul.f32 %v6198, %v8232
        %v8297 = vmul.f32 %v6199, %v8233
        %v8298 = vmul.f32 %v6200, %v8234
        %v8299 = vmul.f32 %v6201, %v8235
        %v8300 = vmul.f32 %v6202, %v8236
        %v8301 = vmul.f32 %v6203, %v8237
        %v8302 = vmul.f32 %v6204, %v8238
        %v8303 = vmul.f32 %v6205, %v8239
        %v8304 = vmul.f32 %v6206, %v8240
        %v8305 = vmul.f32 %v6207, %v8241
        %v8306 = vmul.f32 %v6208, %v8242
        %v8307 = vmul.f32 %v6209, %v8243
        %v8308 = vmul.f32 %v6210, %v8244
        %v8309 = vmul.f32 %v6211, %v8245
        %v8310 = vmul.f32 %v6212, %v8246
        %v8311 = vmul.f32 %v6213, %v8247
        %v8312 = vmul.f32 %v6214, %v8248
        %v8313 = vmul.f32 %v6215, %v8249
        %v8314 = vmul.f32 %v6216, %v8250
        %v8315 = vmul.f32 %v6217, %v8251
        %v8316 = vmul.f32 %v6218, %v8252
        %v8317 = vmul.f32 %v6219, %v8253
        %v8318 = vmul.f32 %v6220, %v8254
        %v8319 = vmul.f32 %v6221, %v8255
        %v8320 = vmul.f32 %v6222, %v8256
        %v8321 = vmul.f32 %v6223, %v8257
        %v8322 = vmul.f32 %v6224, %v8258
        %v8323 = vmul.f32 %v6225, %v8259
        %v8324 = vmul.f32 %v6226, %v8260
        %v8325 = vmul.f32 %v6227, %v8261
        %v8326 = vmul.f32 %v6228, %v8262
        %v8327 = vmul.f32 %v6229, %v8263
        %v8328 = vmul.f32 %v6230, %v8264
        %v8329 = vmul.f32 %v6231, %v8265
        %v8330 = vmul.f32 %v6232, %v8266
        %v8331 = vmul.f32 %v6233, %v8267
        %v8332 = vmul.f32 %v6234, %v8268
        %v8333 = vmul.f32 %v6235, %v8269
        %v8334 = vmul.f32 %v6236, %v8270
        %v8335 = vmul.f32 %v6237, %v8271
        %v8336 = vmul.f32 %v6238, %v8272
        %v8337 = vmul.f32 %v6239, %v8273
        %v8338 = vmul.f32 %v6240, %v8274
        %v8339 = vmul.f32 %v6241, %v8275
        %v8340 = vmul.f32 %v6242, %v8276
        %v8341 = vmul.f32 %v6243, %v8277
        %v8342 = vmul.f32 %v6244, %v8278
        %v8343 = vmul.f32 %v6245, %v8279
        %v8344 = vmul.f32 %v6246, %v8280
        %v8345 = vmul.f32 %v6247, %v8281
        %v8346 = vmul.f32 %v6248, %v8282
        %v8347 = vmul.f32 %v6249, %v8283
        %v8348 = vmul.f32 %v6250, %v8284
        %v8349 = vmul.f32 %v6251, %v8285
        %v8350 = vmul.f32 %v6252, %v8286
        %v8351 = vmul.f32 %v6253, %v8287
        %v8352 = vmul.f32 %v6254, %v8288
        %v8353 = vmul.f32 %v6255, %v8289
        %v8354 = vmul.f32 %v6256, %v8290
        %v8355 = vmul.f32 %v6257, %v8291
        %v8356 = vmul.f32 %v6258, %v8292
        %v8357 = vmul.f32 %v6259, %v8293
        %v8358 = vadd.f32 %v8294, %v574
        %v8359 = vadd.f32 %v8295, %v575
        %v8360 = vadd.f32 %v8296, %v576
        %v8361 = vadd.f32 %v8297, %v577
        %v8362 = vadd.f32 %v8298, %v578
        %v8363 = vadd.f32 %v8299, %v579
        %v8364 = vadd.f32 %v8300, %v580
        %v8365 = vadd.f32 %v8301, %v581
        %v8366 = vadd.f32 %v8302, %v582
        %v8367 = vadd.f32 %v8303, %v583
        %v8368 = vadd.f32 %v8304, %v584
        %v8369 = vadd.f32 %v8305, %v585
        %v8370 = vadd.f32 %v8306, %v586
        %v8371 = vadd.f32 %v8307, %v587
        %v8372 = vadd.f32 %v8308, %v588
        %v8373 = vadd.f32 %v8309, %v589
        %v8374 = vadd.f32 %v8310, %v590
        %v8375 = vadd.f32 %v8311, %v591
        %v8376 = vadd.f32 %v8312, %v592
        %v8377 = vadd.f32 %v8313, %v593
        %v8378 = vadd.f32 %v8314, %v594
        %v8379 = vadd.f32 %v8315, %v595
        %v8380 = vadd.f32 %v8316, %v596
        %v8381 = vadd.f32 %v8317, %v597
        %v8382 = vadd.f32 %v8318, %v598
        %v8383 = vadd.f32 %v8319, %v599
        %v8384 = vadd.f32 %v8320, %v600
        %v8385 = vadd.f32 %v8321, %v601
        %v8386 = vadd.f32 %v8322, %v602
        %v8387 = vadd.f32 %v8323, %v603
        %v8388 = vadd.f32 %v8324, %v604
        %v8389 = vadd.f32 %v8325, %v605
        %v8390 = vadd.f32 %v8326, %v606
        %v8391 = vadd.f32 %v8327, %v607
        %v8392 = vadd.f32 %v8328, %v608
        %v8393 = vadd.f32 %v8329, %v609
        %v8394 = vadd.f32 %v8330, %v610
        %v8395 = vadd.f32 %v8331, %v611
        %v8396 = vadd.f32 %v8332, %v612
        %v8397 = vadd.f32 %v8333, %v613
        %v8398 = vadd.f32 %v8334, %v614
        %v8399 = vadd.f32 %v8335, %v615
        %v8400 = vadd.f32 %v8336, %v616
        %v8401 = vadd.f32 %v8337, %v617
        %v8402 = vadd.f32 %v8338, %v618
        %v8403 = vadd.f32 %v8339, %v619
        %v8404 = vadd.f32 %v8340, %v620
        %v8405 = vadd.f32 %v8341, %v621
        %v8406 = vadd.f32 %v8342, %v622
        %v8407 = vadd.f32 %v8343, %v623
        %v8408 = vadd.f32 %v8344, %v624
        %v8409 = vadd.f32 %v8345, %v625
        %v8410 = vadd.f32 %v8346, %v626
        %v8411 = vadd.f32 %v8347, %v627
        %v8412 = vadd.f32 %v8348, %v628
        %v8413 = vadd.f32 %v8349, %v629
        %v8414 = vadd.f32 %v8350, %v630
        %v8415 = vadd.f32 %v8351, %v631
        %v8416 = vadd.f32 %v8352, %v632
        %v8417 = vadd.f32 %v8353, %v633
        %v8418 = vadd.f32 %v8354, %v634
        %v8419 = vadd.f32 %v8355, %v635
        %v8420 = vadd.f32 %v8356, %v636
        %v8421 = vadd.f32 %v8357, %v637
        %8422 = vst [vmem:[%s571] sm:$0xff] %v8358
        %8423 = vst [vmem:[%s571 + $0x8] sm:$0xff] %v8359
        %8424 = vst [vmem:[%s571 + $0x10] sm:$0xff] %v8360
        %8425 = vst [vmem:[%s571 + $0x18] sm:$0xff] %v8361
        %8426 = vst [vmem:[%s571 + $0x20] sm:$0xff] %v8362
        %8427 = vst [vmem:[%s571 + $0x28] sm:$0xff] %v8363
        %8428 = vst [vmem:[%s571 + $0x30] sm:$0xff] %v8364
        %8429 = vst [vmem:[%s571 + $0x38] sm:$0xff] %v8365
        %8430 = vst [vmem:[%s571 + $0x40] sm:$0xff] %v8366
        %8431 = vst [vmem:[%s571 + $0x48] sm:$0xff] %v8367
        %8432 = vst [vmem:[%s571 + $0x50] sm:$0xff] %v8368
        %8433 = vst [vmem:[%s571 + $0x58] sm:$0xff] %v8369
        %8434 = vst [vmem:[%s571 + $0x60] sm:$0xff] %v8370
        %8435 = vst [vmem:[%s571 + $0x68] sm:$0xff] %v8371
        %8436 = vst [vmem:[%s571 + $0x70] sm:$0xff] %v8372
        %8437 = vst [vmem:[%s571 + $0x78] sm:$0xff] %v8373
        %8438 = vst [vmem:[%s571 + $0x80] sm:$0xff] %v8374
        %8439 = vst [vmem:[%s571 + $0x88] sm:$0xff] %v8375
        %8440 = vst [vmem:[%s571 + $0x90] sm:$0xff] %v8376
        %8441 = vst [vmem:[%s571 + $0x98] sm:$0xff] %v8377
        %8442 = vst [vmem:[%s571 + $0xa0] sm:$0xff] %v8378
        %8443 = vst [vmem:[%s571 + $0xa8] sm:$0xff] %v8379
        %8444 = vst [vmem:[%s571 + $0xb0] sm:$0xff] %v8380
        %8445 = vst [vmem:[%s571 + $0xb8] sm:$0xff] %v8381
        %8446 = vst [vmem:[%s571 + $0xc0] sm:$0xff] %v8382
        %8447 = vst [vmem:[%s571 + $0xc8] sm:$0xff] %v8383
        %8448 = vst [vmem:[%s571 + $0xd0] sm:$0xff] %v8384
        %8449 = vst [vmem:[%s571 + $0xd8] sm:$0xff] %v8385
        %8450 = vst [vmem:[%s571 + $0xe0] sm:$0xff] %v8386
        %8451 = vst [vmem:[%s571 + $0xe8] sm:$0xff] %v8387
        %8452 = vst [vmem:[%s571 + $0xf0] sm:$0xff] %v8388
        %8453 = vst [vmem:[%s571 + $0xf8] sm:$0xff] %v8389
        %8454 = vst [vmem:[%s571 + $0x100] sm:$0xff] %v8390
        %8455 = vst [vmem:[%s571 + $0x108] sm:$0xff] %v8391
        %8456 = vst [vmem:[%s571 + $0x110] sm:$0xff] %v8392
        %8457 = vst [vmem:[%s571 + $0x118] sm:$0xff] %v8393
        %8458 = vst [vmem:[%s571 + $0x120] sm:$0xff] %v8394
        %8459 = vst [vmem:[%s571 + $0x128] sm:$0xff] %v8395
        %8460 = vst [vmem:[%s571 + $0x130] sm:$0xff] %v8396
        %8461 = vst [vmem:[%s571 + $0x138] sm:$0xff] %v8397
        %8462 = vst [vmem:[%s571 + $0x140] sm:$0xff] %v8398
        %8463 = vst [vmem:[%s571 + $0x148] sm:$0xff] %v8399
        %8464 = vst [vmem:[%s571 + $0x150] sm:$0xff] %v8400
        %8465 = vst [vmem:[%s571 + $0x158] sm:$0xff] %v8401
        %8466 = vst [vmem:[%s571 + $0x160] sm:$0xff] %v8402
        %8467 = vst [vmem:[%s571 + $0x168] sm:$0xff] %v8403
        %8468 = vst [vmem:[%s571 + $0x170] sm:$0xff] %v8404
        %8469 = vst [vmem:[%s571 + $0x178] sm:$0xff] %v8405
        %8470 = vst [vmem:[%s571 + $0x180] sm:$0xff] %v8406
        %8471 = vst [vmem:[%s571 + $0x188] sm:$0xff] %v8407
        %8472 = vst [vmem:[%s571 + $0x190] sm:$0xff] %v8408
        %8473 = vst [vmem:[%s571 + $0x198] sm:$0xff] %v8409
        %8474 = vst [vmem:[%s571 + $0x1a0] sm:$0xff] %v8410
        %8475 = vst [vmem:[%s571 + $0x1a8] sm:$0xff] %v8411
        %8476 = vst [vmem:[%s571 + $0x1b0] sm:$0xff] %v8412
        %8477 = vst [vmem:[%s571 + $0x1b8] sm:$0xff] %v8413
        %8478 = vst [vmem:[%s571 + $0x1c0] sm:$0xff] %v8414
        %8479 = vst [vmem:[%s571 + $0x1c8] sm:$0xff] %v8415
        %8480 = vst [vmem:[%s571 + $0x1d0] sm:$0xff] %v8416
        %8481 = vst [vmem:[%s571 + $0x1d8] sm:$0xff] %v8417
        %8482 = vst [vmem:[%s571 + $0x1e0] sm:$0xff] %v8418
        %8483 = vst [vmem:[%s571 + $0x1e8] sm:$0xff] %v8419
        %8484 = vst [vmem:[%s571 + $0x1f0] sm:$0xff] %v8420
        %8485 = vst [vmem:[%s571 + $0x1f8] sm:$0xff] %v8421
        %s8486 = sand.u32 %s362, 1
        %s8487 = scalar_lea.sflag [#allocation4], %s8486
        %s8488 = sand.u32 %s362, 1
        %s8489 = smul.addr %s8488, 512
        %s8490 = scalar_lea.vmem [#allocation11], %s8489
        // Predicated region
        $region101: #{tpu_custom_call.1} parent=79 // pred_check
          %p8491 = pneg %p372
        $region102: #{tpu_custom_call.1} parent=79 // pred_check_branch
          %8493 = sbr.rel (%p8491) target = $region104
        $region103: #{tpu_custom_call.1} parent=79 // pred_region
          %s8494 = smul.u32 32, %s34
          %s8496 = ssub.s32 8192, 8192
          %8497 = vsyncadd %s8487, %s8496
          %s8498 = smul.addr %s8494, 2
          %s8499 = smul.addr %s8498, 128
          %s8500 = scalar_lea.hbm %s15, %s8499
          %s8501 = sshll.u32 %s8490, 4
          %s8502 = int_to_ptr.vmem [resolvable:$true] %s8501
          %8507 = dma.vmem_to_hbm [thread:$0]  %s8502, 8192, %s8500, %s8487, 256, 256, 16
        $region104: #{tpu_custom_call.1} parent=79 // pred_fallthru
          _
      $region80: #{tpu_custom_call.1} parent=5 // pred_fallthru
        _
      %p8508 = scmp.le.s32.totalorder 2, %s29
      // Predicated region
      $region105: #{tpu_custom_call.1} parent=5 // pred_check
        %p8509 = pneg %p8508
      $region106: #{tpu_custom_call.1} parent=5 // pred_check_branch
        %8511 = sbr.rel (%p8509) target = $region108
      $region107: #{tpu_custom_call.1} parent=5 // pred_region
        %s8512 = ssub.s32 %s29, 2
        // Predicated region
        $region109: #{tpu_custom_call.1} parent=107 // pred_check
          %p8513 = pneg %p378
        $region110: #{tpu_custom_call.1} parent=107 // pred_check_branch
          %8515 = sbr.rel (%p8513) target = $region112
        $region111: #{tpu_custom_call.1} parent=107 // pred_region
          %s8516 = sand.u32 %s363, 1
          %s8517 = scalar_lea.sflag [#allocation4], %s8516
          %s8518 = sand.u32 %s363, 1
          %s8519 = smul.addr %s8518, 512
          %s8520 = scalar_lea.vmem [#allocation11], %s8519
          %8521 = dma.done %s8517, 8192
        $region112: #{tpu_custom_call.1} parent=107 // pred_fallthru
          _
      $region108: #{tpu_custom_call.1} parent=5 // pred_fallthru
        _
    $region6: #{tpu_custom_call.1} parent=1 // loop_footer
      %s33 = sadd.s32 1, %s29
    $region7: #{tpu_custom_call.1} parent=1 // loop_footer_branch
      %28 = sbr.rel target = $region3
    $region8: #{tpu_custom_call.1} parent=1 // loop_exit
      _
    %8522 = vsyncpa [#allocation3], 1
    %s8523 = scalar_lea.sflag [#allocation3], 1
    %8524 = vsyncpa %s8523, 1
    %8525 = vsyncpa [#allocation6], 1
    %8526 = vsyncpa [#allocation9], 1
    %8527 = vsyncpa [#allocation4], 1
    %s8528 = scalar_lea.sflag [#allocation4], 1
    %8529 = vsyncpa %s8528, 1

</llo_original>
